<compile_context>
chip_gen: v6e
topology: v6e:2x2x1
jax: 0.10.0
libtpu: 0.0.40
codegen_flags: <defaults>
</compile_context>

<pallas_src>
import functools

import jax
import jax.numpy as jnp
from jax.experimental import pallas as pl
from jax.experimental.pallas import tpu as pltpu

IMG_C = 4
IMG_W = 19
IN_FEAT = IMG_W * IMG_C          # 76
HIDE1 = 128                      # input-Linear width (folded into LSTM weights)
HIDE2 = 256                      # LSTM hidden size
N_CLASSES = 2


def _lstm_kernel(x_ref, w_x_ref, b_ref, w_h_ref, h_out_ref,
                 pre_scr, h_scr, c_scr, *,
                 t_chunk, bg, seq_len, n_chunks, pre_dtype, compute_dtype):
    """One grid step = one (batch-group, time-chunk) pair.

    Phase 1: one MXU matmul projects the whole chunk's inputs to pre-gates.
    Phase 2: serial LSTM recurrence over the chunk; the only per-step matmul
             is h @ W_hh (all input-side work was hoisted into phase 1).
    """
    c_idx = pl.program_id(1)
    H = HIDE2

    @pl.when(c_idx == 0)
    def _():
        h_scr[...] = jnp.zeros_like(h_scr)
        c_scr[...] = jnp.zeros_like(c_scr)

    # ---- Phase 1: fused input projection, (rows, 76) @ (76, 1024) + bias. ---
    pre = jnp.dot(x_ref[...], w_x_ref[...],
                  preferred_element_type=jnp.float32) + b_ref[...]
    pre_scr[...] = pre.astype(pre_dtype)

    ragged = (n_chunks * t_chunk != seq_len)   # Python bool at trace time

    # ---- Phase 2: serial recurrence. Gate column order is (i, f, o, g). -----
    def step(t, carry):
        def body():
            row = pl.multiple_of(t * bg, 8)
            gates = (pre_scr[pl.ds(row, bg), :].astype(jnp.float32)
                     + jnp.dot(h_scr[...].astype(compute_dtype), w_h_ref[...],
                               preferred_element_type=jnp.float32))
            sig = jax.nn.sigmoid(gates[:, :3 * H])     # i | f | o in one pass
            i_g = sig[:, 0 * H:1 * H]
            f_g = sig[:, 1 * H:2 * H]
            o_g = sig[:, 2 * H:3 * H]
            g_g = jnp.tanh(gates[:, 3 * H:4 * H])
            c_new = f_g * c_scr[...] + i_g * g_g
            c_scr[...] = c_new
            h_scr[...] = o_g * jnp.tanh(c_new)

        if ragged:
            # Only the last chunk can hold padded timesteps: skip them outright
            # (no matmul / transcendentals on dead steps).
            @pl.when(c_idx * t_chunk + t < seq_len)
            def _():
                body()
        else:
            body()
        return carry

    jax.lax.fori_loop(0, t_chunk, step, 0, unroll=8)

    @pl.when(c_idx == n_chunks - 1)
    def _():
        h_out_ref[...] = h_scr[...]


def rnn_forward(x, params, *, t_chunk=None, batch_group=None,
                compute_dtype=jnp.bfloat16):
    """x: (B, T, IN_FEAT) float32. Returns (B, N_CLASSES) float32."""
    B, T, F = x.shape
    assert F == IN_FEAT
    (w_in, b_in, w_ih, b_ih, w_hh, b_hh, w_out, b_out) = params
    H = HIDE2

    # ---- Fold the input Linear into the LSTM input path (exact algebra):
    #   (x @ W_in^T + b_in) @ W_ih^T + b_ih + b_hh
    #     = x @ (W_ih @ W_in)^T + (W_ih @ b_in + b_ih + b_hh)
    w_x = w_ih @ w_in                                   # (1024, 76)
    b_fused = w_ih @ b_in + b_ih + b_hh                 # (1024,)

    # ---- Permute gate columns (i, f, g, o) -> (i, f, o, g). -----------------
    perm = jnp.concatenate([jnp.arange(0, 2 * H),
                            jnp.arange(3 * H, 4 * H),
                            jnp.arange(2 * H, 3 * H)])
    w_x_t = w_x.T[:, perm].astype(compute_dtype)        # (76, 1024)
    w_hh_t = w_hh.T[:, perm].astype(compute_dtype)      # (256, 1024)
    b_fused = b_fused[perm][None, :].astype(jnp.float32)  # (1, 1024), f32 bias

    # ---- Batch row-groups: bound vreg pressure in the unrolled recurrence
    # and give a "parallel" grid axis the v7x megacore can split.
    bg = batch_group or (8 if B <= 8 else 16)
    assert bg % 8 == 0
    n_bg = -(-B // bg)
    b_pad = n_bg * bg

    pre_dtype = compute_dtype
    x_bytes = jnp.dtype(compute_dtype).itemsize
    pre_bytes = jnp.dtype(pre_dtype).itemsize

    # ---- Time-chunk length from a ~32 MiB VMEM budget (safe on v7x 64 MiB).
    per_row = 2 * F * x_bytes + 4 * H * pre_bytes       # 2x-buffered x + pre slab
    if t_chunk is None:
        t_chunk = max(8, min(256, (32 * 2 ** 20) // (per_row * bg)))
    tc = max(8, (min(T, t_chunk) // 8) * 8)             # multiple of 8 (>= 8)
    n_chunks = -(-T // tc)
    t_pad = n_chunks * tc
    rows = tc * bg

    # ---- Layout: cast to compute dtype BEFORE the transpose (half the HBM
    # copy), then (b_pad, T, F) -> (n_bg, t_pad, bg, F) -> flat rows.
    xc = x.astype(compute_dtype)
    xc = jnp.pad(xc, ((0, b_pad - B), (0, t_pad - T), (0, 0)))
    x_rows = (xc.reshape(n_bg, bg, t_pad, F)
                .transpose(0, 2, 1, 3)
                .reshape(n_bg * t_pad * bg, F))

    kernel = functools.partial(
        _lstm_kernel, t_chunk=tc, bg=bg, seq_len=T, n_chunks=n_chunks,
        pre_dtype=pre_dtype, compute_dtype=compute_dtype)

    def const_spec(arr):
        return pl.BlockSpec(arr.shape, lambda b, c: (0,) * arr.ndim)

    grid_spec = pltpu.PrefetchScalarGridSpec(
        num_scalar_prefetch=0,
        grid=(n_bg, n_chunks),
        in_specs=[
            pl.BlockSpec((rows, F), lambda b, c: (b * n_chunks + c, 0)),
            const_spec(w_x_t), const_spec(b_fused), const_spec(w_hh_t),
        ],
        out_specs=pl.BlockSpec((bg, H), lambda b, c: (b, 0)),
        scratch_shapes=[
            pltpu.VMEM((rows, 4 * H), pre_dtype),        # pre-gates slab (chunk)
            pltpu.VMEM((bg, H), jnp.float32),            # h (f32 state)
            pltpu.VMEM((bg, H), jnp.float32),            # c (f32 state)
        ],
    )

    h_last = pl.pallas_call(
        kernel,
        out_shape=jax.ShapeDtypeStruct((b_pad, H), jnp.float32),
        grid_spec=grid_spec,
        compiler_params=pltpu.CompilerParams(
            dimension_semantics=("parallel", "arbitrary"),  # batch || , time serial
            vmem_limit_bytes=48 * 2 ** 20),
    )(x_rows, w_x_t, b_fused, w_hh_t)

    # Final (256 -> 2) Linear stays in XLA: a 2-lane-wide kernel output would
    # force masked stores and a latency-only matmul inside the kernel.
    return h_last[:B] @ w_out.T + b_out


def init_params(key):
    """Deterministic parameter init matching the PyTorch module's shapes."""
    ks = jax.random.split(key, 8)

    def u(k, shape, fan_in):
        bound = 1.0 / jnp.sqrt(fan_in)
        return jax.random.uniform(k, shape, jnp.float32, -bound, bound)

    w_in = u(ks[0], (HIDE1, IN_FEAT), IN_FEAT)       # input Linear weight
    b_in = u(ks[1], (HIDE1,), IN_FEAT)
    w_ih = u(ks[2], (4 * HIDE2, HIDE1), HIDE2)       # LSTM weight_ih_l0
    b_ih = u(ks[3], (4 * HIDE2,), HIDE2)
    w_hh = u(ks[4], (4 * HIDE2, HIDE2), HIDE2)       # LSTM weight_hh_l0
    b_hh = u(ks[5], (4 * HIDE2,), HIDE2)
    w_out = u(ks[6], (N_CLASSES, HIDE2), HIDE2)      # output Linear weight
    b_out = u(ks[7], (N_CLASSES,), HIDE2)
    return (w_in, b_in, w_ih, b_ih, w_hh, b_hh, w_out, b_out)


def rnn_forward_ref(x, params):
    """Pure-JAX reference (unfolded weights, standard gate order)."""
    (w_in, b_in, w_ih, b_ih, w_hh, b_hh, w_out, b_out) = params
    B = x.shape[0]
    xp = x @ w_in.T + b_in                            # (B, T, 128)

    def step(carry, x_t):
        h, c = carry
        gates = x_t @ w_ih.T + b_ih + h @ w_hh.T + b_hh
        i, f, g, o = jnp.split(gates, 4, axis=-1)
        i, f, o = jax.nn.sigmoid(i), jax.nn.sigmoid(f), jax.nn.sigmoid(o)
        g = jnp.tanh(g)
        c = f * c + i * g
        h = o * jnp.tanh(c)
        return (h, c), h

    h0 = jnp.zeros((B, HIDE2), jnp.float32)
    c0 = jnp.zeros((B, HIDE2), jnp.float32)
    (h_last, _), _ = jax.lax.scan(step, (h0, c0), jnp.transpose(xp, (1, 0, 2)))
    return h_last @ w_out.T + b_out


if __name__ == "__main__":
    key = jax.random.PRNGKey(0)
    k_param, k_x = jax.random.split(key)
    params = init_params(k_param)

    B, T = 2, 8
    x = jax.random.normal(k_x, (B, T, IN_FEAT), jnp.float32)
    ref = rnn_forward_ref(x, params)

    # Default path: bf16 MXU operands, f32 accumulate / f32 recurrent state.
    out = jax.block_until_ready(rnn_forward(x, params))
    assert out.shape == (B, N_CLASSES)
    assert jnp.allclose(out, ref, atol=1e-1, rtol=1e-1), (out, ref)

    # Full-f32 path (tight tolerance).
    out_f32 = jax.block_until_ready(
        rnn_forward(x, params, compute_dtype=jnp.float32))
    assert jnp.allclose(out_f32, ref, atol=1e-3, rtol=1e-3), (out_f32, ref)

    # Ragged multi-chunk + padded-batch path (exercises the tail-skip guard).
    B2, T2 = 3, 21
    x2 = jax.random.normal(jax.random.PRNGKey(1), (B2, T2, IN_FEAT), jnp.float32)
    ref2 = rnn_forward_ref(x2, params)
    out2 = jax.block_until_ready(
        rnn_forward(x2, params, t_chunk=8, compute_dtype=jnp.float32))
    assert jnp.allclose(out2, ref2, atol=1e-3, rtol=1e-3), (out2, ref2)

    print("KERNEL_OK")
</pallas_src>

<mosaic_0001>
module attributes {stable_mosaic.version = 11 : i64} {
  func.func @_lstm_kernel(%arg0: i32, %arg1: i32, %arg2: memref<64x76xbf16, #tpu.memory_space<vmem>>, %arg3: memref<76x1024xbf16, #tpu.memory_space<vmem>>, %arg4: memref<1x1024xf32, #tpu.memory_space<vmem>>, %arg5: memref<256x1024xbf16, #tpu.memory_space<vmem>>, %arg6: memref<8x256xf32, #tpu.memory_space<vmem>>, %arg7: memref<64x1024xbf16, #tpu.memory_space<vmem>>, %arg8: memref<8x256xf32, #tpu.memory_space<vmem>>, %arg9: memref<8x256xf32, #tpu.memory_space<vmem>>) attributes {dimension_semantics = [#tpu.dimension_semantics<parallel>, #tpu.dimension_semantics<arbitrary>], iteration_bounds = array<i64: 1, 1>, scalar_prefetch = 0 : i64, scratch_operands = 3 : i64, tpu.core_type = #tpu.core_type<tc>, window_params = [{transform_indices = @transform_0, window_bounds = array<i64: 64, 76>}, {pipeline_mode = #tpu.pipeline_mode<synchronous>, transform_indices = @transform_1, window_bounds = array<i64: 76, 1024>}, {pipeline_mode = #tpu.pipeline_mode<synchronous>, transform_indices = @transform_2, window_bounds = array<i64: 1, 1024>}, {pipeline_mode = #tpu.pipeline_mode<synchronous>, transform_indices = @transform_3, window_bounds = array<i64: 256, 1024>}, {transform_indices = @transform_4, window_bounds = array<i64: 8, 256>}]} {
    %c0_i32 = arith.constant 0 : i32
    %0 = arith.cmpi eq, %arg1, %c0_i32 : i32
    %1 = arith.extui %0 : i1 to i32
    %c0_i32_0 = arith.constant 0 : i32
    %2 = arith.cmpi ne, %1, %c0_i32_0 : i32
    scf.if %2 {
      %cst_123 = arith.constant 0.000000e+00 : f32
      %246 = vector.broadcast %cst_123 : f32 to vector<8x256xf32>
      %c0_124 = arith.constant 0 : index
      %c0_125 = arith.constant 0 : index
      %247 = vector.load %arg8[%c0_124, %c0_125] : memref<8x256xf32, #tpu.memory_space<vmem>>, vector<8x256xf32>
      tpu.vector_store %arg8[%c0_124, %c0_125], %246 {strides = array<i32>} : memref<8x256xf32, #tpu.memory_space<vmem>>, vector<8x256xf32>,
      %cst_126 = arith.constant 0.000000e+00 : f32
      %248 = vector.broadcast %cst_126 : f32 to vector<8x256xf32>
      %c0_127 = arith.constant 0 : index
      %c0_128 = arith.constant 0 : index
      %249 = vector.load %arg9[%c0_127, %c0_128] : memref<8x256xf32, #tpu.memory_space<vmem>>, vector<8x256xf32>
      tpu.vector_store %arg9[%c0_127, %c0_128], %248 {strides = array<i32>} : memref<8x256xf32, #tpu.memory_space<vmem>>, vector<8x256xf32>,
    } else {
    }
    %c0 = arith.constant 0 : index
    %c0_1 = arith.constant 0 : index
    %3 = vector.load %arg2[%c0, %c0_1] : memref<64x76xbf16, #tpu.memory_space<vmem>>, vector<64x76xbf16>
    %c0_2 = arith.constant 0 : index
    %c0_3 = arith.constant 0 : index
    %4 = vector.load %arg3[%c0_2, %c0_3] : memref<76x1024xbf16, #tpu.memory_space<vmem>>, vector<76x1024xbf16>
    %cst = arith.constant dense<0.000000e+00> : vector<64x1024xf32>
    %5 = tpu.matmul %3, %4, %cst {dimension_numbers = #tpu.dot_dimension_numbers<[1], [0], [0], [1], [0, 0, 1, 1], [], []>} : vector<64x76xbf16>, vector<76x1024xbf16>, vector<64x1024xf32> -> vector<64x1024xf32>
    %c0_4 = arith.constant 0 : index
    %c0_5 = arith.constant 0 : index
    %6 = vector.load %arg4[%c0_4, %c0_5] : memref<1x1024xf32, #tpu.memory_space<vmem>>, vector<1x1024xf32>
    %7 = vector.broadcast %6 : vector<1x1024xf32> to vector<64x1024xf32>
    %8 = arith.addf %5, %7 : vector<64x1024xf32>
    %9 = arith.truncf %8 : vector<64x1024xf32> to vector<64x1024xbf16>
    %c0_6 = arith.constant 0 : index
    %c0_7 = arith.constant 0 : index
    %10 = vector.load %arg7[%c0_6, %c0_7] : memref<64x1024xbf16, #tpu.memory_space<vmem>>, vector<64x1024xbf16>
    tpu.vector_store %arg7[%c0_6, %c0_7], %9 {strides = array<i32>} : memref<64x1024xbf16, #tpu.memory_space<vmem>>, vector<64x1024xbf16>,
    %c0_i32_8 = arith.constant 0 : i32
    %c8_i32 = arith.constant 8 : i32
    %11 = arith.muli %c0_i32_8, %c8_i32 : i32
    %12 = tpu.assume_multiple %11, 8 : i32
    %13 = arith.index_cast %12 : i32 to index
    %c0_9 = arith.constant 0 : index
    %14 = vector.load %arg7[%13, %c0_9] : memref<64x1024xbf16, #tpu.memory_space<vmem>>, vector<8x1024xbf16>
    %15 = arith.extf %14 : vector<8x1024xbf16> to vector<8x1024xf32>
    %c0_10 = arith.constant 0 : index
    %c0_11 = arith.constant 0 : index
    %16 = vector.load %arg8[%c0_10, %c0_11] : memref<8x256xf32, #tpu.memory_space<vmem>>, vector<8x256xf32>
    %17 = arith.truncf %16 : vector<8x256xf32> to vector<8x256xbf16>
    %c0_12 = arith.constant 0 : index
    %c0_13 = arith.constant 0 : index
    %18 = vector.load %arg5[%c0_12, %c0_13] : memref<256x1024xbf16, #tpu.memory_space<vmem>>, vector<256x1024xbf16>
    %cst_14 = arith.constant dense<0.000000e+00> : vector<8x1024xf32>
    %19 = tpu.matmul %17, %18, %cst_14 {dimension_numbers = #tpu.dot_dimension_numbers<[1], [0], [0], [1], [0, 0, 1, 1], [], []>} : vector<8x256xbf16>, vector<256x1024xbf16>, vector<8x1024xf32> -> vector<8x1024xf32>
    %20 = arith.addf %15, %19 : vector<8x1024xf32>
    %21 = vector.extract_strided_slice %20 {offsets = [0, 0], sizes = [8, 768], strides = [1, 1]} : vector<8x1024xf32> to vector<8x768xf32>
    %22 = arith.negf %21 : vector<8x768xf32>
    %23 = math.exp %22 : vector<8x768xf32>
    %cst_15 = arith.constant 1.000000e+00 : f32
    %24 = vector.broadcast %cst_15 : f32 to vector<8x768xf32>
    %25 = arith.addf %24, %23 : vector<8x768xf32>
    %26 = arith.divf %24, %25 : vector<8x768xf32>
    %27 = vector.extract_strided_slice %26 {offsets = [0, 0], sizes = [8, 256], strides = [1, 1]} : vector<8x768xf32> to vector<8x256xf32>
    %28 = vector.extract_strided_slice %26 {offsets = [0, 256], sizes = [8, 256], strides = [1, 1]} : vector<8x768xf32> to vector<8x256xf32>
    %29 = vector.extract_strided_slice %26 {offsets = [0, 512], sizes = [8, 256], strides = [1, 1]} : vector<8x768xf32> to vector<8x256xf32>
    %30 = vector.extract_strided_slice %20 {offsets = [0, 768], sizes = [8, 256], strides = [1, 1]} : vector<8x1024xf32> to vector<8x256xf32>
    %31 = math.tanh %30 : vector<8x256xf32>
    %c0_16 = arith.constant 0 : index
    %c0_17 = arith.constant 0 : index
    %32 = vector.load %arg9[%c0_16, %c0_17] : memref<8x256xf32, #tpu.memory_space<vmem>>, vector<8x256xf32>
    %33 = arith.mulf %28, %32 : vector<8x256xf32>
    %34 = arith.mulf %27, %31 : vector<8x256xf32>
    %35 = arith.addf %33, %34 : vector<8x256xf32>
    %c0_18 = arith.constant 0 : index
    %c0_19 = arith.constant 0 : index
    %36 = vector.load %arg9[%c0_18, %c0_19] : memref<8x256xf32, #tpu.memory_space<vmem>>, vector<8x256xf32>
    tpu.vector_store %arg9[%c0_18, %c0_19], %35 {strides = array<i32>} : memref<8x256xf32, #tpu.memory_space<vmem>>, vector<8x256xf32>,
    %37 = math.tanh %35 : vector<8x256xf32>
    %38 = arith.mulf %29, %37 : vector<8x256xf32>
    %c0_20 = arith.constant 0 : index
    %c0_21 = arith.constant 0 : index
    %39 = vector.load %arg8[%c0_20, %c0_21] : memref<8x256xf32, #tpu.memory_space<vmem>>, vector<8x256xf32>
    tpu.vector_store %arg8[%c0_20, %c0_21], %38 {strides = array<i32>} : memref<8x256xf32, #tpu.memory_space<vmem>>, vector<8x256xf32>,
    %c1_i32 = arith.constant 1 : i32
    %c8_i32_22 = arith.constant 8 : i32
    %40 = arith.muli %c1_i32, %c8_i32_22 : i32
    %41 = tpu.assume_multiple %40, 8 : i32
    %42 = arith.index_cast %41 : i32 to index
    %c0_23 = arith.constant 0 : index
    %43 = vector.load %arg7[%42, %c0_23] : memref<64x1024xbf16, #tpu.memory_space<vmem>>, vector<8x1024xbf16>
    %44 = arith.extf %43 : vector<8x1024xbf16> to vector<8x1024xf32>
    %c0_24 = arith.constant 0 : index
    %c0_25 = arith.constant 0 : index
    %45 = vector.load %arg8[%c0_24, %c0_25] : memref<8x256xf32, #tpu.memory_space<vmem>>, vector<8x256xf32>
    %46 = arith.truncf %45 : vector<8x256xf32> to vector<8x256xbf16>
    %c0_26 = arith.constant 0 : index
    %c0_27 = arith.constant 0 : index
    %47 = vector.load %arg5[%c0_26, %c0_27] : memref<256x1024xbf16, #tpu.memory_space<vmem>>, vector<256x1024xbf16>
    %cst_28 = arith.constant dense<0.000000e+00> : vector<8x1024xf32>
    %48 = tpu.matmul %46, %47, %cst_28 {dimension_numbers = #tpu.dot_dimension_numbers<[1], [0], [0], [1], [0, 0, 1, 1], [], []>} : vector<8x256xbf16>, vector<256x1024xbf16>, vector<8x1024xf32> -> vector<8x1024xf32>
    %49 = arith.addf %44, %48 : vector<8x1024xf32>
    %50 = vector.extract_strided_slice %49 {offsets = [0, 0], sizes = [8, 768], strides = [1, 1]} : vector<8x1024xf32> to vector<8x768xf32>
    %51 = arith.negf %50 : vector<8x768xf32>
    %52 = math.exp %51 : vector<8x768xf32>
    %cst_29 = arith.constant 1.000000e+00 : f32
    %53 = vector.broadcast %cst_29 : f32 to vector<8x768xf32>
    %54 = arith.addf %53, %52 : vector<8x768xf32>
    %55 = arith.divf %53, %54 : vector<8x768xf32>
    %56 = vector.extract_strided_slice %55 {offsets = [0, 0], sizes = [8, 256], strides = [1, 1]} : vector<8x768xf32> to vector<8x256xf32>
    %57 = vector.extract_strided_slice %55 {offsets = [0, 256], sizes = [8, 256], strides = [1, 1]} : vector<8x768xf32> to vector<8x256xf32>
    %58 = vector.extract_strided_slice %55 {offsets = [0, 512], sizes = [8, 256], strides = [1, 1]} : vector<8x768xf32> to vector<8x256xf32>
    %59 = vector.extract_strided_slice %49 {offsets = [0, 768], sizes = [8, 256], strides = [1, 1]} : vector<8x1024xf32> to vector<8x256xf32>
    %60 = math.tanh %59 : vector<8x256xf32>
    %c0_30 = arith.constant 0 : index
    %c0_31 = arith.constant 0 : index
    %61 = vector.load %arg9[%c0_30, %c0_31] : memref<8x256xf32, #tpu.memory_space<vmem>>, vector<8x256xf32>
    %62 = arith.mulf %57, %61 : vector<8x256xf32>
    %63 = arith.mulf %56, %60 : vector<8x256xf32>
    %64 = arith.addf %62, %63 : vector<8x256xf32>
    %c0_32 = arith.constant 0 : index
    %c0_33 = arith.constant 0 : index
    %65 = vector.load %arg9[%c0_32, %c0_33] : memref<8x256xf32, #tpu.memory_space<vmem>>, vector<8x256xf32>
    tpu.vector_store %arg9[%c0_32, %c0_33], %64 {strides = array<i32>} : memref<8x256xf32, #tpu.memory_space<vmem>>, vector<8x256xf32>,
    %66 = math.tanh %64 : vector<8x256xf32>
    %67 = arith.mulf %58, %66 : vector<8x256xf32>
    %c0_34 = arith.constant 0 : index
    %c0_35 = arith.constant 0 : index
    %68 = vector.load %arg8[%c0_34, %c0_35] : memref<8x256xf32, #tpu.memory_space<vmem>>, vector<8x256xf32>
    tpu.vector_store %arg8[%c0_34, %c0_35], %67 {strides = array<i32>} : memref<8x256xf32, #tpu.memory_space<vmem>>, vector<8x256xf32>,
    %c2_i32 = arith.constant 2 : i32
    %c8_i32_36 = arith.constant 8 : i32
    %69 = arith.muli %c2_i32, %c8_i32_36 : i32
    %70 = tpu.assume_multiple %69, 8 : i32
    %71 = arith.index_cast %70 : i32 to index
    %c0_37 = arith.constant 0 : index
    %72 = vector.load %arg7[%71, %c0_37] : memref<64x1024xbf16, #tpu.memory_space<vmem>>, vector<8x1024xbf16>
    %73 = arith.extf %72 : vector<8x1024xbf16> to vector<8x1024xf32>
    %c0_38 = arith.constant 0 : index
    %c0_39 = arith.constant 0 : index
    %74 = vector.load %arg8[%c0_38, %c0_39] : memref<8x256xf32, #tpu.memory_space<vmem>>, vector<8x256xf32>
    %75 = arith.truncf %74 : vector<8x256xf32> to vector<8x256xbf16>
    %c0_40 = arith.constant 0 : index
    %c0_41 = arith.constant 0 : index
    %76 = vector.load %arg5[%c0_40, %c0_41] : memref<256x1024xbf16, #tpu.memory_space<vmem>>, vector<256x1024xbf16>
    %cst_42 = arith.constant dense<0.000000e+00> : vector<8x1024xf32>
    %77 = tpu.matmul %75, %76, %cst_42 {dimension_numbers = #tpu.dot_dimension_numbers<[1], [0], [0], [1], [0, 0, 1, 1], [], []>} : vector<8x256xbf16>, vector<256x1024xbf16>, vector<8x1024xf32> -> vector<8x1024xf32>
    %78 = arith.addf %73, %77 : vector<8x1024xf32>
    %79 = vector.extract_strided_slice %78 {offsets = [0, 0], sizes = [8, 768], strides = [1, 1]} : vector<8x1024xf32> to vector<8x768xf32>
    %80 = arith.negf %79 : vector<8x768xf32>
    %81 = math.exp %80 : vector<8x768xf32>
    %cst_43 = arith.constant 1.000000e+00 : f32
    %82 = vector.broadcast %cst_43 : f32 to vector<8x768xf32>
    %83 = arith.addf %82, %81 : vector<8x768xf32>
    %84 = arith.divf %82, %83 : vector<8x768xf32>
    %85 = vector.extract_strided_slice %84 {offsets = [0, 0], sizes = [8, 256], strides = [1, 1]} : vector<8x768xf32> to vector<8x256xf32>
    %86 = vector.extract_strided_slice %84 {offsets = [0, 256], sizes = [8, 256], strides = [1, 1]} : vector<8x768xf32> to vector<8x256xf32>
    %87 = vector.extract_strided_slice %84 {offsets = [0, 512], sizes = [8, 256], strides = [1, 1]} : vector<8x768xf32> to vector<8x256xf32>
    %88 = vector.extract_strided_slice %78 {offsets = [0, 768], sizes = [8, 256], strides = [1, 1]} : vector<8x1024xf32> to vector<8x256xf32>
    %89 = math.tanh %88 : vector<8x256xf32>
    %c0_44 = arith.constant 0 : index
    %c0_45 = arith.constant 0 : index
    %90 = vector.load %arg9[%c0_44, %c0_45] : memref<8x256xf32, #tpu.memory_space<vmem>>, vector<8x256xf32>
    %91 = arith.mulf %86, %90 : vector<8x256xf32>
    %92 = arith.mulf %85, %89 : vector<8x256xf32>
    %93 = arith.addf %91, %92 : vector<8x256xf32>
    %c0_46 = arith.constant 0 : index
    %c0_47 = arith.constant 0 : index
    %94 = vector.load %arg9[%c0_46, %c0_47] : memref<8x256xf32, #tpu.memory_space<vmem>>, vector<8x256xf32>
    tpu.vector_store %arg9[%c0_46, %c0_47], %93 {strides = array<i32>} : memref<8x256xf32, #tpu.memory_space<vmem>>, vector<8x256xf32>,
    %95 = math.tanh %93 : vector<8x256xf32>
    %96 = arith.mulf %87, %95 : vector<8x256xf32>
    %c0_48 = arith.constant 0 : index
    %c0_49 = arith.constant 0 : index
    %97 = vector.load %arg8[%c0_48, %c0_49] : memref<8x256xf32, #tpu.memory_space<vmem>>, vector<8x256xf32>
    tpu.vector_store %arg8[%c0_48, %c0_49], %96 {strides = array<i32>} : memref<8x256xf32, #tpu.memory_space<vmem>>, vector<8x256xf32>,
    %c3_i32 = arith.constant 3 : i32
    %c8_i32_50 = arith.constant 8 : i32
    %98 = arith.muli %c3_i32, %c8_i32_50 : i32
    %99 = tpu.assume_multiple %98, 8 : i32
    %100 = arith.index_cast %99 : i32 to index
    %c0_51 = arith.constant 0 : index
    %101 = vector.load %arg7[%100, %c0_51] : memref<64x1024xbf16, #tpu.memory_space<vmem>>, vector<8x1024xbf16>
    %102 = arith.extf %101 : vector<8x1024xbf16> to vector<8x1024xf32>
    %c0_52 = arith.constant 0 : index
    %c0_53 = arith.constant 0 : index
    %103 = vector.load %arg8[%c0_52, %c0_53] : memref<8x256xf32, #tpu.memory_space<vmem>>, vector<8x256xf32>
    %104 = arith.truncf %103 : vector<8x256xf32> to vector<8x256xbf16>
    %c0_54 = arith.constant 0 : index
    %c0_55 = arith.constant 0 : index
    %105 = vector.load %arg5[%c0_54, %c0_55] : memref<256x1024xbf16, #tpu.memory_space<vmem>>, vector<256x1024xbf16>
    %cst_56 = arith.constant dense<0.000000e+00> : vector<8x1024xf32>
    %106 = tpu.matmul %104, %105, %cst_56 {dimension_numbers = #tpu.dot_dimension_numbers<[1], [0], [0], [1], [0, 0, 1, 1], [], []>} : vector<8x256xbf16>, vector<256x1024xbf16>, vector<8x1024xf32> -> vector<8x1024xf32>
    %107 = arith.addf %102, %106 : vector<8x1024xf32>
    %108 = vector.extract_strided_slice %107 {offsets = [0, 0], sizes = [8, 768], strides = [1, 1]} : vector<8x1024xf32> to vector<8x768xf32>
    %109 = arith.negf %108 : vector<8x768xf32>
    %110 = math.exp %109 : vector<8x768xf32>
    %cst_57 = arith.constant 1.000000e+00 : f32
    %111 = vector.broadcast %cst_57 : f32 to vector<8x768xf32>
    %112 = arith.addf %111, %110 : vector<8x768xf32>
    %113 = arith.divf %111, %112 : vector<8x768xf32>
    %114 = vector.extract_strided_slice %113 {offsets = [0, 0], sizes = [8, 256], strides = [1, 1]} : vector<8x768xf32> to vector<8x256xf32>
    %115 = vector.extract_strided_slice %113 {offsets = [0, 256], sizes = [8, 256], strides = [1, 1]} : vector<8x768xf32> to vector<8x256xf32>
    %116 = vector.extract_strided_slice %113 {offsets = [0, 512], sizes = [8, 256], strides = [1, 1]} : vector<8x768xf32> to vector<8x256xf32>
    %117 = vector.extract_strided_slice %107 {offsets = [0, 768], sizes = [8, 256], strides = [1, 1]} : vector<8x1024xf32> to vector<8x256xf32>
    %118 = math.tanh %117 : vector<8x256xf32>
    %c0_58 = arith.constant 0 : index
    %c0_59 = arith.constant 0 : index
    %119 = vector.load %arg9[%c0_58, %c0_59] : memref<8x256xf32, #tpu.memory_space<vmem>>, vector<8x256xf32>
    %120 = arith.mulf %115, %119 : vector<8x256xf32>
    %121 = arith.mulf %114, %118 : vector<8x256xf32>
    %122 = arith.addf %120, %121 : vector<8x256xf32>
    %c0_60 = arith.constant 0 : index
    %c0_61 = arith.constant 0 : index
    %123 = vector.load %arg9[%c0_60, %c0_61] : memref<8x256xf32, #tpu.memory_space<vmem>>, vector<8x256xf32>
    tpu.vector_store %arg9[%c0_60, %c0_61], %122 {strides = array<i32>} : memref<8x256xf32, #tpu.memory_space<vmem>>, vector<8x256xf32>,
    %124 = math.tanh %122 : vector<8x256xf32>
    %125 = arith.mulf %116, %124 : vector<8x256xf32>
    %c0_62 = arith.constant 0 : index
    %c0_63 = arith.constant 0 : index
    %126 = vector.load %arg8[%c0_62, %c0_63] : memref<8x256xf32, #tpu.memory_space<vmem>>, vector<8x256xf32>
    tpu.vector_store %arg8[%c0_62, %c0_63], %125 {strides = array<i32>} : memref<8x256xf32, #tpu.memory_space<vmem>>, vector<8x256xf32>,
    %c4_i32 = arith.constant 4 : i32
    %c8_i32_64 = arith.constant 8 : i32
    %127 = arith.muli %c4_i32, %c8_i32_64 : i32
    %128 = tpu.assume_multiple %127, 8 : i32
    %129 = arith.index_cast %128 : i32 to index
    %c0_65 = arith.constant 0 : index
    %130 = vector.load %arg7[%129, %c0_65] : memref<64x1024xbf16, #tpu.memory_space<vmem>>, vector<8x1024xbf16>
    %131 = arith.extf %130 : vector<8x1024xbf16> to vector<8x1024xf32>
    %c0_66 = arith.constant 0 : index
    %c0_67 = arith.constant 0 : index
    %132 = vector.load %arg8[%c0_66, %c0_67] : memref<8x256xf32, #tpu.memory_space<vmem>>, vector<8x256xf32>
    %133 = arith.truncf %132 : vector<8x256xf32> to vector<8x256xbf16>
    %c0_68 = arith.constant 0 : index
    %c0_69 = arith.constant 0 : index
    %134 = vector.load %arg5[%c0_68, %c0_69] : memref<256x1024xbf16, #tpu.memory_space<vmem>>, vector<256x1024xbf16>
    %cst_70 = arith.constant dense<0.000000e+00> : vector<8x1024xf32>
    %135 = tpu.matmul %133, %134, %cst_70 {dimension_numbers = #tpu.dot_dimension_numbers<[1], [0], [0], [1], [0, 0, 1, 1], [], []>} : vector<8x256xbf16>, vector<256x1024xbf16>, vector<8x1024xf32> -> vector<8x1024xf32>
    %136 = arith.addf %131, %135 : vector<8x1024xf32>
    %137 = vector.extract_strided_slice %136 {offsets = [0, 0], sizes = [8, 768], strides = [1, 1]} : vector<8x1024xf32> to vector<8x768xf32>
    %138 = arith.negf %137 : vector<8x768xf32>
    %139 = math.exp %138 : vector<8x768xf32>
    %cst_71 = arith.constant 1.000000e+00 : f32
    %140 = vector.broadcast %cst_71 : f32 to vector<8x768xf32>
    %141 = arith.addf %140, %139 : vector<8x768xf32>
    %142 = arith.divf %140, %141 : vector<8x768xf32>
    %143 = vector.extract_strided_slice %142 {offsets = [0, 0], sizes = [8, 256], strides = [1, 1]} : vector<8x768xf32> to vector<8x256xf32>
    %144 = vector.extract_strided_slice %142 {offsets = [0, 256], sizes = [8, 256], strides = [1, 1]} : vector<8x768xf32> to vector<8x256xf32>
    %145 = vector.extract_strided_slice %142 {offsets = [0, 512], sizes = [8, 256], strides = [1, 1]} : vector<8x768xf32> to vector<8x256xf32>
    %146 = vector.extract_strided_slice %136 {offsets = [0, 768], sizes = [8, 256], strides = [1, 1]} : vector<8x1024xf32> to vector<8x256xf32>
    %147 = math.tanh %146 : vector<8x256xf32>
    %c0_72 = arith.constant 0 : index
    %c0_73 = arith.constant 0 : index
    %148 = vector.load %arg9[%c0_72, %c0_73] : memref<8x256xf32, #tpu.memory_space<vmem>>, vector<8x256xf32>
    %149 = arith.mulf %144, %148 : vector<8x256xf32>
    %150 = arith.mulf %143, %147 : vector<8x256xf32>
    %151 = arith.addf %149, %150 : vector<8x256xf32>
    %c0_74 = arith.constant 0 : index
    %c0_75 = arith.constant 0 : index
    %152 = vector.load %arg9[%c0_74, %c0_75] : memref<8x256xf32, #tpu.memory_space<vmem>>, vector<8x256xf32>
    tpu.vector_store %arg9[%c0_74, %c0_75], %151 {strides = array<i32>} : memref<8x256xf32, #tpu.memory_space<vmem>>, vector<8x256xf32>,
    %153 = math.tanh %151 : vector<8x256xf32>
    %154 = arith.mulf %145, %153 : vector<8x256xf32>
    %c0_76 = arith.constant 0 : index
    %c0_77 = arith.constant 0 : index
    %155 = vector.load %arg8[%c0_76, %c0_77] : memref<8x256xf32, #tpu.memory_space<vmem>>, vector<8x256xf32>
    tpu.vector_store %arg8[%c0_76, %c0_77], %154 {strides = array<i32>} : memref<8x256xf32, #tpu.memory_space<vmem>>, vector<8x256xf32>,
    %c5_i32 = arith.constant 5 : i32
    %c8_i32_78 = arith.constant 8 : i32
    %156 = arith.muli %c5_i32, %c8_i32_78 : i32
    %157 = tpu.assume_multiple %156, 8 : i32
    %158 = arith.index_cast %157 : i32 to index
    %c0_79 = arith.constant 0 : index
    %159 = vector.load %arg7[%158, %c0_79] : memref<64x1024xbf16, #tpu.memory_space<vmem>>, vector<8x1024xbf16>
    %160 = arith.extf %159 : vector<8x1024xbf16> to vector<8x1024xf32>
    %c0_80 = arith.constant 0 : index
    %c0_81 = arith.constant 0 : index
    %161 = vector.load %arg8[%c0_80, %c0_81] : memref<8x256xf32, #tpu.memory_space<vmem>>, vector<8x256xf32>
    %162 = arith.truncf %161 : vector<8x256xf32> to vector<8x256xbf16>
    %c0_82 = arith.constant 0 : index
    %c0_83 = arith.constant 0 : index
    %163 = vector.load %arg5[%c0_82, %c0_83] : memref<256x1024xbf16, #tpu.memory_space<vmem>>, vector<256x1024xbf16>
    %cst_84 = arith.constant dense<0.000000e+00> : vector<8x1024xf32>
    %164 = tpu.matmul %162, %163, %cst_84 {dimension_numbers = #tpu.dot_dimension_numbers<[1], [0], [0], [1], [0, 0, 1, 1], [], []>} : vector<8x256xbf16>, vector<256x1024xbf16>, vector<8x1024xf32> -> vector<8x1024xf32>
    %165 = arith.addf %160, %164 : vector<8x1024xf32>
    %166 = vector.extract_strided_slice %165 {offsets = [0, 0], sizes = [8, 768], strides = [1, 1]} : vector<8x1024xf32> to vector<8x768xf32>
    %167 = arith.negf %166 : vector<8x768xf32>
    %168 = math.exp %167 : vector<8x768xf32>
    %cst_85 = arith.constant 1.000000e+00 : f32
    %169 = vector.broadcast %cst_85 : f32 to vector<8x768xf32>
    %170 = arith.addf %169, %168 : vector<8x768xf32>
    %171 = arith.divf %169, %170 : vector<8x768xf32>
    %172 = vector.extract_strided_slice %171 {offsets = [0, 0], sizes = [8, 256], strides = [1, 1]} : vector<8x768xf32> to vector<8x256xf32>
    %173 = vector.extract_strided_slice %171 {offsets = [0, 256], sizes = [8, 256], strides = [1, 1]} : vector<8x768xf32> to vector<8x256xf32>
    %174 = vector.extract_strided_slice %171 {offsets = [0, 512], sizes = [8, 256], strides = [1, 1]} : vector<8x768xf32> to vector<8x256xf32>
    %175 = vector.extract_strided_slice %165 {offsets = [0, 768], sizes = [8, 256], strides = [1, 1]} : vector<8x1024xf32> to vector<8x256xf32>
    %176 = math.tanh %175 : vector<8x256xf32>
    %c0_86 = arith.constant 0 : index
    %c0_87 = arith.constant 0 : index
    %177 = vector.load %arg9[%c0_86, %c0_87] : memref<8x256xf32, #tpu.memory_space<vmem>>, vector<8x256xf32>
    %178 = arith.mulf %173, %177 : vector<8x256xf32>
    %179 = arith.mulf %172, %176 : vector<8x256xf32>
    %180 = arith.addf %178, %179 : vector<8x256xf32>
    %c0_88 = arith.constant 0 : index
    %c0_89 = arith.constant 0 : index
    %181 = vector.load %arg9[%c0_88, %c0_89] : memref<8x256xf32, #tpu.memory_space<vmem>>, vector<8x256xf32>
    tpu.vector_store %arg9[%c0_88, %c0_89], %180 {strides = array<i32>} : memref<8x256xf32, #tpu.memory_space<vmem>>, vector<8x256xf32>,
    %182 = math.tanh %180 : vector<8x256xf32>
    %183 = arith.mulf %174, %182 : vector<8x256xf32>
    %c0_90 = arith.constant 0 : index
    %c0_91 = arith.constant 0 : index
    %184 = vector.load %arg8[%c0_90, %c0_91] : memref<8x256xf32, #tpu.memory_space<vmem>>, vector<8x256xf32>
    tpu.vector_store %arg8[%c0_90, %c0_91], %183 {strides = array<i32>} : memref<8x256xf32, #tpu.memory_space<vmem>>, vector<8x256xf32>,
    %c6_i32 = arith.constant 6 : i32
    %c8_i32_92 = arith.constant 8 : i32
    %185 = arith.muli %c6_i32, %c8_i32_92 : i32
    %186 = tpu.assume_multiple %185, 8 : i32
    %187 = arith.index_cast %186 : i32 to index
    %c0_93 = arith.constant 0 : index
    %188 = vector.load %arg7[%187, %c0_93] : memref<64x1024xbf16, #tpu.memory_space<vmem>>, vector<8x1024xbf16>
    %189 = arith.extf %188 : vector<8x1024xbf16> to vector<8x1024xf32>
    %c0_94 = arith.constant 0 : index
    %c0_95 = arith.constant 0 : index
    %190 = vector.load %arg8[%c0_94, %c0_95] : memref<8x256xf32, #tpu.memory_space<vmem>>, vector<8x256xf32>
    %191 = arith.truncf %190 : vector<8x256xf32> to vector<8x256xbf16>
    %c0_96 = arith.constant 0 : index
    %c0_97 = arith.constant 0 : index
    %192 = vector.load %arg5[%c0_96, %c0_97] : memref<256x1024xbf16, #tpu.memory_space<vmem>>, vector<256x1024xbf16>
    %cst_98 = arith.constant dense<0.000000e+00> : vector<8x1024xf32>
    %193 = tpu.matmul %191, %192, %cst_98 {dimension_numbers = #tpu.dot_dimension_numbers<[1], [0], [0], [1], [0, 0, 1, 1], [], []>} : vector<8x256xbf16>, vector<256x1024xbf16>, vector<8x1024xf32> -> vector<8x1024xf32>
    %194 = arith.addf %189, %193 : vector<8x1024xf32>
    %195 = vector.extract_strided_slice %194 {offsets = [0, 0], sizes = [8, 768], strides = [1, 1]} : vector<8x1024xf32> to vector<8x768xf32>
    %196 = arith.negf %195 : vector<8x768xf32>
    %197 = math.exp %196 : vector<8x768xf32>
    %cst_99 = arith.constant 1.000000e+00 : f32
    %198 = vector.broadcast %cst_99 : f32 to vector<8x768xf32>
    %199 = arith.addf %198, %197 : vector<8x768xf32>
    %200 = arith.divf %198, %199 : vector<8x768xf32>
    %201 = vector.extract_strided_slice %200 {offsets = [0, 0], sizes = [8, 256], strides = [1, 1]} : vector<8x768xf32> to vector<8x256xf32>
    %202 = vector.extract_strided_slice %200 {offsets = [0, 256], sizes = [8, 256], strides = [1, 1]} : vector<8x768xf32> to vector<8x256xf32>
    %203 = vector.extract_strided_slice %200 {offsets = [0, 512], sizes = [8, 256], strides = [1, 1]} : vector<8x768xf32> to vector<8x256xf32>
    %204 = vector.extract_strided_slice %194 {offsets = [0, 768], sizes = [8, 256], strides = [1, 1]} : vector<8x1024xf32> to vector<8x256xf32>
    %205 = math.tanh %204 : vector<8x256xf32>
    %c0_100 = arith.constant 0 : index
    %c0_101 = arith.constant 0 : index
    %206 = vector.load %arg9[%c0_100, %c0_101] : memref<8x256xf32, #tpu.memory_space<vmem>>, vector<8x256xf32>
    %207 = arith.mulf %202, %206 : vector<8x256xf32>
    %208 = arith.mulf %201, %205 : vector<8x256xf32>
    %209 = arith.addf %207, %208 : vector<8x256xf32>
    %c0_102 = arith.constant 0 : index
    %c0_103 = arith.constant 0 : index
    %210 = vector.load %arg9[%c0_102, %c0_103] : memref<8x256xf32, #tpu.memory_space<vmem>>, vector<8x256xf32>
    tpu.vector_store %arg9[%c0_102, %c0_103], %209 {strides = array<i32>} : memref<8x256xf32, #tpu.memory_space<vmem>>, vector<8x256xf32>,
    %211 = math.tanh %209 : vector<8x256xf32>
    %212 = arith.mulf %203, %211 : vector<8x256xf32>
    %c0_104 = arith.constant 0 : index
    %c0_105 = arith.constant 0 : index
    %213 = vector.load %arg8[%c0_104, %c0_105] : memref<8x256xf32, #tpu.memory_space<vmem>>, vector<8x256xf32>
    tpu.vector_store %arg8[%c0_104, %c0_105], %212 {strides = array<i32>} : memref<8x256xf32, #tpu.memory_space<vmem>>, vector<8x256xf32>,
    %c7_i32 = arith.constant 7 : i32
    %c8_i32_106 = arith.constant 8 : i32
    %214 = arith.muli %c7_i32, %c8_i32_106 : i32
    %215 = tpu.assume_multiple %214, 8 : i32
    %216 = arith.index_cast %215 : i32 to index
    %c0_107 = arith.constant 0 : index
    %217 = vector.load %arg7[%216, %c0_107] : memref<64x1024xbf16, #tpu.memory_space<vmem>>, vector<8x1024xbf16>
    %218 = arith.extf %217 : vector<8x1024xbf16> to vector<8x1024xf32>
    %c0_108 = arith.constant 0 : index
    %c0_109 = arith.constant 0 : index
    %219 = vector.load %arg8[%c0_108, %c0_109] : memref<8x256xf32, #tpu.memory_space<vmem>>, vector<8x256xf32>
    %220 = arith.truncf %219 : vector<8x256xf32> to vector<8x256xbf16>
    %c0_110 = arith.constant 0 : index
    %c0_111 = arith.constant 0 : index
    %221 = vector.load %arg5[%c0_110, %c0_111] : memref<256x1024xbf16, #tpu.memory_space<vmem>>, vector<256x1024xbf16>
    %cst_112 = arith.constant dense<0.000000e+00> : vector<8x1024xf32>
    %222 = tpu.matmul %220, %221, %cst_112 {dimension_numbers = #tpu.dot_dimension_numbers<[1], [0], [0], [1], [0, 0, 1, 1], [], []>} : vector<8x256xbf16>, vector<256x1024xbf16>, vector<8x1024xf32> -> vector<8x1024xf32>
    %223 = arith.addf %218, %222 : vector<8x1024xf32>
    %224 = vector.extract_strided_slice %223 {offsets = [0, 0], sizes = [8, 768], strides = [1, 1]} : vector<8x1024xf32> to vector<8x768xf32>
    %225 = arith.negf %224 : vector<8x768xf32>
    %226 = math.exp %225 : vector<8x768xf32>
    %cst_113 = arith.constant 1.000000e+00 : f32
    %227 = vector.broadcast %cst_113 : f32 to vector<8x768xf32>
    %228 = arith.addf %227, %226 : vector<8x768xf32>
    %229 = arith.divf %227, %228 : vector<8x768xf32>
    %230 = vector.extract_strided_slice %229 {offsets = [0, 0], sizes = [8, 256], strides = [1, 1]} : vector<8x768xf32> to vector<8x256xf32>
    %231 = vector.extract_strided_slice %229 {offsets = [0, 256], sizes = [8, 256], strides = [1, 1]} : vector<8x768xf32> to vector<8x256xf32>
    %232 = vector.extract_strided_slice %229 {offsets = [0, 512], sizes = [8, 256], strides = [1, 1]} : vector<8x768xf32> to vector<8x256xf32>
    %233 = vector.extract_strided_slice %223 {offsets = [0, 768], sizes = [8, 256], strides = [1, 1]} : vector<8x1024xf32> to vector<8x256xf32>
    %234 = math.tanh %233 : vector<8x256xf32>
    %c0_114 = arith.constant 0 : index
    %c0_115 = arith.constant 0 : index
    %235 = vector.load %arg9[%c0_114, %c0_115] : memref<8x256xf32, #tpu.memory_space<vmem>>, vector<8x256xf32>
    %236 = arith.mulf %231, %235 : vector<8x256xf32>
    %237 = arith.mulf %230, %234 : vector<8x256xf32>
    %238 = arith.addf %236, %237 : vector<8x256xf32>
    %c0_116 = arith.constant 0 : index
    %c0_117 = arith.constant 0 : index
    %239 = vector.load %arg9[%c0_116, %c0_117] : memref<8x256xf32, #tpu.memory_space<vmem>>, vector<8x256xf32>
    tpu.vector_store %arg9[%c0_116, %c0_117], %238 {strides = array<i32>} : memref<8x256xf32, #tpu.memory_space<vmem>>, vector<8x256xf32>,
    %240 = math.tanh %238 : vector<8x256xf32>
    %241 = arith.mulf %232, %240 : vector<8x256xf32>
    %c0_118 = arith.constant 0 : index
    %c0_119 = arith.constant 0 : index
    %242 = vector.load %arg8[%c0_118, %c0_119] : memref<8x256xf32, #tpu.memory_space<vmem>>, vector<8x256xf32>
    tpu.vector_store %arg8[%c0_118, %c0_119], %241 {strides = array<i32>} : memref<8x256xf32, #tpu.memory_space<vmem>>, vector<8x256xf32>,
    %c8_i32_120 = arith.constant 8 : i32
    %c0_i32_121 = arith.constant 0 : i32
    %243 = arith.cmpi eq, %arg1, %c0_i32_121 : i32
    %244 = arith.extui %243 : i1 to i32
    %c0_i32_122 = arith.constant 0 : i32
    %245 = arith.cmpi ne, %244, %c0_i32_122 : i32
    scf.if %245 {
      %c0_123 = arith.constant 0 : index
      %c0_124 = arith.constant 0 : index
      %246 = vector.load %arg8[%c0_123, %c0_124] : memref<8x256xf32, #tpu.memory_space<vmem>>, vector<8x256xf32>
      %c0_125 = arith.constant 0 : index
      %c0_126 = arith.constant 0 : index
      %247 = vector.load %arg6[%c0_125, %c0_126] : memref<8x256xf32, #tpu.memory_space<vmem>>, vector<8x256xf32>
      tpu.vector_store %arg6[%c0_125, %c0_126], %246 {strides = array<i32>} : memref<8x256xf32, #tpu.memory_space<vmem>>, vector<8x256xf32>,
    } else {
    }
    return
  }
  func.func @transform_0(%arg0: i32, %arg1: i32) -> (i32, i32) {
    %c1_i32 = arith.constant 1 : i32
    %0 = arith.muli %arg0, %c1_i32 : i32
    %1 = arith.addi %0, %arg1 : i32
    %c0_i32 = arith.constant 0 : i32
    %c0_i32_0 = arith.constant 0 : i32
    return %1, %c0_i32 : i32, i32
  }
  func.func @transform_1(%arg0: i32, %arg1: i32) -> (i32, i32) {
    %c0_i32 = arith.constant 0 : i32
    %c0_i32_0 = arith.constant 0 : i32
    %c0_i32_1 = arith.constant 0 : i32
    return %c0_i32, %c0_i32_0 : i32, i32
  }
  func.func @transform_2(%arg0: i32, %arg1: i32) -> (i32, i32) {
    %c0_i32 = arith.constant 0 : i32
    %c0_i32_0 = arith.constant 0 : i32
    %c0_i32_1 = arith.constant 0 : i32
    return %c0_i32, %c0_i32_0 : i32, i32
  }
  func.func @transform_3(%arg0: i32, %arg1: i32) -> (i32, i32) {
    %c0_i32 = arith.constant 0 : i32
    %c0_i32_0 = arith.constant 0 : i32
    %c0_i32_1 = arith.constant 0 : i32
    return %c0_i32, %c0_i32_0 : i32, i32
  }
  func.func @transform_4(%arg0: i32, %arg1: i32) -> (i32, i32) {
    %c0_i32 = arith.constant 0 : i32
    %c0_i32_0 = arith.constant 0 : i32
    return %arg0, %c0_i32 : i32, i32
  }
}

</mosaic_0001>

<llo_original>
// kernel: tpu_custom_call.1
$region0: #{tpu_custom_call.1}
  #allocation0 [shape = 'u32[]', space=smem, size = 0x4, offset = 0x4, fixed_abs, tag = 'smem constant byte address 0x4 - core index']
  #allocation1 [shape = 'u32[144,128]{1,0:T(1,128)}', space=vmem, size = 0x12000, scoped, tag = 'internal scratch']
  #allocation2 [shape = 'bf16[64,1024]{1,0:T(8,128)(2,1)}', space=vmem, size = 0x20000, scoped, tag = 'scratch operand']
  #allocation3 [shape = 'f32[8,256]{1,0:T(8,128)}', space=vmem, size = 0x2000, scoped, tag = 'scratch operand']
  #allocation4 [shape = 'f32[8,256]{1,0:T(8,128)}', space=vmem, size = 0x2000, scoped, tag = 'scratch operand']
  %s0 = inlined_call_operand.hbm [shape: bf16[64,76], index: 0, kind: input, shape index: {}]
  %s1 = inlined_call_operand.hbm [shape: bf16[76,1024], index: 1, kind: input, shape index: {}]
  %s2 = inlined_call_operand.hbm [shape: f32[1,1024], index: 2, kind: input, shape index: {}]
  %s3 = inlined_call_operand.hbm [shape: bf16[256,1024], index: 3, kind: input, shape index: {}]
  %s4 = inlined_call_operand.hbm [shape: f32[8,256], index: 4, kind: output, shape index: {}]
  %s5 = sld [smem:[#allocation0]]
  $region50: #{tpu_custom_call.1} parent=0
    _
  %s7 = ssub.s32 1, %s5
  %s8 = scalar_select 0, %s7, %s5
  $region1: #{tpu_custom_call.1} parent=0
    #allocation5 [shape = 'u8[16384]{0}', space=vmem, size = 0x4000, scoped, tag = 'input window, operand 0, single buffered']
    #allocation6 [shape = 's32[1]{0}', space=sflag, size = 0x4, scoped, tag = 'scoped memory for tpu_custom_call.1']
    #allocation7 [shape = 's32[1]{0}', space=sflag, size = 0x4, scoped, tag = 'scoped memory for tpu_custom_call.1']
    #allocation8 [shape = 'u8[163840]{0}', space=vmem, size = 0x28000, scoped, tag = 'input window, operand 1, single buffered']
    #allocation9 [shape = 's32[1]{0}', space=sflag, size = 0x4, scoped, tag = 'scoped memory for tpu_custom_call.1']
    #allocation10 [shape = 'u8[4096]{0}', space=vmem, size = 0x1000, scoped, tag = 'input window, operand 2, single buffered']
    #allocation11 [shape = 'u8[524288]{0}', space=vmem, size = 0x80000, scoped, tag = 'input window, operand 3, single buffered']
    #allocation12 [shape = 's32[1]{0}', space=sflag, size = 0x4, scoped, tag = 'scoped memory for tpu_custom_call.1']
    #allocation13 [shape = 'u8[8192]{0}', space=vmem, size = 0x2000, scoped, tag = 'output window, operand 0, single buffered']
    %9 = vsyncpa [#allocation6], 0
    %10 = vsyncpa [#allocation9], 0
    %11 = vsyncpa [#allocation12], 0
    %12 = vsyncpa [#allocation7], 0
    // Predicated region
    $region2: #{tpu_custom_call.1} parent=1 // pred_check
      _
    $region3: #{tpu_custom_call.1} parent=1 // pred_check_branch
      %14 = sbr.rel (0) target = $region5
    $region4: #{tpu_custom_call.1} parent=1 // pred_region
      %s15 = sadd.s32 0, 0
      %s16 = smul.u32 8, %s15
      %s18 = ssub.s32 512, 512
      %19 = vsyncadd [#allocation6], %s18
      %s20 = smul.addr %s16, 64
      %s21 = scalar_lea.hbm %s0, %s20
      %s22 = sshll.u32 [#allocation5], 4
      %s23 = int_to_ptr.vmem [resolvable:$true] %s22
      %28 = dma.hbm_to_vmem [thread:$0]  %s21, 512, %s23, [#allocation6], 64, 64, 4
    $region5: #{tpu_custom_call.1} parent=1 // pred_fallthru
      _
    // Predicated region
    $region6: #{tpu_custom_call.1} parent=1 // pred_check
      _
    $region7: #{tpu_custom_call.1} parent=1 // pred_check_branch
      %30 = sbr.rel (0) target = $region9
    $region8: #{tpu_custom_call.1} parent=1 // pred_region
      %s32 = ssub.s32 5120, 5120
      %33 = vsyncadd [#allocation9], %s32
      %s34 = sshll.u32 [#allocation8], 4
      %s35 = int_to_ptr.vmem [resolvable:$true] %s34
      %40 = dma.hbm_to_vmem [thread:$0]  %s1, 5120, %s35, [#allocation9], 512, 512, 32
    $region9: #{tpu_custom_call.1} parent=1 // pred_fallthru
      _
    // Predicated region
    $region10: #{tpu_custom_call.1} parent=1 // pred_check
      _
    $region11: #{tpu_custom_call.1} parent=1 // pred_check_branch
      %42 = sbr.rel (0) target = $region13
    $region12: #{tpu_custom_call.1} parent=1 // pred_region
      %s44 = ssub.s32 128, 128
      %45 = vsyncadd [#allocation9], %s44
      %s47 = sshll.u32 [#allocation10], 4
      %s48 = int_to_ptr.vmem [resolvable:$true] %s47
      %50 = dma.hbm_to_vmem [thread:$0]  %s2, 128, %s48, [#allocation9]
    $region13: #{tpu_custom_call.1} parent=1 // pred_fallthru
      _
    // Predicated region
    $region14: #{tpu_custom_call.1} parent=1 // pred_check
      _
    $region15: #{tpu_custom_call.1} parent=1 // pred_check_branch
      %52 = sbr.rel (0) target = $region17
    $region16: #{tpu_custom_call.1} parent=1 // pred_region
      %s54 = ssub.s32 16384, 16384
      %55 = vsyncadd [#allocation12], %s54
      %s56 = sshll.u32 [#allocation11], 4
      %s57 = int_to_ptr.vmem [resolvable:$true] %s56
      %62 = dma.hbm_to_vmem [thread:$0]  %s3, 16384, %s57, [#allocation12], 512, 512, 32
    $region17: #{tpu_custom_call.1} parent=1 // pred_fallthru
      _
    // Predicated region
    $region18: #{tpu_custom_call.1} parent=1 // pred_check
      _
    $region19: #{tpu_custom_call.1} parent=1 // pred_check_branch
      %64 = sbr.rel (0) target = $region21
    $region20: #{tpu_custom_call.1} parent=1 // pred_region
      %65 = dma.done [#allocation6], 512
    $region21: #{tpu_custom_call.1} parent=1 // pred_fallthru
      _
    // Predicated region
    $region22: #{tpu_custom_call.1} parent=1 // pred_check
      _
    $region23: #{tpu_custom_call.1} parent=1 // pred_check_branch
      %67 = sbr.rel (0) target = $region25
    $region24: #{tpu_custom_call.1} parent=1 // pred_region
      %68 = dma.done [#allocation9], 5120
    $region25: #{tpu_custom_call.1} parent=1 // pred_fallthru
      _
    // Predicated region
    $region26: #{tpu_custom_call.1} parent=1 // pred_check
      _
    $region27: #{tpu_custom_call.1} parent=1 // pred_check_branch
      %70 = sbr.rel (0) target = $region29
    $region28: #{tpu_custom_call.1} parent=1 // pred_region
      %71 = dma.done [#allocation9], 128
    $region29: #{tpu_custom_call.1} parent=1 // pred_fallthru
      _
    // Predicated region
    $region30: #{tpu_custom_call.1} parent=1 // pred_check
      _
    $region31: #{tpu_custom_call.1} parent=1 // pred_check_branch
      %73 = sbr.rel (0) target = $region33
    $region32: #{tpu_custom_call.1} parent=1 // pred_region
      %74 = dma.done [#allocation12], 16384
    $region33: #{tpu_custom_call.1} parent=1 // pred_fallthru
      _
    %s75 = sadd.s32 0, 0
    %s76 = smul.u32 8, %s75
    %p78 = scmp.eq.s32.totalorder 0, 0
    // Predicated region
    $region34: #{tpu_custom_call.1} parent=1 // pred_check
      %p79 = pneg %p78
    $region35: #{tpu_custom_call.1} parent=1 // pred_check_branch
      %81 = sbr.rel (%p79) target = $region37
    $region36: #{tpu_custom_call.1} parent=1 // pred_region
      %82 = vst [vmem:[#allocation3] sm:$0xff] 0.0
      %83 = vst [vmem:[#allocation3 + $0x8] sm:$0xff] 0.0
      %84 = vst [vmem:[#allocation4] sm:$0xff] 0.0
      %85 = vst [vmem:[#allocation4 + $0x8] sm:$0xff] 0.0
    $region37: #{tpu_custom_call.1} parent=1 // pred_fallthru
      _
    %v86 = vld [vmem:[#allocation5] sm:$0xf]
    %v87 = vld [vmem:[#allocation5 + $0x4] sm:$0xf]
    %v88 = vld [vmem:[#allocation5 + $0x8] sm:$0xf]
    %v89 = vld [vmem:[#allocation5 + $0xc] sm:$0xf]
    %v90 = vld [vmem:[#allocation5 + $0x10] sm:$0xf]
    %v91 = vld [vmem:[#allocation5 + $0x14] sm:$0xf]
    %v92 = vld [vmem:[#allocation5 + $0x18] sm:$0xf]
    %v93 = vld [vmem:[#allocation5 + $0x1c] sm:$0xf]
    %v94 = vld [vmem:[#allocation8] sm:$0xff]
    %v95 = vld [vmem:[#allocation8 + $0x8] sm:$0xff]
    %v96 = vld [vmem:[#allocation8 + $0x10] sm:$0xff]
    %v97 = vld [vmem:[#allocation8 + $0x18] sm:$0xff]
    %v98 = vld [vmem:[#allocation8 + $0x20] sm:$0xff]
    %v99 = vld [vmem:[#allocation8 + $0x28] sm:$0xff]
    %v100 = vld [vmem:[#allocation8 + $0x30] sm:$0xff]
    %v101 = vld [vmem:[#allocation8 + $0x38] sm:$0xff]
    %v102 = vld [vmem:[#allocation8 + $0x40] sm:$0xff]
    %v103 = vld [vmem:[#allocation8 + $0x48] sm:$0xff]
    %v104 = vld [vmem:[#allocation8 + $0x50] sm:$0xff]
    %v105 = vld [vmem:[#allocation8 + $0x58] sm:$0xff]
    %v106 = vld [vmem:[#allocation8 + $0x60] sm:$0xff]
    %v107 = vld [vmem:[#allocation8 + $0x68] sm:$0xff]
    %v108 = vld [vmem:[#allocation8 + $0x70] sm:$0xff]
    %v109 = vld [vmem:[#allocation8 + $0x78] sm:$0xff]
    %v110 = vld [vmem:[#allocation8 + $0x80] sm:$0xff]
    %v111 = vld [vmem:[#allocation8 + $0x88] sm:$0xff]
    %v112 = vld [vmem:[#allocation8 + $0x90] sm:$0xff]
    %v113 = vld [vmem:[#allocation8 + $0x98] sm:$0xff]
    %v114 = vld [vmem:[#allocation8 + $0xa0] sm:$0xff]
    %v115 = vld [vmem:[#allocation8 + $0xa8] sm:$0xff]
    %v116 = vld [vmem:[#allocation8 + $0xb0] sm:$0xff]
    %v117 = vld [vmem:[#allocation8 + $0xb8] sm:$0xff]
    %v118 = vld [vmem:[#allocation8 + $0xc0] sm:$0xff]
    %v119 = vld [vmem:[#allocation8 + $0xc8] sm:$0xff]
    %v120 = vld [vmem:[#allocation8 + $0xd0] sm:$0xff]
    %v121 = vld [vmem:[#allocation8 + $0xd8] sm:$0xff]
    %v122 = vld [vmem:[#allocation8 + $0xe0] sm:$0xff]
    %v123 = vld [vmem:[#allocation8 + $0xe8] sm:$0xff]
    %v124 = vld [vmem:[#allocation8 + $0xf0] sm:$0xff]
    %v125 = vld [vmem:[#allocation8 + $0xf8] sm:$0xff]
    %v126 = vld [vmem:[#allocation8 + $0x100] sm:$0xff]
    %v127 = vld [vmem:[#allocation8 + $0x108] sm:$0xff]
    %v128 = vld [vmem:[#allocation8 + $0x110] sm:$0xff]
    %v129 = vld [vmem:[#allocation8 + $0x118] sm:$0xff]
    %v130 = vld [vmem:[#allocation8 + $0x120] sm:$0x33]
    %v131 = vld [vmem:[#allocation8 + $0x128] sm:$0x33]
    %v132 = vld [vmem:[#allocation8 + $0x130] sm:$0x33]
    %v133 = vld [vmem:[#allocation8 + $0x138] sm:$0x33]
    %v134 = vld [vmem:[#allocation10] sm:$0xff]
    %v136 = vlaneseq
    %v137 = vshrl.u32 %v136, 7
    %v138 = vsub.s32 0, %v137
    %v139 = vrot.slane %v134, %v138
    %v140 = vlaneseq
    %v141 = vshrl.u32 %v140, 7
    %v142 = vsub.s32 1, %v141
    %v143 = vrot.slane %v134, %v142
    %v144 = vlaneseq
    %v145 = vshrl.u32 %v144, 7
    %v146 = vsub.s32 2, %v145
    %v147 = vrot.slane %v134, %v146
    %v148 = vlaneseq
    %v149 = vshrl.u32 %v148, 7
    %v150 = vsub.s32 3, %v149
    %v151 = vrot.slane %v134, %v150
    %v152 = vlaneseq
    %v153 = vshrl.u32 %v152, 7
    %v154 = vsub.s32 4, %v153
    %v155 = vrot.slane %v134, %v154
    %v156 = vlaneseq
    %v157 = vshrl.u32 %v156, 7
    %v158 = vsub.s32 5, %v157
    %v159 = vrot.slane %v134, %v158
    %v160 = vlaneseq
    %v161 = vshrl.u32 %v160, 7
    %v162 = vsub.s32 6, %v161
    %v163 = vrot.slane %v134, %v162
    %v164 = vlaneseq
    %v165 = vshrl.u32 %v164, 7
    %v166 = vsub.s32 7, %v165
    %v167 = vrot.slane %v134, %v166
    %v184 = vunpack.c.l.b16 %v86
    %v185 = vunpack.c.l.b16 %v87
    %v186 = vunpack.c.l.b16 %v88
    %v187 = vunpack.c.l.b16 %v89
    %v188 = vunpack.c.l.b16 %v90
    %v189 = vunpack.c.l.b16 %v91
    %v190 = vunpack.c.l.b16 %v92
    %v191 = vunpack.c.l.b16 %v93
    %v192 = vpack.c.b16 %v185, %v184
    %v193 = vpack.c.b16 %v187, %v186
    %v194 = vpack.c.b16 %v189, %v188
    %v195 = vpack.c.b16 %v191, %v190
    %v236 = vunpack.c.l.b16 %v94
    %v237 = vunpack.c.h.b16 %v94
    %v238 = vunpack.c.l.b16 %v95
    %v239 = vunpack.c.h.b16 %v95
    %v240 = vunpack.c.l.b16 %v96
    %v241 = vunpack.c.h.b16 %v96
    %v242 = vunpack.c.l.b16 %v97
    %v243 = vunpack.c.h.b16 %v97
    %v244 = vunpack.c.l.b16 %v98
    %v245 = vunpack.c.h.b16 %v98
    %v246 = vunpack.c.l.b16 %v99
    %v247 = vunpack.c.h.b16 %v99
    %v248 = vunpack.c.l.b16 %v100
    %v249 = vunpack.c.h.b16 %v100
    %v250 = vunpack.c.l.b16 %v101
    %v251 = vunpack.c.h.b16 %v101
    %v252 = vunpack.c.l.b16 %v102
    %v253 = vunpack.c.h.b16 %v102
    %v254 = vunpack.c.l.b16 %v103
    %v255 = vunpack.c.h.b16 %v103
    %v256 = vunpack.c.l.b16 %v104
    %v257 = vunpack.c.h.b16 %v104
    %v258 = vunpack.c.l.b16 %v105
    %v259 = vunpack.c.h.b16 %v105
    %v260 = vunpack.c.l.b16 %v106
    %v261 = vunpack.c.h.b16 %v106
    %v262 = vunpack.c.l.b16 %v107
    %v263 = vunpack.c.h.b16 %v107
    %v264 = vunpack.c.l.b16 %v108
    %v265 = vunpack.c.h.b16 %v108
    %v266 = vunpack.c.l.b16 %v109
    %v267 = vunpack.c.h.b16 %v109
    %v268 = vunpack.c.l.b16 %v110
    %v269 = vunpack.c.h.b16 %v110
    %v270 = vunpack.c.l.b16 %v111
    %v271 = vunpack.c.h.b16 %v111
    %v272 = vunpack.c.l.b16 %v112
    %v273 = vunpack.c.h.b16 %v112
    %v274 = vunpack.c.l.b16 %v113
    %v275 = vunpack.c.h.b16 %v113
    %v276 = vunpack.c.l.b16 %v114
    %v277 = vunpack.c.h.b16 %v114
    %v278 = vunpack.c.l.b16 %v115
    %v279 = vunpack.c.h.b16 %v115
    %v280 = vunpack.c.l.b16 %v116
    %v281 = vunpack.c.h.b16 %v116
    %v282 = vunpack.c.l.b16 %v117
    %v283 = vunpack.c.h.b16 %v117
    %v284 = vunpack.c.l.b16 %v118
    %v285 = vunpack.c.h.b16 %v118
    %v286 = vunpack.c.l.b16 %v119
    %v287 = vunpack.c.h.b16 %v119
    %v288 = vunpack.c.l.b16 %v120
    %v289 = vunpack.c.h.b16 %v120
    %v290 = vunpack.c.l.b16 %v121
    %v291 = vunpack.c.h.b16 %v121
    %v292 = vunpack.c.l.b16 %v122
    %v293 = vunpack.c.h.b16 %v122
    %v294 = vunpack.c.l.b16 %v123
    %v295 = vunpack.c.h.b16 %v123
    %v296 = vunpack.c.l.b16 %v124
    %v297 = vunpack.c.h.b16 %v124
    %v298 = vunpack.c.l.b16 %v125
    %v299 = vunpack.c.h.b16 %v125
    %v300 = vunpack.c.l.b16 %v126
    %v301 = vunpack.c.h.b16 %v126
    %v302 = vunpack.c.l.b16 %v127
    %v303 = vunpack.c.h.b16 %v127
    %v304 = vunpack.c.l.b16 %v128
    %v305 = vunpack.c.h.b16 %v128
    %v306 = vunpack.c.l.b16 %v129
    %v307 = vunpack.c.h.b16 %v129
    %v308 = vunpack.c.l.b16 %v130
    %v309 = vunpack.c.h.b16 %v130
    %v310 = vunpack.c.l.b16 %v131
    %v311 = vunpack.c.h.b16 %v131
    %v312 = vunpack.c.l.b16 %v132
    %v313 = vunpack.c.h.b16 %v132
    %v314 = vunpack.c.l.b16 %v133
    %v315 = vunpack.c.h.b16 %v133
    %v316 = vpack.c.b16 %v244, %v236
    %v317 = vpack.c.b16 %v245, %v237
    %v318 = vpack.c.b16 %v246, %v238
    %v319 = vpack.c.b16 %v247, %v239
    %v320 = vpack.c.b16 %v248, %v240
    %v321 = vpack.c.b16 %v249, %v241
    %v322 = vpack.c.b16 %v250, %v242
    %v323 = vpack.c.b16 %v251, %v243
    %v324 = vpack.c.b16 %v260, %v252
    %v325 = vpack.c.b16 %v261, %v253
    %v326 = vpack.c.b16 %v262, %v254
    %v327 = vpack.c.b16 %v263, %v255
    %v328 = vpack.c.b16 %v264, %v256
    %v329 = vpack.c.b16 %v265, %v257
    %v330 = vpack.c.b16 %v266, %v258
    %v331 = vpack.c.b16 %v267, %v259
    %v332 = vpack.c.b16 %v276, %v268
    %v333 = vpack.c.b16 %v277, %v269
    %v334 = vpack.c.b16 %v278, %v270
    %v335 = vpack.c.b16 %v279, %v271
    %v336 = vpack.c.b16 %v280, %v272
    %v337 = vpack.c.b16 %v281, %v273
    %v338 = vpack.c.b16 %v282, %v274
    %v339 = vpack.c.b16 %v283, %v275
    %v340 = vpack.c.b16 %v292, %v284
    %v341 = vpack.c.b16 %v293, %v285
    %v342 = vpack.c.b16 %v294, %v286
    %v343 = vpack.c.b16 %v295, %v287
    %v344 = vpack.c.b16 %v296, %v288
    %v345 = vpack.c.b16 %v297, %v289
    %v346 = vpack.c.b16 %v298, %v290
    %v347 = vpack.c.b16 %v299, %v291
    %v348 = vpack.c.b16 %v308, %v300
    %v349 = vpack.c.b16 %v309, %v301
    %v350 = vpack.c.b16 %v310, %v302
    %v351 = vpack.c.b16 %v311, %v303
    %v352 = vpack.c.b16 %v312, %v304
    %v353 = vpack.c.b16 %v313, %v305
    %v354 = vpack.c.b16 %v314, %v306
    %v355 = vpack.c.b16 %v315, %v307
    %vm388 = vcmask 621568
    %v390 = vsel %vm388, %v192, 0
    %v393 = vsel %vm388, %v193, 0
    %v396 = vsel %vm388, %v194, 0
    %v399 = vsel %vm388, %v195, 0
    %vm401 = vcmask 1045504
    %v403 = vsel %vm401, %v348, 0
    %v406 = vsel %vm401, %v349, 0
    %v409 = vsel %vm401, %v350, 0
    %v412 = vsel %vm401, %v351, 0
    %v415 = vsel %vm401, %v352, 0
    %v418 = vsel %vm401, %v353, 0
    %v421 = vsel %vm401, %v354, 0
    %v424 = vsel %vm401, %v355, 0
    %426 = vmatprep.subr.bf16.mxu0 0
    %427 = vmatpush1.bf16.msra.mxu0 0
    %428 = vmatprep.subr.bf16.mxu0 0
    %429 = vmatpush1.bf16.msra.mxu0 0
    %430 = vmatprep.subr.bf16.mxu0 0
    %431 = vmatpush1.bf16.msra.mxu0 0
    %432 = vmatprep.subr.bf16.mxu0 %v406
    %433 = vmatpush1.bf16.msra.mxu0 %v403
    %434 = vmatprep.subr.bf16.mxu0 %v341
    %435 = vmatpush1.bf16.msra.mxu0 %v340
    %436 = vmatprep.subr.bf16.mxu0 %v333
    %437 = vmatpush1.bf16.msra.mxu0 %v332
    %438 = vmatprep.subr.bf16.mxu0 %v325
    %439 = vmatpush1.bf16.msra.mxu0 %v324
    %440 = vmatprep.subr.bf16.mxu0 %v317
    %441 = vmatpush1.bf16.msra.mxu0 %v316
    %442 = vmatprep.subr.bf16.mxu0 0
    %443 = vmatpush2.bf16.msra.mxu0 0
    %444 = vmatprep.subr.bf16.mxu0 0
    %445 = vmatpush2.bf16.msra.mxu0 0
    %446 = vmatprep.subr.bf16.mxu0 0
    %447 = vmatpush2.bf16.msra.mxu0 0
    %448 = vmatprep.subr.bf16.mxu0 0
    %449 = vmatpush2.bf16.msra.mxu0 0
    %450 = vmatprep.subr.bf16.mxu0 0
    %451 = vmatpush2.bf16.msra.mxu0 0
    %452 = vmatprep.subr.bf16.mxu0 0
    %453 = vmatpush2.bf16.msra.mxu0 0
    %454 = vmatprep.subr.bf16.mxu0 0
    %455 = vmatpush2.bf16.msra.mxu0 0
    %456 = vmatprep.subr.bf16.mxu0 0
    %457 = vmatpush2.bf16.msra.mxu0 0
    %458 = vmatprep.mubr.bf16.mxu0 0
    %459 = vmatmul.mubr.bf16.gmra.mxu0 %v390
    %v460 = vpop.f32.mrf.mxu0
    %v461 = vadd.f32 %v139, %v460
    %v462 = vpop.f32.mrf.mxu0
    %v463 = vadd.f32 %v143, %v462
    %v464 = vpop.f32.mrf.mxu0
    %v465 = vadd.f32 %v139, %v464
    %v466 = vpop.f32.mrf.mxu0
    %v467 = vadd.f32 %v143, %v466
    %468 = vmatprep.mubr.bf16.mxu0 0
    %469 = vmatmul.mubr.bf16.gmra.mxu0 %v393
    %v470 = vpop.f32.mrf.mxu0
    %v471 = vadd.f32 %v139, %v470
    %v472 = vpop.f32.mrf.mxu0
    %v473 = vadd.f32 %v143, %v472
    %v474 = vpop.f32.mrf.mxu0
    %v475 = vadd.f32 %v139, %v474
    %v476 = vpop.f32.mrf.mxu0
    %v477 = vadd.f32 %v143, %v476
    %478 = vmatprep.mubr.bf16.mxu0 0
    %479 = vmatmul.mubr.bf16.gmra.mxu0 %v396
    %v480 = vpop.f32.mrf.mxu0
    %v481 = vadd.f32 %v139, %v480
    %v482 = vpop.f32.mrf.mxu0
    %v483 = vadd.f32 %v143, %v482
    %v484 = vpop.f32.mrf.mxu0
    %v485 = vadd.f32 %v139, %v484
    %v486 = vpop.f32.mrf.mxu0
    %v487 = vadd.f32 %v143, %v486
    %488 = vmatprep.mubr.bf16.mxu0 0
    %489 = vmatmul.mubr.bf16.gmra.mxu0 %v399
    %v490 = vpop.f32.mrf.mxu0
    %v491 = vadd.f32 %v139, %v490
    %v492 = vpop.f32.mrf.mxu0
    %v493 = vadd.f32 %v143, %v492
    %v494 = vpop.f32.mrf.mxu0
    %v495 = vadd.f32 %v139, %v494
    %v496 = vpop.f32.mrf.mxu0
    %v497 = vadd.f32 %v143, %v496
    %498 = vdwg.mxu0
    %499 = vmatprep.subr.bf16.mxu0 0
    %500 = vmatpush1.bf16.msra.mxu0 0
    %501 = vmatprep.subr.bf16.mxu0 0
    %502 = vmatpush1.bf16.msra.mxu0 0
    %503 = vmatprep.subr.bf16.mxu0 0
    %504 = vmatpush1.bf16.msra.mxu0 0
    %505 = vmatprep.subr.bf16.mxu0 %v412
    %506 = vmatpush1.bf16.msra.mxu0 %v409
    %507 = vmatprep.subr.bf16.mxu0 %v343
    %508 = vmatpush1.bf16.msra.mxu0 %v342
    %509 = vmatprep.subr.bf16.mxu0 %v335
    %510 = vmatpush1.bf16.msra.mxu0 %v334
    %511 = vmatprep.subr.bf16.mxu0 %v327
    %512 = vmatpush1.bf16.msra.mxu0 %v326
    %513 = vmatprep.subr.bf16.mxu0 %v319
    %514 = vmatpush1.bf16.msra.mxu0 %v318
    %515 = vmatprep.subr.bf16.mxu0 0
    %516 = vmatpush2.bf16.msra.mxu0 0
    %517 = vmatprep.subr.bf16.mxu0 0
    %518 = vmatpush2.bf16.msra.mxu0 0
    %519 = vmatprep.subr.bf16.mxu0 0
    %520 = vmatpush2.bf16.msra.mxu0 0
    %521 = vmatprep.subr.bf16.mxu0 0
    %522 = vmatpush2.bf16.msra.mxu0 0
    %523 = vmatprep.subr.bf16.mxu0 0
    %524 = vmatpush2.bf16.msra.mxu0 0
    %525 = vmatprep.subr.bf16.mxu0 0
    %526 = vmatpush2.bf16.msra.mxu0 0
    %527 = vmatprep.subr.bf16.mxu0 0
    %528 = vmatpush2.bf16.msra.mxu0 0
    %529 = vmatprep.subr.bf16.mxu0 0
    %530 = vmatpush2.bf16.msra.mxu0 0
    %531 = vmatprep.mubr.bf16.mxu0 0
    %532 = vmatmul.mubr.bf16.gmra.mxu0 %v390
    %v533 = vpop.f32.mrf.mxu0
    %v534 = vadd.f32 %v147, %v533
    %v535 = vpop.f32.mrf.mxu0
    %v536 = vadd.f32 %v151, %v535
    %v537 = vpop.f32.mrf.mxu0
    %v538 = vadd.f32 %v147, %v537
    %v539 = vpop.f32.mrf.mxu0
    %v540 = vadd.f32 %v151, %v539
    %541 = vmatprep.mubr.bf16.mxu0 0
    %542 = vmatmul.mubr.bf16.gmra.mxu0 %v393
    %v543 = vpop.f32.mrf.mxu0
    %v544 = vadd.f32 %v147, %v543
    %v545 = vpop.f32.mrf.mxu0
    %v546 = vadd.f32 %v151, %v545
    %v547 = vpop.f32.mrf.mxu0
    %v548 = vadd.f32 %v147, %v547
    %v549 = vpop.f32.mrf.mxu0
    %v550 = vadd.f32 %v151, %v549
    %551 = vmatprep.mubr.bf16.mxu0 0
    %552 = vmatmul.mubr.bf16.gmra.mxu0 %v396
    %v553 = vpop.f32.mrf.mxu0
    %v554 = vadd.f32 %v147, %v553
    %v555 = vpop.f32.mrf.mxu0
    %v556 = vadd.f32 %v151, %v555
    %v557 = vpop.f32.mrf.mxu0
    %v558 = vadd.f32 %v147, %v557
    %v559 = vpop.f32.mrf.mxu0
    %v560 = vadd.f32 %v151, %v559
    %561 = vmatprep.mubr.bf16.mxu0 0
    %562 = vmatmul.mubr.bf16.gmra.mxu0 %v399
    %v563 = vpop.f32.mrf.mxu0
    %v564 = vadd.f32 %v147, %v563
    %v565 = vpop.f32.mrf.mxu0
    %v566 = vadd.f32 %v151, %v565
    %v567 = vpop.f32.mrf.mxu0
    %v568 = vadd.f32 %v147, %v567
    %v569 = vpop.f32.mrf.mxu0
    %v570 = vadd.f32 %v151, %v569
    %571 = vdwg.mxu0
    %572 = vmatprep.subr.bf16.mxu0 0
    %573 = vmatpush1.bf16.msra.mxu0 0
    %574 = vmatprep.subr.bf16.mxu0 0
    %575 = vmatpush1.bf16.msra.mxu0 0
    %576 = vmatprep.subr.bf16.mxu0 0
    %577 = vmatpush1.bf16.msra.mxu0 0
    %578 = vmatprep.subr.bf16.mxu0 %v418
    %579 = vmatpush1.bf16.msra.mxu0 %v415
    %580 = vmatprep.subr.bf16.mxu0 %v345
    %581 = vmatpush1.bf16.msra.mxu0 %v344
    %582 = vmatprep.subr.bf16.mxu0 %v337
    %583 = vmatpush1.bf16.msra.mxu0 %v336
    %584 = vmatprep.subr.bf16.mxu0 %v329
    %585 = vmatpush1.bf16.msra.mxu0 %v328
    %586 = vmatprep.subr.bf16.mxu0 %v321
    %587 = vmatpush1.bf16.msra.mxu0 %v320
    %588 = vmatprep.subr.bf16.mxu0 0
    %589 = vmatpush2.bf16.msra.mxu0 0
    %590 = vmatprep.subr.bf16.mxu0 0
    %591 = vmatpush2.bf16.msra.mxu0 0
    %592 = vmatprep.subr.bf16.mxu0 0
    %593 = vmatpush2.bf16.msra.mxu0 0
    %594 = vmatprep.subr.bf16.mxu0 0
    %595 = vmatpush2.bf16.msra.mxu0 0
    %596 = vmatprep.subr.bf16.mxu0 0
    %597 = vmatpush2.bf16.msra.mxu0 0
    %598 = vmatprep.subr.bf16.mxu0 0
    %599 = vmatpush2.bf16.msra.mxu0 0
    %600 = vmatprep.subr.bf16.mxu0 0
    %601 = vmatpush2.bf16.msra.mxu0 0
    %602 = vmatprep.subr.bf16.mxu0 0
    %603 = vmatpush2.bf16.msra.mxu0 0
    %604 = vmatprep.mubr.bf16.mxu0 0
    %605 = vmatmul.mubr.bf16.gmra.mxu0 %v390
    %v606 = vpop.f32.mrf.mxu0
    %v607 = vadd.f32 %v155, %v606
    %v608 = vpop.f32.mrf.mxu0
    %v609 = vadd.f32 %v159, %v608
    %v610 = vpop.f32.mrf.mxu0
    %v611 = vadd.f32 %v155, %v610
    %v612 = vpop.f32.mrf.mxu0
    %v613 = vadd.f32 %v159, %v612
    %614 = vmatprep.mubr.bf16.mxu0 0
    %615 = vmatmul.mubr.bf16.gmra.mxu0 %v393
    %v616 = vpop.f32.mrf.mxu0
    %v617 = vadd.f32 %v155, %v616
    %v618 = vpop.f32.mrf.mxu0
    %v619 = vadd.f32 %v159, %v618
    %v620 = vpop.f32.mrf.mxu0
    %v621 = vadd.f32 %v155, %v620
    %v622 = vpop.f32.mrf.mxu0
    %v623 = vadd.f32 %v159, %v622
    %624 = vmatprep.mubr.bf16.mxu0 0
    %625 = vmatmul.mubr.bf16.gmra.mxu0 %v396
    %v626 = vpop.f32.mrf.mxu0
    %v627 = vadd.f32 %v155, %v626
    %v628 = vpop.f32.mrf.mxu0
    %v629 = vadd.f32 %v159, %v628
    %v630 = vpop.f32.mrf.mxu0
    %v631 = vadd.f32 %v155, %v630
    %v632 = vpop.f32.mrf.mxu0
    %v633 = vadd.f32 %v159, %v632
    %634 = vmatprep.mubr.bf16.mxu0 0
    %635 = vmatmul.mubr.bf16.gmra.mxu0 %v399
    %v636 = vpop.f32.mrf.mxu0
    %v637 = vadd.f32 %v155, %v636
    %v638 = vpop.f32.mrf.mxu0
    %v639 = vadd.f32 %v159, %v638
    %v640 = vpop.f32.mrf.mxu0
    %v641 = vadd.f32 %v155, %v640
    %v642 = vpop.f32.mrf.mxu0
    %v643 = vadd.f32 %v159, %v642
    %644 = vdwg.mxu0
    %645 = vmatprep.subr.bf16.mxu0 0
    %646 = vmatpush1.bf16.msra.mxu0 0
    %647 = vmatprep.subr.bf16.mxu0 0
    %648 = vmatpush1.bf16.msra.mxu0 0
    %649 = vmatprep.subr.bf16.mxu0 0
    %650 = vmatpush1.bf16.msra.mxu0 0
    %651 = vmatprep.subr.bf16.mxu0 %v424
    %652 = vmatpush1.bf16.msra.mxu0 %v421
    %653 = vmatprep.subr.bf16.mxu0 %v347
    %654 = vmatpush1.bf16.msra.mxu0 %v346
    %655 = vmatprep.subr.bf16.mxu0 %v339
    %656 = vmatpush1.bf16.msra.mxu0 %v338
    %657 = vmatprep.subr.bf16.mxu0 %v331
    %658 = vmatpush1.bf16.msra.mxu0 %v330
    %659 = vmatprep.subr.bf16.mxu0 %v323
    %660 = vmatpush1.bf16.msra.mxu0 %v322
    %661 = vmatprep.subr.bf16.mxu0 0
    %662 = vmatpush2.bf16.msra.mxu0 0
    %663 = vmatprep.subr.bf16.mxu0 0
    %664 = vmatpush2.bf16.msra.mxu0 0
    %665 = vmatprep.subr.bf16.mxu0 0
    %666 = vmatpush2.bf16.msra.mxu0 0
    %667 = vmatprep.subr.bf16.mxu0 0
    %668 = vmatpush2.bf16.msra.mxu0 0
    %669 = vmatprep.subr.bf16.mxu0 0
    %670 = vmatpush2.bf16.msra.mxu0 0
    %671 = vmatprep.subr.bf16.mxu0 0
    %672 = vmatpush2.bf16.msra.mxu0 0
    %673 = vmatprep.subr.bf16.mxu0 0
    %674 = vmatpush2.bf16.msra.mxu0 0
    %675 = vmatprep.subr.bf16.mxu0 0
    %676 = vmatpush2.bf16.msra.mxu0 0
    %677 = vmatprep.mubr.bf16.mxu0 0
    %678 = vmatmul.mubr.bf16.gmra.mxu0 %v390
    %v679 = vpop.f32.mrf.mxu0
    %v680 = vadd.f32 %v163, %v679
    %v681 = vpop.f32.mrf.mxu0
    %v682 = vadd.f32 %v167, %v681
    %v683 = vpop.f32.mrf.mxu0
    %v684 = vadd.f32 %v163, %v683
    %v685 = vpop.f32.mrf.mxu0
    %v686 = vadd.f32 %v167, %v685
    %687 = vmatprep.mubr.bf16.mxu0 0
    %688 = vmatmul.mubr.bf16.gmra.mxu0 %v393
    %v689 = vpop.f32.mrf.mxu0
    %v690 = vadd.f32 %v163, %v689
    %v691 = vpop.f32.mrf.mxu0
    %v692 = vadd.f32 %v167, %v691
    %v693 = vpop.f32.mrf.mxu0
    %v694 = vadd.f32 %v163, %v693
    %v695 = vpop.f32.mrf.mxu0
    %v696 = vadd.f32 %v167, %v695
    %697 = vmatprep.mubr.bf16.mxu0 0
    %698 = vmatmul.mubr.bf16.gmra.mxu0 %v396
    %v699 = vpop.f32.mrf.mxu0
    %v700 = vadd.f32 %v163, %v699
    %v701 = vpop.f32.mrf.mxu0
    %v702 = vadd.f32 %v167, %v701
    %v703 = vpop.f32.mrf.mxu0
    %v704 = vadd.f32 %v163, %v703
    %v705 = vpop.f32.mrf.mxu0
    %v706 = vadd.f32 %v167, %v705
    %707 = vmatprep.mubr.bf16.mxu0 0
    %708 = vmatmul.mubr.bf16.gmra.mxu0 %v399
    %v709 = vpop.f32.mrf.mxu0
    %v710 = vadd.f32 %v163, %v709
    %v711 = vpop.f32.mrf.mxu0
    %v712 = vadd.f32 %v167, %v711
    %v713 = vpop.f32.mrf.mxu0
    %v714 = vadd.f32 %v163, %v713
    %v715 = vpop.f32.mrf.mxu0
    %v716 = vadd.f32 %v167, %v715
    %717 = vdwg.mxu0
    %v718 = vpack.c.bf16 %v465, %v461
    %v719 = vpack.c.bf16 %v467, %v463
    %v720 = vpack.c.bf16 %v538, %v534
    %v721 = vpack.c.bf16 %v540, %v536
    %v722 = vpack.c.bf16 %v611, %v607
    %v723 = vpack.c.bf16 %v613, %v609
    %v724 = vpack.c.bf16 %v684, %v680
    %v725 = vpack.c.bf16 %v686, %v682
    %v726 = vpack.c.bf16 %v475, %v471
    %v727 = vpack.c.bf16 %v477, %v473
    %v728 = vpack.c.bf16 %v548, %v544
    %v729 = vpack.c.bf16 %v550, %v546
    %v730 = vpack.c.bf16 %v621, %v617
    %v731 = vpack.c.bf16 %v623, %v619
    %v732 = vpack.c.bf16 %v694, %v690
    %v733 = vpack.c.bf16 %v696, %v692
    %v734 = vpack.c.bf16 %v485, %v481
    %v735 = vpack.c.bf16 %v487, %v483
    %v736 = vpack.c.bf16 %v558, %v554
    %v737 = vpack.c.bf16 %v560, %v556
    %v738 = vpack.c.bf16 %v631, %v627
    %v739 = vpack.c.bf16 %v633, %v629
    %v740 = vpack.c.bf16 %v704, %v700
    %v741 = vpack.c.bf16 %v706, %v702
    %v742 = vpack.c.bf16 %v495, %v491
    %v743 = vpack.c.bf16 %v497, %v493
    %v744 = vpack.c.bf16 %v568, %v564
    %v745 = vpack.c.bf16 %v570, %v566
    %v746 = vpack.c.bf16 %v641, %v637
    %v747 = vpack.c.bf16 %v643, %v639
    %v748 = vpack.c.bf16 %v714, %v710
    %v749 = vpack.c.bf16 %v716, %v712
    %v782 = vunpack.c.l.b16 %v718
    %v783 = vunpack.c.l.b16 %v719
    %v784 = vunpack.c.l.b16 %v720
    %v785 = vunpack.c.l.b16 %v721
    %v786 = vunpack.c.l.b16 %v722
    %v787 = vunpack.c.l.b16 %v723
    %v788 = vunpack.c.l.b16 %v724
    %v789 = vunpack.c.l.b16 %v725
    %v790 = vunpack.c.h.b16 %v718
    %v791 = vunpack.c.h.b16 %v719
    %v792 = vunpack.c.h.b16 %v720
    %v793 = vunpack.c.h.b16 %v721
    %v794 = vunpack.c.h.b16 %v722
    %v795 = vunpack.c.h.b16 %v723
    %v796 = vunpack.c.h.b16 %v724
    %v797 = vunpack.c.h.b16 %v725
    %v798 = vunpack.c.l.b16 %v726
    %v799 = vunpack.c.l.b16 %v727
    %v800 = vunpack.c.l.b16 %v728
    %v801 = vunpack.c.l.b16 %v729
    %v802 = vunpack.c.l.b16 %v730
    %v803 = vunpack.c.l.b16 %v731
    %v804 = vunpack.c.l.b16 %v732
    %v805 = vunpack.c.l.b16 %v733
    %v806 = vunpack.c.h.b16 %v726
    %v807 = vunpack.c.h.b16 %v727
    %v808 = vunpack.c.h.b16 %v728
    %v809 = vunpack.c.h.b16 %v729
    %v810 = vunpack.c.h.b16 %v730
    %v811 = vunpack.c.h.b16 %v731
    %v812 = vunpack.c.h.b16 %v732
    %v813 = vunpack.c.h.b16 %v733
    %v814 = vunpack.c.l.b16 %v734
    %v815 = vunpack.c.l.b16 %v735
    %v816 = vunpack.c.l.b16 %v736
    %v817 = vunpack.c.l.b16 %v737
    %v818 = vunpack.c.l.b16 %v738
    %v819 = vunpack.c.l.b16 %v739
    %v820 = vunpack.c.l.b16 %v740
    %v821 = vunpack.c.l.b16 %v741
    %v822 = vunpack.c.h.b16 %v734
    %v823 = vunpack.c.h.b16 %v735
    %v824 = vunpack.c.h.b16 %v736
    %v825 = vunpack.c.h.b16 %v737
    %v826 = vunpack.c.h.b16 %v738
    %v827 = vunpack.c.h.b16 %v739
    %v828 = vunpack.c.h.b16 %v740
    %v829 = vunpack.c.h.b16 %v741
    %v830 = vunpack.c.l.b16 %v742
    %v831 = vunpack.c.l.b16 %v743
    %v832 = vunpack.c.l.b16 %v744
    %v833 = vunpack.c.l.b16 %v745
    %v834 = vunpack.c.l.b16 %v746
    %v835 = vunpack.c.l.b16 %v747
    %v836 = vunpack.c.l.b16 %v748
    %v837 = vunpack.c.l.b16 %v749
    %v838 = vunpack.c.h.b16 %v742
    %v839 = vunpack.c.h.b16 %v743
    %v840 = vunpack.c.h.b16 %v744
    %v841 = vunpack.c.h.b16 %v745
    %v842 = vunpack.c.h.b16 %v746
    %v843 = vunpack.c.h.b16 %v747
    %v844 = vunpack.c.h.b16 %v748
    %v845 = vunpack.c.h.b16 %v749
    %v846 = vpack.c.b16 %v783, %v782
    %v847 = vpack.c.b16 %v785, %v784
    %v848 = vpack.c.b16 %v787, %v786
    %v849 = vpack.c.b16 %v789, %v788
    %v850 = vpack.c.b16 %v791, %v790
    %v851 = vpack.c.b16 %v793, %v792
    %v852 = vpack.c.b16 %v795, %v794
    %v853 = vpack.c.b16 %v797, %v796
    %v854 = vpack.c.b16 %v799, %v798
    %v855 = vpack.c.b16 %v801, %v800
    %v856 = vpack.c.b16 %v803, %v802
    %v857 = vpack.c.b16 %v805, %v804
    %v858 = vpack.c.b16 %v807, %v806
    %v859 = vpack.c.b16 %v809, %v808
    %v860 = vpack.c.b16 %v811, %v810
    %v861 = vpack.c.b16 %v813, %v812
    %v862 = vpack.c.b16 %v815, %v814
    %v863 = vpack.c.b16 %v817, %v816
    %v864 = vpack.c.b16 %v819, %v818
    %v865 = vpack.c.b16 %v821, %v820
    %v866 = vpack.c.b16 %v823, %v822
    %v867 = vpack.c.b16 %v825, %v824
    %v868 = vpack.c.b16 %v827, %v826
    %v869 = vpack.c.b16 %v829, %v828
    %v870 = vpack.c.b16 %v831, %v830
    %v871 = vpack.c.b16 %v833, %v832
    %v872 = vpack.c.b16 %v835, %v834
    %v873 = vpack.c.b16 %v837, %v836
    %v874 = vpack.c.b16 %v839, %v838
    %v875 = vpack.c.b16 %v841, %v840
    %v876 = vpack.c.b16 %v843, %v842
    %v877 = vpack.c.b16 %v845, %v844
    %910 = vst [vmem:[#allocation2] sm:$0xff] %v846
    %911 = vst [vmem:[#allocation2 + $0x8] sm:$0xff] %v847
    %912 = vst [vmem:[#allocation2 + $0x10] sm:$0xff] %v848
    %913 = vst [vmem:[#allocation2 + $0x18] sm:$0xff] %v849
    %914 = vst [vmem:[#allocation2 + $0x20] sm:$0xff] %v850
    %915 = vst [vmem:[#allocation2 + $0x28] sm:$0xff] %v851
    %916 = vst [vmem:[#allocation2 + $0x30] sm:$0xff] %v852
    %917 = vst [vmem:[#allocation2 + $0x38] sm:$0xff] %v853
    %918 = vst [vmem:[#allocation2 + $0x40] sm:$0xff] %v854
    %919 = vst [vmem:[#allocation2 + $0x48] sm:$0xff] %v855
    %920 = vst [vmem:[#allocation2 + $0x50] sm:$0xff] %v856
    %921 = vst [vmem:[#allocation2 + $0x58] sm:$0xff] %v857
    %922 = vst [vmem:[#allocation2 + $0x60] sm:$0xff] %v858
    %923 = vst [vmem:[#allocation2 + $0x68] sm:$0xff] %v859
    %924 = vst [vmem:[#allocation2 + $0x70] sm:$0xff] %v860
    %925 = vst [vmem:[#allocation2 + $0x78] sm:$0xff] %v861
    %926 = vst [vmem:[#allocation2 + $0x80] sm:$0xff] %v862
    %927 = vst [vmem:[#allocation2 + $0x88] sm:$0xff] %v863
    %928 = vst [vmem:[#allocation2 + $0x90] sm:$0xff] %v864
    %929 = vst [vmem:[#allocation2 + $0x98] sm:$0xff] %v865
    %930 = vst [vmem:[#allocation2 + $0xa0] sm:$0xff] %v866
    %931 = vst [vmem:[#allocation2 + $0xa8] sm:$0xff] %v867
    %932 = vst [vmem:[#allocation2 + $0xb0] sm:$0xff] %v868
    %933 = vst [vmem:[#allocation2 + $0xb8] sm:$0xff] %v869
    %934 = vst [vmem:[#allocation2 + $0xc0] sm:$0xff] %v870
    %935 = vst [vmem:[#allocation2 + $0xc8] sm:$0xff] %v871
    %936 = vst [vmem:[#allocation2 + $0xd0] sm:$0xff] %v872
    %937 = vst [vmem:[#allocation2 + $0xd8] sm:$0xff] %v873
    %938 = vst [vmem:[#allocation2 + $0xe0] sm:$0xff] %v874
    %939 = vst [vmem:[#allocation2 + $0xe8] sm:$0xff] %v875
    %940 = vst [vmem:[#allocation2 + $0xf0] sm:$0xff] %v876
    %941 = vst [vmem:[#allocation2 + $0xf8] sm:$0xff] %v877
    %s942 = smul.u32 0, 8
    %s943 = smul.addr %s942, 4
    %s944 = scalar_lea.vmem [#allocation2], %s943
    %v945 = vld [vmem:[%s944] sm:$0xff]
    %v946 = vld [vmem:[%s944 + $0x8] sm:$0xff]
    %v947 = vld [vmem:[%s944 + $0x10] sm:$0xff]
    %v948 = vld [vmem:[%s944 + $0x18] sm:$0xff]
    %v949 = vunpack.c.l.bf16 %v945
    %v950 = vunpack.c.h.bf16 %v945
    %v951 = vunpack.c.l.bf16 %v946
    %v952 = vunpack.c.h.bf16 %v946
    %v953 = vunpack.c.l.bf16 %v947
    %v954 = vunpack.c.h.bf16 %v947
    %v955 = vunpack.c.l.bf16 %v948
    %v956 = vunpack.c.h.bf16 %v948
    %v957 = vld [vmem:[#allocation3] sm:$0xff]
    %v958 = vld [vmem:[#allocation3 + $0x8] sm:$0xff]
    %v959 = vpack.c.bf16 %v957, %v957
    %v960 = vpack.c.bf16 %v958, %v958
    %v961 = vld [vmem:[#allocation11] sm:$0xff]
    %v962 = vld [vmem:[#allocation11 + $0x8] sm:$0xff]
    %v963 = vld [vmem:[#allocation11 + $0x10] sm:$0xff]
    %v964 = vld [vmem:[#allocation11 + $0x18] sm:$0xff]
    %v965 = vld [vmem:[#allocation11 + $0x20] sm:$0xff]
    %v966 = vld [vmem:[#allocation11 + $0x28] sm:$0xff]
    %v967 = vld [vmem:[#allocation11 + $0x30] sm:$0xff]
    %v968 = vld [vmem:[#allocation11 + $0x38] sm:$0xff]
    %v969 = vld [vmem:[#allocation11 + $0x40] sm:$0xff]
    %v970 = vld [vmem:[#allocation11 + $0x48] sm:$0xff]
    %v971 = vld [vmem:[#allocation11 + $0x50] sm:$0xff]
    %v972 = vld [vmem:[#allocation11 + $0x58] sm:$0xff]
    %v973 = vld [vmem:[#allocation11 + $0x60] sm:$0xff]
    %v974 = vld [vmem:[#allocation11 + $0x68] sm:$0xff]
    %v975 = vld [vmem:[#allocation11 + $0x70] sm:$0xff]
    %v976 = vld [vmem:[#allocation11 + $0x78] sm:$0xff]
    %v977 = vld [vmem:[#allocation11 + $0x80] sm:$0xff]
    %v978 = vld [vmem:[#allocation11 + $0x88] sm:$0xff]
    %v979 = vld [vmem:[#allocation11 + $0x90] sm:$0xff]
    %v980 = vld [vmem:[#allocation11 + $0x98] sm:$0xff]
    %v981 = vld [vmem:[#allocation11 + $0xa0] sm:$0xff]
    %v982 = vld [vmem:[#allocation11 + $0xa8] sm:$0xff]
    %v983 = vld [vmem:[#allocation11 + $0xb0] sm:$0xff]
    %v984 = vld [vmem:[#allocation11 + $0xb8] sm:$0xff]
    %v985 = vld [vmem:[#allocation11 + $0xc0] sm:$0xff]
    %v986 = vld [vmem:[#allocation11 + $0xc8] sm:$0xff]
    %v987 = vld [vmem:[#allocation11 + $0xd0] sm:$0xff]
    %v988 = vld [vmem:[#allocation11 + $0xd8] sm:$0xff]
    %v989 = vld [vmem:[#allocation11 + $0xe0] sm:$0xff]
    %v990 = vld [vmem:[#allocation11 + $0xe8] sm:$0xff]
    %v991 = vld [vmem:[#allocation11 + $0xf0] sm:$0xff]
    %v992 = vld [vmem:[#allocation11 + $0xf8] sm:$0xff]
    %v993 = vld [vmem:[#allocation11 + $0x100] sm:$0xff]
    %v994 = vld [vmem:[#allocation11 + $0x108] sm:$0xff]
    %v995 = vld [vmem:[#allocation11 + $0x110] sm:$0xff]
    %v996 = vld [vmem:[#allocation11 + $0x118] sm:$0xff]
    %v997 = vld [vmem:[#allocation11 + $0x120] sm:$0xff]
    %v998 = vld [vmem:[#allocation11 + $0x128] sm:$0xff]
    %v999 = vld [vmem:[#allocation11 + $0x130] sm:$0xff]
    %v1000 = vld [vmem:[#allocation11 + $0x138] sm:$0xff]
    %v1001 = vld [vmem:[#allocation11 + $0x140] sm:$0xff]
    %v1002 = vld [vmem:[#allocation11 + $0x148] sm:$0xff]
    %v1003 = vld [vmem:[#allocation11 + $0x150] sm:$0xff]
    %v1004 = vld [vmem:[#allocation11 + $0x158] sm:$0xff]
    %v1005 = vld [vmem:[#allocation11 + $0x160] sm:$0xff]
    %v1006 = vld [vmem:[#allocation11 + $0x168] sm:$0xff]
    %v1007 = vld [vmem:[#allocation11 + $0x170] sm:$0xff]
    %v1008 = vld [vmem:[#allocation11 + $0x178] sm:$0xff]
    %v1009 = vld [vmem:[#allocation11 + $0x180] sm:$0xff]
    %v1010 = vld [vmem:[#allocation11 + $0x188] sm:$0xff]
    %v1011 = vld [vmem:[#allocation11 + $0x190] sm:$0xff]
    %v1012 = vld [vmem:[#allocation11 + $0x198] sm:$0xff]
    %v1013 = vld [vmem:[#allocation11 + $0x1a0] sm:$0xff]
    %v1014 = vld [vmem:[#allocation11 + $0x1a8] sm:$0xff]
    %v1015 = vld [vmem:[#allocation11 + $0x1b0] sm:$0xff]
    %v1016 = vld [vmem:[#allocation11 + $0x1b8] sm:$0xff]
    %v1017 = vld [vmem:[#allocation11 + $0x1c0] sm:$0xff]
    %v1018 = vld [vmem:[#allocation11 + $0x1c8] sm:$0xff]
    %v1019 = vld [vmem:[#allocation11 + $0x1d0] sm:$0xff]
    %v1020 = vld [vmem:[#allocation11 + $0x1d8] sm:$0xff]
    %v1021 = vld [vmem:[#allocation11 + $0x1e0] sm:$0xff]
    %v1022 = vld [vmem:[#allocation11 + $0x1e8] sm:$0xff]
    %v1023 = vld [vmem:[#allocation11 + $0x1f0] sm:$0xff]
    %v1024 = vld [vmem:[#allocation11 + $0x1f8] sm:$0xff]
    %v1025 = vld [vmem:[#allocation11 + $0x200] sm:$0xff]
    %v1026 = vld [vmem:[#allocation11 + $0x208] sm:$0xff]
    %v1027 = vld [vmem:[#allocation11 + $0x210] sm:$0xff]
    %v1028 = vld [vmem:[#allocation11 + $0x218] sm:$0xff]
    %v1029 = vld [vmem:[#allocation11 + $0x220] sm:$0xff]
    %v1030 = vld [vmem:[#allocation11 + $0x228] sm:$0xff]
    %v1031 = vld [vmem:[#allocation11 + $0x230] sm:$0xff]
    %v1032 = vld [vmem:[#allocation11 + $0x238] sm:$0xff]
    %v1033 = vld [vmem:[#allocation11 + $0x240] sm:$0xff]
    %v1034 = vld [vmem:[#allocation11 + $0x248] sm:$0xff]
    %v1035 = vld [vmem:[#allocation11 + $0x250] sm:$0xff]
    %v1036 = vld [vmem:[#allocation11 + $0x258] sm:$0xff]
    %v1037 = vld [vmem:[#allocation11 + $0x260] sm:$0xff]
    %v1038 = vld [vmem:[#allocation11 + $0x268] sm:$0xff]
    %v1039 = vld [vmem:[#allocation11 + $0x270] sm:$0xff]
    %v1040 = vld [vmem:[#allocation11 + $0x278] sm:$0xff]
    %v1041 = vld [vmem:[#allocation11 + $0x280] sm:$0xff]
    %v1042 = vld [vmem:[#allocation11 + $0x288] sm:$0xff]
    %v1043 = vld [vmem:[#allocation11 + $0x290] sm:$0xff]
    %v1044 = vld [vmem:[#allocation11 + $0x298] sm:$0xff]
    %v1045 = vld [vmem:[#allocation11 + $0x2a0] sm:$0xff]
    %v1046 = vld [vmem:[#allocation11 + $0x2a8] sm:$0xff]
    %v1047 = vld [vmem:[#allocation11 + $0x2b0] sm:$0xff]
    %v1048 = vld [vmem:[#allocation11 + $0x2b8] sm:$0xff]
    %v1049 = vld [vmem:[#allocation11 + $0x2c0] sm:$0xff]
    %v1050 = vld [vmem:[#allocation11 + $0x2c8] sm:$0xff]
    %v1051 = vld [vmem:[#allocation11 + $0x2d0] sm:$0xff]
    %v1052 = vld [vmem:[#allocation11 + $0x2d8] sm:$0xff]
    %v1053 = vld [vmem:[#allocation11 + $0x2e0] sm:$0xff]
    %v1054 = vld [vmem:[#allocation11 + $0x2e8] sm:$0xff]
    %v1055 = vld [vmem:[#allocation11 + $0x2f0] sm:$0xff]
    %v1056 = vld [vmem:[#allocation11 + $0x2f8] sm:$0xff]
    %v1057 = vld [vmem:[#allocation11 + $0x300] sm:$0xff]
    %v1058 = vld [vmem:[#allocation11 + $0x308] sm:$0xff]
    %v1059 = vld [vmem:[#allocation11 + $0x310] sm:$0xff]
    %v1060 = vld [vmem:[#allocation11 + $0x318] sm:$0xff]
    %v1061 = vld [vmem:[#allocation11 + $0x320] sm:$0xff]
    %v1062 = vld [vmem:[#allocation11 + $0x328] sm:$0xff]
    %v1063 = vld [vmem:[#allocation11 + $0x330] sm:$0xff]
    %v1064 = vld [vmem:[#allocation11 + $0x338] sm:$0xff]
    %v1065 = vld [vmem:[#allocation11 + $0x340] sm:$0xff]
    %v1066 = vld [vmem:[#allocation11 + $0x348] sm:$0xff]
    %v1067 = vld [vmem:[#allocation11 + $0x350] sm:$0xff]
    %v1068 = vld [vmem:[#allocation11 + $0x358] sm:$0xff]
    %v1069 = vld [vmem:[#allocation11 + $0x360] sm:$0xff]
    %v1070 = vld [vmem:[#allocation11 + $0x368] sm:$0xff]
    %v1071 = vld [vmem:[#allocation11 + $0x370] sm:$0xff]
    %v1072 = vld [vmem:[#allocation11 + $0x378] sm:$0xff]
    %v1073 = vld [vmem:[#allocation11 + $0x380] sm:$0xff]
    %v1074 = vld [vmem:[#allocation11 + $0x388] sm:$0xff]
    %v1075 = vld [vmem:[#allocation11 + $0x390] sm:$0xff]
    %v1076 = vld [vmem:[#allocation11 + $0x398] sm:$0xff]
    %v1077 = vld [vmem:[#allocation11 + $0x3a0] sm:$0xff]
    %v1078 = vld [vmem:[#allocation11 + $0x3a8] sm:$0xff]
    %v1079 = vld [vmem:[#allocation11 + $0x3b0] sm:$0xff]
    %v1080 = vld [vmem:[#allocation11 + $0x3b8] sm:$0xff]
    %v1081 = vld [vmem:[#allocation11 + $0x3c0] sm:$0xff]
    %v1082 = vld [vmem:[#allocation11 + $0x3c8] sm:$0xff]
    %v1083 = vld [vmem:[#allocation11 + $0x3d0] sm:$0xff]
    %v1084 = vld [vmem:[#allocation11 + $0x3d8] sm:$0xff]
    %v1085 = vld [vmem:[#allocation11 + $0x3e0] sm:$0xff]
    %v1086 = vld [vmem:[#allocation11 + $0x3e8] sm:$0xff]
    %v1087 = vld [vmem:[#allocation11 + $0x3f0] sm:$0xff]
    %v1088 = vld [vmem:[#allocation11 + $0x3f8] sm:$0xff]
    %v1217 = vunpack.c.l.b16 %v961
    %v1218 = vunpack.c.h.b16 %v961
    %v1219 = vunpack.c.l.b16 %v962
    %v1220 = vunpack.c.h.b16 %v962
    %v1221 = vunpack.c.l.b16 %v963
    %v1222 = vunpack.c.h.b16 %v963
    %v1223 = vunpack.c.l.b16 %v964
    %v1224 = vunpack.c.h.b16 %v964
    %v1225 = vunpack.c.l.b16 %v965
    %v1226 = vunpack.c.h.b16 %v965
    %v1227 = vunpack.c.l.b16 %v966
    %v1228 = vunpack.c.h.b16 %v966
    %v1229 = vunpack.c.l.b16 %v967
    %v1230 = vunpack.c.h.b16 %v967
    %v1231 = vunpack.c.l.b16 %v968
    %v1232 = vunpack.c.h.b16 %v968
    %v1233 = vunpack.c.l.b16 %v969
    %v1234 = vunpack.c.h.b16 %v969
    %v1235 = vunpack.c.l.b16 %v970
    %v1236 = vunpack.c.h.b16 %v970
    %v1237 = vunpack.c.l.b16 %v971
    %v1238 = vunpack.c.h.b16 %v971
    %v1239 = vunpack.c.l.b16 %v972
    %v1240 = vunpack.c.h.b16 %v972
    %v1241 = vunpack.c.l.b16 %v973
    %v1242 = vunpack.c.h.b16 %v973
    %v1243 = vunpack.c.l.b16 %v974
    %v1244 = vunpack.c.h.b16 %v974
    %v1245 = vunpack.c.l.b16 %v975
    %v1246 = vunpack.c.h.b16 %v975
    %v1247 = vunpack.c.l.b16 %v976
    %v1248 = vunpack.c.h.b16 %v976
    %v1249 = vunpack.c.l.b16 %v977
    %v1250 = vunpack.c.h.b16 %v977
    %v1251 = vunpack.c.l.b16 %v978
    %v1252 = vunpack.c.h.b16 %v978
    %v1253 = vunpack.c.l.b16 %v979
    %v1254 = vunpack.c.h.b16 %v979
    %v1255 = vunpack.c.l.b16 %v980
    %v1256 = vunpack.c.h.b16 %v980
    %v1257 = vunpack.c.l.b16 %v981
    %v1258 = vunpack.c.h.b16 %v981
    %v1259 = vunpack.c.l.b16 %v982
    %v1260 = vunpack.c.h.b16 %v982
    %v1261 = vunpack.c.l.b16 %v983
    %v1262 = vunpack.c.h.b16 %v983
    %v1263 = vunpack.c.l.b16 %v984
    %v1264 = vunpack.c.h.b16 %v984
    %v1265 = vunpack.c.l.b16 %v985
    %v1266 = vunpack.c.h.b16 %v985
    %v1267 = vunpack.c.l.b16 %v986
    %v1268 = vunpack.c.h.b16 %v986
    %v1269 = vunpack.c.l.b16 %v987
    %v1270 = vunpack.c.h.b16 %v987
    %v1271 = vunpack.c.l.b16 %v988
    %v1272 = vunpack.c.h.b16 %v988
    %v1273 = vunpack.c.l.b16 %v989
    %v1274 = vunpack.c.h.b16 %v989
    %v1275 = vunpack.c.l.b16 %v990
    %v1276 = vunpack.c.h.b16 %v990
    %v1277 = vunpack.c.l.b16 %v991
    %v1278 = vunpack.c.h.b16 %v991
    %v1279 = vunpack.c.l.b16 %v992
    %v1280 = vunpack.c.h.b16 %v992
    %v1281 = vunpack.c.l.b16 %v993
    %v1282 = vunpack.c.h.b16 %v993
    %v1283 = vunpack.c.l.b16 %v994
    %v1284 = vunpack.c.h.b16 %v994
    %v1285 = vunpack.c.l.b16 %v995
    %v1286 = vunpack.c.h.b16 %v995
    %v1287 = vunpack.c.l.b16 %v996
    %v1288 = vunpack.c.h.b16 %v996
    %v1289 = vunpack.c.l.b16 %v997
    %v1290 = vunpack.c.h.b16 %v997
    %v1291 = vunpack.c.l.b16 %v998
    %v1292 = vunpack.c.h.b16 %v998
    %v1293 = vunpack.c.l.b16 %v999
    %v1294 = vunpack.c.h.b16 %v999
    %v1295 = vunpack.c.l.b16 %v1000
    %v1296 = vunpack.c.h.b16 %v1000
    %v1297 = vunpack.c.l.b16 %v1001
    %v1298 = vunpack.c.h.b16 %v1001
    %v1299 = vunpack.c.l.b16 %v1002
    %v1300 = vunpack.c.h.b16 %v1002
    %v1301 = vunpack.c.l.b16 %v1003
    %v1302 = vunpack.c.h.b16 %v1003
    %v1303 = vunpack.c.l.b16 %v1004
    %v1304 = vunpack.c.h.b16 %v1004
    %v1305 = vunpack.c.l.b16 %v1005
    %v1306 = vunpack.c.h.b16 %v1005
    %v1307 = vunpack.c.l.b16 %v1006
    %v1308 = vunpack.c.h.b16 %v1006
    %v1309 = vunpack.c.l.b16 %v1007
    %v1310 = vunpack.c.h.b16 %v1007
    %v1311 = vunpack.c.l.b16 %v1008
    %v1312 = vunpack.c.h.b16 %v1008
    %v1313 = vunpack.c.l.b16 %v1009
    %v1314 = vunpack.c.h.b16 %v1009
    %v1315 = vunpack.c.l.b16 %v1010
    %v1316 = vunpack.c.h.b16 %v1010
    %v1317 = vunpack.c.l.b16 %v1011
    %v1318 = vunpack.c.h.b16 %v1011
    %v1319 = vunpack.c.l.b16 %v1012
    %v1320 = vunpack.c.h.b16 %v1012
    %v1321 = vunpack.c.l.b16 %v1013
    %v1322 = vunpack.c.h.b16 %v1013
    %v1323 = vunpack.c.l.b16 %v1014
    %v1324 = vunpack.c.h.b16 %v1014
    %v1325 = vunpack.c.l.b16 %v1015
    %v1326 = vunpack.c.h.b16 %v1015
    %v1327 = vunpack.c.l.b16 %v1016
    %v1328 = vunpack.c.h.b16 %v1016
    %v1329 = vunpack.c.l.b16 %v1017
    %v1330 = vunpack.c.h.b16 %v1017
    %v1331 = vunpack.c.l.b16 %v1018
    %v1332 = vunpack.c.h.b16 %v1018
    %v1333 = vunpack.c.l.b16 %v1019
    %v1334 = vunpack.c.h.b16 %v1019
    %v1335 = vunpack.c.l.b16 %v1020
    %v1336 = vunpack.c.h.b16 %v1020
    %v1337 = vunpack.c.l.b16 %v1021
    %v1338 = vunpack.c.h.b16 %v1021
    %v1339 = vunpack.c.l.b16 %v1022
    %v1340 = vunpack.c.h.b16 %v1022
    %v1341 = vunpack.c.l.b16 %v1023
    %v1342 = vunpack.c.h.b16 %v1023
    %v1343 = vunpack.c.l.b16 %v1024
    %v1344 = vunpack.c.h.b16 %v1024
    %v1345 = vunpack.c.l.b16 %v1025
    %v1346 = vunpack.c.h.b16 %v1025
    %v1347 = vunpack.c.l.b16 %v1026
    %v1348 = vunpack.c.h.b16 %v1026
    %v1349 = vunpack.c.l.b16 %v1027
    %v1350 = vunpack.c.h.b16 %v1027
    %v1351 = vunpack.c.l.b16 %v1028
    %v1352 = vunpack.c.h.b16 %v1028
    %v1353 = vunpack.c.l.b16 %v1029
    %v1354 = vunpack.c.h.b16 %v1029
    %v1355 = vunpack.c.l.b16 %v1030
    %v1356 = vunpack.c.h.b16 %v1030
    %v1357 = vunpack.c.l.b16 %v1031
    %v1358 = vunpack.c.h.b16 %v1031
    %v1359 = vunpack.c.l.b16 %v1032
    %v1360 = vunpack.c.h.b16 %v1032
    %v1361 = vunpack.c.l.b16 %v1033
    %v1362 = vunpack.c.h.b16 %v1033
    %v1363 = vunpack.c.l.b16 %v1034
    %v1364 = vunpack.c.h.b16 %v1034
    %v1365 = vunpack.c.l.b16 %v1035
    %v1366 = vunpack.c.h.b16 %v1035
    %v1367 = vunpack.c.l.b16 %v1036
    %v1368 = vunpack.c.h.b16 %v1036
    %v1369 = vunpack.c.l.b16 %v1037
    %v1370 = vunpack.c.h.b16 %v1037
    %v1371 = vunpack.c.l.b16 %v1038
    %v1372 = vunpack.c.h.b16 %v1038
    %v1373 = vunpack.c.l.b16 %v1039
    %v1374 = vunpack.c.h.b16 %v1039
    %v1375 = vunpack.c.l.b16 %v1040
    %v1376 = vunpack.c.h.b16 %v1040
    %v1377 = vunpack.c.l.b16 %v1041
    %v1378 = vunpack.c.h.b16 %v1041
    %v1379 = vunpack.c.l.b16 %v1042
    %v1380 = vunpack.c.h.b16 %v1042
    %v1381 = vunpack.c.l.b16 %v1043
    %v1382 = vunpack.c.h.b16 %v1043
    %v1383 = vunpack.c.l.b16 %v1044
    %v1384 = vunpack.c.h.b16 %v1044
    %v1385 = vunpack.c.l.b16 %v1045
    %v1386 = vunpack.c.h.b16 %v1045
    %v1387 = vunpack.c.l.b16 %v1046
    %v1388 = vunpack.c.h.b16 %v1046
    %v1389 = vunpack.c.l.b16 %v1047
    %v1390 = vunpack.c.h.b16 %v1047
    %v1391 = vunpack.c.l.b16 %v1048
    %v1392 = vunpack.c.h.b16 %v1048
    %v1393 = vunpack.c.l.b16 %v1049
    %v1394 = vunpack.c.h.b16 %v1049
    %v1395 = vunpack.c.l.b16 %v1050
    %v1396 = vunpack.c.h.b16 %v1050
    %v1397 = vunpack.c.l.b16 %v1051
    %v1398 = vunpack.c.h.b16 %v1051
    %v1399 = vunpack.c.l.b16 %v1052
    %v1400 = vunpack.c.h.b16 %v1052
    %v1401 = vunpack.c.l.b16 %v1053
    %v1402 = vunpack.c.h.b16 %v1053
    %v1403 = vunpack.c.l.b16 %v1054
    %v1404 = vunpack.c.h.b16 %v1054
    %v1405 = vunpack.c.l.b16 %v1055
    %v1406 = vunpack.c.h.b16 %v1055
    %v1407 = vunpack.c.l.b16 %v1056
    %v1408 = vunpack.c.h.b16 %v1056
    %v1409 = vunpack.c.l.b16 %v1057
    %v1410 = vunpack.c.h.b16 %v1057
    %v1411 = vunpack.c.l.b16 %v1058
    %v1412 = vunpack.c.h.b16 %v1058
    %v1413 = vunpack.c.l.b16 %v1059
    %v1414 = vunpack.c.h.b16 %v1059
    %v1415 = vunpack.c.l.b16 %v1060
    %v1416 = vunpack.c.h.b16 %v1060
    %v1417 = vunpack.c.l.b16 %v1061
    %v1418 = vunpack.c.h.b16 %v1061
    %v1419 = vunpack.c.l.b16 %v1062
    %v1420 = vunpack.c.h.b16 %v1062
    %v1421 = vunpack.c.l.b16 %v1063
    %v1422 = vunpack.c.h.b16 %v1063
    %v1423 = vunpack.c.l.b16 %v1064
    %v1424 = vunpack.c.h.b16 %v1064
    %v1425 = vunpack.c.l.b16 %v1065
    %v1426 = vunpack.c.h.b16 %v1065
    %v1427 = vunpack.c.l.b16 %v1066
    %v1428 = vunpack.c.h.b16 %v1066
    %v1429 = vunpack.c.l.b16 %v1067
    %v1430 = vunpack.c.h.b16 %v1067
    %v1431 = vunpack.c.l.b16 %v1068
    %v1432 = vunpack.c.h.b16 %v1068
    %v1433 = vunpack.c.l.b16 %v1069
    %v1434 = vunpack.c.h.b16 %v1069
    %v1435 = vunpack.c.l.b16 %v1070
    %v1436 = vunpack.c.h.b16 %v1070
    %v1437 = vunpack.c.l.b16 %v1071
    %v1438 = vunpack.c.h.b16 %v1071
    %v1439 = vunpack.c.l.b16 %v1072
    %v1440 = vunpack.c.h.b16 %v1072
    %v1441 = vunpack.c.l.b16 %v1073
    %v1442 = vunpack.c.h.b16 %v1073
    %v1443 = vunpack.c.l.b16 %v1074
    %v1444 = vunpack.c.h.b16 %v1074
    %v1445 = vunpack.c.l.b16 %v1075
    %v1446 = vunpack.c.h.b16 %v1075
    %v1447 = vunpack.c.l.b16 %v1076
    %v1448 = vunpack.c.h.b16 %v1076
    %v1449 = vunpack.c.l.b16 %v1077
    %v1450 = vunpack.c.h.b16 %v1077
    %v1451 = vunpack.c.l.b16 %v1078
    %v1452 = vunpack.c.h.b16 %v1078
    %v1453 = vunpack.c.l.b16 %v1079
    %v1454 = vunpack.c.h.b16 %v1079
    %v1455 = vunpack.c.l.b16 %v1080
    %v1456 = vunpack.c.h.b16 %v1080
    %v1457 = vunpack.c.l.b16 %v1081
    %v1458 = vunpack.c.h.b16 %v1081
    %v1459 = vunpack.c.l.b16 %v1082
    %v1460 = vunpack.c.h.b16 %v1082
    %v1461 = vunpack.c.l.b16 %v1083
    %v1462 = vunpack.c.h.b16 %v1083
    %v1463 = vunpack.c.l.b16 %v1084
    %v1464 = vunpack.c.h.b16 %v1084
    %v1465 = vunpack.c.l.b16 %v1085
    %v1466 = vunpack.c.h.b16 %v1085
    %v1467 = vunpack.c.l.b16 %v1086
    %v1468 = vunpack.c.h.b16 %v1086
    %v1469 = vunpack.c.l.b16 %v1087
    %v1470 = vunpack.c.h.b16 %v1087
    %v1471 = vunpack.c.l.b16 %v1088
    %v1472 = vunpack.c.h.b16 %v1088
    %v1473 = vpack.c.b16 %v1225, %v1217
    %v1474 = vpack.c.b16 %v1226, %v1218
    %v1475 = vpack.c.b16 %v1227, %v1219
    %v1476 = vpack.c.b16 %v1228, %v1220
    %v1477 = vpack.c.b16 %v1229, %v1221
    %v1478 = vpack.c.b16 %v1230, %v1222
    %v1479 = vpack.c.b16 %v1231, %v1223
    %v1480 = vpack.c.b16 %v1232, %v1224
    %v1481 = vpack.c.b16 %v1241, %v1233
    %v1482 = vpack.c.b16 %v1242, %v1234
    %v1483 = vpack.c.b16 %v1243, %v1235
    %v1484 = vpack.c.b16 %v1244, %v1236
    %v1485 = vpack.c.b16 %v1245, %v1237
    %v1486 = vpack.c.b16 %v1246, %v1238
    %v1487 = vpack.c.b16 %v1247, %v1239
    %v1488 = vpack.c.b16 %v1248, %v1240
    %v1489 = vpack.c.b16 %v1257, %v1249
    %v1490 = vpack.c.b16 %v1258, %v1250
    %v1491 = vpack.c.b16 %v1259, %v1251
    %v1492 = vpack.c.b16 %v1260, %v1252
    %v1493 = vpack.c.b16 %v1261, %v1253
    %v1494 = vpack.c.b16 %v1262, %v1254
    %v1495 = vpack.c.b16 %v1263, %v1255
    %v1496 = vpack.c.b16 %v1264, %v1256
    %v1497 = vpack.c.b16 %v1273, %v1265
    %v1498 = vpack.c.b16 %v1274, %v1266
    %v1499 = vpack.c.b16 %v1275, %v1267
    %v1500 = vpack.c.b16 %v1276, %v1268
    %v1501 = vpack.c.b16 %v1277, %v1269
    %v1502 = vpack.c.b16 %v1278, %v1270
    %v1503 = vpack.c.b16 %v1279, %v1271
    %v1504 = vpack.c.b16 %v1280, %v1272
    %v1505 = vpack.c.b16 %v1289, %v1281
    %v1506 = vpack.c.b16 %v1290, %v1282
    %v1507 = vpack.c.b16 %v1291, %v1283
    %v1508 = vpack.c.b16 %v1292, %v1284
    %v1509 = vpack.c.b16 %v1293, %v1285
    %v1510 = vpack.c.b16 %v1294, %v1286
    %v1511 = vpack.c.b16 %v1295, %v1287
    %v1512 = vpack.c.b16 %v1296, %v1288
    %v1513 = vpack.c.b16 %v1305, %v1297
    %v1514 = vpack.c.b16 %v1306, %v1298
    %v1515 = vpack.c.b16 %v1307, %v1299
    %v1516 = vpack.c.b16 %v1308, %v1300
    %v1517 = vpack.c.b16 %v1309, %v1301
    %v1518 = vpack.c.b16 %v1310, %v1302
    %v1519 = vpack.c.b16 %v1311, %v1303
    %v1520 = vpack.c.b16 %v1312, %v1304
    %v1521 = vpack.c.b16 %v1321, %v1313
    %v1522 = vpack.c.b16 %v1322, %v1314
    %v1523 = vpack.c.b16 %v1323, %v1315
    %v1524 = vpack.c.b16 %v1324, %v1316
    %v1525 = vpack.c.b16 %v1325, %v1317
    %v1526 = vpack.c.b16 %v1326, %v1318
    %v1527 = vpack.c.b16 %v1327, %v1319
    %v1528 = vpack.c.b16 %v1328, %v1320
    %v1529 = vpack.c.b16 %v1337, %v1329
    %v1530 = vpack.c.b16 %v1338, %v1330
    %v1531 = vpack.c.b16 %v1339, %v1331
    %v1532 = vpack.c.b16 %v1340, %v1332
    %v1533 = vpack.c.b16 %v1341, %v1333
    %v1534 = vpack.c.b16 %v1342, %v1334
    %v1535 = vpack.c.b16 %v1343, %v1335
    %v1536 = vpack.c.b16 %v1344, %v1336
    %v1537 = vpack.c.b16 %v1353, %v1345
    %v1538 = vpack.c.b16 %v1354, %v1346
    %v1539 = vpack.c.b16 %v1355, %v1347
    %v1540 = vpack.c.b16 %v1356, %v1348
    %v1541 = vpack.c.b16 %v1357, %v1349
    %v1542 = vpack.c.b16 %v1358, %v1350
    %v1543 = vpack.c.b16 %v1359, %v1351
    %v1544 = vpack.c.b16 %v1360, %v1352
    %v1545 = vpack.c.b16 %v1369, %v1361
    %v1546 = vpack.c.b16 %v1370, %v1362
    %v1547 = vpack.c.b16 %v1371, %v1363
    %v1548 = vpack.c.b16 %v1372, %v1364
    %v1549 = vpack.c.b16 %v1373, %v1365
    %v1550 = vpack.c.b16 %v1374, %v1366
    %v1551 = vpack.c.b16 %v1375, %v1367
    %v1552 = vpack.c.b16 %v1376, %v1368
    %v1553 = vpack.c.b16 %v1385, %v1377
    %v1554 = vpack.c.b16 %v1386, %v1378
    %v1555 = vpack.c.b16 %v1387, %v1379
    %v1556 = vpack.c.b16 %v1388, %v1380
    %v1557 = vpack.c.b16 %v1389, %v1381
    %v1558 = vpack.c.b16 %v1390, %v1382
    %v1559 = vpack.c.b16 %v1391, %v1383
    %v1560 = vpack.c.b16 %v1392, %v1384
    %v1561 = vpack.c.b16 %v1401, %v1393
    %v1562 = vpack.c.b16 %v1402, %v1394
    %v1563 = vpack.c.b16 %v1403, %v1395
    %v1564 = vpack.c.b16 %v1404, %v1396
    %v1565 = vpack.c.b16 %v1405, %v1397
    %v1566 = vpack.c.b16 %v1406, %v1398
    %v1567 = vpack.c.b16 %v1407, %v1399
    %v1568 = vpack.c.b16 %v1408, %v1400
    %v1569 = vpack.c.b16 %v1417, %v1409
    %v1570 = vpack.c.b16 %v1418, %v1410
    %v1571 = vpack.c.b16 %v1419, %v1411
    %v1572 = vpack.c.b16 %v1420, %v1412
    %v1573 = vpack.c.b16 %v1421, %v1413
    %v1574 = vpack.c.b16 %v1422, %v1414
    %v1575 = vpack.c.b16 %v1423, %v1415
    %v1576 = vpack.c.b16 %v1424, %v1416
    %v1577 = vpack.c.b16 %v1433, %v1425
    %v1578 = vpack.c.b16 %v1434, %v1426
    %v1579 = vpack.c.b16 %v1435, %v1427
    %v1580 = vpack.c.b16 %v1436, %v1428
    %v1581 = vpack.c.b16 %v1437, %v1429
    %v1582 = vpack.c.b16 %v1438, %v1430
    %v1583 = vpack.c.b16 %v1439, %v1431
    %v1584 = vpack.c.b16 %v1440, %v1432
    %v1585 = vpack.c.b16 %v1449, %v1441
    %v1586 = vpack.c.b16 %v1450, %v1442
    %v1587 = vpack.c.b16 %v1451, %v1443
    %v1588 = vpack.c.b16 %v1452, %v1444
    %v1589 = vpack.c.b16 %v1453, %v1445
    %v1590 = vpack.c.b16 %v1454, %v1446
    %v1591 = vpack.c.b16 %v1455, %v1447
    %v1592 = vpack.c.b16 %v1456, %v1448
    %v1593 = vpack.c.b16 %v1465, %v1457
    %v1594 = vpack.c.b16 %v1466, %v1458
    %v1595 = vpack.c.b16 %v1467, %v1459
    %v1596 = vpack.c.b16 %v1468, %v1460
    %v1597 = vpack.c.b16 %v1469, %v1461
    %v1598 = vpack.c.b16 %v1470, %v1462
    %v1599 = vpack.c.b16 %v1471, %v1463
    %v1600 = vpack.c.b16 %v1472, %v1464
    %1729 = vmatprep.subr.bf16.mxu0 %v1530
    %1730 = vmatpush1.bf16.msra.mxu0 %v1529
    %1731 = vmatprep.subr.bf16.mxu0 %v1522
    %1732 = vmatpush1.bf16.msra.mxu0 %v1521
    %1733 = vmatprep.subr.bf16.mxu0 %v1514
    %1734 = vmatpush1.bf16.msra.mxu0 %v1513
    %1735 = vmatprep.subr.bf16.mxu0 %v1506
    %1736 = vmatpush1.bf16.msra.mxu0 %v1505
    %1737 = vmatprep.subr.bf16.mxu0 %v1498
    %1738 = vmatpush1.bf16.msra.mxu0 %v1497
    %1739 = vmatprep.subr.bf16.mxu0 %v1490
    %1740 = vmatpush1.bf16.msra.mxu0 %v1489
    %1741 = vmatprep.subr.bf16.mxu0 %v1482
    %1742 = vmatpush1.bf16.msra.mxu0 %v1481
    %1743 = vmatprep.subr.bf16.mxu0 %v1474
    %1744 = vmatpush1.bf16.msra.mxu0 %v1473
    %1745 = vmatprep.subr.bf16.mxu0 %v1594
    %1746 = vmatpush2.bf16.msra.mxu0 %v1593
    %1747 = vmatprep.subr.bf16.mxu0 %v1586
    %1748 = vmatpush2.bf16.msra.mxu0 %v1585
    %1749 = vmatprep.subr.bf16.mxu0 %v1578
    %1750 = vmatpush2.bf16.msra.mxu0 %v1577
    %1751 = vmatprep.subr.bf16.mxu0 %v1570
    %1752 = vmatpush2.bf16.msra.mxu0 %v1569
    %1753 = vmatprep.subr.bf16.mxu0 %v1562
    %1754 = vmatpush2.bf16.msra.mxu0 %v1561
    %1755 = vmatprep.subr.bf16.mxu0 %v1554
    %1756 = vmatpush2.bf16.msra.mxu0 %v1553
    %1757 = vmatprep.subr.bf16.mxu0 %v1546
    %1758 = vmatpush2.bf16.msra.mxu0 %v1545
    %1759 = vmatprep.subr.bf16.mxu0 %v1538
    %1760 = vmatpush2.bf16.msra.mxu0 %v1537
    %1761 = vmatprep.mubr.bf16.mxu0 %v960
    %1762 = vmatmul.mubr.bf16.gmra.mxu0 %v959
    %v1763 = vpop.f32.mrf.mxu0
    %v1764 = vadd.f32 0.0, %v1763
    %v1765 = vpop.f32.mrf.mxu0
    %v1766 = vadd.f32 0.0, %v1765
    %v1767 = vpop.f32.mrf.mxu0
    %v1768 = vpop.f32.mrf.mxu0
    %1769 = vdwg.mxu0
    %1770 = vmatprep.subr.bf16.mxu0 %v1532
    %1771 = vmatpush1.bf16.msra.mxu0 %v1531
    %1772 = vmatprep.subr.bf16.mxu0 %v1524
    %1773 = vmatpush1.bf16.msra.mxu0 %v1523
    %1774 = vmatprep.subr.bf16.mxu0 %v1516
    %1775 = vmatpush1.bf16.msra.mxu0 %v1515
    %1776 = vmatprep.subr.bf16.mxu0 %v1508
    %1777 = vmatpush1.bf16.msra.mxu0 %v1507
    %1778 = vmatprep.subr.bf16.mxu0 %v1500
    %1779 = vmatpush1.bf16.msra.mxu0 %v1499
    %1780 = vmatprep.subr.bf16.mxu0 %v1492
    %1781 = vmatpush1.bf16.msra.mxu0 %v1491
    %1782 = vmatprep.subr.bf16.mxu0 %v1484
    %1783 = vmatpush1.bf16.msra.mxu0 %v1483
    %1784 = vmatprep.subr.bf16.mxu0 %v1476
    %1785 = vmatpush1.bf16.msra.mxu0 %v1475
    %1786 = vmatprep.subr.bf16.mxu0 %v1596
    %1787 = vmatpush2.bf16.msra.mxu0 %v1595
    %1788 = vmatprep.subr.bf16.mxu0 %v1588
    %1789 = vmatpush2.bf16.msra.mxu0 %v1587
    %1790 = vmatprep.subr.bf16.mxu0 %v1580
    %1791 = vmatpush2.bf16.msra.mxu0 %v1579
    %1792 = vmatprep.subr.bf16.mxu0 %v1572
    %1793 = vmatpush2.bf16.msra.mxu0 %v1571
    %1794 = vmatprep.subr.bf16.mxu0 %v1564
    %1795 = vmatpush2.bf16.msra.mxu0 %v1563
    %1796 = vmatprep.subr.bf16.mxu0 %v1556
    %1797 = vmatpush2.bf16.msra.mxu0 %v1555
    %1798 = vmatprep.subr.bf16.mxu0 %v1548
    %1799 = vmatpush2.bf16.msra.mxu0 %v1547
    %1800 = vmatprep.subr.bf16.mxu0 %v1540
    %1801 = vmatpush2.bf16.msra.mxu0 %v1539
    %1802 = vmatprep.mubr.bf16.mxu0 %v960
    %1803 = vmatmul.mubr.bf16.gmra.mxu0 %v959
    %v1804 = vpop.f32.mrf.mxu0
    %v1805 = vadd.f32 0.0, %v1804
    %v1806 = vpop.f32.mrf.mxu0
    %v1807 = vadd.f32 0.0, %v1806
    %v1808 = vpop.f32.mrf.mxu0
    %v1809 = vpop.f32.mrf.mxu0
    %1810 = vdwg.mxu0
    %1811 = vmatprep.subr.bf16.mxu0 %v1534
    %1812 = vmatpush1.bf16.msra.mxu0 %v1533
    %1813 = vmatprep.subr.bf16.mxu0 %v1526
    %1814 = vmatpush1.bf16.msra.mxu0 %v1525
    %1815 = vmatprep.subr.bf16.mxu0 %v1518
    %1816 = vmatpush1.bf16.msra.mxu0 %v1517
    %1817 = vmatprep.subr.bf16.mxu0 %v1510
    %1818 = vmatpush1.bf16.msra.mxu0 %v1509
    %1819 = vmatprep.subr.bf16.mxu0 %v1502
    %1820 = vmatpush1.bf16.msra.mxu0 %v1501
    %1821 = vmatprep.subr.bf16.mxu0 %v1494
    %1822 = vmatpush1.bf16.msra.mxu0 %v1493
    %1823 = vmatprep.subr.bf16.mxu0 %v1486
    %1824 = vmatpush1.bf16.msra.mxu0 %v1485
    %1825 = vmatprep.subr.bf16.mxu0 %v1478
    %1826 = vmatpush1.bf16.msra.mxu0 %v1477
    %1827 = vmatprep.subr.bf16.mxu0 %v1598
    %1828 = vmatpush2.bf16.msra.mxu0 %v1597
    %1829 = vmatprep.subr.bf16.mxu0 %v1590
    %1830 = vmatpush2.bf16.msra.mxu0 %v1589
    %1831 = vmatprep.subr.bf16.mxu0 %v1582
    %1832 = vmatpush2.bf16.msra.mxu0 %v1581
    %1833 = vmatprep.subr.bf16.mxu0 %v1574
    %1834 = vmatpush2.bf16.msra.mxu0 %v1573
    %1835 = vmatprep.subr.bf16.mxu0 %v1566
    %1836 = vmatpush2.bf16.msra.mxu0 %v1565
    %1837 = vmatprep.subr.bf16.mxu0 %v1558
    %1838 = vmatpush2.bf16.msra.mxu0 %v1557
    %1839 = vmatprep.subr.bf16.mxu0 %v1550
    %1840 = vmatpush2.bf16.msra.mxu0 %v1549
    %1841 = vmatprep.subr.bf16.mxu0 %v1542
    %1842 = vmatpush2.bf16.msra.mxu0 %v1541
    %1843 = vmatprep.mubr.bf16.mxu0 %v960
    %1844 = vmatmul.mubr.bf16.gmra.mxu0 %v959
    %v1845 = vpop.f32.mrf.mxu0
    %v1846 = vadd.f32 0.0, %v1845
    %v1847 = vpop.f32.mrf.mxu0
    %v1848 = vadd.f32 0.0, %v1847
    %v1849 = vpop.f32.mrf.mxu0
    %v1850 = vpop.f32.mrf.mxu0
    %1851 = vdwg.mxu0
    %1852 = vmatprep.subr.bf16.mxu0 %v1536
    %1853 = vmatpush1.bf16.msra.mxu0 %v1535
    %1854 = vmatprep.subr.bf16.mxu0 %v1528
    %1855 = vmatpush1.bf16.msra.mxu0 %v1527
    %1856 = vmatprep.subr.bf16.mxu0 %v1520
    %1857 = vmatpush1.bf16.msra.mxu0 %v1519
    %1858 = vmatprep.subr.bf16.mxu0 %v1512
    %1859 = vmatpush1.bf16.msra.mxu0 %v1511
    %1860 = vmatprep.subr.bf16.mxu0 %v1504
    %1861 = vmatpush1.bf16.msra.mxu0 %v1503
    %1862 = vmatprep.subr.bf16.mxu0 %v1496
    %1863 = vmatpush1.bf16.msra.mxu0 %v1495
    %1864 = vmatprep.subr.bf16.mxu0 %v1488
    %1865 = vmatpush1.bf16.msra.mxu0 %v1487
    %1866 = vmatprep.subr.bf16.mxu0 %v1480
    %1867 = vmatpush1.bf16.msra.mxu0 %v1479
    %1868 = vmatprep.subr.bf16.mxu0 %v1600
    %1869 = vmatpush2.bf16.msra.mxu0 %v1599
    %1870 = vmatprep.subr.bf16.mxu0 %v1592
    %1871 = vmatpush2.bf16.msra.mxu0 %v1591
    %1872 = vmatprep.subr.bf16.mxu0 %v1584
    %1873 = vmatpush2.bf16.msra.mxu0 %v1583
    %1874 = vmatprep.subr.bf16.mxu0 %v1576
    %1875 = vmatpush2.bf16.msra.mxu0 %v1575
    %1876 = vmatprep.subr.bf16.mxu0 %v1568
    %1877 = vmatpush2.bf16.msra.mxu0 %v1567
    %1878 = vmatprep.subr.bf16.mxu0 %v1560
    %1879 = vmatpush2.bf16.msra.mxu0 %v1559
    %1880 = vmatprep.subr.bf16.mxu0 %v1552
    %1881 = vmatpush2.bf16.msra.mxu0 %v1551
    %1882 = vmatprep.subr.bf16.mxu0 %v1544
    %1883 = vmatpush2.bf16.msra.mxu0 %v1543
    %1884 = vmatprep.mubr.bf16.mxu0 %v960
    %1885 = vmatmul.mubr.bf16.gmra.mxu0 %v959
    %v1886 = vpop.f32.mrf.mxu0
    %v1887 = vadd.f32 0.0, %v1886
    %v1888 = vpop.f32.mrf.mxu0
    %v1889 = vadd.f32 0.0, %v1888
    %v1890 = vpop.f32.mrf.mxu0
    %v1891 = vpop.f32.mrf.mxu0
    %1892 = vdwg.mxu0
    %v1893 = vadd.f32 %v949, %v1764
    %v1894 = vadd.f32 %v950, %v1766
    %v1895 = vadd.f32 %v951, %v1805
    %v1896 = vadd.f32 %v952, %v1807
    %v1897 = vadd.f32 %v953, %v1846
    %v1898 = vadd.f32 %v954, %v1848
    %v1899 = vadd.f32 %v955, %v1887
    %v1900 = vadd.f32 %v956, %v1889
    %v1901 = vxor.u32 %v1893, 2147483648
    %v1902 = vxor.u32 %v1894, 2147483648
    %v1903 = vxor.u32 %v1895, 2147483648
    %v1904 = vxor.u32 %v1896, 2147483648
    %v1905 = vxor.u32 %v1897, 2147483648
    %v1906 = vxor.u32 %v1898, 2147483648
    %v1907 = vmul.f32 %v1901, 1.442695
    %v1908 = vpow.pop %v1907
    %v1909 = vmul.f32 %v1902, 1.442695
    %v1910 = vpow.pop %v1909
    %v1911 = vmul.f32 %v1903, 1.442695
    %v1912 = vpow.pop %v1911
    %v1913 = vmul.f32 %v1904, 1.442695
    %v1914 = vpow.pop %v1913
    %v1915 = vmul.f32 %v1905, 1.442695
    %v1916 = vpow.pop %v1915
    %v1917 = vmul.f32 %v1906, 1.442695
    %v1918 = vpow.pop %v1917
    %v1919 = vadd.f32 %v1908, 1.0
    %v1920 = vadd.f32 %v1910, 1.0
    %v1921 = vadd.f32 %v1912, 1.0
    %v1922 = vadd.f32 %v1914, 1.0
    %v1923 = vadd.f32 %v1916, 1.0
    %v1924 = vadd.f32 %v1918, 1.0
    %v1925 = vrcp.pop %v1919
    %v1926 = vmul.f32 1.0, %v1925
    %v1927 = vrcp.pop %v1920
    %v1928 = vmul.f32 1.0, %v1927
    %v1929 = vrcp.pop %v1921
    %v1930 = vmul.f32 1.0, %v1929
    %v1931 = vrcp.pop %v1922
    %v1932 = vmul.f32 1.0, %v1931
    %v1933 = vrcp.pop %v1923
    %v1934 = vmul.f32 1.0, %v1933
    %v1935 = vrcp.pop %v1924
    %v1936 = vmul.f32 1.0, %v1935
    %v1937 = vtanh.pop %v1899
    %v1938 = vtanh.pop %v1900
    %v1939 = vld [vmem:[#allocation4] sm:$0xff]
    %v1940 = vld [vmem:[#allocation4 + $0x8] sm:$0xff]
    %v1941 = vmul.f32 %v1930, %v1939
    %v1942 = vmul.f32 %v1932, %v1940
    %v1943 = vmul.f32 %v1926, %v1937
    %v1944 = vmul.f32 %v1928, %v1938
    %v1945 = vadd.f32 %v1941, %v1943
    %v1946 = vadd.f32 %v1942, %v1944
    %1947 = vst [vmem:[#allocation4] sm:$0xff] %v1945
    %1948 = vst [vmem:[#allocation4 + $0x8] sm:$0xff] %v1946
    %v1949 = vtanh.pop %v1945
    %v1950 = vtanh.pop %v1946
    %v1951 = vmul.f32 %v1934, %v1949
    %v1952 = vmul.f32 %v1936, %v1950
    %1953 = vst [vmem:[#allocation3] sm:$0xff] %v1951
    %1954 = vst [vmem:[#allocation3 + $0x8] sm:$0xff] %v1952
    %s1955 = smul.u32 1, 8
    %s1956 = smul.addr %s1955, 4
    %s1957 = scalar_lea.vmem [#allocation2], %s1956
    %v1958 = vld [vmem:[%s1957] sm:$0xff]
    %v1959 = vld [vmem:[%s1957 + $0x8] sm:$0xff]
    %v1960 = vld [vmem:[%s1957 + $0x10] sm:$0xff]
    %v1961 = vld [vmem:[%s1957 + $0x18] sm:$0xff]
    %v1962 = vunpack.c.l.bf16 %v1958
    %v1963 = vunpack.c.h.bf16 %v1958
    %v1964 = vunpack.c.l.bf16 %v1959
    %v1965 = vunpack.c.h.bf16 %v1959
    %v1966 = vunpack.c.l.bf16 %v1960
    %v1967 = vunpack.c.h.bf16 %v1960
    %v1968 = vunpack.c.l.bf16 %v1961
    %v1969 = vunpack.c.h.bf16 %v1961
    %v1970 = vld [vmem:[#allocation3] sm:$0xff]
    %v1971 = vld [vmem:[#allocation3 + $0x8] sm:$0xff]
    %v1972 = vpack.c.bf16 %v1970, %v1970
    %v1973 = vpack.c.bf16 %v1971, %v1971
    %v1974 = vld [vmem:[#allocation11] sm:$0xff]
    %v1975 = vld [vmem:[#allocation11 + $0x8] sm:$0xff]
    %v1976 = vld [vmem:[#allocation11 + $0x10] sm:$0xff]
    %v1977 = vld [vmem:[#allocation11 + $0x18] sm:$0xff]
    %v1978 = vld [vmem:[#allocation11 + $0x20] sm:$0xff]
    %v1979 = vld [vmem:[#allocation11 + $0x28] sm:$0xff]
    %v1980 = vld [vmem:[#allocation11 + $0x30] sm:$0xff]
    %v1981 = vld [vmem:[#allocation11 + $0x38] sm:$0xff]
    %v1982 = vld [vmem:[#allocation11 + $0x40] sm:$0xff]
    %v1983 = vld [vmem:[#allocation11 + $0x48] sm:$0xff]
    %v1984 = vld [vmem:[#allocation11 + $0x50] sm:$0xff]
    %v1985 = vld [vmem:[#allocation11 + $0x58] sm:$0xff]
    %v1986 = vld [vmem:[#allocation11 + $0x60] sm:$0xff]
    %v1987 = vld [vmem:[#allocation11 + $0x68] sm:$0xff]
    %v1988 = vld [vmem:[#allocation11 + $0x70] sm:$0xff]
    %v1989 = vld [vmem:[#allocation11 + $0x78] sm:$0xff]
    %v1990 = vld [vmem:[#allocation11 + $0x80] sm:$0xff]
    %v1991 = vld [vmem:[#allocation11 + $0x88] sm:$0xff]
    %v1992 = vld [vmem:[#allocation11 + $0x90] sm:$0xff]
    %v1993 = vld [vmem:[#allocation11 + $0x98] sm:$0xff]
    %v1994 = vld [vmem:[#allocation11 + $0xa0] sm:$0xff]
    %v1995 = vld [vmem:[#allocation11 + $0xa8] sm:$0xff]
    %v1996 = vld [vmem:[#allocation11 + $0xb0] sm:$0xff]
    %v1997 = vld [vmem:[#allocation11 + $0xb8] sm:$0xff]
    %v1998 = vld [vmem:[#allocation11 + $0xc0] sm:$0xff]
    %v1999 = vld [vmem:[#allocation11 + $0xc8] sm:$0xff]
    %v2000 = vld [vmem:[#allocation11 + $0xd0] sm:$0xff]
    %v2001 = vld [vmem:[#allocation11 + $0xd8] sm:$0xff]
    %v2002 = vld [vmem:[#allocation11 + $0xe0] sm:$0xff]
    %v2003 = vld [vmem:[#allocation11 + $0xe8] sm:$0xff]
    %v2004 = vld [vmem:[#allocation11 + $0xf0] sm:$0xff]
    %v2005 = vld [vmem:[#allocation11 + $0xf8] sm:$0xff]
    %v2006 = vld [vmem:[#allocation11 + $0x100] sm:$0xff]
    %v2007 = vld [vmem:[#allocation11 + $0x108] sm:$0xff]
    %v2008 = vld [vmem:[#allocation11 + $0x110] sm:$0xff]
    %v2009 = vld [vmem:[#allocation11 + $0x118] sm:$0xff]
    %v2010 = vld [vmem:[#allocation11 + $0x120] sm:$0xff]
    %v2011 = vld [vmem:[#allocation11 + $0x128] sm:$0xff]
    %v2012 = vld [vmem:[#allocation11 + $0x130] sm:$0xff]
    %v2013 = vld [vmem:[#allocation11 + $0x138] sm:$0xff]
    %v2014 = vld [vmem:[#allocation11 + $0x140] sm:$0xff]
    %v2015 = vld [vmem:[#allocation11 + $0x148] sm:$0xff]
    %v2016 = vld [vmem:[#allocation11 + $0x150] sm:$0xff]
    %v2017 = vld [vmem:[#allocation11 + $0x158] sm:$0xff]
    %v2018 = vld [vmem:[#allocation11 + $0x160] sm:$0xff]
    %v2019 = vld [vmem:[#allocation11 + $0x168] sm:$0xff]
    %v2020 = vld [vmem:[#allocation11 + $0x170] sm:$0xff]
    %v2021 = vld [vmem:[#allocation11 + $0x178] sm:$0xff]
    %v2022 = vld [vmem:[#allocation11 + $0x180] sm:$0xff]
    %v2023 = vld [vmem:[#allocation11 + $0x188] sm:$0xff]
    %v2024 = vld [vmem:[#allocation11 + $0x190] sm:$0xff]
    %v2025 = vld [vmem:[#allocation11 + $0x198] sm:$0xff]
    %v2026 = vld [vmem:[#allocation11 + $0x1a0] sm:$0xff]
    %v2027 = vld [vmem:[#allocation11 + $0x1a8] sm:$0xff]
    %v2028 = vld [vmem:[#allocation11 + $0x1b0] sm:$0xff]
    %v2029 = vld [vmem:[#allocation11 + $0x1b8] sm:$0xff]
    %v2030 = vld [vmem:[#allocation11 + $0x1c0] sm:$0xff]
    %v2031 = vld [vmem:[#allocation11 + $0x1c8] sm:$0xff]
    %v2032 = vld [vmem:[#allocation11 + $0x1d0] sm:$0xff]
    %v2033 = vld [vmem:[#allocation11 + $0x1d8] sm:$0xff]
    %v2034 = vld [vmem:[#allocation11 + $0x1e0] sm:$0xff]
    %v2035 = vld [vmem:[#allocation11 + $0x1e8] sm:$0xff]
    %v2036 = vld [vmem:[#allocation11 + $0x1f0] sm:$0xff]
    %v2037 = vld [vmem:[#allocation11 + $0x1f8] sm:$0xff]
    %v2038 = vld [vmem:[#allocation11 + $0x200] sm:$0xff]
    %v2039 = vld [vmem:[#allocation11 + $0x208] sm:$0xff]
    %v2040 = vld [vmem:[#allocation11 + $0x210] sm:$0xff]
    %v2041 = vld [vmem:[#allocation11 + $0x218] sm:$0xff]
    %v2042 = vld [vmem:[#allocation11 + $0x220] sm:$0xff]
    %v2043 = vld [vmem:[#allocation11 + $0x228] sm:$0xff]
    %v2044 = vld [vmem:[#allocation11 + $0x230] sm:$0xff]
    %v2045 = vld [vmem:[#allocation11 + $0x238] sm:$0xff]
    %v2046 = vld [vmem:[#allocation11 + $0x240] sm:$0xff]
    %v2047 = vld [vmem:[#allocation11 + $0x248] sm:$0xff]
    %v2048 = vld [vmem:[#allocation11 + $0x250] sm:$0xff]
    %v2049 = vld [vmem:[#allocation11 + $0x258] sm:$0xff]
    %v2050 = vld [vmem:[#allocation11 + $0x260] sm:$0xff]
    %v2051 = vld [vmem:[#allocation11 + $0x268] sm:$0xff]
    %v2052 = vld [vmem:[#allocation11 + $0x270] sm:$0xff]
    %v2053 = vld [vmem:[#allocation11 + $0x278] sm:$0xff]
    %v2054 = vld [vmem:[#allocation11 + $0x280] sm:$0xff]
    %v2055 = vld [vmem:[#allocation11 + $0x288] sm:$0xff]
    %v2056 = vld [vmem:[#allocation11 + $0x290] sm:$0xff]
    %v2057 = vld [vmem:[#allocation11 + $0x298] sm:$0xff]
    %v2058 = vld [vmem:[#allocation11 + $0x2a0] sm:$0xff]
    %v2059 = vld [vmem:[#allocation11 + $0x2a8] sm:$0xff]
    %v2060 = vld [vmem:[#allocation11 + $0x2b0] sm:$0xff]
    %v2061 = vld [vmem:[#allocation11 + $0x2b8] sm:$0xff]
    %v2062 = vld [vmem:[#allocation11 + $0x2c0] sm:$0xff]
    %v2063 = vld [vmem:[#allocation11 + $0x2c8] sm:$0xff]
    %v2064 = vld [vmem:[#allocation11 + $0x2d0] sm:$0xff]
    %v2065 = vld [vmem:[#allocation11 + $0x2d8] sm:$0xff]
    %v2066 = vld [vmem:[#allocation11 + $0x2e0] sm:$0xff]
    %v2067 = vld [vmem:[#allocation11 + $0x2e8] sm:$0xff]
    %v2068 = vld [vmem:[#allocation11 + $0x2f0] sm:$0xff]
    %v2069 = vld [vmem:[#allocation11 + $0x2f8] sm:$0xff]
    %v2070 = vld [vmem:[#allocation11 + $0x300] sm:$0xff]
    %v2071 = vld [vmem:[#allocation11 + $0x308] sm:$0xff]
    %v2072 = vld [vmem:[#allocation11 + $0x310] sm:$0xff]
    %v2073 = vld [vmem:[#allocation11 + $0x318] sm:$0xff]
    %v2074 = vld [vmem:[#allocation11 + $0x320] sm:$0xff]
    %v2075 = vld [vmem:[#allocation11 + $0x328] sm:$0xff]
    %v2076 = vld [vmem:[#allocation11 + $0x330] sm:$0xff]
    %v2077 = vld [vmem:[#allocation11 + $0x338] sm:$0xff]
    %v2078 = vld [vmem:[#allocation11 + $0x340] sm:$0xff]
    %v2079 = vld [vmem:[#allocation11 + $0x348] sm:$0xff]
    %v2080 = vld [vmem:[#allocation11 + $0x350] sm:$0xff]
    %v2081 = vld [vmem:[#allocation11 + $0x358] sm:$0xff]
    %v2082 = vld [vmem:[#allocation11 + $0x360] sm:$0xff]
    %v2083 = vld [vmem:[#allocation11 + $0x368] sm:$0xff]
    %v2084 = vld [vmem:[#allocation11 + $0x370] sm:$0xff]
    %v2085 = vld [vmem:[#allocation11 + $0x378] sm:$0xff]
    %v2086 = vld [vmem:[#allocation11 + $0x380] sm:$0xff]
    %v2087 = vld [vmem:[#allocation11 + $0x388] sm:$0xff]
    %v2088 = vld [vmem:[#allocation11 + $0x390] sm:$0xff]
    %v2089 = vld [vmem:[#allocation11 + $0x398] sm:$0xff]
    %v2090 = vld [vmem:[#allocation11 + $0x3a0] sm:$0xff]
    %v2091 = vld [vmem:[#allocation11 + $0x3a8] sm:$0xff]
    %v2092 = vld [vmem:[#allocation11 + $0x3b0] sm:$0xff]
    %v2093 = vld [vmem:[#allocation11 + $0x3b8] sm:$0xff]
    %v2094 = vld [vmem:[#allocation11 + $0x3c0] sm:$0xff]
    %v2095 = vld [vmem:[#allocation11 + $0x3c8] sm:$0xff]
    %v2096 = vld [vmem:[#allocation11 + $0x3d0] sm:$0xff]
    %v2097 = vld [vmem:[#allocation11 + $0x3d8] sm:$0xff]
    %v2098 = vld [vmem:[#allocation11 + $0x3e0] sm:$0xff]
    %v2099 = vld [vmem:[#allocation11 + $0x3e8] sm:$0xff]
    %v2100 = vld [vmem:[#allocation11 + $0x3f0] sm:$0xff]
    %v2101 = vld [vmem:[#allocation11 + $0x3f8] sm:$0xff]
    %v2230 = vunpack.c.l.b16 %v1974
    %v2231 = vunpack.c.h.b16 %v1974
    %v2232 = vunpack.c.l.b16 %v1975
    %v2233 = vunpack.c.h.b16 %v1975
    %v2234 = vunpack.c.l.b16 %v1976
    %v2235 = vunpack.c.h.b16 %v1976
    %v2236 = vunpack.c.l.b16 %v1977
    %v2237 = vunpack.c.h.b16 %v1977
    %v2238 = vunpack.c.l.b16 %v1978
    %v2239 = vunpack.c.h.b16 %v1978
    %v2240 = vunpack.c.l.b16 %v1979
    %v2241 = vunpack.c.h.b16 %v1979
    %v2242 = vunpack.c.l.b16 %v1980
    %v2243 = vunpack.c.h.b16 %v1980
    %v2244 = vunpack.c.l.b16 %v1981
    %v2245 = vunpack.c.h.b16 %v1981
    %v2246 = vunpack.c.l.b16 %v1982
    %v2247 = vunpack.c.h.b16 %v1982
    %v2248 = vunpack.c.l.b16 %v1983
    %v2249 = vunpack.c.h.b16 %v1983
    %v2250 = vunpack.c.l.b16 %v1984
    %v2251 = vunpack.c.h.b16 %v1984
    %v2252 = vunpack.c.l.b16 %v1985
    %v2253 = vunpack.c.h.b16 %v1985
    %v2254 = vunpack.c.l.b16 %v1986
    %v2255 = vunpack.c.h.b16 %v1986
    %v2256 = vunpack.c.l.b16 %v1987
    %v2257 = vunpack.c.h.b16 %v1987
    %v2258 = vunpack.c.l.b16 %v1988
    %v2259 = vunpack.c.h.b16 %v1988
    %v2260 = vunpack.c.l.b16 %v1989
    %v2261 = vunpack.c.h.b16 %v1989
    %v2262 = vunpack.c.l.b16 %v1990
    %v2263 = vunpack.c.h.b16 %v1990
    %v2264 = vunpack.c.l.b16 %v1991
    %v2265 = vunpack.c.h.b16 %v1991
    %v2266 = vunpack.c.l.b16 %v1992
    %v2267 = vunpack.c.h.b16 %v1992
    %v2268 = vunpack.c.l.b16 %v1993
    %v2269 = vunpack.c.h.b16 %v1993
    %v2270 = vunpack.c.l.b16 %v1994
    %v2271 = vunpack.c.h.b16 %v1994
    %v2272 = vunpack.c.l.b16 %v1995
    %v2273 = vunpack.c.h.b16 %v1995
    %v2274 = vunpack.c.l.b16 %v1996
    %v2275 = vunpack.c.h.b16 %v1996
    %v2276 = vunpack.c.l.b16 %v1997
    %v2277 = vunpack.c.h.b16 %v1997
    %v2278 = vunpack.c.l.b16 %v1998
    %v2279 = vunpack.c.h.b16 %v1998
    %v2280 = vunpack.c.l.b16 %v1999
    %v2281 = vunpack.c.h.b16 %v1999
    %v2282 = vunpack.c.l.b16 %v2000
    %v2283 = vunpack.c.h.b16 %v2000
    %v2284 = vunpack.c.l.b16 %v2001
    %v2285 = vunpack.c.h.b16 %v2001
    %v2286 = vunpack.c.l.b16 %v2002
    %v2287 = vunpack.c.h.b16 %v2002
    %v2288 = vunpack.c.l.b16 %v2003
    %v2289 = vunpack.c.h.b16 %v2003
    %v2290 = vunpack.c.l.b16 %v2004
    %v2291 = vunpack.c.h.b16 %v2004
    %v2292 = vunpack.c.l.b16 %v2005
    %v2293 = vunpack.c.h.b16 %v2005
    %v2294 = vunpack.c.l.b16 %v2006
    %v2295 = vunpack.c.h.b16 %v2006
    %v2296 = vunpack.c.l.b16 %v2007
    %v2297 = vunpack.c.h.b16 %v2007
    %v2298 = vunpack.c.l.b16 %v2008
    %v2299 = vunpack.c.h.b16 %v2008
    %v2300 = vunpack.c.l.b16 %v2009
    %v2301 = vunpack.c.h.b16 %v2009
    %v2302 = vunpack.c.l.b16 %v2010
    %v2303 = vunpack.c.h.b16 %v2010
    %v2304 = vunpack.c.l.b16 %v2011
    %v2305 = vunpack.c.h.b16 %v2011
    %v2306 = vunpack.c.l.b16 %v2012
    %v2307 = vunpack.c.h.b16 %v2012
    %v2308 = vunpack.c.l.b16 %v2013
    %v2309 = vunpack.c.h.b16 %v2013
    %v2310 = vunpack.c.l.b16 %v2014
    %v2311 = vunpack.c.h.b16 %v2014
    %v2312 = vunpack.c.l.b16 %v2015
    %v2313 = vunpack.c.h.b16 %v2015
    %v2314 = vunpack.c.l.b16 %v2016
    %v2315 = vunpack.c.h.b16 %v2016
    %v2316 = vunpack.c.l.b16 %v2017
    %v2317 = vunpack.c.h.b16 %v2017
    %v2318 = vunpack.c.l.b16 %v2018
    %v2319 = vunpack.c.h.b16 %v2018
    %v2320 = vunpack.c.l.b16 %v2019
    %v2321 = vunpack.c.h.b16 %v2019
    %v2322 = vunpack.c.l.b16 %v2020
    %v2323 = vunpack.c.h.b16 %v2020
    %v2324 = vunpack.c.l.b16 %v2021
    %v2325 = vunpack.c.h.b16 %v2021
    %v2326 = vunpack.c.l.b16 %v2022
    %v2327 = vunpack.c.h.b16 %v2022
    %v2328 = vunpack.c.l.b16 %v2023
    %v2329 = vunpack.c.h.b16 %v2023
    %v2330 = vunpack.c.l.b16 %v2024
    %v2331 = vunpack.c.h.b16 %v2024
    %v2332 = vunpack.c.l.b16 %v2025
    %v2333 = vunpack.c.h.b16 %v2025
    %v2334 = vunpack.c.l.b16 %v2026
    %v2335 = vunpack.c.h.b16 %v2026
    %v2336 = vunpack.c.l.b16 %v2027
    %v2337 = vunpack.c.h.b16 %v2027
    %v2338 = vunpack.c.l.b16 %v2028
    %v2339 = vunpack.c.h.b16 %v2028
    %v2340 = vunpack.c.l.b16 %v2029
    %v2341 = vunpack.c.h.b16 %v2029
    %v2342 = vunpack.c.l.b16 %v2030
    %v2343 = vunpack.c.h.b16 %v2030
    %v2344 = vunpack.c.l.b16 %v2031
    %v2345 = vunpack.c.h.b16 %v2031
    %v2346 = vunpack.c.l.b16 %v2032
    %v2347 = vunpack.c.h.b16 %v2032
    %v2348 = vunpack.c.l.b16 %v2033
    %v2349 = vunpack.c.h.b16 %v2033
    %v2350 = vunpack.c.l.b16 %v2034
    %v2351 = vunpack.c.h.b16 %v2034
    %v2352 = vunpack.c.l.b16 %v2035
    %v2353 = vunpack.c.h.b16 %v2035
    %v2354 = vunpack.c.l.b16 %v2036
    %v2355 = vunpack.c.h.b16 %v2036
    %v2356 = vunpack.c.l.b16 %v2037
    %v2357 = vunpack.c.h.b16 %v2037
    %v2358 = vunpack.c.l.b16 %v2038
    %v2359 = vunpack.c.h.b16 %v2038
    %v2360 = vunpack.c.l.b16 %v2039
    %v2361 = vunpack.c.h.b16 %v2039
    %v2362 = vunpack.c.l.b16 %v2040
    %v2363 = vunpack.c.h.b16 %v2040
    %v2364 = vunpack.c.l.b16 %v2041
    %v2365 = vunpack.c.h.b16 %v2041
    %v2366 = vunpack.c.l.b16 %v2042
    %v2367 = vunpack.c.h.b16 %v2042
    %v2368 = vunpack.c.l.b16 %v2043
    %v2369 = vunpack.c.h.b16 %v2043
    %v2370 = vunpack.c.l.b16 %v2044
    %v2371 = vunpack.c.h.b16 %v2044
    %v2372 = vunpack.c.l.b16 %v2045
    %v2373 = vunpack.c.h.b16 %v2045
    %v2374 = vunpack.c.l.b16 %v2046
    %v2375 = vunpack.c.h.b16 %v2046
    %v2376 = vunpack.c.l.b16 %v2047
    %v2377 = vunpack.c.h.b16 %v2047
    %v2378 = vunpack.c.l.b16 %v2048
    %v2379 = vunpack.c.h.b16 %v2048
    %v2380 = vunpack.c.l.b16 %v2049
    %v2381 = vunpack.c.h.b16 %v2049
    %v2382 = vunpack.c.l.b16 %v2050
    %v2383 = vunpack.c.h.b16 %v2050
    %v2384 = vunpack.c.l.b16 %v2051
    %v2385 = vunpack.c.h.b16 %v2051
    %v2386 = vunpack.c.l.b16 %v2052
    %v2387 = vunpack.c.h.b16 %v2052
    %v2388 = vunpack.c.l.b16 %v2053
    %v2389 = vunpack.c.h.b16 %v2053
    %v2390 = vunpack.c.l.b16 %v2054
    %v2391 = vunpack.c.h.b16 %v2054
    %v2392 = vunpack.c.l.b16 %v2055
    %v2393 = vunpack.c.h.b16 %v2055
    %v2394 = vunpack.c.l.b16 %v2056
    %v2395 = vunpack.c.h.b16 %v2056
    %v2396 = vunpack.c.l.b16 %v2057
    %v2397 = vunpack.c.h.b16 %v2057
    %v2398 = vunpack.c.l.b16 %v2058
    %v2399 = vunpack.c.h.b16 %v2058
    %v2400 = vunpack.c.l.b16 %v2059
    %v2401 = vunpack.c.h.b16 %v2059
    %v2402 = vunpack.c.l.b16 %v2060
    %v2403 = vunpack.c.h.b16 %v2060
    %v2404 = vunpack.c.l.b16 %v2061
    %v2405 = vunpack.c.h.b16 %v2061
    %v2406 = vunpack.c.l.b16 %v2062
    %v2407 = vunpack.c.h.b16 %v2062
    %v2408 = vunpack.c.l.b16 %v2063
    %v2409 = vunpack.c.h.b16 %v2063
    %v2410 = vunpack.c.l.b16 %v2064
    %v2411 = vunpack.c.h.b16 %v2064
    %v2412 = vunpack.c.l.b16 %v2065
    %v2413 = vunpack.c.h.b16 %v2065
    %v2414 = vunpack.c.l.b16 %v2066
    %v2415 = vunpack.c.h.b16 %v2066
    %v2416 = vunpack.c.l.b16 %v2067
    %v2417 = vunpack.c.h.b16 %v2067
    %v2418 = vunpack.c.l.b16 %v2068
    %v2419 = vunpack.c.h.b16 %v2068
    %v2420 = vunpack.c.l.b16 %v2069
    %v2421 = vunpack.c.h.b16 %v2069
    %v2422 = vunpack.c.l.b16 %v2070
    %v2423 = vunpack.c.h.b16 %v2070
    %v2424 = vunpack.c.l.b16 %v2071
    %v2425 = vunpack.c.h.b16 %v2071
    %v2426 = vunpack.c.l.b16 %v2072
    %v2427 = vunpack.c.h.b16 %v2072
    %v2428 = vunpack.c.l.b16 %v2073
    %v2429 = vunpack.c.h.b16 %v2073
    %v2430 = vunpack.c.l.b16 %v2074
    %v2431 = vunpack.c.h.b16 %v2074
    %v2432 = vunpack.c.l.b16 %v2075
    %v2433 = vunpack.c.h.b16 %v2075
    %v2434 = vunpack.c.l.b16 %v2076
    %v2435 = vunpack.c.h.b16 %v2076
    %v2436 = vunpack.c.l.b16 %v2077
    %v2437 = vunpack.c.h.b16 %v2077
    %v2438 = vunpack.c.l.b16 %v2078
    %v2439 = vunpack.c.h.b16 %v2078
    %v2440 = vunpack.c.l.b16 %v2079
    %v2441 = vunpack.c.h.b16 %v2079
    %v2442 = vunpack.c.l.b16 %v2080
    %v2443 = vunpack.c.h.b16 %v2080
    %v2444 = vunpack.c.l.b16 %v2081
    %v2445 = vunpack.c.h.b16 %v2081
    %v2446 = vunpack.c.l.b16 %v2082
    %v2447 = vunpack.c.h.b16 %v2082
    %v2448 = vunpack.c.l.b16 %v2083
    %v2449 = vunpack.c.h.b16 %v2083
    %v2450 = vunpack.c.l.b16 %v2084
    %v2451 = vunpack.c.h.b16 %v2084
    %v2452 = vunpack.c.l.b16 %v2085
    %v2453 = vunpack.c.h.b16 %v2085
    %v2454 = vunpack.c.l.b16 %v2086
    %v2455 = vunpack.c.h.b16 %v2086
    %v2456 = vunpack.c.l.b16 %v2087
    %v2457 = vunpack.c.h.b16 %v2087
    %v2458 = vunpack.c.l.b16 %v2088
    %v2459 = vunpack.c.h.b16 %v2088
    %v2460 = vunpack.c.l.b16 %v2089
    %v2461 = vunpack.c.h.b16 %v2089
    %v2462 = vunpack.c.l.b16 %v2090
    %v2463 = vunpack.c.h.b16 %v2090
    %v2464 = vunpack.c.l.b16 %v2091
    %v2465 = vunpack.c.h.b16 %v2091
    %v2466 = vunpack.c.l.b16 %v2092
    %v2467 = vunpack.c.h.b16 %v2092
    %v2468 = vunpack.c.l.b16 %v2093
    %v2469 = vunpack.c.h.b16 %v2093
    %v2470 = vunpack.c.l.b16 %v2094
    %v2471 = vunpack.c.h.b16 %v2094
    %v2472 = vunpack.c.l.b16 %v2095
    %v2473 = vunpack.c.h.b16 %v2095
    %v2474 = vunpack.c.l.b16 %v2096
    %v2475 = vunpack.c.h.b16 %v2096
    %v2476 = vunpack.c.l.b16 %v2097
    %v2477 = vunpack.c.h.b16 %v2097
    %v2478 = vunpack.c.l.b16 %v2098
    %v2479 = vunpack.c.h.b16 %v2098
    %v2480 = vunpack.c.l.b16 %v2099
    %v2481 = vunpack.c.h.b16 %v2099
    %v2482 = vunpack.c.l.b16 %v2100
    %v2483 = vunpack.c.h.b16 %v2100
    %v2484 = vunpack.c.l.b16 %v2101
    %v2485 = vunpack.c.h.b16 %v2101
    %v2486 = vpack.c.b16 %v2238, %v2230
    %v2487 = vpack.c.b16 %v2239, %v2231
    %v2488 = vpack.c.b16 %v2240, %v2232
    %v2489 = vpack.c.b16 %v2241, %v2233
    %v2490 = vpack.c.b16 %v2242, %v2234
    %v2491 = vpack.c.b16 %v2243, %v2235
    %v2492 = vpack.c.b16 %v2244, %v2236
    %v2493 = vpack.c.b16 %v2245, %v2237
    %v2494 = vpack.c.b16 %v2254, %v2246
    %v2495 = vpack.c.b16 %v2255, %v2247
    %v2496 = vpack.c.b16 %v2256, %v2248
    %v2497 = vpack.c.b16 %v2257, %v2249
    %v2498 = vpack.c.b16 %v2258, %v2250
    %v2499 = vpack.c.b16 %v2259, %v2251
    %v2500 = vpack.c.b16 %v2260, %v2252
    %v2501 = vpack.c.b16 %v2261, %v2253
    %v2502 = vpack.c.b16 %v2270, %v2262
    %v2503 = vpack.c.b16 %v2271, %v2263
    %v2504 = vpack.c.b16 %v2272, %v2264
    %v2505 = vpack.c.b16 %v2273, %v2265
    %v2506 = vpack.c.b16 %v2274, %v2266
    %v2507 = vpack.c.b16 %v2275, %v2267
    %v2508 = vpack.c.b16 %v2276, %v2268
    %v2509 = vpack.c.b16 %v2277, %v2269
    %v2510 = vpack.c.b16 %v2286, %v2278
    %v2511 = vpack.c.b16 %v2287, %v2279
    %v2512 = vpack.c.b16 %v2288, %v2280
    %v2513 = vpack.c.b16 %v2289, %v2281
    %v2514 = vpack.c.b16 %v2290, %v2282
    %v2515 = vpack.c.b16 %v2291, %v2283
    %v2516 = vpack.c.b16 %v2292, %v2284
    %v2517 = vpack.c.b16 %v2293, %v2285
    %v2518 = vpack.c.b16 %v2302, %v2294
    %v2519 = vpack.c.b16 %v2303, %v2295
    %v2520 = vpack.c.b16 %v2304, %v2296
    %v2521 = vpack.c.b16 %v2305, %v2297
    %v2522 = vpack.c.b16 %v2306, %v2298
    %v2523 = vpack.c.b16 %v2307, %v2299
    %v2524 = vpack.c.b16 %v2308, %v2300
    %v2525 = vpack.c.b16 %v2309, %v2301
    %v2526 = vpack.c.b16 %v2318, %v2310
    %v2527 = vpack.c.b16 %v2319, %v2311
    %v2528 = vpack.c.b16 %v2320, %v2312
    %v2529 = vpack.c.b16 %v2321, %v2313
    %v2530 = vpack.c.b16 %v2322, %v2314
    %v2531 = vpack.c.b16 %v2323, %v2315
    %v2532 = vpack.c.b16 %v2324, %v2316
    %v2533 = vpack.c.b16 %v2325, %v2317
    %v2534 = vpack.c.b16 %v2334, %v2326
    %v2535 = vpack.c.b16 %v2335, %v2327
    %v2536 = vpack.c.b16 %v2336, %v2328
    %v2537 = vpack.c.b16 %v2337, %v2329
    %v2538 = vpack.c.b16 %v2338, %v2330
    %v2539 = vpack.c.b16 %v2339, %v2331
    %v2540 = vpack.c.b16 %v2340, %v2332
    %v2541 = vpack.c.b16 %v2341, %v2333
    %v2542 = vpack.c.b16 %v2350, %v2342
    %v2543 = vpack.c.b16 %v2351, %v2343
    %v2544 = vpack.c.b16 %v2352, %v2344
    %v2545 = vpack.c.b16 %v2353, %v2345
    %v2546 = vpack.c.b16 %v2354, %v2346
    %v2547 = vpack.c.b16 %v2355, %v2347
    %v2548 = vpack.c.b16 %v2356, %v2348
    %v2549 = vpack.c.b16 %v2357, %v2349
    %v2550 = vpack.c.b16 %v2366, %v2358
    %v2551 = vpack.c.b16 %v2367, %v2359
    %v2552 = vpack.c.b16 %v2368, %v2360
    %v2553 = vpack.c.b16 %v2369, %v2361
    %v2554 = vpack.c.b16 %v2370, %v2362
    %v2555 = vpack.c.b16 %v2371, %v2363
    %v2556 = vpack.c.b16 %v2372, %v2364
    %v2557 = vpack.c.b16 %v2373, %v2365
    %v2558 = vpack.c.b16 %v2382, %v2374
    %v2559 = vpack.c.b16 %v2383, %v2375
    %v2560 = vpack.c.b16 %v2384, %v2376
    %v2561 = vpack.c.b16 %v2385, %v2377
    %v2562 = vpack.c.b16 %v2386, %v2378
    %v2563 = vpack.c.b16 %v2387, %v2379
    %v2564 = vpack.c.b16 %v2388, %v2380
    %v2565 = vpack.c.b16 %v2389, %v2381
    %v2566 = vpack.c.b16 %v2398, %v2390
    %v2567 = vpack.c.b16 %v2399, %v2391
    %v2568 = vpack.c.b16 %v2400, %v2392
    %v2569 = vpack.c.b16 %v2401, %v2393
    %v2570 = vpack.c.b16 %v2402, %v2394
    %v2571 = vpack.c.b16 %v2403, %v2395
    %v2572 = vpack.c.b16 %v2404, %v2396
    %v2573 = vpack.c.b16 %v2405, %v2397
    %v2574 = vpack.c.b16 %v2414, %v2406
    %v2575 = vpack.c.b16 %v2415, %v2407
    %v2576 = vpack.c.b16 %v2416, %v2408
    %v2577 = vpack.c.b16 %v2417, %v2409
    %v2578 = vpack.c.b16 %v2418, %v2410
    %v2579 = vpack.c.b16 %v2419, %v2411
    %v2580 = vpack.c.b16 %v2420, %v2412
    %v2581 = vpack.c.b16 %v2421, %v2413
    %v2582 = vpack.c.b16 %v2430, %v2422
    %v2583 = vpack.c.b16 %v2431, %v2423
    %v2584 = vpack.c.b16 %v2432, %v2424
    %v2585 = vpack.c.b16 %v2433, %v2425
    %v2586 = vpack.c.b16 %v2434, %v2426
    %v2587 = vpack.c.b16 %v2435, %v2427
    %v2588 = vpack.c.b16 %v2436, %v2428
    %v2589 = vpack.c.b16 %v2437, %v2429
    %v2590 = vpack.c.b16 %v2446, %v2438
    %v2591 = vpack.c.b16 %v2447, %v2439
    %v2592 = vpack.c.b16 %v2448, %v2440
    %v2593 = vpack.c.b16 %v2449, %v2441
    %v2594 = vpack.c.b16 %v2450, %v2442
    %v2595 = vpack.c.b16 %v2451, %v2443
    %v2596 = vpack.c.b16 %v2452, %v2444
    %v2597 = vpack.c.b16 %v2453, %v2445
    %v2598 = vpack.c.b16 %v2462, %v2454
    %v2599 = vpack.c.b16 %v2463, %v2455
    %v2600 = vpack.c.b16 %v2464, %v2456
    %v2601 = vpack.c.b16 %v2465, %v2457
    %v2602 = vpack.c.b16 %v2466, %v2458
    %v2603 = vpack.c.b16 %v2467, %v2459
    %v2604 = vpack.c.b16 %v2468, %v2460
    %v2605 = vpack.c.b16 %v2469, %v2461
    %v2606 = vpack.c.b16 %v2478, %v2470
    %v2607 = vpack.c.b16 %v2479, %v2471
    %v2608 = vpack.c.b16 %v2480, %v2472
    %v2609 = vpack.c.b16 %v2481, %v2473
    %v2610 = vpack.c.b16 %v2482, %v2474
    %v2611 = vpack.c.b16 %v2483, %v2475
    %v2612 = vpack.c.b16 %v2484, %v2476
    %v2613 = vpack.c.b16 %v2485, %v2477
    %2742 = vmatprep.subr.bf16.mxu0 %v2543
    %2743 = vmatpush1.bf16.msra.mxu0 %v2542
    %2744 = vmatprep.subr.bf16.mxu0 %v2535
    %2745 = vmatpush1.bf16.msra.mxu0 %v2534
    %2746 = vmatprep.subr.bf16.mxu0 %v2527
    %2747 = vmatpush1.bf16.msra.mxu0 %v2526
    %2748 = vmatprep.subr.bf16.mxu0 %v2519
    %2749 = vmatpush1.bf16.msra.mxu0 %v2518
    %2750 = vmatprep.subr.bf16.mxu0 %v2511
    %2751 = vmatpush1.bf16.msra.mxu0 %v2510
    %2752 = vmatprep.subr.bf16.mxu0 %v2503
    %2753 = vmatpush1.bf16.msra.mxu0 %v2502
    %2754 = vmatprep.subr.bf16.mxu0 %v2495
    %2755 = vmatpush1.bf16.msra.mxu0 %v2494
    %2756 = vmatprep.subr.bf16.mxu0 %v2487
    %2757 = vmatpush1.bf16.msra.mxu0 %v2486
    %2758 = vmatprep.subr.bf16.mxu0 %v2607
    %2759 = vmatpush2.bf16.msra.mxu0 %v2606
    %2760 = vmatprep.subr.bf16.mxu0 %v2599
    %2761 = vmatpush2.bf16.msra.mxu0 %v2598
    %2762 = vmatprep.subr.bf16.mxu0 %v2591
    %2763 = vmatpush2.bf16.msra.mxu0 %v2590
    %2764 = vmatprep.subr.bf16.mxu0 %v2583
    %2765 = vmatpush2.bf16.msra.mxu0 %v2582
    %2766 = vmatprep.subr.bf16.mxu0 %v2575
    %2767 = vmatpush2.bf16.msra.mxu0 %v2574
    %2768 = vmatprep.subr.bf16.mxu0 %v2567
    %2769 = vmatpush2.bf16.msra.mxu0 %v2566
    %2770 = vmatprep.subr.bf16.mxu0 %v2559
    %2771 = vmatpush2.bf16.msra.mxu0 %v2558
    %2772 = vmatprep.subr.bf16.mxu0 %v2551
    %2773 = vmatpush2.bf16.msra.mxu0 %v2550
    %2774 = vmatprep.mubr.bf16.mxu0 %v1973
    %2775 = vmatmul.mubr.bf16.gmra.mxu0 %v1972
    %v2776 = vpop.f32.mrf.mxu0
    %v2777 = vadd.f32 0.0, %v2776
    %v2778 = vpop.f32.mrf.mxu0
    %v2779 = vadd.f32 0.0, %v2778
    %v2780 = vpop.f32.mrf.mxu0
    %v2781 = vpop.f32.mrf.mxu0
    %2782 = vdwg.mxu0
    %2783 = vmatprep.subr.bf16.mxu0 %v2545
    %2784 = vmatpush1.bf16.msra.mxu0 %v2544
    %2785 = vmatprep.subr.bf16.mxu0 %v2537
    %2786 = vmatpush1.bf16.msra.mxu0 %v2536
    %2787 = vmatprep.subr.bf16.mxu0 %v2529
    %2788 = vmatpush1.bf16.msra.mxu0 %v2528
    %2789 = vmatprep.subr.bf16.mxu0 %v2521
    %2790 = vmatpush1.bf16.msra.mxu0 %v2520
    %2791 = vmatprep.subr.bf16.mxu0 %v2513
    %2792 = vmatpush1.bf16.msra.mxu0 %v2512
    %2793 = vmatprep.subr.bf16.mxu0 %v2505
    %2794 = vmatpush1.bf16.msra.mxu0 %v2504
    %2795 = vmatprep.subr.bf16.mxu0 %v2497
    %2796 = vmatpush1.bf16.msra.mxu0 %v2496
    %2797 = vmatprep.subr.bf16.mxu0 %v2489
    %2798 = vmatpush1.bf16.msra.mxu0 %v2488
    %2799 = vmatprep.subr.bf16.mxu0 %v2609
    %2800 = vmatpush2.bf16.msra.mxu0 %v2608
    %2801 = vmatprep.subr.bf16.mxu0 %v2601
    %2802 = vmatpush2.bf16.msra.mxu0 %v2600
    %2803 = vmatprep.subr.bf16.mxu0 %v2593
    %2804 = vmatpush2.bf16.msra.mxu0 %v2592
    %2805 = vmatprep.subr.bf16.mxu0 %v2585
    %2806 = vmatpush2.bf16.msra.mxu0 %v2584
    %2807 = vmatprep.subr.bf16.mxu0 %v2577
    %2808 = vmatpush2.bf16.msra.mxu0 %v2576
    %2809 = vmatprep.subr.bf16.mxu0 %v2569
    %2810 = vmatpush2.bf16.msra.mxu0 %v2568
    %2811 = vmatprep.subr.bf16.mxu0 %v2561
    %2812 = vmatpush2.bf16.msra.mxu0 %v2560
    %2813 = vmatprep.subr.bf16.mxu0 %v2553
    %2814 = vmatpush2.bf16.msra.mxu0 %v2552
    %2815 = vmatprep.mubr.bf16.mxu0 %v1973
    %2816 = vmatmul.mubr.bf16.gmra.mxu0 %v1972
    %v2817 = vpop.f32.mrf.mxu0
    %v2818 = vadd.f32 0.0, %v2817
    %v2819 = vpop.f32.mrf.mxu0
    %v2820 = vadd.f32 0.0, %v2819
    %v2821 = vpop.f32.mrf.mxu0
    %v2822 = vpop.f32.mrf.mxu0
    %2823 = vdwg.mxu0
    %2824 = vmatprep.subr.bf16.mxu0 %v2547
    %2825 = vmatpush1.bf16.msra.mxu0 %v2546
    %2826 = vmatprep.subr.bf16.mxu0 %v2539
    %2827 = vmatpush1.bf16.msra.mxu0 %v2538
    %2828 = vmatprep.subr.bf16.mxu0 %v2531
    %2829 = vmatpush1.bf16.msra.mxu0 %v2530
    %2830 = vmatprep.subr.bf16.mxu0 %v2523
    %2831 = vmatpush1.bf16.msra.mxu0 %v2522
    %2832 = vmatprep.subr.bf16.mxu0 %v2515
    %2833 = vmatpush1.bf16.msra.mxu0 %v2514
    %2834 = vmatprep.subr.bf16.mxu0 %v2507
    %2835 = vmatpush1.bf16.msra.mxu0 %v2506
    %2836 = vmatprep.subr.bf16.mxu0 %v2499
    %2837 = vmatpush1.bf16.msra.mxu0 %v2498
    %2838 = vmatprep.subr.bf16.mxu0 %v2491
    %2839 = vmatpush1.bf16.msra.mxu0 %v2490
    %2840 = vmatprep.subr.bf16.mxu0 %v2611
    %2841 = vmatpush2.bf16.msra.mxu0 %v2610
    %2842 = vmatprep.subr.bf16.mxu0 %v2603
    %2843 = vmatpush2.bf16.msra.mxu0 %v2602
    %2844 = vmatprep.subr.bf16.mxu0 %v2595
    %2845 = vmatpush2.bf16.msra.mxu0 %v2594
    %2846 = vmatprep.subr.bf16.mxu0 %v2587
    %2847 = vmatpush2.bf16.msra.mxu0 %v2586
    %2848 = vmatprep.subr.bf16.mxu0 %v2579
    %2849 = vmatpush2.bf16.msra.mxu0 %v2578
    %2850 = vmatprep.subr.bf16.mxu0 %v2571
    %2851 = vmatpush2.bf16.msra.mxu0 %v2570
    %2852 = vmatprep.subr.bf16.mxu0 %v2563
    %2853 = vmatpush2.bf16.msra.mxu0 %v2562
    %2854 = vmatprep.subr.bf16.mxu0 %v2555
    %2855 = vmatpush2.bf16.msra.mxu0 %v2554
    %2856 = vmatprep.mubr.bf16.mxu0 %v1973
    %2857 = vmatmul.mubr.bf16.gmra.mxu0 %v1972
    %v2858 = vpop.f32.mrf.mxu0
    %v2859 = vadd.f32 0.0, %v2858
    %v2860 = vpop.f32.mrf.mxu0
    %v2861 = vadd.f32 0.0, %v2860
    %v2862 = vpop.f32.mrf.mxu0
    %v2863 = vpop.f32.mrf.mxu0
    %2864 = vdwg.mxu0
    %2865 = vmatprep.subr.bf16.mxu0 %v2549
    %2866 = vmatpush1.bf16.msra.mxu0 %v2548
    %2867 = vmatprep.subr.bf16.mxu0 %v2541
    %2868 = vmatpush1.bf16.msra.mxu0 %v2540
    %2869 = vmatprep.subr.bf16.mxu0 %v2533
    %2870 = vmatpush1.bf16.msra.mxu0 %v2532
    %2871 = vmatprep.subr.bf16.mxu0 %v2525
    %2872 = vmatpush1.bf16.msra.mxu0 %v2524
    %2873 = vmatprep.subr.bf16.mxu0 %v2517
    %2874 = vmatpush1.bf16.msra.mxu0 %v2516
    %2875 = vmatprep.subr.bf16.mxu0 %v2509
    %2876 = vmatpush1.bf16.msra.mxu0 %v2508
    %2877 = vmatprep.subr.bf16.mxu0 %v2501
    %2878 = vmatpush1.bf16.msra.mxu0 %v2500
    %2879 = vmatprep.subr.bf16.mxu0 %v2493
    %2880 = vmatpush1.bf16.msra.mxu0 %v2492
    %2881 = vmatprep.subr.bf16.mxu0 %v2613
    %2882 = vmatpush2.bf16.msra.mxu0 %v2612
    %2883 = vmatprep.subr.bf16.mxu0 %v2605
    %2884 = vmatpush2.bf16.msra.mxu0 %v2604
    %2885 = vmatprep.subr.bf16.mxu0 %v2597
    %2886 = vmatpush2.bf16.msra.mxu0 %v2596
    %2887 = vmatprep.subr.bf16.mxu0 %v2589
    %2888 = vmatpush2.bf16.msra.mxu0 %v2588
    %2889 = vmatprep.subr.bf16.mxu0 %v2581
    %2890 = vmatpush2.bf16.msra.mxu0 %v2580
    %2891 = vmatprep.subr.bf16.mxu0 %v2573
    %2892 = vmatpush2.bf16.msra.mxu0 %v2572
    %2893 = vmatprep.subr.bf16.mxu0 %v2565
    %2894 = vmatpush2.bf16.msra.mxu0 %v2564
    %2895 = vmatprep.subr.bf16.mxu0 %v2557
    %2896 = vmatpush2.bf16.msra.mxu0 %v2556
    %2897 = vmatprep.mubr.bf16.mxu0 %v1973
    %2898 = vmatmul.mubr.bf16.gmra.mxu0 %v1972
    %v2899 = vpop.f32.mrf.mxu0
    %v2900 = vadd.f32 0.0, %v2899
    %v2901 = vpop.f32.mrf.mxu0
    %v2902 = vadd.f32 0.0, %v2901
    %v2903 = vpop.f32.mrf.mxu0
    %v2904 = vpop.f32.mrf.mxu0
    %2905 = vdwg.mxu0
    %v2906 = vadd.f32 %v1962, %v2777
    %v2907 = vadd.f32 %v1963, %v2779
    %v2908 = vadd.f32 %v1964, %v2818
    %v2909 = vadd.f32 %v1965, %v2820
    %v2910 = vadd.f32 %v1966, %v2859
    %v2911 = vadd.f32 %v1967, %v2861
    %v2912 = vadd.f32 %v1968, %v2900
    %v2913 = vadd.f32 %v1969, %v2902
    %v2914 = vxor.u32 %v2906, 2147483648
    %v2915 = vxor.u32 %v2907, 2147483648
    %v2916 = vxor.u32 %v2908, 2147483648
    %v2917 = vxor.u32 %v2909, 2147483648
    %v2918 = vxor.u32 %v2910, 2147483648
    %v2919 = vxor.u32 %v2911, 2147483648
    %v2920 = vmul.f32 %v2914, 1.442695
    %v2921 = vpow.pop %v2920
    %v2922 = vmul.f32 %v2915, 1.442695
    %v2923 = vpow.pop %v2922
    %v2924 = vmul.f32 %v2916, 1.442695
    %v2925 = vpow.pop %v2924
    %v2926 = vmul.f32 %v2917, 1.442695
    %v2927 = vpow.pop %v2926
    %v2928 = vmul.f32 %v2918, 1.442695
    %v2929 = vpow.pop %v2928
    %v2930 = vmul.f32 %v2919, 1.442695
    %v2931 = vpow.pop %v2930
    %v2932 = vadd.f32 %v2921, 1.0
    %v2933 = vadd.f32 %v2923, 1.0
    %v2934 = vadd.f32 %v2925, 1.0
    %v2935 = vadd.f32 %v2927, 1.0
    %v2936 = vadd.f32 %v2929, 1.0
    %v2937 = vadd.f32 %v2931, 1.0
    %v2938 = vrcp.pop %v2932
    %v2939 = vmul.f32 1.0, %v2938
    %v2940 = vrcp.pop %v2933
    %v2941 = vmul.f32 1.0, %v2940
    %v2942 = vrcp.pop %v2934
    %v2943 = vmul.f32 1.0, %v2942
    %v2944 = vrcp.pop %v2935
    %v2945 = vmul.f32 1.0, %v2944
    %v2946 = vrcp.pop %v2936
    %v2947 = vmul.f32 1.0, %v2946
    %v2948 = vrcp.pop %v2937
    %v2949 = vmul.f32 1.0, %v2948
    %v2950 = vtanh.pop %v2912
    %v2951 = vtanh.pop %v2913
    %v2952 = vld [vmem:[#allocation4] sm:$0xff]
    %v2953 = vld [vmem:[#allocation4 + $0x8] sm:$0xff]
    %v2954 = vmul.f32 %v2943, %v2952
    %v2955 = vmul.f32 %v2945, %v2953
    %v2956 = vmul.f32 %v2939, %v2950
    %v2957 = vmul.f32 %v2941, %v2951
    %v2958 = vadd.f32 %v2954, %v2956
    %v2959 = vadd.f32 %v2955, %v2957
    %2960 = vst [vmem:[#allocation4] sm:$0xff] %v2958
    %2961 = vst [vmem:[#allocation4 + $0x8] sm:$0xff] %v2959
    %v2962 = vtanh.pop %v2958
    %v2963 = vtanh.pop %v2959
    %v2964 = vmul.f32 %v2947, %v2962
    %v2965 = vmul.f32 %v2949, %v2963
    %2966 = vst [vmem:[#allocation3] sm:$0xff] %v2964
    %2967 = vst [vmem:[#allocation3 + $0x8] sm:$0xff] %v2965
    %s2968 = smul.u32 2, 8
    %s2969 = smul.addr %s2968, 4
    %s2970 = scalar_lea.vmem [#allocation2], %s2969
    %v2971 = vld [vmem:[%s2970] sm:$0xff]
    %v2972 = vld [vmem:[%s2970 + $0x8] sm:$0xff]
    %v2973 = vld [vmem:[%s2970 + $0x10] sm:$0xff]
    %v2974 = vld [vmem:[%s2970 + $0x18] sm:$0xff]
    %v2975 = vunpack.c.l.bf16 %v2971
    %v2976 = vunpack.c.h.bf16 %v2971
    %v2977 = vunpack.c.l.bf16 %v2972
    %v2978 = vunpack.c.h.bf16 %v2972
    %v2979 = vunpack.c.l.bf16 %v2973
    %v2980 = vunpack.c.h.bf16 %v2973
    %v2981 = vunpack.c.l.bf16 %v2974
    %v2982 = vunpack.c.h.bf16 %v2974
    %v2983 = vld [vmem:[#allocation3] sm:$0xff]
    %v2984 = vld [vmem:[#allocation3 + $0x8] sm:$0xff]
    %v2985 = vpack.c.bf16 %v2983, %v2983
    %v2986 = vpack.c.bf16 %v2984, %v2984
    %v2987 = vld [vmem:[#allocation11] sm:$0xff]
    %v2988 = vld [vmem:[#allocation11 + $0x8] sm:$0xff]
    %v2989 = vld [vmem:[#allocation11 + $0x10] sm:$0xff]
    %v2990 = vld [vmem:[#allocation11 + $0x18] sm:$0xff]
    %v2991 = vld [vmem:[#allocation11 + $0x20] sm:$0xff]
    %v2992 = vld [vmem:[#allocation11 + $0x28] sm:$0xff]
    %v2993 = vld [vmem:[#allocation11 + $0x30] sm:$0xff]
    %v2994 = vld [vmem:[#allocation11 + $0x38] sm:$0xff]
    %v2995 = vld [vmem:[#allocation11 + $0x40] sm:$0xff]
    %v2996 = vld [vmem:[#allocation11 + $0x48] sm:$0xff]
    %v2997 = vld [vmem:[#allocation11 + $0x50] sm:$0xff]
    %v2998 = vld [vmem:[#allocation11 + $0x58] sm:$0xff]
    %v2999 = vld [vmem:[#allocation11 + $0x60] sm:$0xff]
    %v3000 = vld [vmem:[#allocation11 + $0x68] sm:$0xff]
    %v3001 = vld [vmem:[#allocation11 + $0x70] sm:$0xff]
    %v3002 = vld [vmem:[#allocation11 + $0x78] sm:$0xff]
    %v3003 = vld [vmem:[#allocation11 + $0x80] sm:$0xff]
    %v3004 = vld [vmem:[#allocation11 + $0x88] sm:$0xff]
    %v3005 = vld [vmem:[#allocation11 + $0x90] sm:$0xff]
    %v3006 = vld [vmem:[#allocation11 + $0x98] sm:$0xff]
    %v3007 = vld [vmem:[#allocation11 + $0xa0] sm:$0xff]
    %v3008 = vld [vmem:[#allocation11 + $0xa8] sm:$0xff]
    %v3009 = vld [vmem:[#allocation11 + $0xb0] sm:$0xff]
    %v3010 = vld [vmem:[#allocation11 + $0xb8] sm:$0xff]
    %v3011 = vld [vmem:[#allocation11 + $0xc0] sm:$0xff]
    %v3012 = vld [vmem:[#allocation11 + $0xc8] sm:$0xff]
    %v3013 = vld [vmem:[#allocation11 + $0xd0] sm:$0xff]
    %v3014 = vld [vmem:[#allocation11 + $0xd8] sm:$0xff]
    %v3015 = vld [vmem:[#allocation11 + $0xe0] sm:$0xff]
    %v3016 = vld [vmem:[#allocation11 + $0xe8] sm:$0xff]
    %v3017 = vld [vmem:[#allocation11 + $0xf0] sm:$0xff]
    %v3018 = vld [vmem:[#allocation11 + $0xf8] sm:$0xff]
    %v3019 = vld [vmem:[#allocation11 + $0x100] sm:$0xff]
    %v3020 = vld [vmem:[#allocation11 + $0x108] sm:$0xff]
    %v3021 = vld [vmem:[#allocation11 + $0x110] sm:$0xff]
    %v3022 = vld [vmem:[#allocation11 + $0x118] sm:$0xff]
    %v3023 = vld [vmem:[#allocation11 + $0x120] sm:$0xff]
    %v3024 = vld [vmem:[#allocation11 + $0x128] sm:$0xff]
    %v3025 = vld [vmem:[#allocation11 + $0x130] sm:$0xff]
    %v3026 = vld [vmem:[#allocation11 + $0x138] sm:$0xff]
    %v3027 = vld [vmem:[#allocation11 + $0x140] sm:$0xff]
    %v3028 = vld [vmem:[#allocation11 + $0x148] sm:$0xff]
    %v3029 = vld [vmem:[#allocation11 + $0x150] sm:$0xff]
    %v3030 = vld [vmem:[#allocation11 + $0x158] sm:$0xff]
    %v3031 = vld [vmem:[#allocation11 + $0x160] sm:$0xff]
    %v3032 = vld [vmem:[#allocation11 + $0x168] sm:$0xff]
    %v3033 = vld [vmem:[#allocation11 + $0x170] sm:$0xff]
    %v3034 = vld [vmem:[#allocation11 + $0x178] sm:$0xff]
    %v3035 = vld [vmem:[#allocation11 + $0x180] sm:$0xff]
    %v3036 = vld [vmem:[#allocation11 + $0x188] sm:$0xff]
    %v3037 = vld [vmem:[#allocation11 + $0x190] sm:$0xff]
    %v3038 = vld [vmem:[#allocation11 + $0x198] sm:$0xff]
    %v3039 = vld [vmem:[#allocation11 + $0x1a0] sm:$0xff]
    %v3040 = vld [vmem:[#allocation11 + $0x1a8] sm:$0xff]
    %v3041 = vld [vmem:[#allocation11 + $0x1b0] sm:$0xff]
    %v3042 = vld [vmem:[#allocation11 + $0x1b8] sm:$0xff]
    %v3043 = vld [vmem:[#allocation11 + $0x1c0] sm:$0xff]
    %v3044 = vld [vmem:[#allocation11 + $0x1c8] sm:$0xff]
    %v3045 = vld [vmem:[#allocation11 + $0x1d0] sm:$0xff]
    %v3046 = vld [vmem:[#allocation11 + $0x1d8] sm:$0xff]
    %v3047 = vld [vmem:[#allocation11 + $0x1e0] sm:$0xff]
    %v3048 = vld [vmem:[#allocation11 + $0x1e8] sm:$0xff]
    %v3049 = vld [vmem:[#allocation11 + $0x1f0] sm:$0xff]
    %v3050 = vld [vmem:[#allocation11 + $0x1f8] sm:$0xff]
    %v3051 = vld [vmem:[#allocation11 + $0x200] sm:$0xff]
    %v3052 = vld [vmem:[#allocation11 + $0x208] sm:$0xff]
    %v3053 = vld [vmem:[#allocation11 + $0x210] sm:$0xff]
    %v3054 = vld [vmem:[#allocation11 + $0x218] sm:$0xff]
    %v3055 = vld [vmem:[#allocation11 + $0x220] sm:$0xff]
    %v3056 = vld [vmem:[#allocation11 + $0x228] sm:$0xff]
    %v3057 = vld [vmem:[#allocation11 + $0x230] sm:$0xff]
    %v3058 = vld [vmem:[#allocation11 + $0x238] sm:$0xff]
    %v3059 = vld [vmem:[#allocation11 + $0x240] sm:$0xff]
    %v3060 = vld [vmem:[#allocation11 + $0x248] sm:$0xff]
    %v3061 = vld [vmem:[#allocation11 + $0x250] sm:$0xff]
    %v3062 = vld [vmem:[#allocation11 + $0x258] sm:$0xff]
    %v3063 = vld [vmem:[#allocation11 + $0x260] sm:$0xff]
    %v3064 = vld [vmem:[#allocation11 + $0x268] sm:$0xff]
    %v3065 = vld [vmem:[#allocation11 + $0x270] sm:$0xff]
    %v3066 = vld [vmem:[#allocation11 + $0x278] sm:$0xff]
    %v3067 = vld [vmem:[#allocation11 + $0x280] sm:$0xff]
    %v3068 = vld [vmem:[#allocation11 + $0x288] sm:$0xff]
    %v3069 = vld [vmem:[#allocation11 + $0x290] sm:$0xff]
    %v3070 = vld [vmem:[#allocation11 + $0x298] sm:$0xff]
    %v3071 = vld [vmem:[#allocation11 + $0x2a0] sm:$0xff]
    %v3072 = vld [vmem:[#allocation11 + $0x2a8] sm:$0xff]
    %v3073 = vld [vmem:[#allocation11 + $0x2b0] sm:$0xff]
    %v3074 = vld [vmem:[#allocation11 + $0x2b8] sm:$0xff]
    %v3075 = vld [vmem:[#allocation11 + $0x2c0] sm:$0xff]
    %v3076 = vld [vmem:[#allocation11 + $0x2c8] sm:$0xff]
    %v3077 = vld [vmem:[#allocation11 + $0x2d0] sm:$0xff]
    %v3078 = vld [vmem:[#allocation11 + $0x2d8] sm:$0xff]
    %v3079 = vld [vmem:[#allocation11 + $0x2e0] sm:$0xff]
    %v3080 = vld [vmem:[#allocation11 + $0x2e8] sm:$0xff]
    %v3081 = vld [vmem:[#allocation11 + $0x2f0] sm:$0xff]
    %v3082 = vld [vmem:[#allocation11 + $0x2f8] sm:$0xff]
    %v3083 = vld [vmem:[#allocation11 + $0x300] sm:$0xff]
    %v3084 = vld [vmem:[#allocation11 + $0x308] sm:$0xff]
    %v3085 = vld [vmem:[#allocation11 + $0x310] sm:$0xff]
    %v3086 = vld [vmem:[#allocation11 + $0x318] sm:$0xff]
    %v3087 = vld [vmem:[#allocation11 + $0x320] sm:$0xff]
    %v3088 = vld [vmem:[#allocation11 + $0x328] sm:$0xff]
    %v3089 = vld [vmem:[#allocation11 + $0x330] sm:$0xff]
    %v3090 = vld [vmem:[#allocation11 + $0x338] sm:$0xff]
    %v3091 = vld [vmem:[#allocation11 + $0x340] sm:$0xff]
    %v3092 = vld [vmem:[#allocation11 + $0x348] sm:$0xff]
    %v3093 = vld [vmem:[#allocation11 + $0x350] sm:$0xff]
    %v3094 = vld [vmem:[#allocation11 + $0x358] sm:$0xff]
    %v3095 = vld [vmem:[#allocation11 + $0x360] sm:$0xff]
    %v3096 = vld [vmem:[#allocation11 + $0x368] sm:$0xff]
    %v3097 = vld [vmem:[#allocation11 + $0x370] sm:$0xff]
    %v3098 = vld [vmem:[#allocation11 + $0x378] sm:$0xff]
    %v3099 = vld [vmem:[#allocation11 + $0x380] sm:$0xff]
    %v3100 = vld [vmem:[#allocation11 + $0x388] sm:$0xff]
    %v3101 = vld [vmem:[#allocation11 + $0x390] sm:$0xff]
    %v3102 = vld [vmem:[#allocation11 + $0x398] sm:$0xff]
    %v3103 = vld [vmem:[#allocation11 + $0x3a0] sm:$0xff]
    %v3104 = vld [vmem:[#allocation11 + $0x3a8] sm:$0xff]
    %v3105 = vld [vmem:[#allocation11 + $0x3b0] sm:$0xff]
    %v3106 = vld [vmem:[#allocation11 + $0x3b8] sm:$0xff]
    %v3107 = vld [vmem:[#allocation11 + $0x3c0] sm:$0xff]
    %v3108 = vld [vmem:[#allocation11 + $0x3c8] sm:$0xff]
    %v3109 = vld [vmem:[#allocation11 + $0x3d0] sm:$0xff]
    %v3110 = vld [vmem:[#allocation11 + $0x3d8] sm:$0xff]
    %v3111 = vld [vmem:[#allocation11 + $0x3e0] sm:$0xff]
    %v3112 = vld [vmem:[#allocation11 + $0x3e8] sm:$0xff]
    %v3113 = vld [vmem:[#allocation11 + $0x3f0] sm:$0xff]
    %v3114 = vld [vmem:[#allocation11 + $0x3f8] sm:$0xff]
    %v3243 = vunpack.c.l.b16 %v2987
    %v3244 = vunpack.c.h.b16 %v2987
    %v3245 = vunpack.c.l.b16 %v2988
    %v3246 = vunpack.c.h.b16 %v2988
    %v3247 = vunpack.c.l.b16 %v2989
    %v3248 = vunpack.c.h.b16 %v2989
    %v3249 = vunpack.c.l.b16 %v2990
    %v3250 = vunpack.c.h.b16 %v2990
    %v3251 = vunpack.c.l.b16 %v2991
    %v3252 = vunpack.c.h.b16 %v2991
    %v3253 = vunpack.c.l.b16 %v2992
    %v3254 = vunpack.c.h.b16 %v2992
    %v3255 = vunpack.c.l.b16 %v2993
    %v3256 = vunpack.c.h.b16 %v2993
    %v3257 = vunpack.c.l.b16 %v2994
    %v3258 = vunpack.c.h.b16 %v2994
    %v3259 = vunpack.c.l.b16 %v2995
    %v3260 = vunpack.c.h.b16 %v2995
    %v3261 = vunpack.c.l.b16 %v2996
    %v3262 = vunpack.c.h.b16 %v2996
    %v3263 = vunpack.c.l.b16 %v2997
    %v3264 = vunpack.c.h.b16 %v2997
    %v3265 = vunpack.c.l.b16 %v2998
    %v3266 = vunpack.c.h.b16 %v2998
    %v3267 = vunpack.c.l.b16 %v2999
    %v3268 = vunpack.c.h.b16 %v2999
    %v3269 = vunpack.c.l.b16 %v3000
    %v3270 = vunpack.c.h.b16 %v3000
    %v3271 = vunpack.c.l.b16 %v3001
    %v3272 = vunpack.c.h.b16 %v3001
    %v3273 = vunpack.c.l.b16 %v3002
    %v3274 = vunpack.c.h.b16 %v3002
    %v3275 = vunpack.c.l.b16 %v3003
    %v3276 = vunpack.c.h.b16 %v3003
    %v3277 = vunpack.c.l.b16 %v3004
    %v3278 = vunpack.c.h.b16 %v3004
    %v3279 = vunpack.c.l.b16 %v3005
    %v3280 = vunpack.c.h.b16 %v3005
    %v3281 = vunpack.c.l.b16 %v3006
    %v3282 = vunpack.c.h.b16 %v3006
    %v3283 = vunpack.c.l.b16 %v3007
    %v3284 = vunpack.c.h.b16 %v3007
    %v3285 = vunpack.c.l.b16 %v3008
    %v3286 = vunpack.c.h.b16 %v3008
    %v3287 = vunpack.c.l.b16 %v3009
    %v3288 = vunpack.c.h.b16 %v3009
    %v3289 = vunpack.c.l.b16 %v3010
    %v3290 = vunpack.c.h.b16 %v3010
    %v3291 = vunpack.c.l.b16 %v3011
    %v3292 = vunpack.c.h.b16 %v3011
    %v3293 = vunpack.c.l.b16 %v3012
    %v3294 = vunpack.c.h.b16 %v3012
    %v3295 = vunpack.c.l.b16 %v3013
    %v3296 = vunpack.c.h.b16 %v3013
    %v3297 = vunpack.c.l.b16 %v3014
    %v3298 = vunpack.c.h.b16 %v3014
    %v3299 = vunpack.c.l.b16 %v3015
    %v3300 = vunpack.c.h.b16 %v3015
    %v3301 = vunpack.c.l.b16 %v3016
    %v3302 = vunpack.c.h.b16 %v3016
    %v3303 = vunpack.c.l.b16 %v3017
    %v3304 = vunpack.c.h.b16 %v3017
    %v3305 = vunpack.c.l.b16 %v3018
    %v3306 = vunpack.c.h.b16 %v3018
    %v3307 = vunpack.c.l.b16 %v3019
    %v3308 = vunpack.c.h.b16 %v3019
    %v3309 = vunpack.c.l.b16 %v3020
    %v3310 = vunpack.c.h.b16 %v3020
    %v3311 = vunpack.c.l.b16 %v3021
    %v3312 = vunpack.c.h.b16 %v3021
    %v3313 = vunpack.c.l.b16 %v3022
    %v3314 = vunpack.c.h.b16 %v3022
    %v3315 = vunpack.c.l.b16 %v3023
    %v3316 = vunpack.c.h.b16 %v3023
    %v3317 = vunpack.c.l.b16 %v3024
    %v3318 = vunpack.c.h.b16 %v3024
    %v3319 = vunpack.c.l.b16 %v3025
    %v3320 = vunpack.c.h.b16 %v3025
    %v3321 = vunpack.c.l.b16 %v3026
    %v3322 = vunpack.c.h.b16 %v3026
    %v3323 = vunpack.c.l.b16 %v3027
    %v3324 = vunpack.c.h.b16 %v3027
    %v3325 = vunpack.c.l.b16 %v3028
    %v3326 = vunpack.c.h.b16 %v3028
    %v3327 = vunpack.c.l.b16 %v3029
    %v3328 = vunpack.c.h.b16 %v3029
    %v3329 = vunpack.c.l.b16 %v3030
    %v3330 = vunpack.c.h.b16 %v3030
    %v3331 = vunpack.c.l.b16 %v3031
    %v3332 = vunpack.c.h.b16 %v3031
    %v3333 = vunpack.c.l.b16 %v3032
    %v3334 = vunpack.c.h.b16 %v3032
    %v3335 = vunpack.c.l.b16 %v3033
    %v3336 = vunpack.c.h.b16 %v3033
    %v3337 = vunpack.c.l.b16 %v3034
    %v3338 = vunpack.c.h.b16 %v3034
    %v3339 = vunpack.c.l.b16 %v3035
    %v3340 = vunpack.c.h.b16 %v3035
    %v3341 = vunpack.c.l.b16 %v3036
    %v3342 = vunpack.c.h.b16 %v3036
    %v3343 = vunpack.c.l.b16 %v3037
    %v3344 = vunpack.c.h.b16 %v3037
    %v3345 = vunpack.c.l.b16 %v3038
    %v3346 = vunpack.c.h.b16 %v3038
    %v3347 = vunpack.c.l.b16 %v3039
    %v3348 = vunpack.c.h.b16 %v3039
    %v3349 = vunpack.c.l.b16 %v3040
    %v3350 = vunpack.c.h.b16 %v3040
    %v3351 = vunpack.c.l.b16 %v3041
    %v3352 = vunpack.c.h.b16 %v3041
    %v3353 = vunpack.c.l.b16 %v3042
    %v3354 = vunpack.c.h.b16 %v3042
    %v3355 = vunpack.c.l.b16 %v3043
    %v3356 = vunpack.c.h.b16 %v3043
    %v3357 = vunpack.c.l.b16 %v3044
    %v3358 = vunpack.c.h.b16 %v3044
    %v3359 = vunpack.c.l.b16 %v3045
    %v3360 = vunpack.c.h.b16 %v3045
    %v3361 = vunpack.c.l.b16 %v3046
    %v3362 = vunpack.c.h.b16 %v3046
    %v3363 = vunpack.c.l.b16 %v3047
    %v3364 = vunpack.c.h.b16 %v3047
    %v3365 = vunpack.c.l.b16 %v3048
    %v3366 = vunpack.c.h.b16 %v3048
    %v3367 = vunpack.c.l.b16 %v3049
    %v3368 = vunpack.c.h.b16 %v3049
    %v3369 = vunpack.c.l.b16 %v3050
    %v3370 = vunpack.c.h.b16 %v3050
    %v3371 = vunpack.c.l.b16 %v3051
    %v3372 = vunpack.c.h.b16 %v3051
    %v3373 = vunpack.c.l.b16 %v3052
    %v3374 = vunpack.c.h.b16 %v3052
    %v3375 = vunpack.c.l.b16 %v3053
    %v3376 = vunpack.c.h.b16 %v3053
    %v3377 = vunpack.c.l.b16 %v3054
    %v3378 = vunpack.c.h.b16 %v3054
    %v3379 = vunpack.c.l.b16 %v3055
    %v3380 = vunpack.c.h.b16 %v3055
    %v3381 = vunpack.c.l.b16 %v3056
    %v3382 = vunpack.c.h.b16 %v3056
    %v3383 = vunpack.c.l.b16 %v3057
    %v3384 = vunpack.c.h.b16 %v3057
    %v3385 = vunpack.c.l.b16 %v3058
    %v3386 = vunpack.c.h.b16 %v3058
    %v3387 = vunpack.c.l.b16 %v3059
    %v3388 = vunpack.c.h.b16 %v3059
    %v3389 = vunpack.c.l.b16 %v3060
    %v3390 = vunpack.c.h.b16 %v3060
    %v3391 = vunpack.c.l.b16 %v3061
    %v3392 = vunpack.c.h.b16 %v3061
    %v3393 = vunpack.c.l.b16 %v3062
    %v3394 = vunpack.c.h.b16 %v3062
    %v3395 = vunpack.c.l.b16 %v3063
    %v3396 = vunpack.c.h.b16 %v3063
    %v3397 = vunpack.c.l.b16 %v3064
    %v3398 = vunpack.c.h.b16 %v3064
    %v3399 = vunpack.c.l.b16 %v3065
    %v3400 = vunpack.c.h.b16 %v3065
    %v3401 = vunpack.c.l.b16 %v3066
    %v3402 = vunpack.c.h.b16 %v3066
    %v3403 = vunpack.c.l.b16 %v3067
    %v3404 = vunpack.c.h.b16 %v3067
    %v3405 = vunpack.c.l.b16 %v3068
    %v3406 = vunpack.c.h.b16 %v3068
    %v3407 = vunpack.c.l.b16 %v3069
    %v3408 = vunpack.c.h.b16 %v3069
    %v3409 = vunpack.c.l.b16 %v3070
    %v3410 = vunpack.c.h.b16 %v3070
    %v3411 = vunpack.c.l.b16 %v3071
    %v3412 = vunpack.c.h.b16 %v3071
    %v3413 = vunpack.c.l.b16 %v3072
    %v3414 = vunpack.c.h.b16 %v3072
    %v3415 = vunpack.c.l.b16 %v3073
    %v3416 = vunpack.c.h.b16 %v3073
    %v3417 = vunpack.c.l.b16 %v3074
    %v3418 = vunpack.c.h.b16 %v3074
    %v3419 = vunpack.c.l.b16 %v3075
    %v3420 = vunpack.c.h.b16 %v3075
    %v3421 = vunpack.c.l.b16 %v3076
    %v3422 = vunpack.c.h.b16 %v3076
    %v3423 = vunpack.c.l.b16 %v3077
    %v3424 = vunpack.c.h.b16 %v3077
    %v3425 = vunpack.c.l.b16 %v3078
    %v3426 = vunpack.c.h.b16 %v3078
    %v3427 = vunpack.c.l.b16 %v3079
    %v3428 = vunpack.c.h.b16 %v3079
    %v3429 = vunpack.c.l.b16 %v3080
    %v3430 = vunpack.c.h.b16 %v3080
    %v3431 = vunpack.c.l.b16 %v3081
    %v3432 = vunpack.c.h.b16 %v3081
    %v3433 = vunpack.c.l.b16 %v3082
    %v3434 = vunpack.c.h.b16 %v3082
    %v3435 = vunpack.c.l.b16 %v3083
    %v3436 = vunpack.c.h.b16 %v3083
    %v3437 = vunpack.c.l.b16 %v3084
    %v3438 = vunpack.c.h.b16 %v3084
    %v3439 = vunpack.c.l.b16 %v3085
    %v3440 = vunpack.c.h.b16 %v3085
    %v3441 = vunpack.c.l.b16 %v3086
    %v3442 = vunpack.c.h.b16 %v3086
    %v3443 = vunpack.c.l.b16 %v3087
    %v3444 = vunpack.c.h.b16 %v3087
    %v3445 = vunpack.c.l.b16 %v3088
    %v3446 = vunpack.c.h.b16 %v3088
    %v3447 = vunpack.c.l.b16 %v3089
    %v3448 = vunpack.c.h.b16 %v3089
    %v3449 = vunpack.c.l.b16 %v3090
    %v3450 = vunpack.c.h.b16 %v3090
    %v3451 = vunpack.c.l.b16 %v3091
    %v3452 = vunpack.c.h.b16 %v3091
    %v3453 = vunpack.c.l.b16 %v3092
    %v3454 = vunpack.c.h.b16 %v3092
    %v3455 = vunpack.c.l.b16 %v3093
    %v3456 = vunpack.c.h.b16 %v3093
    %v3457 = vunpack.c.l.b16 %v3094
    %v3458 = vunpack.c.h.b16 %v3094
    %v3459 = vunpack.c.l.b16 %v3095
    %v3460 = vunpack.c.h.b16 %v3095
    %v3461 = vunpack.c.l.b16 %v3096
    %v3462 = vunpack.c.h.b16 %v3096
    %v3463 = vunpack.c.l.b16 %v3097
    %v3464 = vunpack.c.h.b16 %v3097
    %v3465 = vunpack.c.l.b16 %v3098
    %v3466 = vunpack.c.h.b16 %v3098
    %v3467 = vunpack.c.l.b16 %v3099
    %v3468 = vunpack.c.h.b16 %v3099
    %v3469 = vunpack.c.l.b16 %v3100
    %v3470 = vunpack.c.h.b16 %v3100
    %v3471 = vunpack.c.l.b16 %v3101
    %v3472 = vunpack.c.h.b16 %v3101
    %v3473 = vunpack.c.l.b16 %v3102
    %v3474 = vunpack.c.h.b16 %v3102
    %v3475 = vunpack.c.l.b16 %v3103
    %v3476 = vunpack.c.h.b16 %v3103
    %v3477 = vunpack.c.l.b16 %v3104
    %v3478 = vunpack.c.h.b16 %v3104
    %v3479 = vunpack.c.l.b16 %v3105
    %v3480 = vunpack.c.h.b16 %v3105
    %v3481 = vunpack.c.l.b16 %v3106
    %v3482 = vunpack.c.h.b16 %v3106
    %v3483 = vunpack.c.l.b16 %v3107
    %v3484 = vunpack.c.h.b16 %v3107
    %v3485 = vunpack.c.l.b16 %v3108
    %v3486 = vunpack.c.h.b16 %v3108
    %v3487 = vunpack.c.l.b16 %v3109
    %v3488 = vunpack.c.h.b16 %v3109
    %v3489 = vunpack.c.l.b16 %v3110
    %v3490 = vunpack.c.h.b16 %v3110
    %v3491 = vunpack.c.l.b16 %v3111
    %v3492 = vunpack.c.h.b16 %v3111
    %v3493 = vunpack.c.l.b16 %v3112
    %v3494 = vunpack.c.h.b16 %v3112
    %v3495 = vunpack.c.l.b16 %v3113
    %v3496 = vunpack.c.h.b16 %v3113
    %v3497 = vunpack.c.l.b16 %v3114
    %v3498 = vunpack.c.h.b16 %v3114
    %v3499 = vpack.c.b16 %v3251, %v3243
    %v3500 = vpack.c.b16 %v3252, %v3244
    %v3501 = vpack.c.b16 %v3253, %v3245
    %v3502 = vpack.c.b16 %v3254, %v3246
    %v3503 = vpack.c.b16 %v3255, %v3247
    %v3504 = vpack.c.b16 %v3256, %v3248
    %v3505 = vpack.c.b16 %v3257, %v3249
    %v3506 = vpack.c.b16 %v3258, %v3250
    %v3507 = vpack.c.b16 %v3267, %v3259
    %v3508 = vpack.c.b16 %v3268, %v3260
    %v3509 = vpack.c.b16 %v3269, %v3261
    %v3510 = vpack.c.b16 %v3270, %v3262
    %v3511 = vpack.c.b16 %v3271, %v3263
    %v3512 = vpack.c.b16 %v3272, %v3264
    %v3513 = vpack.c.b16 %v3273, %v3265
    %v3514 = vpack.c.b16 %v3274, %v3266
    %v3515 = vpack.c.b16 %v3283, %v3275
    %v3516 = vpack.c.b16 %v3284, %v3276
    %v3517 = vpack.c.b16 %v3285, %v3277
    %v3518 = vpack.c.b16 %v3286, %v3278
    %v3519 = vpack.c.b16 %v3287, %v3279
    %v3520 = vpack.c.b16 %v3288, %v3280
    %v3521 = vpack.c.b16 %v3289, %v3281
    %v3522 = vpack.c.b16 %v3290, %v3282
    %v3523 = vpack.c.b16 %v3299, %v3291
    %v3524 = vpack.c.b16 %v3300, %v3292
    %v3525 = vpack.c.b16 %v3301, %v3293
    %v3526 = vpack.c.b16 %v3302, %v3294
    %v3527 = vpack.c.b16 %v3303, %v3295
    %v3528 = vpack.c.b16 %v3304, %v3296
    %v3529 = vpack.c.b16 %v3305, %v3297
    %v3530 = vpack.c.b16 %v3306, %v3298
    %v3531 = vpack.c.b16 %v3315, %v3307
    %v3532 = vpack.c.b16 %v3316, %v3308
    %v3533 = vpack.c.b16 %v3317, %v3309
    %v3534 = vpack.c.b16 %v3318, %v3310
    %v3535 = vpack.c.b16 %v3319, %v3311
    %v3536 = vpack.c.b16 %v3320, %v3312
    %v3537 = vpack.c.b16 %v3321, %v3313
    %v3538 = vpack.c.b16 %v3322, %v3314
    %v3539 = vpack.c.b16 %v3331, %v3323
    %v3540 = vpack.c.b16 %v3332, %v3324
    %v3541 = vpack.c.b16 %v3333, %v3325
    %v3542 = vpack.c.b16 %v3334, %v3326
    %v3543 = vpack.c.b16 %v3335, %v3327
    %v3544 = vpack.c.b16 %v3336, %v3328
    %v3545 = vpack.c.b16 %v3337, %v3329
    %v3546 = vpack.c.b16 %v3338, %v3330
    %v3547 = vpack.c.b16 %v3347, %v3339
    %v3548 = vpack.c.b16 %v3348, %v3340
    %v3549 = vpack.c.b16 %v3349, %v3341
    %v3550 = vpack.c.b16 %v3350, %v3342
    %v3551 = vpack.c.b16 %v3351, %v3343
    %v3552 = vpack.c.b16 %v3352, %v3344
    %v3553 = vpack.c.b16 %v3353, %v3345
    %v3554 = vpack.c.b16 %v3354, %v3346
    %v3555 = vpack.c.b16 %v3363, %v3355
    %v3556 = vpack.c.b16 %v3364, %v3356
    %v3557 = vpack.c.b16 %v3365, %v3357
    %v3558 = vpack.c.b16 %v3366, %v3358
    %v3559 = vpack.c.b16 %v3367, %v3359
    %v3560 = vpack.c.b16 %v3368, %v3360
    %v3561 = vpack.c.b16 %v3369, %v3361
    %v3562 = vpack.c.b16 %v3370, %v3362
    %v3563 = vpack.c.b16 %v3379, %v3371
    %v3564 = vpack.c.b16 %v3380, %v3372
    %v3565 = vpack.c.b16 %v3381, %v3373
    %v3566 = vpack.c.b16 %v3382, %v3374
    %v3567 = vpack.c.b16 %v3383, %v3375
    %v3568 = vpack.c.b16 %v3384, %v3376
    %v3569 = vpack.c.b16 %v3385, %v3377
    %v3570 = vpack.c.b16 %v3386, %v3378
    %v3571 = vpack.c.b16 %v3395, %v3387
    %v3572 = vpack.c.b16 %v3396, %v3388
    %v3573 = vpack.c.b16 %v3397, %v3389
    %v3574 = vpack.c.b16 %v3398, %v3390
    %v3575 = vpack.c.b16 %v3399, %v3391
    %v3576 = vpack.c.b16 %v3400, %v3392
    %v3577 = vpack.c.b16 %v3401, %v3393
    %v3578 = vpack.c.b16 %v3402, %v3394
    %v3579 = vpack.c.b16 %v3411, %v3403
    %v3580 = vpack.c.b16 %v3412, %v3404
    %v3581 = vpack.c.b16 %v3413, %v3405
    %v3582 = vpack.c.b16 %v3414, %v3406
    %v3583 = vpack.c.b16 %v3415, %v3407
    %v3584 = vpack.c.b16 %v3416, %v3408
    %v3585 = vpack.c.b16 %v3417, %v3409
    %v3586 = vpack.c.b16 %v3418, %v3410
    %v3587 = vpack.c.b16 %v3427, %v3419
    %v3588 = vpack.c.b16 %v3428, %v3420
    %v3589 = vpack.c.b16 %v3429, %v3421
    %v3590 = vpack.c.b16 %v3430, %v3422
    %v3591 = vpack.c.b16 %v3431, %v3423
    %v3592 = vpack.c.b16 %v3432, %v3424
    %v3593 = vpack.c.b16 %v3433, %v3425
    %v3594 = vpack.c.b16 %v3434, %v3426
    %v3595 = vpack.c.b16 %v3443, %v3435
    %v3596 = vpack.c.b16 %v3444, %v3436
    %v3597 = vpack.c.b16 %v3445, %v3437
    %v3598 = vpack.c.b16 %v3446, %v3438
    %v3599 = vpack.c.b16 %v3447, %v3439
    %v3600 = vpack.c.b16 %v3448, %v3440
    %v3601 = vpack.c.b16 %v3449, %v3441
    %v3602 = vpack.c.b16 %v3450, %v3442
    %v3603 = vpack.c.b16 %v3459, %v3451
    %v3604 = vpack.c.b16 %v3460, %v3452
    %v3605 = vpack.c.b16 %v3461, %v3453
    %v3606 = vpack.c.b16 %v3462, %v3454
    %v3607 = vpack.c.b16 %v3463, %v3455
    %v3608 = vpack.c.b16 %v3464, %v3456
    %v3609 = vpack.c.b16 %v3465, %v3457
    %v3610 = vpack.c.b16 %v3466, %v3458
    %v3611 = vpack.c.b16 %v3475, %v3467
    %v3612 = vpack.c.b16 %v3476, %v3468
    %v3613 = vpack.c.b16 %v3477, %v3469
    %v3614 = vpack.c.b16 %v3478, %v3470
    %v3615 = vpack.c.b16 %v3479, %v3471
    %v3616 = vpack.c.b16 %v3480, %v3472
    %v3617 = vpack.c.b16 %v3481, %v3473
    %v3618 = vpack.c.b16 %v3482, %v3474
    %v3619 = vpack.c.b16 %v3491, %v3483
    %v3620 = vpack.c.b16 %v3492, %v3484
    %v3621 = vpack.c.b16 %v3493, %v3485
    %v3622 = vpack.c.b16 %v3494, %v3486
    %v3623 = vpack.c.b16 %v3495, %v3487
    %v3624 = vpack.c.b16 %v3496, %v3488
    %v3625 = vpack.c.b16 %v3497, %v3489
    %v3626 = vpack.c.b16 %v3498, %v3490
    %3755 = vmatprep.subr.bf16.mxu0 %v3556
    %3756 = vmatpush1.bf16.msra.mxu0 %v3555
    %3757 = vmatprep.subr.bf16.mxu0 %v3548
    %3758 = vmatpush1.bf16.msra.mxu0 %v3547
    %3759 = vmatprep.subr.bf16.mxu0 %v3540
    %3760 = vmatpush1.bf16.msra.mxu0 %v3539
    %3761 = vmatprep.subr.bf16.mxu0 %v3532
    %3762 = vmatpush1.bf16.msra.mxu0 %v3531
    %3763 = vmatprep.subr.bf16.mxu0 %v3524
    %3764 = vmatpush1.bf16.msra.mxu0 %v3523
    %3765 = vmatprep.subr.bf16.mxu0 %v3516
    %3766 = vmatpush1.bf16.msra.mxu0 %v3515
    %3767 = vmatprep.subr.bf16.mxu0 %v3508
    %3768 = vmatpush1.bf16.msra.mxu0 %v3507
    %3769 = vmatprep.subr.bf16.mxu0 %v3500
    %3770 = vmatpush1.bf16.msra.mxu0 %v3499
    %3771 = vmatprep.subr.bf16.mxu0 %v3620
    %3772 = vmatpush2.bf16.msra.mxu0 %v3619
    %3773 = vmatprep.subr.bf16.mxu0 %v3612
    %3774 = vmatpush2.bf16.msra.mxu0 %v3611
    %3775 = vmatprep.subr.bf16.mxu0 %v3604
    %3776 = vmatpush2.bf16.msra.mxu0 %v3603
    %3777 = vmatprep.subr.bf16.mxu0 %v3596
    %3778 = vmatpush2.bf16.msra.mxu0 %v3595
    %3779 = vmatprep.subr.bf16.mxu0 %v3588
    %3780 = vmatpush2.bf16.msra.mxu0 %v3587
    %3781 = vmatprep.subr.bf16.mxu0 %v3580
    %3782 = vmatpush2.bf16.msra.mxu0 %v3579
    %3783 = vmatprep.subr.bf16.mxu0 %v3572
    %3784 = vmatpush2.bf16.msra.mxu0 %v3571
    %3785 = vmatprep.subr.bf16.mxu0 %v3564
    %3786 = vmatpush2.bf16.msra.mxu0 %v3563
    %3787 = vmatprep.mubr.bf16.mxu0 %v2986
    %3788 = vmatmul.mubr.bf16.gmra.mxu0 %v2985
    %v3789 = vpop.f32.mrf.mxu0
    %v3790 = vadd.f32 0.0, %v3789
    %v3791 = vpop.f32.mrf.mxu0
    %v3792 = vadd.f32 0.0, %v3791
    %v3793 = vpop.f32.mrf.mxu0
    %v3794 = vpop.f32.mrf.mxu0
    %3795 = vdwg.mxu0
    %3796 = vmatprep.subr.bf16.mxu0 %v3558
    %3797 = vmatpush1.bf16.msra.mxu0 %v3557
    %3798 = vmatprep.subr.bf16.mxu0 %v3550
    %3799 = vmatpush1.bf16.msra.mxu0 %v3549
    %3800 = vmatprep.subr.bf16.mxu0 %v3542
    %3801 = vmatpush1.bf16.msra.mxu0 %v3541
    %3802 = vmatprep.subr.bf16.mxu0 %v3534
    %3803 = vmatpush1.bf16.msra.mxu0 %v3533
    %3804 = vmatprep.subr.bf16.mxu0 %v3526
    %3805 = vmatpush1.bf16.msra.mxu0 %v3525
    %3806 = vmatprep.subr.bf16.mxu0 %v3518
    %3807 = vmatpush1.bf16.msra.mxu0 %v3517
    %3808 = vmatprep.subr.bf16.mxu0 %v3510
    %3809 = vmatpush1.bf16.msra.mxu0 %v3509
    %3810 = vmatprep.subr.bf16.mxu0 %v3502
    %3811 = vmatpush1.bf16.msra.mxu0 %v3501
    %3812 = vmatprep.subr.bf16.mxu0 %v3622
    %3813 = vmatpush2.bf16.msra.mxu0 %v3621
    %3814 = vmatprep.subr.bf16.mxu0 %v3614
    %3815 = vmatpush2.bf16.msra.mxu0 %v3613
    %3816 = vmatprep.subr.bf16.mxu0 %v3606
    %3817 = vmatpush2.bf16.msra.mxu0 %v3605
    %3818 = vmatprep.subr.bf16.mxu0 %v3598
    %3819 = vmatpush2.bf16.msra.mxu0 %v3597
    %3820 = vmatprep.subr.bf16.mxu0 %v3590
    %3821 = vmatpush2.bf16.msra.mxu0 %v3589
    %3822 = vmatprep.subr.bf16.mxu0 %v3582
    %3823 = vmatpush2.bf16.msra.mxu0 %v3581
    %3824 = vmatprep.subr.bf16.mxu0 %v3574
    %3825 = vmatpush2.bf16.msra.mxu0 %v3573
    %3826 = vmatprep.subr.bf16.mxu0 %v3566
    %3827 = vmatpush2.bf16.msra.mxu0 %v3565
    %3828 = vmatprep.mubr.bf16.mxu0 %v2986
    %3829 = vmatmul.mubr.bf16.gmra.mxu0 %v2985
    %v3830 = vpop.f32.mrf.mxu0
    %v3831 = vadd.f32 0.0, %v3830
    %v3832 = vpop.f32.mrf.mxu0
    %v3833 = vadd.f32 0.0, %v3832
    %v3834 = vpop.f32.mrf.mxu0
    %v3835 = vpop.f32.mrf.mxu0
    %3836 = vdwg.mxu0
    %3837 = vmatprep.subr.bf16.mxu0 %v3560
    %3838 = vmatpush1.bf16.msra.mxu0 %v3559
    %3839 = vmatprep.subr.bf16.mxu0 %v3552
    %3840 = vmatpush1.bf16.msra.mxu0 %v3551
    %3841 = vmatprep.subr.bf16.mxu0 %v3544
    %3842 = vmatpush1.bf16.msra.mxu0 %v3543
    %3843 = vmatprep.subr.bf16.mxu0 %v3536
    %3844 = vmatpush1.bf16.msra.mxu0 %v3535
    %3845 = vmatprep.subr.bf16.mxu0 %v3528
    %3846 = vmatpush1.bf16.msra.mxu0 %v3527
    %3847 = vmatprep.subr.bf16.mxu0 %v3520
    %3848 = vmatpush1.bf16.msra.mxu0 %v3519
    %3849 = vmatprep.subr.bf16.mxu0 %v3512
    %3850 = vmatpush1.bf16.msra.mxu0 %v3511
    %3851 = vmatprep.subr.bf16.mxu0 %v3504
    %3852 = vmatpush1.bf16.msra.mxu0 %v3503
    %3853 = vmatprep.subr.bf16.mxu0 %v3624
    %3854 = vmatpush2.bf16.msra.mxu0 %v3623
    %3855 = vmatprep.subr.bf16.mxu0 %v3616
    %3856 = vmatpush2.bf16.msra.mxu0 %v3615
    %3857 = vmatprep.subr.bf16.mxu0 %v3608
    %3858 = vmatpush2.bf16.msra.mxu0 %v3607
    %3859 = vmatprep.subr.bf16.mxu0 %v3600
    %3860 = vmatpush2.bf16.msra.mxu0 %v3599
    %3861 = vmatprep.subr.bf16.mxu0 %v3592
    %3862 = vmatpush2.bf16.msra.mxu0 %v3591
    %3863 = vmatprep.subr.bf16.mxu0 %v3584
    %3864 = vmatpush2.bf16.msra.mxu0 %v3583
    %3865 = vmatprep.subr.bf16.mxu0 %v3576
    %3866 = vmatpush2.bf16.msra.mxu0 %v3575
    %3867 = vmatprep.subr.bf16.mxu0 %v3568
    %3868 = vmatpush2.bf16.msra.mxu0 %v3567
    %3869 = vmatprep.mubr.bf16.mxu0 %v2986
    %3870 = vmatmul.mubr.bf16.gmra.mxu0 %v2985
    %v3871 = vpop.f32.mrf.mxu0
    %v3872 = vadd.f32 0.0, %v3871
    %v3873 = vpop.f32.mrf.mxu0
    %v3874 = vadd.f32 0.0, %v3873
    %v3875 = vpop.f32.mrf.mxu0
    %v3876 = vpop.f32.mrf.mxu0
    %3877 = vdwg.mxu0
    %3878 = vmatprep.subr.bf16.mxu0 %v3562
    %3879 = vmatpush1.bf16.msra.mxu0 %v3561
    %3880 = vmatprep.subr.bf16.mxu0 %v3554
    %3881 = vmatpush1.bf16.msra.mxu0 %v3553
    %3882 = vmatprep.subr.bf16.mxu0 %v3546
    %3883 = vmatpush1.bf16.msra.mxu0 %v3545
    %3884 = vmatprep.subr.bf16.mxu0 %v3538
    %3885 = vmatpush1.bf16.msra.mxu0 %v3537
    %3886 = vmatprep.subr.bf16.mxu0 %v3530
    %3887 = vmatpush1.bf16.msra.mxu0 %v3529
    %3888 = vmatprep.subr.bf16.mxu0 %v3522
    %3889 = vmatpush1.bf16.msra.mxu0 %v3521
    %3890 = vmatprep.subr.bf16.mxu0 %v3514
    %3891 = vmatpush1.bf16.msra.mxu0 %v3513
    %3892 = vmatprep.subr.bf16.mxu0 %v3506
    %3893 = vmatpush1.bf16.msra.mxu0 %v3505
    %3894 = vmatprep.subr.bf16.mxu0 %v3626
    %3895 = vmatpush2.bf16.msra.mxu0 %v3625
    %3896 = vmatprep.subr.bf16.mxu0 %v3618
    %3897 = vmatpush2.bf16.msra.mxu0 %v3617
    %3898 = vmatprep.subr.bf16.mxu0 %v3610
    %3899 = vmatpush2.bf16.msra.mxu0 %v3609
    %3900 = vmatprep.subr.bf16.mxu0 %v3602
    %3901 = vmatpush2.bf16.msra.mxu0 %v3601
    %3902 = vmatprep.subr.bf16.mxu0 %v3594
    %3903 = vmatpush2.bf16.msra.mxu0 %v3593
    %3904 = vmatprep.subr.bf16.mxu0 %v3586
    %3905 = vmatpush2.bf16.msra.mxu0 %v3585
    %3906 = vmatprep.subr.bf16.mxu0 %v3578
    %3907 = vmatpush2.bf16.msra.mxu0 %v3577
    %3908 = vmatprep.subr.bf16.mxu0 %v3570
    %3909 = vmatpush2.bf16.msra.mxu0 %v3569
    %3910 = vmatprep.mubr.bf16.mxu0 %v2986
    %3911 = vmatmul.mubr.bf16.gmra.mxu0 %v2985
    %v3912 = vpop.f32.mrf.mxu0
    %v3913 = vadd.f32 0.0, %v3912
    %v3914 = vpop.f32.mrf.mxu0
    %v3915 = vadd.f32 0.0, %v3914
    %v3916 = vpop.f32.mrf.mxu0
    %v3917 = vpop.f32.mrf.mxu0
    %3918 = vdwg.mxu0
    %v3919 = vadd.f32 %v2975, %v3790
    %v3920 = vadd.f32 %v2976, %v3792
    %v3921 = vadd.f32 %v2977, %v3831
    %v3922 = vadd.f32 %v2978, %v3833
    %v3923 = vadd.f32 %v2979, %v3872
    %v3924 = vadd.f32 %v2980, %v3874
    %v3925 = vadd.f32 %v2981, %v3913
    %v3926 = vadd.f32 %v2982, %v3915
    %v3927 = vxor.u32 %v3919, 2147483648
    %v3928 = vxor.u32 %v3920, 2147483648
    %v3929 = vxor.u32 %v3921, 2147483648
    %v3930 = vxor.u32 %v3922, 2147483648
    %v3931 = vxor.u32 %v3923, 2147483648
    %v3932 = vxor.u32 %v3924, 2147483648
    %v3933 = vmul.f32 %v3927, 1.442695
    %v3934 = vpow.pop %v3933
    %v3935 = vmul.f32 %v3928, 1.442695
    %v3936 = vpow.pop %v3935
    %v3937 = vmul.f32 %v3929, 1.442695
    %v3938 = vpow.pop %v3937
    %v3939 = vmul.f32 %v3930, 1.442695
    %v3940 = vpow.pop %v3939
    %v3941 = vmul.f32 %v3931, 1.442695
    %v3942 = vpow.pop %v3941
    %v3943 = vmul.f32 %v3932, 1.442695
    %v3944 = vpow.pop %v3943
    %v3945 = vadd.f32 %v3934, 1.0
    %v3946 = vadd.f32 %v3936, 1.0
    %v3947 = vadd.f32 %v3938, 1.0
    %v3948 = vadd.f32 %v3940, 1.0
    %v3949 = vadd.f32 %v3942, 1.0
    %v3950 = vadd.f32 %v3944, 1.0
    %v3951 = vrcp.pop %v3945
    %v3952 = vmul.f32 1.0, %v3951
    %v3953 = vrcp.pop %v3946
    %v3954 = vmul.f32 1.0, %v3953
    %v3955 = vrcp.pop %v3947
    %v3956 = vmul.f32 1.0, %v3955
    %v3957 = vrcp.pop %v3948
    %v3958 = vmul.f32 1.0, %v3957
    %v3959 = vrcp.pop %v3949
    %v3960 = vmul.f32 1.0, %v3959
    %v3961 = vrcp.pop %v3950
    %v3962 = vmul.f32 1.0, %v3961
    %v3963 = vtanh.pop %v3925
    %v3964 = vtanh.pop %v3926
    %v3965 = vld [vmem:[#allocation4] sm:$0xff]
    %v3966 = vld [vmem:[#allocation4 + $0x8] sm:$0xff]
    %v3967 = vmul.f32 %v3956, %v3965
    %v3968 = vmul.f32 %v3958, %v3966
    %v3969 = vmul.f32 %v3952, %v3963
    %v3970 = vmul.f32 %v3954, %v3964
    %v3971 = vadd.f32 %v3967, %v3969
    %v3972 = vadd.f32 %v3968, %v3970
    %3973 = vst [vmem:[#allocation4] sm:$0xff] %v3971
    %3974 = vst [vmem:[#allocation4 + $0x8] sm:$0xff] %v3972
    %v3975 = vtanh.pop %v3971
    %v3976 = vtanh.pop %v3972
    %v3977 = vmul.f32 %v3960, %v3975
    %v3978 = vmul.f32 %v3962, %v3976
    %3979 = vst [vmem:[#allocation3] sm:$0xff] %v3977
    %3980 = vst [vmem:[#allocation3 + $0x8] sm:$0xff] %v3978
    %s3981 = smul.u32 3, 8
    %s3982 = smul.addr %s3981, 4
    %s3983 = scalar_lea.vmem [#allocation2], %s3982
    %v3984 = vld [vmem:[%s3983] sm:$0xff]
    %v3985 = vld [vmem:[%s3983 + $0x8] sm:$0xff]
    %v3986 = vld [vmem:[%s3983 + $0x10] sm:$0xff]
    %v3987 = vld [vmem:[%s3983 + $0x18] sm:$0xff]
    %v3988 = vunpack.c.l.bf16 %v3984
    %v3989 = vunpack.c.h.bf16 %v3984
    %v3990 = vunpack.c.l.bf16 %v3985
    %v3991 = vunpack.c.h.bf16 %v3985
    %v3992 = vunpack.c.l.bf16 %v3986
    %v3993 = vunpack.c.h.bf16 %v3986
    %v3994 = vunpack.c.l.bf16 %v3987
    %v3995 = vunpack.c.h.bf16 %v3987
    %v3996 = vld [vmem:[#allocation3] sm:$0xff]
    %v3997 = vld [vmem:[#allocation3 + $0x8] sm:$0xff]
    %v3998 = vpack.c.bf16 %v3996, %v3996
    %v3999 = vpack.c.bf16 %v3997, %v3997
    %v4000 = vld [vmem:[#allocation11] sm:$0xff]
    %v4001 = vld [vmem:[#allocation11 + $0x8] sm:$0xff]
    %v4002 = vld [vmem:[#allocation11 + $0x10] sm:$0xff]
    %v4003 = vld [vmem:[#allocation11 + $0x18] sm:$0xff]
    %v4004 = vld [vmem:[#allocation11 + $0x20] sm:$0xff]
    %v4005 = vld [vmem:[#allocation11 + $0x28] sm:$0xff]
    %v4006 = vld [vmem:[#allocation11 + $0x30] sm:$0xff]
    %v4007 = vld [vmem:[#allocation11 + $0x38] sm:$0xff]
    %v4008 = vld [vmem:[#allocation11 + $0x40] sm:$0xff]
    %v4009 = vld [vmem:[#allocation11 + $0x48] sm:$0xff]
    %v4010 = vld [vmem:[#allocation11 + $0x50] sm:$0xff]
    %v4011 = vld [vmem:[#allocation11 + $0x58] sm:$0xff]
    %v4012 = vld [vmem:[#allocation11 + $0x60] sm:$0xff]
    %v4013 = vld [vmem:[#allocation11 + $0x68] sm:$0xff]
    %v4014 = vld [vmem:[#allocation11 + $0x70] sm:$0xff]
    %v4015 = vld [vmem:[#allocation11 + $0x78] sm:$0xff]
    %v4016 = vld [vmem:[#allocation11 + $0x80] sm:$0xff]
    %v4017 = vld [vmem:[#allocation11 + $0x88] sm:$0xff]
    %v4018 = vld [vmem:[#allocation11 + $0x90] sm:$0xff]
    %v4019 = vld [vmem:[#allocation11 + $0x98] sm:$0xff]
    %v4020 = vld [vmem:[#allocation11 + $0xa0] sm:$0xff]
    %v4021 = vld [vmem:[#allocation11 + $0xa8] sm:$0xff]
    %v4022 = vld [vmem:[#allocation11 + $0xb0] sm:$0xff]
    %v4023 = vld [vmem:[#allocation11 + $0xb8] sm:$0xff]
    %v4024 = vld [vmem:[#allocation11 + $0xc0] sm:$0xff]
    %v4025 = vld [vmem:[#allocation11 + $0xc8] sm:$0xff]
    %v4026 = vld [vmem:[#allocation11 + $0xd0] sm:$0xff]
    %v4027 = vld [vmem:[#allocation11 + $0xd8] sm:$0xff]
    %v4028 = vld [vmem:[#allocation11 + $0xe0] sm:$0xff]
    %v4029 = vld [vmem:[#allocation11 + $0xe8] sm:$0xff]
    %v4030 = vld [vmem:[#allocation11 + $0xf0] sm:$0xff]
    %v4031 = vld [vmem:[#allocation11 + $0xf8] sm:$0xff]
    %v4032 = vld [vmem:[#allocation11 + $0x100] sm:$0xff]
    %v4033 = vld [vmem:[#allocation11 + $0x108] sm:$0xff]
    %v4034 = vld [vmem:[#allocation11 + $0x110] sm:$0xff]
    %v4035 = vld [vmem:[#allocation11 + $0x118] sm:$0xff]
    %v4036 = vld [vmem:[#allocation11 + $0x120] sm:$0xff]
    %v4037 = vld [vmem:[#allocation11 + $0x128] sm:$0xff]
    %v4038 = vld [vmem:[#allocation11 + $0x130] sm:$0xff]
    %v4039 = vld [vmem:[#allocation11 + $0x138] sm:$0xff]
    %v4040 = vld [vmem:[#allocation11 + $0x140] sm:$0xff]
    %v4041 = vld [vmem:[#allocation11 + $0x148] sm:$0xff]
    %v4042 = vld [vmem:[#allocation11 + $0x150] sm:$0xff]
    %v4043 = vld [vmem:[#allocation11 + $0x158] sm:$0xff]
    %v4044 = vld [vmem:[#allocation11 + $0x160] sm:$0xff]
    %v4045 = vld [vmem:[#allocation11 + $0x168] sm:$0xff]
    %v4046 = vld [vmem:[#allocation11 + $0x170] sm:$0xff]
    %v4047 = vld [vmem:[#allocation11 + $0x178] sm:$0xff]
    %v4048 = vld [vmem:[#allocation11 + $0x180] sm:$0xff]
    %v4049 = vld [vmem:[#allocation11 + $0x188] sm:$0xff]
    %v4050 = vld [vmem:[#allocation11 + $0x190] sm:$0xff]
    %v4051 = vld [vmem:[#allocation11 + $0x198] sm:$0xff]
    %v4052 = vld [vmem:[#allocation11 + $0x1a0] sm:$0xff]
    %v4053 = vld [vmem:[#allocation11 + $0x1a8] sm:$0xff]
    %v4054 = vld [vmem:[#allocation11 + $0x1b0] sm:$0xff]
    %v4055 = vld [vmem:[#allocation11 + $0x1b8] sm:$0xff]
    %v4056 = vld [vmem:[#allocation11 + $0x1c0] sm:$0xff]
    %v4057 = vld [vmem:[#allocation11 + $0x1c8] sm:$0xff]
    %v4058 = vld [vmem:[#allocation11 + $0x1d0] sm:$0xff]
    %v4059 = vld [vmem:[#allocation11 + $0x1d8] sm:$0xff]
    %v4060 = vld [vmem:[#allocation11 + $0x1e0] sm:$0xff]
    %v4061 = vld [vmem:[#allocation11 + $0x1e8] sm:$0xff]
    %v4062 = vld [vmem:[#allocation11 + $0x1f0] sm:$0xff]
    %v4063 = vld [vmem:[#allocation11 + $0x1f8] sm:$0xff]
    %v4064 = vld [vmem:[#allocation11 + $0x200] sm:$0xff]
    %v4065 = vld [vmem:[#allocation11 + $0x208] sm:$0xff]
    %v4066 = vld [vmem:[#allocation11 + $0x210] sm:$0xff]
    %v4067 = vld [vmem:[#allocation11 + $0x218] sm:$0xff]
    %v4068 = vld [vmem:[#allocation11 + $0x220] sm:$0xff]
    %v4069 = vld [vmem:[#allocation11 + $0x228] sm:$0xff]
    %v4070 = vld [vmem:[#allocation11 + $0x230] sm:$0xff]
    %v4071 = vld [vmem:[#allocation11 + $0x238] sm:$0xff]
    %v4072 = vld [vmem:[#allocation11 + $0x240] sm:$0xff]
    %v4073 = vld [vmem:[#allocation11 + $0x248] sm:$0xff]
    %v4074 = vld [vmem:[#allocation11 + $0x250] sm:$0xff]
    %v4075 = vld [vmem:[#allocation11 + $0x258] sm:$0xff]
    %v4076 = vld [vmem:[#allocation11 + $0x260] sm:$0xff]
    %v4077 = vld [vmem:[#allocation11 + $0x268] sm:$0xff]
    %v4078 = vld [vmem:[#allocation11 + $0x270] sm:$0xff]
    %v4079 = vld [vmem:[#allocation11 + $0x278] sm:$0xff]
    %v4080 = vld [vmem:[#allocation11 + $0x280] sm:$0xff]
    %v4081 = vld [vmem:[#allocation11 + $0x288] sm:$0xff]
    %v4082 = vld [vmem:[#allocation11 + $0x290] sm:$0xff]
    %v4083 = vld [vmem:[#allocation11 + $0x298] sm:$0xff]
    %v4084 = vld [vmem:[#allocation11 + $0x2a0] sm:$0xff]
    %v4085 = vld [vmem:[#allocation11 + $0x2a8] sm:$0xff]
    %v4086 = vld [vmem:[#allocation11 + $0x2b0] sm:$0xff]
    %v4087 = vld [vmem:[#allocation11 + $0x2b8] sm:$0xff]
    %v4088 = vld [vmem:[#allocation11 + $0x2c0] sm:$0xff]
    %v4089 = vld [vmem:[#allocation11 + $0x2c8] sm:$0xff]
    %v4090 = vld [vmem:[#allocation11 + $0x2d0] sm:$0xff]
    %v4091 = vld [vmem:[#allocation11 + $0x2d8] sm:$0xff]
    %v4092 = vld [vmem:[#allocation11 + $0x2e0] sm:$0xff]
    %v4093 = vld [vmem:[#allocation11 + $0x2e8] sm:$0xff]
    %v4094 = vld [vmem:[#allocation11 + $0x2f0] sm:$0xff]
    %v4095 = vld [vmem:[#allocation11 + $0x2f8] sm:$0xff]
    %v4096 = vld [vmem:[#allocation11 + $0x300] sm:$0xff]
    %v4097 = vld [vmem:[#allocation11 + $0x308] sm:$0xff]
    %v4098 = vld [vmem:[#allocation11 + $0x310] sm:$0xff]
    %v4099 = vld [vmem:[#allocation11 + $0x318] sm:$0xff]
    %v4100 = vld [vmem:[#allocation11 + $0x320] sm:$0xff]
    %v4101 = vld [vmem:[#allocation11 + $0x328] sm:$0xff]
    %v4102 = vld [vmem:[#allocation11 + $0x330] sm:$0xff]
    %v4103 = vld [vmem:[#allocation11 + $0x338] sm:$0xff]
    %v4104 = vld [vmem:[#allocation11 + $0x340] sm:$0xff]
    %v4105 = vld [vmem:[#allocation11 + $0x348] sm:$0xff]
    %v4106 = vld [vmem:[#allocation11 + $0x350] sm:$0xff]
    %v4107 = vld [vmem:[#allocation11 + $0x358] sm:$0xff]
    %v4108 = vld [vmem:[#allocation11 + $0x360] sm:$0xff]
    %v4109 = vld [vmem:[#allocation11 + $0x368] sm:$0xff]
    %v4110 = vld [vmem:[#allocation11 + $0x370] sm:$0xff]
    %v4111 = vld [vmem:[#allocation11 + $0x378] sm:$0xff]
    %v4112 = vld [vmem:[#allocation11 + $0x380] sm:$0xff]
    %v4113 = vld [vmem:[#allocation11 + $0x388] sm:$0xff]
    %v4114 = vld [vmem:[#allocation11 + $0x390] sm:$0xff]
    %v4115 = vld [vmem:[#allocation11 + $0x398] sm:$0xff]
    %v4116 = vld [vmem:[#allocation11 + $0x3a0] sm:$0xff]
    %v4117 = vld [vmem:[#allocation11 + $0x3a8] sm:$0xff]
    %v4118 = vld [vmem:[#allocation11 + $0x3b0] sm:$0xff]
    %v4119 = vld [vmem:[#allocation11 + $0x3b8] sm:$0xff]
    %v4120 = vld [vmem:[#allocation11 + $0x3c0] sm:$0xff]
    %v4121 = vld [vmem:[#allocation11 + $0x3c8] sm:$0xff]
    %v4122 = vld [vmem:[#allocation11 + $0x3d0] sm:$0xff]
    %v4123 = vld [vmem:[#allocation11 + $0x3d8] sm:$0xff]
    %v4124 = vld [vmem:[#allocation11 + $0x3e0] sm:$0xff]
    %v4125 = vld [vmem:[#allocation11 + $0x3e8] sm:$0xff]
    %v4126 = vld [vmem:[#allocation11 + $0x3f0] sm:$0xff]
    %v4127 = vld [vmem:[#allocation11 + $0x3f8] sm:$0xff]
    %v4256 = vunpack.c.l.b16 %v4000
    %v4257 = vunpack.c.h.b16 %v4000
    %v4258 = vunpack.c.l.b16 %v4001
    %v4259 = vunpack.c.h.b16 %v4001
    %v4260 = vunpack.c.l.b16 %v4002
    %v4261 = vunpack.c.h.b16 %v4002
    %v4262 = vunpack.c.l.b16 %v4003
    %v4263 = vunpack.c.h.b16 %v4003
    %v4264 = vunpack.c.l.b16 %v4004
    %v4265 = vunpack.c.h.b16 %v4004
    %v4266 = vunpack.c.l.b16 %v4005
    %v4267 = vunpack.c.h.b16 %v4005
    %v4268 = vunpack.c.l.b16 %v4006
    %v4269 = vunpack.c.h.b16 %v4006
    %v4270 = vunpack.c.l.b16 %v4007
    %v4271 = vunpack.c.h.b16 %v4007
    %v4272 = vunpack.c.l.b16 %v4008
    %v4273 = vunpack.c.h.b16 %v4008
    %v4274 = vunpack.c.l.b16 %v4009
    %v4275 = vunpack.c.h.b16 %v4009
    %v4276 = vunpack.c.l.b16 %v4010
    %v4277 = vunpack.c.h.b16 %v4010
    %v4278 = vunpack.c.l.b16 %v4011
    %v4279 = vunpack.c.h.b16 %v4011
    %v4280 = vunpack.c.l.b16 %v4012
    %v4281 = vunpack.c.h.b16 %v4012
    %v4282 = vunpack.c.l.b16 %v4013
    %v4283 = vunpack.c.h.b16 %v4013
    %v4284 = vunpack.c.l.b16 %v4014
    %v4285 = vunpack.c.h.b16 %v4014
    %v4286 = vunpack.c.l.b16 %v4015
    %v4287 = vunpack.c.h.b16 %v4015
    %v4288 = vunpack.c.l.b16 %v4016
    %v4289 = vunpack.c.h.b16 %v4016
    %v4290 = vunpack.c.l.b16 %v4017
    %v4291 = vunpack.c.h.b16 %v4017
    %v4292 = vunpack.c.l.b16 %v4018
    %v4293 = vunpack.c.h.b16 %v4018
    %v4294 = vunpack.c.l.b16 %v4019
    %v4295 = vunpack.c.h.b16 %v4019
    %v4296 = vunpack.c.l.b16 %v4020
    %v4297 = vunpack.c.h.b16 %v4020
    %v4298 = vunpack.c.l.b16 %v4021
    %v4299 = vunpack.c.h.b16 %v4021
    %v4300 = vunpack.c.l.b16 %v4022
    %v4301 = vunpack.c.h.b16 %v4022
    %v4302 = vunpack.c.l.b16 %v4023
    %v4303 = vunpack.c.h.b16 %v4023
    %v4304 = vunpack.c.l.b16 %v4024
    %v4305 = vunpack.c.h.b16 %v4024
    %v4306 = vunpack.c.l.b16 %v4025
    %v4307 = vunpack.c.h.b16 %v4025
    %v4308 = vunpack.c.l.b16 %v4026
    %v4309 = vunpack.c.h.b16 %v4026
    %v4310 = vunpack.c.l.b16 %v4027
    %v4311 = vunpack.c.h.b16 %v4027
    %v4312 = vunpack.c.l.b16 %v4028
    %v4313 = vunpack.c.h.b16 %v4028
    %v4314 = vunpack.c.l.b16 %v4029
    %v4315 = vunpack.c.h.b16 %v4029
    %v4316 = vunpack.c.l.b16 %v4030
    %v4317 = vunpack.c.h.b16 %v4030
    %v4318 = vunpack.c.l.b16 %v4031
    %v4319 = vunpack.c.h.b16 %v4031
    %v4320 = vunpack.c.l.b16 %v4032
    %v4321 = vunpack.c.h.b16 %v4032
    %v4322 = vunpack.c.l.b16 %v4033
    %v4323 = vunpack.c.h.b16 %v4033
    %v4324 = vunpack.c.l.b16 %v4034
    %v4325 = vunpack.c.h.b16 %v4034
    %v4326 = vunpack.c.l.b16 %v4035
    %v4327 = vunpack.c.h.b16 %v4035
    %v4328 = vunpack.c.l.b16 %v4036
    %v4329 = vunpack.c.h.b16 %v4036
    %v4330 = vunpack.c.l.b16 %v4037
    %v4331 = vunpack.c.h.b16 %v4037
    %v4332 = vunpack.c.l.b16 %v4038
    %v4333 = vunpack.c.h.b16 %v4038
    %v4334 = vunpack.c.l.b16 %v4039
    %v4335 = vunpack.c.h.b16 %v4039
    %v4336 = vunpack.c.l.b16 %v4040
    %v4337 = vunpack.c.h.b16 %v4040
    %v4338 = vunpack.c.l.b16 %v4041
    %v4339 = vunpack.c.h.b16 %v4041
    %v4340 = vunpack.c.l.b16 %v4042
    %v4341 = vunpack.c.h.b16 %v4042
    %v4342 = vunpack.c.l.b16 %v4043
    %v4343 = vunpack.c.h.b16 %v4043
    %v4344 = vunpack.c.l.b16 %v4044
    %v4345 = vunpack.c.h.b16 %v4044
    %v4346 = vunpack.c.l.b16 %v4045
    %v4347 = vunpack.c.h.b16 %v4045
    %v4348 = vunpack.c.l.b16 %v4046
    %v4349 = vunpack.c.h.b16 %v4046
    %v4350 = vunpack.c.l.b16 %v4047
    %v4351 = vunpack.c.h.b16 %v4047
    %v4352 = vunpack.c.l.b16 %v4048
    %v4353 = vunpack.c.h.b16 %v4048
    %v4354 = vunpack.c.l.b16 %v4049
    %v4355 = vunpack.c.h.b16 %v4049
    %v4356 = vunpack.c.l.b16 %v4050
    %v4357 = vunpack.c.h.b16 %v4050
    %v4358 = vunpack.c.l.b16 %v4051
    %v4359 = vunpack.c.h.b16 %v4051
    %v4360 = vunpack.c.l.b16 %v4052
    %v4361 = vunpack.c.h.b16 %v4052
    %v4362 = vunpack.c.l.b16 %v4053
    %v4363 = vunpack.c.h.b16 %v4053
    %v4364 = vunpack.c.l.b16 %v4054
    %v4365 = vunpack.c.h.b16 %v4054
    %v4366 = vunpack.c.l.b16 %v4055
    %v4367 = vunpack.c.h.b16 %v4055
    %v4368 = vunpack.c.l.b16 %v4056
    %v4369 = vunpack.c.h.b16 %v4056
    %v4370 = vunpack.c.l.b16 %v4057
    %v4371 = vunpack.c.h.b16 %v4057
    %v4372 = vunpack.c.l.b16 %v4058
    %v4373 = vunpack.c.h.b16 %v4058
    %v4374 = vunpack.c.l.b16 %v4059
    %v4375 = vunpack.c.h.b16 %v4059
    %v4376 = vunpack.c.l.b16 %v4060
    %v4377 = vunpack.c.h.b16 %v4060
    %v4378 = vunpack.c.l.b16 %v4061
    %v4379 = vunpack.c.h.b16 %v4061
    %v4380 = vunpack.c.l.b16 %v4062
    %v4381 = vunpack.c.h.b16 %v4062
    %v4382 = vunpack.c.l.b16 %v4063
    %v4383 = vunpack.c.h.b16 %v4063
    %v4384 = vunpack.c.l.b16 %v4064
    %v4385 = vunpack.c.h.b16 %v4064
    %v4386 = vunpack.c.l.b16 %v4065
    %v4387 = vunpack.c.h.b16 %v4065
    %v4388 = vunpack.c.l.b16 %v4066
    %v4389 = vunpack.c.h.b16 %v4066
    %v4390 = vunpack.c.l.b16 %v4067
    %v4391 = vunpack.c.h.b16 %v4067
    %v4392 = vunpack.c.l.b16 %v4068
    %v4393 = vunpack.c.h.b16 %v4068
    %v4394 = vunpack.c.l.b16 %v4069
    %v4395 = vunpack.c.h.b16 %v4069
    %v4396 = vunpack.c.l.b16 %v4070
    %v4397 = vunpack.c.h.b16 %v4070
    %v4398 = vunpack.c.l.b16 %v4071
    %v4399 = vunpack.c.h.b16 %v4071
    %v4400 = vunpack.c.l.b16 %v4072
    %v4401 = vunpack.c.h.b16 %v4072
    %v4402 = vunpack.c.l.b16 %v4073
    %v4403 = vunpack.c.h.b16 %v4073
    %v4404 = vunpack.c.l.b16 %v4074
    %v4405 = vunpack.c.h.b16 %v4074
    %v4406 = vunpack.c.l.b16 %v4075
    %v4407 = vunpack.c.h.b16 %v4075
    %v4408 = vunpack.c.l.b16 %v4076
    %v4409 = vunpack.c.h.b16 %v4076
    %v4410 = vunpack.c.l.b16 %v4077
    %v4411 = vunpack.c.h.b16 %v4077
    %v4412 = vunpack.c.l.b16 %v4078
    %v4413 = vunpack.c.h.b16 %v4078
    %v4414 = vunpack.c.l.b16 %v4079
    %v4415 = vunpack.c.h.b16 %v4079
    %v4416 = vunpack.c.l.b16 %v4080
    %v4417 = vunpack.c.h.b16 %v4080
    %v4418 = vunpack.c.l.b16 %v4081
    %v4419 = vunpack.c.h.b16 %v4081
    %v4420 = vunpack.c.l.b16 %v4082
    %v4421 = vunpack.c.h.b16 %v4082
    %v4422 = vunpack.c.l.b16 %v4083
    %v4423 = vunpack.c.h.b16 %v4083
    %v4424 = vunpack.c.l.b16 %v4084
    %v4425 = vunpack.c.h.b16 %v4084
    %v4426 = vunpack.c.l.b16 %v4085
    %v4427 = vunpack.c.h.b16 %v4085
    %v4428 = vunpack.c.l.b16 %v4086
    %v4429 = vunpack.c.h.b16 %v4086
    %v4430 = vunpack.c.l.b16 %v4087
    %v4431 = vunpack.c.h.b16 %v4087
    %v4432 = vunpack.c.l.b16 %v4088
    %v4433 = vunpack.c.h.b16 %v4088
    %v4434 = vunpack.c.l.b16 %v4089
    %v4435 = vunpack.c.h.b16 %v4089
    %v4436 = vunpack.c.l.b16 %v4090
    %v4437 = vunpack.c.h.b16 %v4090
    %v4438 = vunpack.c.l.b16 %v4091
    %v4439 = vunpack.c.h.b16 %v4091
    %v4440 = vunpack.c.l.b16 %v4092
    %v4441 = vunpack.c.h.b16 %v4092
    %v4442 = vunpack.c.l.b16 %v4093
    %v4443 = vunpack.c.h.b16 %v4093
    %v4444 = vunpack.c.l.b16 %v4094
    %v4445 = vunpack.c.h.b16 %v4094
    %v4446 = vunpack.c.l.b16 %v4095
    %v4447 = vunpack.c.h.b16 %v4095
    %v4448 = vunpack.c.l.b16 %v4096
    %v4449 = vunpack.c.h.b16 %v4096
    %v4450 = vunpack.c.l.b16 %v4097
    %v4451 = vunpack.c.h.b16 %v4097
    %v4452 = vunpack.c.l.b16 %v4098
    %v4453 = vunpack.c.h.b16 %v4098
    %v4454 = vunpack.c.l.b16 %v4099
    %v4455 = vunpack.c.h.b16 %v4099
    %v4456 = vunpack.c.l.b16 %v4100
    %v4457 = vunpack.c.h.b16 %v4100
    %v4458 = vunpack.c.l.b16 %v4101
    %v4459 = vunpack.c.h.b16 %v4101
    %v4460 = vunpack.c.l.b16 %v4102
    %v4461 = vunpack.c.h.b16 %v4102
    %v4462 = vunpack.c.l.b16 %v4103
    %v4463 = vunpack.c.h.b16 %v4103
    %v4464 = vunpack.c.l.b16 %v4104
    %v4465 = vunpack.c.h.b16 %v4104
    %v4466 = vunpack.c.l.b16 %v4105
    %v4467 = vunpack.c.h.b16 %v4105
    %v4468 = vunpack.c.l.b16 %v4106
    %v4469 = vunpack.c.h.b16 %v4106
    %v4470 = vunpack.c.l.b16 %v4107
    %v4471 = vunpack.c.h.b16 %v4107
    %v4472 = vunpack.c.l.b16 %v4108
    %v4473 = vunpack.c.h.b16 %v4108
    %v4474 = vunpack.c.l.b16 %v4109
    %v4475 = vunpack.c.h.b16 %v4109
    %v4476 = vunpack.c.l.b16 %v4110
    %v4477 = vunpack.c.h.b16 %v4110
    %v4478 = vunpack.c.l.b16 %v4111
    %v4479 = vunpack.c.h.b16 %v4111
    %v4480 = vunpack.c.l.b16 %v4112
    %v4481 = vunpack.c.h.b16 %v4112
    %v4482 = vunpack.c.l.b16 %v4113
    %v4483 = vunpack.c.h.b16 %v4113
    %v4484 = vunpack.c.l.b16 %v4114
    %v4485 = vunpack.c.h.b16 %v4114
    %v4486 = vunpack.c.l.b16 %v4115
    %v4487 = vunpack.c.h.b16 %v4115
    %v4488 = vunpack.c.l.b16 %v4116
    %v4489 = vunpack.c.h.b16 %v4116
    %v4490 = vunpack.c.l.b16 %v4117
    %v4491 = vunpack.c.h.b16 %v4117
    %v4492 = vunpack.c.l.b16 %v4118
    %v4493 = vunpack.c.h.b16 %v4118
    %v4494 = vunpack.c.l.b16 %v4119
    %v4495 = vunpack.c.h.b16 %v4119
    %v4496 = vunpack.c.l.b16 %v4120
    %v4497 = vunpack.c.h.b16 %v4120
    %v4498 = vunpack.c.l.b16 %v4121
    %v4499 = vunpack.c.h.b16 %v4121
    %v4500 = vunpack.c.l.b16 %v4122
    %v4501 = vunpack.c.h.b16 %v4122
    %v4502 = vunpack.c.l.b16 %v4123
    %v4503 = vunpack.c.h.b16 %v4123
    %v4504 = vunpack.c.l.b16 %v4124
    %v4505 = vunpack.c.h.b16 %v4124
    %v4506 = vunpack.c.l.b16 %v4125
    %v4507 = vunpack.c.h.b16 %v4125
    %v4508 = vunpack.c.l.b16 %v4126
    %v4509 = vunpack.c.h.b16 %v4126
    %v4510 = vunpack.c.l.b16 %v4127
    %v4511 = vunpack.c.h.b16 %v4127
    %v4512 = vpack.c.b16 %v4264, %v4256
    %v4513 = vpack.c.b16 %v4265, %v4257
    %v4514 = vpack.c.b16 %v4266, %v4258
    %v4515 = vpack.c.b16 %v4267, %v4259
    %v4516 = vpack.c.b16 %v4268, %v4260
    %v4517 = vpack.c.b16 %v4269, %v4261
    %v4518 = vpack.c.b16 %v4270, %v4262
    %v4519 = vpack.c.b16 %v4271, %v4263
    %v4520 = vpack.c.b16 %v4280, %v4272
    %v4521 = vpack.c.b16 %v4281, %v4273
    %v4522 = vpack.c.b16 %v4282, %v4274
    %v4523 = vpack.c.b16 %v4283, %v4275
    %v4524 = vpack.c.b16 %v4284, %v4276
    %v4525 = vpack.c.b16 %v4285, %v4277
    %v4526 = vpack.c.b16 %v4286, %v4278
    %v4527 = vpack.c.b16 %v4287, %v4279
    %v4528 = vpack.c.b16 %v4296, %v4288
    %v4529 = vpack.c.b16 %v4297, %v4289
    %v4530 = vpack.c.b16 %v4298, %v4290
    %v4531 = vpack.c.b16 %v4299, %v4291
    %v4532 = vpack.c.b16 %v4300, %v4292
    %v4533 = vpack.c.b16 %v4301, %v4293
    %v4534 = vpack.c.b16 %v4302, %v4294
    %v4535 = vpack.c.b16 %v4303, %v4295
    %v4536 = vpack.c.b16 %v4312, %v4304
    %v4537 = vpack.c.b16 %v4313, %v4305
    %v4538 = vpack.c.b16 %v4314, %v4306
    %v4539 = vpack.c.b16 %v4315, %v4307
    %v4540 = vpack.c.b16 %v4316, %v4308
    %v4541 = vpack.c.b16 %v4317, %v4309
    %v4542 = vpack.c.b16 %v4318, %v4310
    %v4543 = vpack.c.b16 %v4319, %v4311
    %v4544 = vpack.c.b16 %v4328, %v4320
    %v4545 = vpack.c.b16 %v4329, %v4321
    %v4546 = vpack.c.b16 %v4330, %v4322
    %v4547 = vpack.c.b16 %v4331, %v4323
    %v4548 = vpack.c.b16 %v4332, %v4324
    %v4549 = vpack.c.b16 %v4333, %v4325
    %v4550 = vpack.c.b16 %v4334, %v4326
    %v4551 = vpack.c.b16 %v4335, %v4327
    %v4552 = vpack.c.b16 %v4344, %v4336
    %v4553 = vpack.c.b16 %v4345, %v4337
    %v4554 = vpack.c.b16 %v4346, %v4338
    %v4555 = vpack.c.b16 %v4347, %v4339
    %v4556 = vpack.c.b16 %v4348, %v4340
    %v4557 = vpack.c.b16 %v4349, %v4341
    %v4558 = vpack.c.b16 %v4350, %v4342
    %v4559 = vpack.c.b16 %v4351, %v4343
    %v4560 = vpack.c.b16 %v4360, %v4352
    %v4561 = vpack.c.b16 %v4361, %v4353
    %v4562 = vpack.c.b16 %v4362, %v4354
    %v4563 = vpack.c.b16 %v4363, %v4355
    %v4564 = vpack.c.b16 %v4364, %v4356
    %v4565 = vpack.c.b16 %v4365, %v4357
    %v4566 = vpack.c.b16 %v4366, %v4358
    %v4567 = vpack.c.b16 %v4367, %v4359
    %v4568 = vpack.c.b16 %v4376, %v4368
    %v4569 = vpack.c.b16 %v4377, %v4369
    %v4570 = vpack.c.b16 %v4378, %v4370
    %v4571 = vpack.c.b16 %v4379, %v4371
    %v4572 = vpack.c.b16 %v4380, %v4372
    %v4573 = vpack.c.b16 %v4381, %v4373
    %v4574 = vpack.c.b16 %v4382, %v4374
    %v4575 = vpack.c.b16 %v4383, %v4375
    %v4576 = vpack.c.b16 %v4392, %v4384
    %v4577 = vpack.c.b16 %v4393, %v4385
    %v4578 = vpack.c.b16 %v4394, %v4386
    %v4579 = vpack.c.b16 %v4395, %v4387
    %v4580 = vpack.c.b16 %v4396, %v4388
    %v4581 = vpack.c.b16 %v4397, %v4389
    %v4582 = vpack.c.b16 %v4398, %v4390
    %v4583 = vpack.c.b16 %v4399, %v4391
    %v4584 = vpack.c.b16 %v4408, %v4400
    %v4585 = vpack.c.b16 %v4409, %v4401
    %v4586 = vpack.c.b16 %v4410, %v4402
    %v4587 = vpack.c.b16 %v4411, %v4403
    %v4588 = vpack.c.b16 %v4412, %v4404
    %v4589 = vpack.c.b16 %v4413, %v4405
    %v4590 = vpack.c.b16 %v4414, %v4406
    %v4591 = vpack.c.b16 %v4415, %v4407
    %v4592 = vpack.c.b16 %v4424, %v4416
    %v4593 = vpack.c.b16 %v4425, %v4417
    %v4594 = vpack.c.b16 %v4426, %v4418
    %v4595 = vpack.c.b16 %v4427, %v4419
    %v4596 = vpack.c.b16 %v4428, %v4420
    %v4597 = vpack.c.b16 %v4429, %v4421
    %v4598 = vpack.c.b16 %v4430, %v4422
    %v4599 = vpack.c.b16 %v4431, %v4423
    %v4600 = vpack.c.b16 %v4440, %v4432
    %v4601 = vpack.c.b16 %v4441, %v4433
    %v4602 = vpack.c.b16 %v4442, %v4434
    %v4603 = vpack.c.b16 %v4443, %v4435
    %v4604 = vpack.c.b16 %v4444, %v4436
    %v4605 = vpack.c.b16 %v4445, %v4437
    %v4606 = vpack.c.b16 %v4446, %v4438
    %v4607 = vpack.c.b16 %v4447, %v4439
    %v4608 = vpack.c.b16 %v4456, %v4448
    %v4609 = vpack.c.b16 %v4457, %v4449
    %v4610 = vpack.c.b16 %v4458, %v4450
    %v4611 = vpack.c.b16 %v4459, %v4451
    %v4612 = vpack.c.b16 %v4460, %v4452
    %v4613 = vpack.c.b16 %v4461, %v4453
    %v4614 = vpack.c.b16 %v4462, %v4454
    %v4615 = vpack.c.b16 %v4463, %v4455
    %v4616 = vpack.c.b16 %v4472, %v4464
    %v4617 = vpack.c.b16 %v4473, %v4465
    %v4618 = vpack.c.b16 %v4474, %v4466
    %v4619 = vpack.c.b16 %v4475, %v4467
    %v4620 = vpack.c.b16 %v4476, %v4468
    %v4621 = vpack.c.b16 %v4477, %v4469
    %v4622 = vpack.c.b16 %v4478, %v4470
    %v4623 = vpack.c.b16 %v4479, %v4471
    %v4624 = vpack.c.b16 %v4488, %v4480
    %v4625 = vpack.c.b16 %v4489, %v4481
    %v4626 = vpack.c.b16 %v4490, %v4482
    %v4627 = vpack.c.b16 %v4491, %v4483
    %v4628 = vpack.c.b16 %v4492, %v4484
    %v4629 = vpack.c.b16 %v4493, %v4485
    %v4630 = vpack.c.b16 %v4494, %v4486
    %v4631 = vpack.c.b16 %v4495, %v4487
    %v4632 = vpack.c.b16 %v4504, %v4496
    %v4633 = vpack.c.b16 %v4505, %v4497
    %v4634 = vpack.c.b16 %v4506, %v4498
    %v4635 = vpack.c.b16 %v4507, %v4499
    %v4636 = vpack.c.b16 %v4508, %v4500
    %v4637 = vpack.c.b16 %v4509, %v4501
    %v4638 = vpack.c.b16 %v4510, %v4502
    %v4639 = vpack.c.b16 %v4511, %v4503
    %4768 = vmatprep.subr.bf16.mxu0 %v4569
    %4769 = vmatpush1.bf16.msra.mxu0 %v4568
    %4770 = vmatprep.subr.bf16.mxu0 %v4561
    %4771 = vmatpush1.bf16.msra.mxu0 %v4560
    %4772 = vmatprep.subr.bf16.mxu0 %v4553
    %4773 = vmatpush1.bf16.msra.mxu0 %v4552
    %4774 = vmatprep.subr.bf16.mxu0 %v4545
    %4775 = vmatpush1.bf16.msra.mxu0 %v4544
    %4776 = vmatprep.subr.bf16.mxu0 %v4537
    %4777 = vmatpush1.bf16.msra.mxu0 %v4536
    %4778 = vmatprep.subr.bf16.mxu0 %v4529
    %4779 = vmatpush1.bf16.msra.mxu0 %v4528
    %4780 = vmatprep.subr.bf16.mxu0 %v4521
    %4781 = vmatpush1.bf16.msra.mxu0 %v4520
    %4782 = vmatprep.subr.bf16.mxu0 %v4513
    %4783 = vmatpush1.bf16.msra.mxu0 %v4512
    %4784 = vmatprep.subr.bf16.mxu0 %v4633
    %4785 = vmatpush2.bf16.msra.mxu0 %v4632
    %4786 = vmatprep.subr.bf16.mxu0 %v4625
    %4787 = vmatpush2.bf16.msra.mxu0 %v4624
    %4788 = vmatprep.subr.bf16.mxu0 %v4617
    %4789 = vmatpush2.bf16.msra.mxu0 %v4616
    %4790 = vmatprep.subr.bf16.mxu0 %v4609
    %4791 = vmatpush2.bf16.msra.mxu0 %v4608
    %4792 = vmatprep.subr.bf16.mxu0 %v4601
    %4793 = vmatpush2.bf16.msra.mxu0 %v4600
    %4794 = vmatprep.subr.bf16.mxu0 %v4593
    %4795 = vmatpush2.bf16.msra.mxu0 %v4592
    %4796 = vmatprep.subr.bf16.mxu0 %v4585
    %4797 = vmatpush2.bf16.msra.mxu0 %v4584
    %4798 = vmatprep.subr.bf16.mxu0 %v4577
    %4799 = vmatpush2.bf16.msra.mxu0 %v4576
    %4800 = vmatprep.mubr.bf16.mxu0 %v3999
    %4801 = vmatmul.mubr.bf16.gmra.mxu0 %v3998
    %v4802 = vpop.f32.mrf.mxu0
    %v4803 = vadd.f32 0.0, %v4802
    %v4804 = vpop.f32.mrf.mxu0
    %v4805 = vadd.f32 0.0, %v4804
    %v4806 = vpop.f32.mrf.mxu0
    %v4807 = vpop.f32.mrf.mxu0
    %4808 = vdwg.mxu0
    %4809 = vmatprep.subr.bf16.mxu0 %v4571
    %4810 = vmatpush1.bf16.msra.mxu0 %v4570
    %4811 = vmatprep.subr.bf16.mxu0 %v4563
    %4812 = vmatpush1.bf16.msra.mxu0 %v4562
    %4813 = vmatprep.subr.bf16.mxu0 %v4555
    %4814 = vmatpush1.bf16.msra.mxu0 %v4554
    %4815 = vmatprep.subr.bf16.mxu0 %v4547
    %4816 = vmatpush1.bf16.msra.mxu0 %v4546
    %4817 = vmatprep.subr.bf16.mxu0 %v4539
    %4818 = vmatpush1.bf16.msra.mxu0 %v4538
    %4819 = vmatprep.subr.bf16.mxu0 %v4531
    %4820 = vmatpush1.bf16.msra.mxu0 %v4530
    %4821 = vmatprep.subr.bf16.mxu0 %v4523
    %4822 = vmatpush1.bf16.msra.mxu0 %v4522
    %4823 = vmatprep.subr.bf16.mxu0 %v4515
    %4824 = vmatpush1.bf16.msra.mxu0 %v4514
    %4825 = vmatprep.subr.bf16.mxu0 %v4635
    %4826 = vmatpush2.bf16.msra.mxu0 %v4634
    %4827 = vmatprep.subr.bf16.mxu0 %v4627
    %4828 = vmatpush2.bf16.msra.mxu0 %v4626
    %4829 = vmatprep.subr.bf16.mxu0 %v4619
    %4830 = vmatpush2.bf16.msra.mxu0 %v4618
    %4831 = vmatprep.subr.bf16.mxu0 %v4611
    %4832 = vmatpush2.bf16.msra.mxu0 %v4610
    %4833 = vmatprep.subr.bf16.mxu0 %v4603
    %4834 = vmatpush2.bf16.msra.mxu0 %v4602
    %4835 = vmatprep.subr.bf16.mxu0 %v4595
    %4836 = vmatpush2.bf16.msra.mxu0 %v4594
    %4837 = vmatprep.subr.bf16.mxu0 %v4587
    %4838 = vmatpush2.bf16.msra.mxu0 %v4586
    %4839 = vmatprep.subr.bf16.mxu0 %v4579
    %4840 = vmatpush2.bf16.msra.mxu0 %v4578
    %4841 = vmatprep.mubr.bf16.mxu0 %v3999
    %4842 = vmatmul.mubr.bf16.gmra.mxu0 %v3998
    %v4843 = vpop.f32.mrf.mxu0
    %v4844 = vadd.f32 0.0, %v4843
    %v4845 = vpop.f32.mrf.mxu0
    %v4846 = vadd.f32 0.0, %v4845
    %v4847 = vpop.f32.mrf.mxu0
    %v4848 = vpop.f32.mrf.mxu0
    %4849 = vdwg.mxu0
    %4850 = vmatprep.subr.bf16.mxu0 %v4573
    %4851 = vmatpush1.bf16.msra.mxu0 %v4572
    %4852 = vmatprep.subr.bf16.mxu0 %v4565
    %4853 = vmatpush1.bf16.msra.mxu0 %v4564
    %4854 = vmatprep.subr.bf16.mxu0 %v4557
    %4855 = vmatpush1.bf16.msra.mxu0 %v4556
    %4856 = vmatprep.subr.bf16.mxu0 %v4549
    %4857 = vmatpush1.bf16.msra.mxu0 %v4548
    %4858 = vmatprep.subr.bf16.mxu0 %v4541
    %4859 = vmatpush1.bf16.msra.mxu0 %v4540
    %4860 = vmatprep.subr.bf16.mxu0 %v4533
    %4861 = vmatpush1.bf16.msra.mxu0 %v4532
    %4862 = vmatprep.subr.bf16.mxu0 %v4525
    %4863 = vmatpush1.bf16.msra.mxu0 %v4524
    %4864 = vmatprep.subr.bf16.mxu0 %v4517
    %4865 = vmatpush1.bf16.msra.mxu0 %v4516
    %4866 = vmatprep.subr.bf16.mxu0 %v4637
    %4867 = vmatpush2.bf16.msra.mxu0 %v4636
    %4868 = vmatprep.subr.bf16.mxu0 %v4629
    %4869 = vmatpush2.bf16.msra.mxu0 %v4628
    %4870 = vmatprep.subr.bf16.mxu0 %v4621
    %4871 = vmatpush2.bf16.msra.mxu0 %v4620
    %4872 = vmatprep.subr.bf16.mxu0 %v4613
    %4873 = vmatpush2.bf16.msra.mxu0 %v4612
    %4874 = vmatprep.subr.bf16.mxu0 %v4605
    %4875 = vmatpush2.bf16.msra.mxu0 %v4604
    %4876 = vmatprep.subr.bf16.mxu0 %v4597
    %4877 = vmatpush2.bf16.msra.mxu0 %v4596
    %4878 = vmatprep.subr.bf16.mxu0 %v4589
    %4879 = vmatpush2.bf16.msra.mxu0 %v4588
    %4880 = vmatprep.subr.bf16.mxu0 %v4581
    %4881 = vmatpush2.bf16.msra.mxu0 %v4580
    %4882 = vmatprep.mubr.bf16.mxu0 %v3999
    %4883 = vmatmul.mubr.bf16.gmra.mxu0 %v3998
    %v4884 = vpop.f32.mrf.mxu0
    %v4885 = vadd.f32 0.0, %v4884
    %v4886 = vpop.f32.mrf.mxu0
    %v4887 = vadd.f32 0.0, %v4886
    %v4888 = vpop.f32.mrf.mxu0
    %v4889 = vpop.f32.mrf.mxu0
    %4890 = vdwg.mxu0
    %4891 = vmatprep.subr.bf16.mxu0 %v4575
    %4892 = vmatpush1.bf16.msra.mxu0 %v4574
    %4893 = vmatprep.subr.bf16.mxu0 %v4567
    %4894 = vmatpush1.bf16.msra.mxu0 %v4566
    %4895 = vmatprep.subr.bf16.mxu0 %v4559
    %4896 = vmatpush1.bf16.msra.mxu0 %v4558
    %4897 = vmatprep.subr.bf16.mxu0 %v4551
    %4898 = vmatpush1.bf16.msra.mxu0 %v4550
    %4899 = vmatprep.subr.bf16.mxu0 %v4543
    %4900 = vmatpush1.bf16.msra.mxu0 %v4542
    %4901 = vmatprep.subr.bf16.mxu0 %v4535
    %4902 = vmatpush1.bf16.msra.mxu0 %v4534
    %4903 = vmatprep.subr.bf16.mxu0 %v4527
    %4904 = vmatpush1.bf16.msra.mxu0 %v4526
    %4905 = vmatprep.subr.bf16.mxu0 %v4519
    %4906 = vmatpush1.bf16.msra.mxu0 %v4518
    %4907 = vmatprep.subr.bf16.mxu0 %v4639
    %4908 = vmatpush2.bf16.msra.mxu0 %v4638
    %4909 = vmatprep.subr.bf16.mxu0 %v4631
    %4910 = vmatpush2.bf16.msra.mxu0 %v4630
    %4911 = vmatprep.subr.bf16.mxu0 %v4623
    %4912 = vmatpush2.bf16.msra.mxu0 %v4622
    %4913 = vmatprep.subr.bf16.mxu0 %v4615
    %4914 = vmatpush2.bf16.msra.mxu0 %v4614
    %4915 = vmatprep.subr.bf16.mxu0 %v4607
    %4916 = vmatpush2.bf16.msra.mxu0 %v4606
    %4917 = vmatprep.subr.bf16.mxu0 %v4599
    %4918 = vmatpush2.bf16.msra.mxu0 %v4598
    %4919 = vmatprep.subr.bf16.mxu0 %v4591
    %4920 = vmatpush2.bf16.msra.mxu0 %v4590
    %4921 = vmatprep.subr.bf16.mxu0 %v4583
    %4922 = vmatpush2.bf16.msra.mxu0 %v4582
    %4923 = vmatprep.mubr.bf16.mxu0 %v3999
    %4924 = vmatmul.mubr.bf16.gmra.mxu0 %v3998
    %v4925 = vpop.f32.mrf.mxu0
    %v4926 = vadd.f32 0.0, %v4925
    %v4927 = vpop.f32.mrf.mxu0
    %v4928 = vadd.f32 0.0, %v4927
    %v4929 = vpop.f32.mrf.mxu0
    %v4930 = vpop.f32.mrf.mxu0
    %4931 = vdwg.mxu0
    %v4932 = vadd.f32 %v3988, %v4803
    %v4933 = vadd.f32 %v3989, %v4805
    %v4934 = vadd.f32 %v3990, %v4844
    %v4935 = vadd.f32 %v3991, %v4846
    %v4936 = vadd.f32 %v3992, %v4885
    %v4937 = vadd.f32 %v3993, %v4887
    %v4938 = vadd.f32 %v3994, %v4926
    %v4939 = vadd.f32 %v3995, %v4928
    %v4940 = vxor.u32 %v4932, 2147483648
    %v4941 = vxor.u32 %v4933, 2147483648
    %v4942 = vxor.u32 %v4934, 2147483648
    %v4943 = vxor.u32 %v4935, 2147483648
    %v4944 = vxor.u32 %v4936, 2147483648
    %v4945 = vxor.u32 %v4937, 2147483648
    %v4946 = vmul.f32 %v4940, 1.442695
    %v4947 = vpow.pop %v4946
    %v4948 = vmul.f32 %v4941, 1.442695
    %v4949 = vpow.pop %v4948
    %v4950 = vmul.f32 %v4942, 1.442695
    %v4951 = vpow.pop %v4950
    %v4952 = vmul.f32 %v4943, 1.442695
    %v4953 = vpow.pop %v4952
    %v4954 = vmul.f32 %v4944, 1.442695
    %v4955 = vpow.pop %v4954
    %v4956 = vmul.f32 %v4945, 1.442695
    %v4957 = vpow.pop %v4956
    %v4958 = vadd.f32 %v4947, 1.0
    %v4959 = vadd.f32 %v4949, 1.0
    %v4960 = vadd.f32 %v4951, 1.0
    %v4961 = vadd.f32 %v4953, 1.0
    %v4962 = vadd.f32 %v4955, 1.0
    %v4963 = vadd.f32 %v4957, 1.0
    %v4964 = vrcp.pop %v4958
    %v4965 = vmul.f32 1.0, %v4964
    %v4966 = vrcp.pop %v4959
    %v4967 = vmul.f32 1.0, %v4966
    %v4968 = vrcp.pop %v4960
    %v4969 = vmul.f32 1.0, %v4968
    %v4970 = vrcp.pop %v4961
    %v4971 = vmul.f32 1.0, %v4970
    %v4972 = vrcp.pop %v4962
    %v4973 = vmul.f32 1.0, %v4972
    %v4974 = vrcp.pop %v4963
    %v4975 = vmul.f32 1.0, %v4974
    %v4976 = vtanh.pop %v4938
    %v4977 = vtanh.pop %v4939
    %v4978 = vld [vmem:[#allocation4] sm:$0xff]
    %v4979 = vld [vmem:[#allocation4 + $0x8] sm:$0xff]
    %v4980 = vmul.f32 %v4969, %v4978
    %v4981 = vmul.f32 %v4971, %v4979
    %v4982 = vmul.f32 %v4965, %v4976
    %v4983 = vmul.f32 %v4967, %v4977
    %v4984 = vadd.f32 %v4980, %v4982
    %v4985 = vadd.f32 %v4981, %v4983
    %4986 = vst [vmem:[#allocation4] sm:$0xff] %v4984
    %4987 = vst [vmem:[#allocation4 + $0x8] sm:$0xff] %v4985
    %v4988 = vtanh.pop %v4984
    %v4989 = vtanh.pop %v4985
    %v4990 = vmul.f32 %v4973, %v4988
    %v4991 = vmul.f32 %v4975, %v4989
    %4992 = vst [vmem:[#allocation3] sm:$0xff] %v4990
    %4993 = vst [vmem:[#allocation3 + $0x8] sm:$0xff] %v4991
    %s4994 = smul.u32 4, 8
    %s4995 = smul.addr %s4994, 4
    %s4996 = scalar_lea.vmem [#allocation2], %s4995
    %v4997 = vld [vmem:[%s4996] sm:$0xff]
    %v4998 = vld [vmem:[%s4996 + $0x8] sm:$0xff]
    %v4999 = vld [vmem:[%s4996 + $0x10] sm:$0xff]
    %v5000 = vld [vmem:[%s4996 + $0x18] sm:$0xff]
    %v5001 = vunpack.c.l.bf16 %v4997
    %v5002 = vunpack.c.h.bf16 %v4997
    %v5003 = vunpack.c.l.bf16 %v4998
    %v5004 = vunpack.c.h.bf16 %v4998
    %v5005 = vunpack.c.l.bf16 %v4999
    %v5006 = vunpack.c.h.bf16 %v4999
    %v5007 = vunpack.c.l.bf16 %v5000
    %v5008 = vunpack.c.h.bf16 %v5000
    %v5009 = vld [vmem:[#allocation3] sm:$0xff]
    %v5010 = vld [vmem:[#allocation3 + $0x8] sm:$0xff]
    %v5011 = vpack.c.bf16 %v5009, %v5009
    %v5012 = vpack.c.bf16 %v5010, %v5010
    %v5013 = vld [vmem:[#allocation11] sm:$0xff]
    %v5014 = vld [vmem:[#allocation11 + $0x8] sm:$0xff]
    %v5015 = vld [vmem:[#allocation11 + $0x10] sm:$0xff]
    %v5016 = vld [vmem:[#allocation11 + $0x18] sm:$0xff]
    %v5017 = vld [vmem:[#allocation11 + $0x20] sm:$0xff]
    %v5018 = vld [vmem:[#allocation11 + $0x28] sm:$0xff]
    %v5019 = vld [vmem:[#allocation11 + $0x30] sm:$0xff]
    %v5020 = vld [vmem:[#allocation11 + $0x38] sm:$0xff]
    %v5021 = vld [vmem:[#allocation11 + $0x40] sm:$0xff]
    %v5022 = vld [vmem:[#allocation11 + $0x48] sm:$0xff]
    %v5023 = vld [vmem:[#allocation11 + $0x50] sm:$0xff]
    %v5024 = vld [vmem:[#allocation11 + $0x58] sm:$0xff]
    %v5025 = vld [vmem:[#allocation11 + $0x60] sm:$0xff]
    %v5026 = vld [vmem:[#allocation11 + $0x68] sm:$0xff]
    %v5027 = vld [vmem:[#allocation11 + $0x70] sm:$0xff]
    %v5028 = vld [vmem:[#allocation11 + $0x78] sm:$0xff]
    %v5029 = vld [vmem:[#allocation11 + $0x80] sm:$0xff]
    %v5030 = vld [vmem:[#allocation11 + $0x88] sm:$0xff]
    %v5031 = vld [vmem:[#allocation11 + $0x90] sm:$0xff]
    %v5032 = vld [vmem:[#allocation11 + $0x98] sm:$0xff]
    %v5033 = vld [vmem:[#allocation11 + $0xa0] sm:$0xff]
    %v5034 = vld [vmem:[#allocation11 + $0xa8] sm:$0xff]
    %v5035 = vld [vmem:[#allocation11 + $0xb0] sm:$0xff]
    %v5036 = vld [vmem:[#allocation11 + $0xb8] sm:$0xff]
    %v5037 = vld [vmem:[#allocation11 + $0xc0] sm:$0xff]
    %v5038 = vld [vmem:[#allocation11 + $0xc8] sm:$0xff]
    %v5039 = vld [vmem:[#allocation11 + $0xd0] sm:$0xff]
    %v5040 = vld [vmem:[#allocation11 + $0xd8] sm:$0xff]
    %v5041 = vld [vmem:[#allocation11 + $0xe0] sm:$0xff]
    %v5042 = vld [vmem:[#allocation11 + $0xe8] sm:$0xff]
    %v5043 = vld [vmem:[#allocation11 + $0xf0] sm:$0xff]
    %v5044 = vld [vmem:[#allocation11 + $0xf8] sm:$0xff]
    %v5045 = vld [vmem:[#allocation11 + $0x100] sm:$0xff]
    %v5046 = vld [vmem:[#allocation11 + $0x108] sm:$0xff]
    %v5047 = vld [vmem:[#allocation11 + $0x110] sm:$0xff]
    %v5048 = vld [vmem:[#allocation11 + $0x118] sm:$0xff]
    %v5049 = vld [vmem:[#allocation11 + $0x120] sm:$0xff]
    %v5050 = vld [vmem:[#allocation11 + $0x128] sm:$0xff]
    %v5051 = vld [vmem:[#allocation11 + $0x130] sm:$0xff]
    %v5052 = vld [vmem:[#allocation11 + $0x138] sm:$0xff]
    %v5053 = vld [vmem:[#allocation11 + $0x140] sm:$0xff]
    %v5054 = vld [vmem:[#allocation11 + $0x148] sm:$0xff]
    %v5055 = vld [vmem:[#allocation11 + $0x150] sm:$0xff]
    %v5056 = vld [vmem:[#allocation11 + $0x158] sm:$0xff]
    %v5057 = vld [vmem:[#allocation11 + $0x160] sm:$0xff]
    %v5058 = vld [vmem:[#allocation11 + $0x168] sm:$0xff]
    %v5059 = vld [vmem:[#allocation11 + $0x170] sm:$0xff]
    %v5060 = vld [vmem:[#allocation11 + $0x178] sm:$0xff]
    %v5061 = vld [vmem:[#allocation11 + $0x180] sm:$0xff]
    %v5062 = vld [vmem:[#allocation11 + $0x188] sm:$0xff]
    %v5063 = vld [vmem:[#allocation11 + $0x190] sm:$0xff]
    %v5064 = vld [vmem:[#allocation11 + $0x198] sm:$0xff]
    %v5065 = vld [vmem:[#allocation11 + $0x1a0] sm:$0xff]
    %v5066 = vld [vmem:[#allocation11 + $0x1a8] sm:$0xff]
    %v5067 = vld [vmem:[#allocation11 + $0x1b0] sm:$0xff]
    %v5068 = vld [vmem:[#allocation11 + $0x1b8] sm:$0xff]
    %v5069 = vld [vmem:[#allocation11 + $0x1c0] sm:$0xff]
    %v5070 = vld [vmem:[#allocation11 + $0x1c8] sm:$0xff]
    %v5071 = vld [vmem:[#allocation11 + $0x1d0] sm:$0xff]
    %v5072 = vld [vmem:[#allocation11 + $0x1d8] sm:$0xff]
    %v5073 = vld [vmem:[#allocation11 + $0x1e0] sm:$0xff]
    %v5074 = vld [vmem:[#allocation11 + $0x1e8] sm:$0xff]
    %v5075 = vld [vmem:[#allocation11 + $0x1f0] sm:$0xff]
    %v5076 = vld [vmem:[#allocation11 + $0x1f8] sm:$0xff]
    %v5077 = vld [vmem:[#allocation11 + $0x200] sm:$0xff]
    %v5078 = vld [vmem:[#allocation11 + $0x208] sm:$0xff]
    %v5079 = vld [vmem:[#allocation11 + $0x210] sm:$0xff]
    %v5080 = vld [vmem:[#allocation11 + $0x218] sm:$0xff]
    %v5081 = vld [vmem:[#allocation11 + $0x220] sm:$0xff]
    %v5082 = vld [vmem:[#allocation11 + $0x228] sm:$0xff]
    %v5083 = vld [vmem:[#allocation11 + $0x230] sm:$0xff]
    %v5084 = vld [vmem:[#allocation11 + $0x238] sm:$0xff]
    %v5085 = vld [vmem:[#allocation11 + $0x240] sm:$0xff]
    %v5086 = vld [vmem:[#allocation11 + $0x248] sm:$0xff]
    %v5087 = vld [vmem:[#allocation11 + $0x250] sm:$0xff]
    %v5088 = vld [vmem:[#allocation11 + $0x258] sm:$0xff]
    %v5089 = vld [vmem:[#allocation11 + $0x260] sm:$0xff]
    %v5090 = vld [vmem:[#allocation11 + $0x268] sm:$0xff]
    %v5091 = vld [vmem:[#allocation11 + $0x270] sm:$0xff]
    %v5092 = vld [vmem:[#allocation11 + $0x278] sm:$0xff]
    %v5093 = vld [vmem:[#allocation11 + $0x280] sm:$0xff]
    %v5094 = vld [vmem:[#allocation11 + $0x288] sm:$0xff]
    %v5095 = vld [vmem:[#allocation11 + $0x290] sm:$0xff]
    %v5096 = vld [vmem:[#allocation11 + $0x298] sm:$0xff]
    %v5097 = vld [vmem:[#allocation11 + $0x2a0] sm:$0xff]
    %v5098 = vld [vmem:[#allocation11 + $0x2a8] sm:$0xff]
    %v5099 = vld [vmem:[#allocation11 + $0x2b0] sm:$0xff]
    %v5100 = vld [vmem:[#allocation11 + $0x2b8] sm:$0xff]
    %v5101 = vld [vmem:[#allocation11 + $0x2c0] sm:$0xff]
    %v5102 = vld [vmem:[#allocation11 + $0x2c8] sm:$0xff]
    %v5103 = vld [vmem:[#allocation11 + $0x2d0] sm:$0xff]
    %v5104 = vld [vmem:[#allocation11 + $0x2d8] sm:$0xff]
    %v5105 = vld [vmem:[#allocation11 + $0x2e0] sm:$0xff]
    %v5106 = vld [vmem:[#allocation11 + $0x2e8] sm:$0xff]
    %v5107 = vld [vmem:[#allocation11 + $0x2f0] sm:$0xff]
    %v5108 = vld [vmem:[#allocation11 + $0x2f8] sm:$0xff]
    %v5109 = vld [vmem:[#allocation11 + $0x300] sm:$0xff]
    %v5110 = vld [vmem:[#allocation11 + $0x308] sm:$0xff]
    %v5111 = vld [vmem:[#allocation11 + $0x310] sm:$0xff]
    %v5112 = vld [vmem:[#allocation11 + $0x318] sm:$0xff]
    %v5113 = vld [vmem:[#allocation11 + $0x320] sm:$0xff]
    %v5114 = vld [vmem:[#allocation11 + $0x328] sm:$0xff]
    %v5115 = vld [vmem:[#allocation11 + $0x330] sm:$0xff]
    %v5116 = vld [vmem:[#allocation11 + $0x338] sm:$0xff]
    %v5117 = vld [vmem:[#allocation11 + $0x340] sm:$0xff]
    %v5118 = vld [vmem:[#allocation11 + $0x348] sm:$0xff]
    %v5119 = vld [vmem:[#allocation11 + $0x350] sm:$0xff]
    %v5120 = vld [vmem:[#allocation11 + $0x358] sm:$0xff]
    %v5121 = vld [vmem:[#allocation11 + $0x360] sm:$0xff]
    %v5122 = vld [vmem:[#allocation11 + $0x368] sm:$0xff]
    %v5123 = vld [vmem:[#allocation11 + $0x370] sm:$0xff]
    %v5124 = vld [vmem:[#allocation11 + $0x378] sm:$0xff]
    %v5125 = vld [vmem:[#allocation11 + $0x380] sm:$0xff]
    %v5126 = vld [vmem:[#allocation11 + $0x388] sm:$0xff]
    %v5127 = vld [vmem:[#allocation11 + $0x390] sm:$0xff]
    %v5128 = vld [vmem:[#allocation11 + $0x398] sm:$0xff]
    %v5129 = vld [vmem:[#allocation11 + $0x3a0] sm:$0xff]
    %v5130 = vld [vmem:[#allocation11 + $0x3a8] sm:$0xff]
    %v5131 = vld [vmem:[#allocation11 + $0x3b0] sm:$0xff]
    %v5132 = vld [vmem:[#allocation11 + $0x3b8] sm:$0xff]
    %v5133 = vld [vmem:[#allocation11 + $0x3c0] sm:$0xff]
    %v5134 = vld [vmem:[#allocation11 + $0x3c8] sm:$0xff]
    %v5135 = vld [vmem:[#allocation11 + $0x3d0] sm:$0xff]
    %v5136 = vld [vmem:[#allocation11 + $0x3d8] sm:$0xff]
    %v5137 = vld [vmem:[#allocation11 + $0x3e0] sm:$0xff]
    %v5138 = vld [vmem:[#allocation11 + $0x3e8] sm:$0xff]
    %v5139 = vld [vmem:[#allocation11 + $0x3f0] sm:$0xff]
    %v5140 = vld [vmem:[#allocation11 + $0x3f8] sm:$0xff]
    %v5269 = vunpack.c.l.b16 %v5013
    %v5270 = vunpack.c.h.b16 %v5013
    %v5271 = vunpack.c.l.b16 %v5014
    %v5272 = vunpack.c.h.b16 %v5014
    %v5273 = vunpack.c.l.b16 %v5015
    %v5274 = vunpack.c.h.b16 %v5015
    %v5275 = vunpack.c.l.b16 %v5016
    %v5276 = vunpack.c.h.b16 %v5016
    %v5277 = vunpack.c.l.b16 %v5017
    %v5278 = vunpack.c.h.b16 %v5017
    %v5279 = vunpack.c.l.b16 %v5018
    %v5280 = vunpack.c.h.b16 %v5018
    %v5281 = vunpack.c.l.b16 %v5019
    %v5282 = vunpack.c.h.b16 %v5019
    %v5283 = vunpack.c.l.b16 %v5020
    %v5284 = vunpack.c.h.b16 %v5020
    %v5285 = vunpack.c.l.b16 %v5021
    %v5286 = vunpack.c.h.b16 %v5021
    %v5287 = vunpack.c.l.b16 %v5022
    %v5288 = vunpack.c.h.b16 %v5022
    %v5289 = vunpack.c.l.b16 %v5023
    %v5290 = vunpack.c.h.b16 %v5023
    %v5291 = vunpack.c.l.b16 %v5024
    %v5292 = vunpack.c.h.b16 %v5024
    %v5293 = vunpack.c.l.b16 %v5025
    %v5294 = vunpack.c.h.b16 %v5025
    %v5295 = vunpack.c.l.b16 %v5026
    %v5296 = vunpack.c.h.b16 %v5026
    %v5297 = vunpack.c.l.b16 %v5027
    %v5298 = vunpack.c.h.b16 %v5027
    %v5299 = vunpack.c.l.b16 %v5028
    %v5300 = vunpack.c.h.b16 %v5028
    %v5301 = vunpack.c.l.b16 %v5029
    %v5302 = vunpack.c.h.b16 %v5029
    %v5303 = vunpack.c.l.b16 %v5030
    %v5304 = vunpack.c.h.b16 %v5030
    %v5305 = vunpack.c.l.b16 %v5031
    %v5306 = vunpack.c.h.b16 %v5031
    %v5307 = vunpack.c.l.b16 %v5032
    %v5308 = vunpack.c.h.b16 %v5032
    %v5309 = vunpack.c.l.b16 %v5033
    %v5310 = vunpack.c.h.b16 %v5033
    %v5311 = vunpack.c.l.b16 %v5034
    %v5312 = vunpack.c.h.b16 %v5034
    %v5313 = vunpack.c.l.b16 %v5035
    %v5314 = vunpack.c.h.b16 %v5035
    %v5315 = vunpack.c.l.b16 %v5036
    %v5316 = vunpack.c.h.b16 %v5036
    %v5317 = vunpack.c.l.b16 %v5037
    %v5318 = vunpack.c.h.b16 %v5037
    %v5319 = vunpack.c.l.b16 %v5038
    %v5320 = vunpack.c.h.b16 %v5038
    %v5321 = vunpack.c.l.b16 %v5039
    %v5322 = vunpack.c.h.b16 %v5039
    %v5323 = vunpack.c.l.b16 %v5040
    %v5324 = vunpack.c.h.b16 %v5040
    %v5325 = vunpack.c.l.b16 %v5041
    %v5326 = vunpack.c.h.b16 %v5041
    %v5327 = vunpack.c.l.b16 %v5042
    %v5328 = vunpack.c.h.b16 %v5042
    %v5329 = vunpack.c.l.b16 %v5043
    %v5330 = vunpack.c.h.b16 %v5043
    %v5331 = vunpack.c.l.b16 %v5044
    %v5332 = vunpack.c.h.b16 %v5044
    %v5333 = vunpack.c.l.b16 %v5045
    %v5334 = vunpack.c.h.b16 %v5045
    %v5335 = vunpack.c.l.b16 %v5046
    %v5336 = vunpack.c.h.b16 %v5046
    %v5337 = vunpack.c.l.b16 %v5047
    %v5338 = vunpack.c.h.b16 %v5047
    %v5339 = vunpack.c.l.b16 %v5048
    %v5340 = vunpack.c.h.b16 %v5048
    %v5341 = vunpack.c.l.b16 %v5049
    %v5342 = vunpack.c.h.b16 %v5049
    %v5343 = vunpack.c.l.b16 %v5050
    %v5344 = vunpack.c.h.b16 %v5050
    %v5345 = vunpack.c.l.b16 %v5051
    %v5346 = vunpack.c.h.b16 %v5051
    %v5347 = vunpack.c.l.b16 %v5052
    %v5348 = vunpack.c.h.b16 %v5052
    %v5349 = vunpack.c.l.b16 %v5053
    %v5350 = vunpack.c.h.b16 %v5053
    %v5351 = vunpack.c.l.b16 %v5054
    %v5352 = vunpack.c.h.b16 %v5054
    %v5353 = vunpack.c.l.b16 %v5055
    %v5354 = vunpack.c.h.b16 %v5055
    %v5355 = vunpack.c.l.b16 %v5056
    %v5356 = vunpack.c.h.b16 %v5056
    %v5357 = vunpack.c.l.b16 %v5057
    %v5358 = vunpack.c.h.b16 %v5057
    %v5359 = vunpack.c.l.b16 %v5058
    %v5360 = vunpack.c.h.b16 %v5058
    %v5361 = vunpack.c.l.b16 %v5059
    %v5362 = vunpack.c.h.b16 %v5059
    %v5363 = vunpack.c.l.b16 %v5060
    %v5364 = vunpack.c.h.b16 %v5060
    %v5365 = vunpack.c.l.b16 %v5061
    %v5366 = vunpack.c.h.b16 %v5061
    %v5367 = vunpack.c.l.b16 %v5062
    %v5368 = vunpack.c.h.b16 %v5062
    %v5369 = vunpack.c.l.b16 %v5063
    %v5370 = vunpack.c.h.b16 %v5063
    %v5371 = vunpack.c.l.b16 %v5064
    %v5372 = vunpack.c.h.b16 %v5064
    %v5373 = vunpack.c.l.b16 %v5065
    %v5374 = vunpack.c.h.b16 %v5065
    %v5375 = vunpack.c.l.b16 %v5066
    %v5376 = vunpack.c.h.b16 %v5066
    %v5377 = vunpack.c.l.b16 %v5067
    %v5378 = vunpack.c.h.b16 %v5067
    %v5379 = vunpack.c.l.b16 %v5068
    %v5380 = vunpack.c.h.b16 %v5068
    %v5381 = vunpack.c.l.b16 %v5069
    %v5382 = vunpack.c.h.b16 %v5069
    %v5383 = vunpack.c.l.b16 %v5070
    %v5384 = vunpack.c.h.b16 %v5070
    %v5385 = vunpack.c.l.b16 %v5071
    %v5386 = vunpack.c.h.b16 %v5071
    %v5387 = vunpack.c.l.b16 %v5072
    %v5388 = vunpack.c.h.b16 %v5072
    %v5389 = vunpack.c.l.b16 %v5073
    %v5390 = vunpack.c.h.b16 %v5073
    %v5391 = vunpack.c.l.b16 %v5074
    %v5392 = vunpack.c.h.b16 %v5074
    %v5393 = vunpack.c.l.b16 %v5075
    %v5394 = vunpack.c.h.b16 %v5075
    %v5395 = vunpack.c.l.b16 %v5076
    %v5396 = vunpack.c.h.b16 %v5076
    %v5397 = vunpack.c.l.b16 %v5077
    %v5398 = vunpack.c.h.b16 %v5077
    %v5399 = vunpack.c.l.b16 %v5078
    %v5400 = vunpack.c.h.b16 %v5078
    %v5401 = vunpack.c.l.b16 %v5079
    %v5402 = vunpack.c.h.b16 %v5079
    %v5403 = vunpack.c.l.b16 %v5080
    %v5404 = vunpack.c.h.b16 %v5080
    %v5405 = vunpack.c.l.b16 %v5081
    %v5406 = vunpack.c.h.b16 %v5081
    %v5407 = vunpack.c.l.b16 %v5082
    %v5408 = vunpack.c.h.b16 %v5082
    %v5409 = vunpack.c.l.b16 %v5083
    %v5410 = vunpack.c.h.b16 %v5083
    %v5411 = vunpack.c.l.b16 %v5084
    %v5412 = vunpack.c.h.b16 %v5084
    %v5413 = vunpack.c.l.b16 %v5085
    %v5414 = vunpack.c.h.b16 %v5085
    %v5415 = vunpack.c.l.b16 %v5086
    %v5416 = vunpack.c.h.b16 %v5086
    %v5417 = vunpack.c.l.b16 %v5087
    %v5418 = vunpack.c.h.b16 %v5087
    %v5419 = vunpack.c.l.b16 %v5088
    %v5420 = vunpack.c.h.b16 %v5088
    %v5421 = vunpack.c.l.b16 %v5089
    %v5422 = vunpack.c.h.b16 %v5089
    %v5423 = vunpack.c.l.b16 %v5090
    %v5424 = vunpack.c.h.b16 %v5090
    %v5425 = vunpack.c.l.b16 %v5091
    %v5426 = vunpack.c.h.b16 %v5091
    %v5427 = vunpack.c.l.b16 %v5092
    %v5428 = vunpack.c.h.b16 %v5092
    %v5429 = vunpack.c.l.b16 %v5093
    %v5430 = vunpack.c.h.b16 %v5093
    %v5431 = vunpack.c.l.b16 %v5094
    %v5432 = vunpack.c.h.b16 %v5094
    %v5433 = vunpack.c.l.b16 %v5095
    %v5434 = vunpack.c.h.b16 %v5095
    %v5435 = vunpack.c.l.b16 %v5096
    %v5436 = vunpack.c.h.b16 %v5096
    %v5437 = vunpack.c.l.b16 %v5097
    %v5438 = vunpack.c.h.b16 %v5097
    %v5439 = vunpack.c.l.b16 %v5098
    %v5440 = vunpack.c.h.b16 %v5098
    %v5441 = vunpack.c.l.b16 %v5099
    %v5442 = vunpack.c.h.b16 %v5099
    %v5443 = vunpack.c.l.b16 %v5100
    %v5444 = vunpack.c.h.b16 %v5100
    %v5445 = vunpack.c.l.b16 %v5101
    %v5446 = vunpack.c.h.b16 %v5101
    %v5447 = vunpack.c.l.b16 %v5102
    %v5448 = vunpack.c.h.b16 %v5102
    %v5449 = vunpack.c.l.b16 %v5103
    %v5450 = vunpack.c.h.b16 %v5103
    %v5451 = vunpack.c.l.b16 %v5104
    %v5452 = vunpack.c.h.b16 %v5104
    %v5453 = vunpack.c.l.b16 %v5105
    %v5454 = vunpack.c.h.b16 %v5105
    %v5455 = vunpack.c.l.b16 %v5106
    %v5456 = vunpack.c.h.b16 %v5106
    %v5457 = vunpack.c.l.b16 %v5107
    %v5458 = vunpack.c.h.b16 %v5107
    %v5459 = vunpack.c.l.b16 %v5108
    %v5460 = vunpack.c.h.b16 %v5108
    %v5461 = vunpack.c.l.b16 %v5109
    %v5462 = vunpack.c.h.b16 %v5109
    %v5463 = vunpack.c.l.b16 %v5110
    %v5464 = vunpack.c.h.b16 %v5110
    %v5465 = vunpack.c.l.b16 %v5111
    %v5466 = vunpack.c.h.b16 %v5111
    %v5467 = vunpack.c.l.b16 %v5112
    %v5468 = vunpack.c.h.b16 %v5112
    %v5469 = vunpack.c.l.b16 %v5113
    %v5470 = vunpack.c.h.b16 %v5113
    %v5471 = vunpack.c.l.b16 %v5114
    %v5472 = vunpack.c.h.b16 %v5114
    %v5473 = vunpack.c.l.b16 %v5115
    %v5474 = vunpack.c.h.b16 %v5115
    %v5475 = vunpack.c.l.b16 %v5116
    %v5476 = vunpack.c.h.b16 %v5116
    %v5477 = vunpack.c.l.b16 %v5117
    %v5478 = vunpack.c.h.b16 %v5117
    %v5479 = vunpack.c.l.b16 %v5118
    %v5480 = vunpack.c.h.b16 %v5118
    %v5481 = vunpack.c.l.b16 %v5119
    %v5482 = vunpack.c.h.b16 %v5119
    %v5483 = vunpack.c.l.b16 %v5120
    %v5484 = vunpack.c.h.b16 %v5120
    %v5485 = vunpack.c.l.b16 %v5121
    %v5486 = vunpack.c.h.b16 %v5121
    %v5487 = vunpack.c.l.b16 %v5122
    %v5488 = vunpack.c.h.b16 %v5122
    %v5489 = vunpack.c.l.b16 %v5123
    %v5490 = vunpack.c.h.b16 %v5123
    %v5491 = vunpack.c.l.b16 %v5124
    %v5492 = vunpack.c.h.b16 %v5124
    %v5493 = vunpack.c.l.b16 %v5125
    %v5494 = vunpack.c.h.b16 %v5125
    %v5495 = vunpack.c.l.b16 %v5126
    %v5496 = vunpack.c.h.b16 %v5126
    %v5497 = vunpack.c.l.b16 %v5127
    %v5498 = vunpack.c.h.b16 %v5127
    %v5499 = vunpack.c.l.b16 %v5128
    %v5500 = vunpack.c.h.b16 %v5128
    %v5501 = vunpack.c.l.b16 %v5129
    %v5502 = vunpack.c.h.b16 %v5129
    %v5503 = vunpack.c.l.b16 %v5130
    %v5504 = vunpack.c.h.b16 %v5130
    %v5505 = vunpack.c.l.b16 %v5131
    %v5506 = vunpack.c.h.b16 %v5131
    %v5507 = vunpack.c.l.b16 %v5132
    %v5508 = vunpack.c.h.b16 %v5132
    %v5509 = vunpack.c.l.b16 %v5133
    %v5510 = vunpack.c.h.b16 %v5133
    %v5511 = vunpack.c.l.b16 %v5134
    %v5512 = vunpack.c.h.b16 %v5134
    %v5513 = vunpack.c.l.b16 %v5135
    %v5514 = vunpack.c.h.b16 %v5135
    %v5515 = vunpack.c.l.b16 %v5136
    %v5516 = vunpack.c.h.b16 %v5136
    %v5517 = vunpack.c.l.b16 %v5137
    %v5518 = vunpack.c.h.b16 %v5137
    %v5519 = vunpack.c.l.b16 %v5138
    %v5520 = vunpack.c.h.b16 %v5138
    %v5521 = vunpack.c.l.b16 %v5139
    %v5522 = vunpack.c.h.b16 %v5139
    %v5523 = vunpack.c.l.b16 %v5140
    %v5524 = vunpack.c.h.b16 %v5140
    %v5525 = vpack.c.b16 %v5277, %v5269
    %v5526 = vpack.c.b16 %v5278, %v5270
    %v5527 = vpack.c.b16 %v5279, %v5271
    %v5528 = vpack.c.b16 %v5280, %v5272
    %v5529 = vpack.c.b16 %v5281, %v5273
    %v5530 = vpack.c.b16 %v5282, %v5274
    %v5531 = vpack.c.b16 %v5283, %v5275
    %v5532 = vpack.c.b16 %v5284, %v5276
    %v5533 = vpack.c.b16 %v5293, %v5285
    %v5534 = vpack.c.b16 %v5294, %v5286
    %v5535 = vpack.c.b16 %v5295, %v5287
    %v5536 = vpack.c.b16 %v5296, %v5288
    %v5537 = vpack.c.b16 %v5297, %v5289
    %v5538 = vpack.c.b16 %v5298, %v5290
    %v5539 = vpack.c.b16 %v5299, %v5291
    %v5540 = vpack.c.b16 %v5300, %v5292
    %v5541 = vpack.c.b16 %v5309, %v5301
    %v5542 = vpack.c.b16 %v5310, %v5302
    %v5543 = vpack.c.b16 %v5311, %v5303
    %v5544 = vpack.c.b16 %v5312, %v5304
    %v5545 = vpack.c.b16 %v5313, %v5305
    %v5546 = vpack.c.b16 %v5314, %v5306
    %v5547 = vpack.c.b16 %v5315, %v5307
    %v5548 = vpack.c.b16 %v5316, %v5308
    %v5549 = vpack.c.b16 %v5325, %v5317
    %v5550 = vpack.c.b16 %v5326, %v5318
    %v5551 = vpack.c.b16 %v5327, %v5319
    %v5552 = vpack.c.b16 %v5328, %v5320
    %v5553 = vpack.c.b16 %v5329, %v5321
    %v5554 = vpack.c.b16 %v5330, %v5322
    %v5555 = vpack.c.b16 %v5331, %v5323
    %v5556 = vpack.c.b16 %v5332, %v5324
    %v5557 = vpack.c.b16 %v5341, %v5333
    %v5558 = vpack.c.b16 %v5342, %v5334
    %v5559 = vpack.c.b16 %v5343, %v5335
    %v5560 = vpack.c.b16 %v5344, %v5336
    %v5561 = vpack.c.b16 %v5345, %v5337
    %v5562 = vpack.c.b16 %v5346, %v5338
    %v5563 = vpack.c.b16 %v5347, %v5339
    %v5564 = vpack.c.b16 %v5348, %v5340
    %v5565 = vpack.c.b16 %v5357, %v5349
    %v5566 = vpack.c.b16 %v5358, %v5350
    %v5567 = vpack.c.b16 %v5359, %v5351
    %v5568 = vpack.c.b16 %v5360, %v5352
    %v5569 = vpack.c.b16 %v5361, %v5353
    %v5570 = vpack.c.b16 %v5362, %v5354
    %v5571 = vpack.c.b16 %v5363, %v5355
    %v5572 = vpack.c.b16 %v5364, %v5356
    %v5573 = vpack.c.b16 %v5373, %v5365
    %v5574 = vpack.c.b16 %v5374, %v5366
    %v5575 = vpack.c.b16 %v5375, %v5367
    %v5576 = vpack.c.b16 %v5376, %v5368
    %v5577 = vpack.c.b16 %v5377, %v5369
    %v5578 = vpack.c.b16 %v5378, %v5370
    %v5579 = vpack.c.b16 %v5379, %v5371
    %v5580 = vpack.c.b16 %v5380, %v5372
    %v5581 = vpack.c.b16 %v5389, %v5381
    %v5582 = vpack.c.b16 %v5390, %v5382
    %v5583 = vpack.c.b16 %v5391, %v5383
    %v5584 = vpack.c.b16 %v5392, %v5384
    %v5585 = vpack.c.b16 %v5393, %v5385
    %v5586 = vpack.c.b16 %v5394, %v5386
    %v5587 = vpack.c.b16 %v5395, %v5387
    %v5588 = vpack.c.b16 %v5396, %v5388
    %v5589 = vpack.c.b16 %v5405, %v5397
    %v5590 = vpack.c.b16 %v5406, %v5398
    %v5591 = vpack.c.b16 %v5407, %v5399
    %v5592 = vpack.c.b16 %v5408, %v5400
    %v5593 = vpack.c.b16 %v5409, %v5401
    %v5594 = vpack.c.b16 %v5410, %v5402
    %v5595 = vpack.c.b16 %v5411, %v5403
    %v5596 = vpack.c.b16 %v5412, %v5404
    %v5597 = vpack.c.b16 %v5421, %v5413
    %v5598 = vpack.c.b16 %v5422, %v5414
    %v5599 = vpack.c.b16 %v5423, %v5415
    %v5600 = vpack.c.b16 %v5424, %v5416
    %v5601 = vpack.c.b16 %v5425, %v5417
    %v5602 = vpack.c.b16 %v5426, %v5418
    %v5603 = vpack.c.b16 %v5427, %v5419
    %v5604 = vpack.c.b16 %v5428, %v5420
    %v5605 = vpack.c.b16 %v5437, %v5429
    %v5606 = vpack.c.b16 %v5438, %v5430
    %v5607 = vpack.c.b16 %v5439, %v5431
    %v5608 = vpack.c.b16 %v5440, %v5432
    %v5609 = vpack.c.b16 %v5441, %v5433
    %v5610 = vpack.c.b16 %v5442, %v5434
    %v5611 = vpack.c.b16 %v5443, %v5435
    %v5612 = vpack.c.b16 %v5444, %v5436
    %v5613 = vpack.c.b16 %v5453, %v5445
    %v5614 = vpack.c.b16 %v5454, %v5446
    %v5615 = vpack.c.b16 %v5455, %v5447
    %v5616 = vpack.c.b16 %v5456, %v5448
    %v5617 = vpack.c.b16 %v5457, %v5449
    %v5618 = vpack.c.b16 %v5458, %v5450
    %v5619 = vpack.c.b16 %v5459, %v5451
    %v5620 = vpack.c.b16 %v5460, %v5452
    %v5621 = vpack.c.b16 %v5469, %v5461
    %v5622 = vpack.c.b16 %v5470, %v5462
    %v5623 = vpack.c.b16 %v5471, %v5463
    %v5624 = vpack.c.b16 %v5472, %v5464
    %v5625 = vpack.c.b16 %v5473, %v5465
    %v5626 = vpack.c.b16 %v5474, %v5466
    %v5627 = vpack.c.b16 %v5475, %v5467
    %v5628 = vpack.c.b16 %v5476, %v5468
    %v5629 = vpack.c.b16 %v5485, %v5477
    %v5630 = vpack.c.b16 %v5486, %v5478
    %v5631 = vpack.c.b16 %v5487, %v5479
    %v5632 = vpack.c.b16 %v5488, %v5480
    %v5633 = vpack.c.b16 %v5489, %v5481
    %v5634 = vpack.c.b16 %v5490, %v5482
    %v5635 = vpack.c.b16 %v5491, %v5483
    %v5636 = vpack.c.b16 %v5492, %v5484
    %v5637 = vpack.c.b16 %v5501, %v5493
    %v5638 = vpack.c.b16 %v5502, %v5494
    %v5639 = vpack.c.b16 %v5503, %v5495
    %v5640 = vpack.c.b16 %v5504, %v5496
    %v5641 = vpack.c.b16 %v5505, %v5497
    %v5642 = vpack.c.b16 %v5506, %v5498
    %v5643 = vpack.c.b16 %v5507, %v5499
    %v5644 = vpack.c.b16 %v5508, %v5500
    %v5645 = vpack.c.b16 %v5517, %v5509
    %v5646 = vpack.c.b16 %v5518, %v5510
    %v5647 = vpack.c.b16 %v5519, %v5511
    %v5648 = vpack.c.b16 %v5520, %v5512
    %v5649 = vpack.c.b16 %v5521, %v5513
    %v5650 = vpack.c.b16 %v5522, %v5514
    %v5651 = vpack.c.b16 %v5523, %v5515
    %v5652 = vpack.c.b16 %v5524, %v5516
    %5781 = vmatprep.subr.bf16.mxu0 %v5582
    %5782 = vmatpush1.bf16.msra.mxu0 %v5581
    %5783 = vmatprep.subr.bf16.mxu0 %v5574
    %5784 = vmatpush1.bf16.msra.mxu0 %v5573
    %5785 = vmatprep.subr.bf16.mxu0 %v5566
    %5786 = vmatpush1.bf16.msra.mxu0 %v5565
    %5787 = vmatprep.subr.bf16.mxu0 %v5558
    %5788 = vmatpush1.bf16.msra.mxu0 %v5557
    %5789 = vmatprep.subr.bf16.mxu0 %v5550
    %5790 = vmatpush1.bf16.msra.mxu0 %v5549
    %5791 = vmatprep.subr.bf16.mxu0 %v5542
    %5792 = vmatpush1.bf16.msra.mxu0 %v5541
    %5793 = vmatprep.subr.bf16.mxu0 %v5534
    %5794 = vmatpush1.bf16.msra.mxu0 %v5533
    %5795 = vmatprep.subr.bf16.mxu0 %v5526
    %5796 = vmatpush1.bf16.msra.mxu0 %v5525
    %5797 = vmatprep.subr.bf16.mxu0 %v5646
    %5798 = vmatpush2.bf16.msra.mxu0 %v5645
    %5799 = vmatprep.subr.bf16.mxu0 %v5638
    %5800 = vmatpush2.bf16.msra.mxu0 %v5637
    %5801 = vmatprep.subr.bf16.mxu0 %v5630
    %5802 = vmatpush2.bf16.msra.mxu0 %v5629
    %5803 = vmatprep.subr.bf16.mxu0 %v5622
    %5804 = vmatpush2.bf16.msra.mxu0 %v5621
    %5805 = vmatprep.subr.bf16.mxu0 %v5614
    %5806 = vmatpush2.bf16.msra.mxu0 %v5613
    %5807 = vmatprep.subr.bf16.mxu0 %v5606
    %5808 = vmatpush2.bf16.msra.mxu0 %v5605
    %5809 = vmatprep.subr.bf16.mxu0 %v5598
    %5810 = vmatpush2.bf16.msra.mxu0 %v5597
    %5811 = vmatprep.subr.bf16.mxu0 %v5590
    %5812 = vmatpush2.bf16.msra.mxu0 %v5589
    %5813 = vmatprep.mubr.bf16.mxu0 %v5012
    %5814 = vmatmul.mubr.bf16.gmra.mxu0 %v5011
    %v5815 = vpop.f32.mrf.mxu0
    %v5816 = vadd.f32 0.0, %v5815
    %v5817 = vpop.f32.mrf.mxu0
    %v5818 = vadd.f32 0.0, %v5817
    %v5819 = vpop.f32.mrf.mxu0
    %v5820 = vpop.f32.mrf.mxu0
    %5821 = vdwg.mxu0
    %5822 = vmatprep.subr.bf16.mxu0 %v5584
    %5823 = vmatpush1.bf16.msra.mxu0 %v5583
    %5824 = vmatprep.subr.bf16.mxu0 %v5576
    %5825 = vmatpush1.bf16.msra.mxu0 %v5575
    %5826 = vmatprep.subr.bf16.mxu0 %v5568
    %5827 = vmatpush1.bf16.msra.mxu0 %v5567
    %5828 = vmatprep.subr.bf16.mxu0 %v5560
    %5829 = vmatpush1.bf16.msra.mxu0 %v5559
    %5830 = vmatprep.subr.bf16.mxu0 %v5552
    %5831 = vmatpush1.bf16.msra.mxu0 %v5551
    %5832 = vmatprep.subr.bf16.mxu0 %v5544
    %5833 = vmatpush1.bf16.msra.mxu0 %v5543
    %5834 = vmatprep.subr.bf16.mxu0 %v5536
    %5835 = vmatpush1.bf16.msra.mxu0 %v5535
    %5836 = vmatprep.subr.bf16.mxu0 %v5528
    %5837 = vmatpush1.bf16.msra.mxu0 %v5527
    %5838 = vmatprep.subr.bf16.mxu0 %v5648
    %5839 = vmatpush2.bf16.msra.mxu0 %v5647
    %5840 = vmatprep.subr.bf16.mxu0 %v5640
    %5841 = vmatpush2.bf16.msra.mxu0 %v5639
    %5842 = vmatprep.subr.bf16.mxu0 %v5632
    %5843 = vmatpush2.bf16.msra.mxu0 %v5631
    %5844 = vmatprep.subr.bf16.mxu0 %v5624
    %5845 = vmatpush2.bf16.msra.mxu0 %v5623
    %5846 = vmatprep.subr.bf16.mxu0 %v5616
    %5847 = vmatpush2.bf16.msra.mxu0 %v5615
    %5848 = vmatprep.subr.bf16.mxu0 %v5608
    %5849 = vmatpush2.bf16.msra.mxu0 %v5607
    %5850 = vmatprep.subr.bf16.mxu0 %v5600
    %5851 = vmatpush2.bf16.msra.mxu0 %v5599
    %5852 = vmatprep.subr.bf16.mxu0 %v5592
    %5853 = vmatpush2.bf16.msra.mxu0 %v5591
    %5854 = vmatprep.mubr.bf16.mxu0 %v5012
    %5855 = vmatmul.mubr.bf16.gmra.mxu0 %v5011
    %v5856 = vpop.f32.mrf.mxu0
    %v5857 = vadd.f32 0.0, %v5856
    %v5858 = vpop.f32.mrf.mxu0
    %v5859 = vadd.f32 0.0, %v5858
    %v5860 = vpop.f32.mrf.mxu0
    %v5861 = vpop.f32.mrf.mxu0
    %5862 = vdwg.mxu0
    %5863 = vmatprep.subr.bf16.mxu0 %v5586
    %5864 = vmatpush1.bf16.msra.mxu0 %v5585
    %5865 = vmatprep.subr.bf16.mxu0 %v5578
    %5866 = vmatpush1.bf16.msra.mxu0 %v5577
    %5867 = vmatprep.subr.bf16.mxu0 %v5570
    %5868 = vmatpush1.bf16.msra.mxu0 %v5569
    %5869 = vmatprep.subr.bf16.mxu0 %v5562
    %5870 = vmatpush1.bf16.msra.mxu0 %v5561
    %5871 = vmatprep.subr.bf16.mxu0 %v5554
    %5872 = vmatpush1.bf16.msra.mxu0 %v5553
    %5873 = vmatprep.subr.bf16.mxu0 %v5546
    %5874 = vmatpush1.bf16.msra.mxu0 %v5545
    %5875 = vmatprep.subr.bf16.mxu0 %v5538
    %5876 = vmatpush1.bf16.msra.mxu0 %v5537
    %5877 = vmatprep.subr.bf16.mxu0 %v5530
    %5878 = vmatpush1.bf16.msra.mxu0 %v5529
    %5879 = vmatprep.subr.bf16.mxu0 %v5650
    %5880 = vmatpush2.bf16.msra.mxu0 %v5649
    %5881 = vmatprep.subr.bf16.mxu0 %v5642
    %5882 = vmatpush2.bf16.msra.mxu0 %v5641
    %5883 = vmatprep.subr.bf16.mxu0 %v5634
    %5884 = vmatpush2.bf16.msra.mxu0 %v5633
    %5885 = vmatprep.subr.bf16.mxu0 %v5626
    %5886 = vmatpush2.bf16.msra.mxu0 %v5625
    %5887 = vmatprep.subr.bf16.mxu0 %v5618
    %5888 = vmatpush2.bf16.msra.mxu0 %v5617
    %5889 = vmatprep.subr.bf16.mxu0 %v5610
    %5890 = vmatpush2.bf16.msra.mxu0 %v5609
    %5891 = vmatprep.subr.bf16.mxu0 %v5602
    %5892 = vmatpush2.bf16.msra.mxu0 %v5601
    %5893 = vmatprep.subr.bf16.mxu0 %v5594
    %5894 = vmatpush2.bf16.msra.mxu0 %v5593
    %5895 = vmatprep.mubr.bf16.mxu0 %v5012
    %5896 = vmatmul.mubr.bf16.gmra.mxu0 %v5011
    %v5897 = vpop.f32.mrf.mxu0
    %v5898 = vadd.f32 0.0, %v5897
    %v5899 = vpop.f32.mrf.mxu0
    %v5900 = vadd.f32 0.0, %v5899
    %v5901 = vpop.f32.mrf.mxu0
    %v5902 = vpop.f32.mrf.mxu0
    %5903 = vdwg.mxu0
    %5904 = vmatprep.subr.bf16.mxu0 %v5588
    %5905 = vmatpush1.bf16.msra.mxu0 %v5587
    %5906 = vmatprep.subr.bf16.mxu0 %v5580
    %5907 = vmatpush1.bf16.msra.mxu0 %v5579
    %5908 = vmatprep.subr.bf16.mxu0 %v5572
    %5909 = vmatpush1.bf16.msra.mxu0 %v5571
    %5910 = vmatprep.subr.bf16.mxu0 %v5564
    %5911 = vmatpush1.bf16.msra.mxu0 %v5563
    %5912 = vmatprep.subr.bf16.mxu0 %v5556
    %5913 = vmatpush1.bf16.msra.mxu0 %v5555
    %5914 = vmatprep.subr.bf16.mxu0 %v5548
    %5915 = vmatpush1.bf16.msra.mxu0 %v5547
    %5916 = vmatprep.subr.bf16.mxu0 %v5540
    %5917 = vmatpush1.bf16.msra.mxu0 %v5539
    %5918 = vmatprep.subr.bf16.mxu0 %v5532
    %5919 = vmatpush1.bf16.msra.mxu0 %v5531
    %5920 = vmatprep.subr.bf16.mxu0 %v5652
    %5921 = vmatpush2.bf16.msra.mxu0 %v5651
    %5922 = vmatprep.subr.bf16.mxu0 %v5644
    %5923 = vmatpush2.bf16.msra.mxu0 %v5643
    %5924 = vmatprep.subr.bf16.mxu0 %v5636
    %5925 = vmatpush2.bf16.msra.mxu0 %v5635
    %5926 = vmatprep.subr.bf16.mxu0 %v5628
    %5927 = vmatpush2.bf16.msra.mxu0 %v5627
    %5928 = vmatprep.subr.bf16.mxu0 %v5620
    %5929 = vmatpush2.bf16.msra.mxu0 %v5619
    %5930 = vmatprep.subr.bf16.mxu0 %v5612
    %5931 = vmatpush2.bf16.msra.mxu0 %v5611
    %5932 = vmatprep.subr.bf16.mxu0 %v5604
    %5933 = vmatpush2.bf16.msra.mxu0 %v5603
    %5934 = vmatprep.subr.bf16.mxu0 %v5596
    %5935 = vmatpush2.bf16.msra.mxu0 %v5595
    %5936 = vmatprep.mubr.bf16.mxu0 %v5012
    %5937 = vmatmul.mubr.bf16.gmra.mxu0 %v5011
    %v5938 = vpop.f32.mrf.mxu0
    %v5939 = vadd.f32 0.0, %v5938
    %v5940 = vpop.f32.mrf.mxu0
    %v5941 = vadd.f32 0.0, %v5940
    %v5942 = vpop.f32.mrf.mxu0
    %v5943 = vpop.f32.mrf.mxu0
    %5944 = vdwg.mxu0
    %v5945 = vadd.f32 %v5001, %v5816
    %v5946 = vadd.f32 %v5002, %v5818
    %v5947 = vadd.f32 %v5003, %v5857
    %v5948 = vadd.f32 %v5004, %v5859
    %v5949 = vadd.f32 %v5005, %v5898
    %v5950 = vadd.f32 %v5006, %v5900
    %v5951 = vadd.f32 %v5007, %v5939
    %v5952 = vadd.f32 %v5008, %v5941
    %v5953 = vxor.u32 %v5945, 2147483648
    %v5954 = vxor.u32 %v5946, 2147483648
    %v5955 = vxor.u32 %v5947, 2147483648
    %v5956 = vxor.u32 %v5948, 2147483648
    %v5957 = vxor.u32 %v5949, 2147483648
    %v5958 = vxor.u32 %v5950, 2147483648
    %v5959 = vmul.f32 %v5953, 1.442695
    %v5960 = vpow.pop %v5959
    %v5961 = vmul.f32 %v5954, 1.442695
    %v5962 = vpow.pop %v5961
    %v5963 = vmul.f32 %v5955, 1.442695
    %v5964 = vpow.pop %v5963
    %v5965 = vmul.f32 %v5956, 1.442695
    %v5966 = vpow.pop %v5965
    %v5967 = vmul.f32 %v5957, 1.442695
    %v5968 = vpow.pop %v5967
    %v5969 = vmul.f32 %v5958, 1.442695
    %v5970 = vpow.pop %v5969
    %v5971 = vadd.f32 %v5960, 1.0
    %v5972 = vadd.f32 %v5962, 1.0
    %v5973 = vadd.f32 %v5964, 1.0
    %v5974 = vadd.f32 %v5966, 1.0
    %v5975 = vadd.f32 %v5968, 1.0
    %v5976 = vadd.f32 %v5970, 1.0
    %v5977 = vrcp.pop %v5971
    %v5978 = vmul.f32 1.0, %v5977
    %v5979 = vrcp.pop %v5972
    %v5980 = vmul.f32 1.0, %v5979
    %v5981 = vrcp.pop %v5973
    %v5982 = vmul.f32 1.0, %v5981
    %v5983 = vrcp.pop %v5974
    %v5984 = vmul.f32 1.0, %v5983
    %v5985 = vrcp.pop %v5975
    %v5986 = vmul.f32 1.0, %v5985
    %v5987 = vrcp.pop %v5976
    %v5988 = vmul.f32 1.0, %v5987
    %v5989 = vtanh.pop %v5951
    %v5990 = vtanh.pop %v5952
    %v5991 = vld [vmem:[#allocation4] sm:$0xff]
    %v5992 = vld [vmem:[#allocation4 + $0x8] sm:$0xff]
    %v5993 = vmul.f32 %v5982, %v5991
    %v5994 = vmul.f32 %v5984, %v5992
    %v5995 = vmul.f32 %v5978, %v5989
    %v5996 = vmul.f32 %v5980, %v5990
    %v5997 = vadd.f32 %v5993, %v5995
    %v5998 = vadd.f32 %v5994, %v5996
    %5999 = vst [vmem:[#allocation4] sm:$0xff] %v5997
    %6000 = vst [vmem:[#allocation4 + $0x8] sm:$0xff] %v5998
    %v6001 = vtanh.pop %v5997
    %v6002 = vtanh.pop %v5998
    %v6003 = vmul.f32 %v5986, %v6001
    %v6004 = vmul.f32 %v5988, %v6002
    %6005 = vst [vmem:[#allocation3] sm:$0xff] %v6003
    %6006 = vst [vmem:[#allocation3 + $0x8] sm:$0xff] %v6004
    %s6007 = smul.u32 5, 8
    %s6008 = smul.addr %s6007, 4
    %s6009 = scalar_lea.vmem [#allocation2], %s6008
    %v6010 = vld [vmem:[%s6009] sm:$0xff]
    %v6011 = vld [vmem:[%s6009 + $0x8] sm:$0xff]
    %v6012 = vld [vmem:[%s6009 + $0x10] sm:$0xff]
    %v6013 = vld [vmem:[%s6009 + $0x18] sm:$0xff]
    %v6014 = vunpack.c.l.bf16 %v6010
    %v6015 = vunpack.c.h.bf16 %v6010
    %v6016 = vunpack.c.l.bf16 %v6011
    %v6017 = vunpack.c.h.bf16 %v6011
    %v6018 = vunpack.c.l.bf16 %v6012
    %v6019 = vunpack.c.h.bf16 %v6012
    %v6020 = vunpack.c.l.bf16 %v6013
    %v6021 = vunpack.c.h.bf16 %v6013
    %v6022 = vld [vmem:[#allocation3] sm:$0xff]
    %v6023 = vld [vmem:[#allocation3 + $0x8] sm:$0xff]
    %v6024 = vpack.c.bf16 %v6022, %v6022
    %v6025 = vpack.c.bf16 %v6023, %v6023
    %v6026 = vld [vmem:[#allocation11] sm:$0xff]
    %v6027 = vld [vmem:[#allocation11 + $0x8] sm:$0xff]
    %v6028 = vld [vmem:[#allocation11 + $0x10] sm:$0xff]
    %v6029 = vld [vmem:[#allocation11 + $0x18] sm:$0xff]
    %v6030 = vld [vmem:[#allocation11 + $0x20] sm:$0xff]
    %v6031 = vld [vmem:[#allocation11 + $0x28] sm:$0xff]
    %v6032 = vld [vmem:[#allocation11 + $0x30] sm:$0xff]
    %v6033 = vld [vmem:[#allocation11 + $0x38] sm:$0xff]
    %v6034 = vld [vmem:[#allocation11 + $0x40] sm:$0xff]
    %v6035 = vld [vmem:[#allocation11 + $0x48] sm:$0xff]
    %v6036 = vld [vmem:[#allocation11 + $0x50] sm:$0xff]
    %v6037 = vld [vmem:[#allocation11 + $0x58] sm:$0xff]
    %v6038 = vld [vmem:[#allocation11 + $0x60] sm:$0xff]
    %v6039 = vld [vmem:[#allocation11 + $0x68] sm:$0xff]
    %v6040 = vld [vmem:[#allocation11 + $0x70] sm:$0xff]
    %v6041 = vld [vmem:[#allocation11 + $0x78] sm:$0xff]
    %v6042 = vld [vmem:[#allocation11 + $0x80] sm:$0xff]
    %v6043 = vld [vmem:[#allocation11 + $0x88] sm:$0xff]
    %v6044 = vld [vmem:[#allocation11 + $0x90] sm:$0xff]
    %v6045 = vld [vmem:[#allocation11 + $0x98] sm:$0xff]
    %v6046 = vld [vmem:[#allocation11 + $0xa0] sm:$0xff]
    %v6047 = vld [vmem:[#allocation11 + $0xa8] sm:$0xff]
    %v6048 = vld [vmem:[#allocation11 + $0xb0] sm:$0xff]
    %v6049 = vld [vmem:[#allocation11 + $0xb8] sm:$0xff]
    %v6050 = vld [vmem:[#allocation11 + $0xc0] sm:$0xff]
    %v6051 = vld [vmem:[#allocation11 + $0xc8] sm:$0xff]
    %v6052 = vld [vmem:[#allocation11 + $0xd0] sm:$0xff]
    %v6053 = vld [vmem:[#allocation11 + $0xd8] sm:$0xff]
    %v6054 = vld [vmem:[#allocation11 + $0xe0] sm:$0xff]
    %v6055 = vld [vmem:[#allocation11 + $0xe8] sm:$0xff]
    %v6056 = vld [vmem:[#allocation11 + $0xf0] sm:$0xff]
    %v6057 = vld [vmem:[#allocation11 + $0xf8] sm:$0xff]
    %v6058 = vld [vmem:[#allocation11 + $0x100] sm:$0xff]
    %v6059 = vld [vmem:[#allocation11 + $0x108] sm:$0xff]
    %v6060 = vld [vmem:[#allocation11 + $0x110] sm:$0xff]
    %v6061 = vld [vmem:[#allocation11 + $0x118] sm:$0xff]
    %v6062 = vld [vmem:[#allocation11 + $0x120] sm:$0xff]
    %v6063 = vld [vmem:[#allocation11 + $0x128] sm:$0xff]
    %v6064 = vld [vmem:[#allocation11 + $0x130] sm:$0xff]
    %v6065 = vld [vmem:[#allocation11 + $0x138] sm:$0xff]
    %v6066 = vld [vmem:[#allocation11 + $0x140] sm:$0xff]
    %v6067 = vld [vmem:[#allocation11 + $0x148] sm:$0xff]
    %v6068 = vld [vmem:[#allocation11 + $0x150] sm:$0xff]
    %v6069 = vld [vmem:[#allocation11 + $0x158] sm:$0xff]
    %v6070 = vld [vmem:[#allocation11 + $0x160] sm:$0xff]
    %v6071 = vld [vmem:[#allocation11 + $0x168] sm:$0xff]
    %v6072 = vld [vmem:[#allocation11 + $0x170] sm:$0xff]
    %v6073 = vld [vmem:[#allocation11 + $0x178] sm:$0xff]
    %v6074 = vld [vmem:[#allocation11 + $0x180] sm:$0xff]
    %v6075 = vld [vmem:[#allocation11 + $0x188] sm:$0xff]
    %v6076 = vld [vmem:[#allocation11 + $0x190] sm:$0xff]
    %v6077 = vld [vmem:[#allocation11 + $0x198] sm:$0xff]
    %v6078 = vld [vmem:[#allocation11 + $0x1a0] sm:$0xff]
    %v6079 = vld [vmem:[#allocation11 + $0x1a8] sm:$0xff]
    %v6080 = vld [vmem:[#allocation11 + $0x1b0] sm:$0xff]
    %v6081 = vld [vmem:[#allocation11 + $0x1b8] sm:$0xff]
    %v6082 = vld [vmem:[#allocation11 + $0x1c0] sm:$0xff]
    %v6083 = vld [vmem:[#allocation11 + $0x1c8] sm:$0xff]
    %v6084 = vld [vmem:[#allocation11 + $0x1d0] sm:$0xff]
    %v6085 = vld [vmem:[#allocation11 + $0x1d8] sm:$0xff]
    %v6086 = vld [vmem:[#allocation11 + $0x1e0] sm:$0xff]
    %v6087 = vld [vmem:[#allocation11 + $0x1e8] sm:$0xff]
    %v6088 = vld [vmem:[#allocation11 + $0x1f0] sm:$0xff]
    %v6089 = vld [vmem:[#allocation11 + $0x1f8] sm:$0xff]
    %v6090 = vld [vmem:[#allocation11 + $0x200] sm:$0xff]
    %v6091 = vld [vmem:[#allocation11 + $0x208] sm:$0xff]
    %v6092 = vld [vmem:[#allocation11 + $0x210] sm:$0xff]
    %v6093 = vld [vmem:[#allocation11 + $0x218] sm:$0xff]
    %v6094 = vld [vmem:[#allocation11 + $0x220] sm:$0xff]
    %v6095 = vld [vmem:[#allocation11 + $0x228] sm:$0xff]
    %v6096 = vld [vmem:[#allocation11 + $0x230] sm:$0xff]
    %v6097 = vld [vmem:[#allocation11 + $0x238] sm:$0xff]
    %v6098 = vld [vmem:[#allocation11 + $0x240] sm:$0xff]
    %v6099 = vld [vmem:[#allocation11 + $0x248] sm:$0xff]
    %v6100 = vld [vmem:[#allocation11 + $0x250] sm:$0xff]
    %v6101 = vld [vmem:[#allocation11 + $0x258] sm:$0xff]
    %v6102 = vld [vmem:[#allocation11 + $0x260] sm:$0xff]
    %v6103 = vld [vmem:[#allocation11 + $0x268] sm:$0xff]
    %v6104 = vld [vmem:[#allocation11 + $0x270] sm:$0xff]
    %v6105 = vld [vmem:[#allocation11 + $0x278] sm:$0xff]
    %v6106 = vld [vmem:[#allocation11 + $0x280] sm:$0xff]
    %v6107 = vld [vmem:[#allocation11 + $0x288] sm:$0xff]
    %v6108 = vld [vmem:[#allocation11 + $0x290] sm:$0xff]
    %v6109 = vld [vmem:[#allocation11 + $0x298] sm:$0xff]
    %v6110 = vld [vmem:[#allocation11 + $0x2a0] sm:$0xff]
    %v6111 = vld [vmem:[#allocation11 + $0x2a8] sm:$0xff]
    %v6112 = vld [vmem:[#allocation11 + $0x2b0] sm:$0xff]
    %v6113 = vld [vmem:[#allocation11 + $0x2b8] sm:$0xff]
    %v6114 = vld [vmem:[#allocation11 + $0x2c0] sm:$0xff]
    %v6115 = vld [vmem:[#allocation11 + $0x2c8] sm:$0xff]
    %v6116 = vld [vmem:[#allocation11 + $0x2d0] sm:$0xff]
    %v6117 = vld [vmem:[#allocation11 + $0x2d8] sm:$0xff]
    %v6118 = vld [vmem:[#allocation11 + $0x2e0] sm:$0xff]
    %v6119 = vld [vmem:[#allocation11 + $0x2e8] sm:$0xff]
    %v6120 = vld [vmem:[#allocation11 + $0x2f0] sm:$0xff]
    %v6121 = vld [vmem:[#allocation11 + $0x2f8] sm:$0xff]
    %v6122 = vld [vmem:[#allocation11 + $0x300] sm:$0xff]
    %v6123 = vld [vmem:[#allocation11 + $0x308] sm:$0xff]
    %v6124 = vld [vmem:[#allocation11 + $0x310] sm:$0xff]
    %v6125 = vld [vmem:[#allocation11 + $0x318] sm:$0xff]
    %v6126 = vld [vmem:[#allocation11 + $0x320] sm:$0xff]
    %v6127 = vld [vmem:[#allocation11 + $0x328] sm:$0xff]
    %v6128 = vld [vmem:[#allocation11 + $0x330] sm:$0xff]
    %v6129 = vld [vmem:[#allocation11 + $0x338] sm:$0xff]
    %v6130 = vld [vmem:[#allocation11 + $0x340] sm:$0xff]
    %v6131 = vld [vmem:[#allocation11 + $0x348] sm:$0xff]
    %v6132 = vld [vmem:[#allocation11 + $0x350] sm:$0xff]
    %v6133 = vld [vmem:[#allocation11 + $0x358] sm:$0xff]
    %v6134 = vld [vmem:[#allocation11 + $0x360] sm:$0xff]
    %v6135 = vld [vmem:[#allocation11 + $0x368] sm:$0xff]
    %v6136 = vld [vmem:[#allocation11 + $0x370] sm:$0xff]
    %v6137 = vld [vmem:[#allocation11 + $0x378] sm:$0xff]
    %v6138 = vld [vmem:[#allocation11 + $0x380] sm:$0xff]
    %v6139 = vld [vmem:[#allocation11 + $0x388] sm:$0xff]
    %v6140 = vld [vmem:[#allocation11 + $0x390] sm:$0xff]
    %v6141 = vld [vmem:[#allocation11 + $0x398] sm:$0xff]
    %v6142 = vld [vmem:[#allocation11 + $0x3a0] sm:$0xff]
    %v6143 = vld [vmem:[#allocation11 + $0x3a8] sm:$0xff]
    %v6144 = vld [vmem:[#allocation11 + $0x3b0] sm:$0xff]
    %v6145 = vld [vmem:[#allocation11 + $0x3b8] sm:$0xff]
    %v6146 = vld [vmem:[#allocation11 + $0x3c0] sm:$0xff]
    %v6147 = vld [vmem:[#allocation11 + $0x3c8] sm:$0xff]
    %v6148 = vld [vmem:[#allocation11 + $0x3d0] sm:$0xff]
    %v6149 = vld [vmem:[#allocation11 + $0x3d8] sm:$0xff]
    %v6150 = vld [vmem:[#allocation11 + $0x3e0] sm:$0xff]
    %v6151 = vld [vmem:[#allocation11 + $0x3e8] sm:$0xff]
    %v6152 = vld [vmem:[#allocation11 + $0x3f0] sm:$0xff]
    %v6153 = vld [vmem:[#allocation11 + $0x3f8] sm:$0xff]
    %v6282 = vunpack.c.l.b16 %v6026
    %v6283 = vunpack.c.h.b16 %v6026
    %v6284 = vunpack.c.l.b16 %v6027
    %v6285 = vunpack.c.h.b16 %v6027
    %v6286 = vunpack.c.l.b16 %v6028
    %v6287 = vunpack.c.h.b16 %v6028
    %v6288 = vunpack.c.l.b16 %v6029
    %v6289 = vunpack.c.h.b16 %v6029
    %v6290 = vunpack.c.l.b16 %v6030
    %v6291 = vunpack.c.h.b16 %v6030
    %v6292 = vunpack.c.l.b16 %v6031
    %v6293 = vunpack.c.h.b16 %v6031
    %v6294 = vunpack.c.l.b16 %v6032
    %v6295 = vunpack.c.h.b16 %v6032
    %v6296 = vunpack.c.l.b16 %v6033
    %v6297 = vunpack.c.h.b16 %v6033
    %v6298 = vunpack.c.l.b16 %v6034
    %v6299 = vunpack.c.h.b16 %v6034
    %v6300 = vunpack.c.l.b16 %v6035
    %v6301 = vunpack.c.h.b16 %v6035
    %v6302 = vunpack.c.l.b16 %v6036
    %v6303 = vunpack.c.h.b16 %v6036
    %v6304 = vunpack.c.l.b16 %v6037
    %v6305 = vunpack.c.h.b16 %v6037
    %v6306 = vunpack.c.l.b16 %v6038
    %v6307 = vunpack.c.h.b16 %v6038
    %v6308 = vunpack.c.l.b16 %v6039
    %v6309 = vunpack.c.h.b16 %v6039
    %v6310 = vunpack.c.l.b16 %v6040
    %v6311 = vunpack.c.h.b16 %v6040
    %v6312 = vunpack.c.l.b16 %v6041
    %v6313 = vunpack.c.h.b16 %v6041
    %v6314 = vunpack.c.l.b16 %v6042
    %v6315 = vunpack.c.h.b16 %v6042
    %v6316 = vunpack.c.l.b16 %v6043
    %v6317 = vunpack.c.h.b16 %v6043
    %v6318 = vunpack.c.l.b16 %v6044
    %v6319 = vunpack.c.h.b16 %v6044
    %v6320 = vunpack.c.l.b16 %v6045
    %v6321 = vunpack.c.h.b16 %v6045
    %v6322 = vunpack.c.l.b16 %v6046
    %v6323 = vunpack.c.h.b16 %v6046
    %v6324 = vunpack.c.l.b16 %v6047
    %v6325 = vunpack.c.h.b16 %v6047
    %v6326 = vunpack.c.l.b16 %v6048
    %v6327 = vunpack.c.h.b16 %v6048
    %v6328 = vunpack.c.l.b16 %v6049
    %v6329 = vunpack.c.h.b16 %v6049
    %v6330 = vunpack.c.l.b16 %v6050
    %v6331 = vunpack.c.h.b16 %v6050
    %v6332 = vunpack.c.l.b16 %v6051
    %v6333 = vunpack.c.h.b16 %v6051
    %v6334 = vunpack.c.l.b16 %v6052
    %v6335 = vunpack.c.h.b16 %v6052
    %v6336 = vunpack.c.l.b16 %v6053
    %v6337 = vunpack.c.h.b16 %v6053
    %v6338 = vunpack.c.l.b16 %v6054
    %v6339 = vunpack.c.h.b16 %v6054
    %v6340 = vunpack.c.l.b16 %v6055
    %v6341 = vunpack.c.h.b16 %v6055
    %v6342 = vunpack.c.l.b16 %v6056
    %v6343 = vunpack.c.h.b16 %v6056
    %v6344 = vunpack.c.l.b16 %v6057
    %v6345 = vunpack.c.h.b16 %v6057
    %v6346 = vunpack.c.l.b16 %v6058
    %v6347 = vunpack.c.h.b16 %v6058
    %v6348 = vunpack.c.l.b16 %v6059
    %v6349 = vunpack.c.h.b16 %v6059
    %v6350 = vunpack.c.l.b16 %v6060
    %v6351 = vunpack.c.h.b16 %v6060
    %v6352 = vunpack.c.l.b16 %v6061
    %v6353 = vunpack.c.h.b16 %v6061
    %v6354 = vunpack.c.l.b16 %v6062
    %v6355 = vunpack.c.h.b16 %v6062
    %v6356 = vunpack.c.l.b16 %v6063
    %v6357 = vunpack.c.h.b16 %v6063
    %v6358 = vunpack.c.l.b16 %v6064
    %v6359 = vunpack.c.h.b16 %v6064
    %v6360 = vunpack.c.l.b16 %v6065
    %v6361 = vunpack.c.h.b16 %v6065
    %v6362 = vunpack.c.l.b16 %v6066
    %v6363 = vunpack.c.h.b16 %v6066
    %v6364 = vunpack.c.l.b16 %v6067
    %v6365 = vunpack.c.h.b16 %v6067
    %v6366 = vunpack.c.l.b16 %v6068
    %v6367 = vunpack.c.h.b16 %v6068
    %v6368 = vunpack.c.l.b16 %v6069
    %v6369 = vunpack.c.h.b16 %v6069
    %v6370 = vunpack.c.l.b16 %v6070
    %v6371 = vunpack.c.h.b16 %v6070
    %v6372 = vunpack.c.l.b16 %v6071
    %v6373 = vunpack.c.h.b16 %v6071
    %v6374 = vunpack.c.l.b16 %v6072
    %v6375 = vunpack.c.h.b16 %v6072
    %v6376 = vunpack.c.l.b16 %v6073
    %v6377 = vunpack.c.h.b16 %v6073
    %v6378 = vunpack.c.l.b16 %v6074
    %v6379 = vunpack.c.h.b16 %v6074
    %v6380 = vunpack.c.l.b16 %v6075
    %v6381 = vunpack.c.h.b16 %v6075
    %v6382 = vunpack.c.l.b16 %v6076
    %v6383 = vunpack.c.h.b16 %v6076
    %v6384 = vunpack.c.l.b16 %v6077
    %v6385 = vunpack.c.h.b16 %v6077
    %v6386 = vunpack.c.l.b16 %v6078
    %v6387 = vunpack.c.h.b16 %v6078
    %v6388 = vunpack.c.l.b16 %v6079
    %v6389 = vunpack.c.h.b16 %v6079
    %v6390 = vunpack.c.l.b16 %v6080
    %v6391 = vunpack.c.h.b16 %v6080
    %v6392 = vunpack.c.l.b16 %v6081
    %v6393 = vunpack.c.h.b16 %v6081
    %v6394 = vunpack.c.l.b16 %v6082
    %v6395 = vunpack.c.h.b16 %v6082
    %v6396 = vunpack.c.l.b16 %v6083
    %v6397 = vunpack.c.h.b16 %v6083
    %v6398 = vunpack.c.l.b16 %v6084
    %v6399 = vunpack.c.h.b16 %v6084
    %v6400 = vunpack.c.l.b16 %v6085
    %v6401 = vunpack.c.h.b16 %v6085
    %v6402 = vunpack.c.l.b16 %v6086
    %v6403 = vunpack.c.h.b16 %v6086
    %v6404 = vunpack.c.l.b16 %v6087
    %v6405 = vunpack.c.h.b16 %v6087
    %v6406 = vunpack.c.l.b16 %v6088
    %v6407 = vunpack.c.h.b16 %v6088
    %v6408 = vunpack.c.l.b16 %v6089
    %v6409 = vunpack.c.h.b16 %v6089
    %v6410 = vunpack.c.l.b16 %v6090
    %v6411 = vunpack.c.h.b16 %v6090
    %v6412 = vunpack.c.l.b16 %v6091
    %v6413 = vunpack.c.h.b16 %v6091
    %v6414 = vunpack.c.l.b16 %v6092
    %v6415 = vunpack.c.h.b16 %v6092
    %v6416 = vunpack.c.l.b16 %v6093
    %v6417 = vunpack.c.h.b16 %v6093
    %v6418 = vunpack.c.l.b16 %v6094
    %v6419 = vunpack.c.h.b16 %v6094
    %v6420 = vunpack.c.l.b16 %v6095
    %v6421 = vunpack.c.h.b16 %v6095
    %v6422 = vunpack.c.l.b16 %v6096
    %v6423 = vunpack.c.h.b16 %v6096
    %v6424 = vunpack.c.l.b16 %v6097
    %v6425 = vunpack.c.h.b16 %v6097
    %v6426 = vunpack.c.l.b16 %v6098
    %v6427 = vunpack.c.h.b16 %v6098
    %v6428 = vunpack.c.l.b16 %v6099
    %v6429 = vunpack.c.h.b16 %v6099
    %v6430 = vunpack.c.l.b16 %v6100
    %v6431 = vunpack.c.h.b16 %v6100
    %v6432 = vunpack.c.l.b16 %v6101
    %v6433 = vunpack.c.h.b16 %v6101
    %v6434 = vunpack.c.l.b16 %v6102
    %v6435 = vunpack.c.h.b16 %v6102
    %v6436 = vunpack.c.l.b16 %v6103
    %v6437 = vunpack.c.h.b16 %v6103
    %v6438 = vunpack.c.l.b16 %v6104
    %v6439 = vunpack.c.h.b16 %v6104
    %v6440 = vunpack.c.l.b16 %v6105
    %v6441 = vunpack.c.h.b16 %v6105
    %v6442 = vunpack.c.l.b16 %v6106
    %v6443 = vunpack.c.h.b16 %v6106
    %v6444 = vunpack.c.l.b16 %v6107
    %v6445 = vunpack.c.h.b16 %v6107
    %v6446 = vunpack.c.l.b16 %v6108
    %v6447 = vunpack.c.h.b16 %v6108
    %v6448 = vunpack.c.l.b16 %v6109
    %v6449 = vunpack.c.h.b16 %v6109
    %v6450 = vunpack.c.l.b16 %v6110
    %v6451 = vunpack.c.h.b16 %v6110
    %v6452 = vunpack.c.l.b16 %v6111
    %v6453 = vunpack.c.h.b16 %v6111
    %v6454 = vunpack.c.l.b16 %v6112
    %v6455 = vunpack.c.h.b16 %v6112
    %v6456 = vunpack.c.l.b16 %v6113
    %v6457 = vunpack.c.h.b16 %v6113
    %v6458 = vunpack.c.l.b16 %v6114
    %v6459 = vunpack.c.h.b16 %v6114
    %v6460 = vunpack.c.l.b16 %v6115
    %v6461 = vunpack.c.h.b16 %v6115
    %v6462 = vunpack.c.l.b16 %v6116
    %v6463 = vunpack.c.h.b16 %v6116
    %v6464 = vunpack.c.l.b16 %v6117
    %v6465 = vunpack.c.h.b16 %v6117
    %v6466 = vunpack.c.l.b16 %v6118
    %v6467 = vunpack.c.h.b16 %v6118
    %v6468 = vunpack.c.l.b16 %v6119
    %v6469 = vunpack.c.h.b16 %v6119
    %v6470 = vunpack.c.l.b16 %v6120
    %v6471 = vunpack.c.h.b16 %v6120
    %v6472 = vunpack.c.l.b16 %v6121
    %v6473 = vunpack.c.h.b16 %v6121
    %v6474 = vunpack.c.l.b16 %v6122
    %v6475 = vunpack.c.h.b16 %v6122
    %v6476 = vunpack.c.l.b16 %v6123
    %v6477 = vunpack.c.h.b16 %v6123
    %v6478 = vunpack.c.l.b16 %v6124
    %v6479 = vunpack.c.h.b16 %v6124
    %v6480 = vunpack.c.l.b16 %v6125
    %v6481 = vunpack.c.h.b16 %v6125
    %v6482 = vunpack.c.l.b16 %v6126
    %v6483 = vunpack.c.h.b16 %v6126
    %v6484 = vunpack.c.l.b16 %v6127
    %v6485 = vunpack.c.h.b16 %v6127
    %v6486 = vunpack.c.l.b16 %v6128
    %v6487 = vunpack.c.h.b16 %v6128
    %v6488 = vunpack.c.l.b16 %v6129
    %v6489 = vunpack.c.h.b16 %v6129
    %v6490 = vunpack.c.l.b16 %v6130
    %v6491 = vunpack.c.h.b16 %v6130
    %v6492 = vunpack.c.l.b16 %v6131
    %v6493 = vunpack.c.h.b16 %v6131
    %v6494 = vunpack.c.l.b16 %v6132
    %v6495 = vunpack.c.h.b16 %v6132
    %v6496 = vunpack.c.l.b16 %v6133
    %v6497 = vunpack.c.h.b16 %v6133
    %v6498 = vunpack.c.l.b16 %v6134
    %v6499 = vunpack.c.h.b16 %v6134
    %v6500 = vunpack.c.l.b16 %v6135
    %v6501 = vunpack.c.h.b16 %v6135
    %v6502 = vunpack.c.l.b16 %v6136
    %v6503 = vunpack.c.h.b16 %v6136
    %v6504 = vunpack.c.l.b16 %v6137
    %v6505 = vunpack.c.h.b16 %v6137
    %v6506 = vunpack.c.l.b16 %v6138
    %v6507 = vunpack.c.h.b16 %v6138
    %v6508 = vunpack.c.l.b16 %v6139
    %v6509 = vunpack.c.h.b16 %v6139
    %v6510 = vunpack.c.l.b16 %v6140
    %v6511 = vunpack.c.h.b16 %v6140
    %v6512 = vunpack.c.l.b16 %v6141
    %v6513 = vunpack.c.h.b16 %v6141
    %v6514 = vunpack.c.l.b16 %v6142
    %v6515 = vunpack.c.h.b16 %v6142
    %v6516 = vunpack.c.l.b16 %v6143
    %v6517 = vunpack.c.h.b16 %v6143
    %v6518 = vunpack.c.l.b16 %v6144
    %v6519 = vunpack.c.h.b16 %v6144
    %v6520 = vunpack.c.l.b16 %v6145
    %v6521 = vunpack.c.h.b16 %v6145
    %v6522 = vunpack.c.l.b16 %v6146
    %v6523 = vunpack.c.h.b16 %v6146
    %v6524 = vunpack.c.l.b16 %v6147
    %v6525 = vunpack.c.h.b16 %v6147
    %v6526 = vunpack.c.l.b16 %v6148
    %v6527 = vunpack.c.h.b16 %v6148
    %v6528 = vunpack.c.l.b16 %v6149
    %v6529 = vunpack.c.h.b16 %v6149
    %v6530 = vunpack.c.l.b16 %v6150
    %v6531 = vunpack.c.h.b16 %v6150
    %v6532 = vunpack.c.l.b16 %v6151
    %v6533 = vunpack.c.h.b16 %v6151
    %v6534 = vunpack.c.l.b16 %v6152
    %v6535 = vunpack.c.h.b16 %v6152
    %v6536 = vunpack.c.l.b16 %v6153
    %v6537 = vunpack.c.h.b16 %v6153
    %v6538 = vpack.c.b16 %v6290, %v6282
    %v6539 = vpack.c.b16 %v6291, %v6283
    %v6540 = vpack.c.b16 %v6292, %v6284
    %v6541 = vpack.c.b16 %v6293, %v6285
    %v6542 = vpack.c.b16 %v6294, %v6286
    %v6543 = vpack.c.b16 %v6295, %v6287
    %v6544 = vpack.c.b16 %v6296, %v6288
    %v6545 = vpack.c.b16 %v6297, %v6289
    %v6546 = vpack.c.b16 %v6306, %v6298
    %v6547 = vpack.c.b16 %v6307, %v6299
    %v6548 = vpack.c.b16 %v6308, %v6300
    %v6549 = vpack.c.b16 %v6309, %v6301
    %v6550 = vpack.c.b16 %v6310, %v6302
    %v6551 = vpack.c.b16 %v6311, %v6303
    %v6552 = vpack.c.b16 %v6312, %v6304
    %v6553 = vpack.c.b16 %v6313, %v6305
    %v6554 = vpack.c.b16 %v6322, %v6314
    %v6555 = vpack.c.b16 %v6323, %v6315
    %v6556 = vpack.c.b16 %v6324, %v6316
    %v6557 = vpack.c.b16 %v6325, %v6317
    %v6558 = vpack.c.b16 %v6326, %v6318
    %v6559 = vpack.c.b16 %v6327, %v6319
    %v6560 = vpack.c.b16 %v6328, %v6320
    %v6561 = vpack.c.b16 %v6329, %v6321
    %v6562 = vpack.c.b16 %v6338, %v6330
    %v6563 = vpack.c.b16 %v6339, %v6331
    %v6564 = vpack.c.b16 %v6340, %v6332
    %v6565 = vpack.c.b16 %v6341, %v6333
    %v6566 = vpack.c.b16 %v6342, %v6334
    %v6567 = vpack.c.b16 %v6343, %v6335
    %v6568 = vpack.c.b16 %v6344, %v6336
    %v6569 = vpack.c.b16 %v6345, %v6337
    %v6570 = vpack.c.b16 %v6354, %v6346
    %v6571 = vpack.c.b16 %v6355, %v6347
    %v6572 = vpack.c.b16 %v6356, %v6348
    %v6573 = vpack.c.b16 %v6357, %v6349
    %v6574 = vpack.c.b16 %v6358, %v6350
    %v6575 = vpack.c.b16 %v6359, %v6351
    %v6576 = vpack.c.b16 %v6360, %v6352
    %v6577 = vpack.c.b16 %v6361, %v6353
    %v6578 = vpack.c.b16 %v6370, %v6362
    %v6579 = vpack.c.b16 %v6371, %v6363
    %v6580 = vpack.c.b16 %v6372, %v6364
    %v6581 = vpack.c.b16 %v6373, %v6365
    %v6582 = vpack.c.b16 %v6374, %v6366
    %v6583 = vpack.c.b16 %v6375, %v6367
    %v6584 = vpack.c.b16 %v6376, %v6368
    %v6585 = vpack.c.b16 %v6377, %v6369
    %v6586 = vpack.c.b16 %v6386, %v6378
    %v6587 = vpack.c.b16 %v6387, %v6379
    %v6588 = vpack.c.b16 %v6388, %v6380
    %v6589 = vpack.c.b16 %v6389, %v6381
    %v6590 = vpack.c.b16 %v6390, %v6382
    %v6591 = vpack.c.b16 %v6391, %v6383
    %v6592 = vpack.c.b16 %v6392, %v6384
    %v6593 = vpack.c.b16 %v6393, %v6385
    %v6594 = vpack.c.b16 %v6402, %v6394
    %v6595 = vpack.c.b16 %v6403, %v6395
    %v6596 = vpack.c.b16 %v6404, %v6396
    %v6597 = vpack.c.b16 %v6405, %v6397
    %v6598 = vpack.c.b16 %v6406, %v6398
    %v6599 = vpack.c.b16 %v6407, %v6399
    %v6600 = vpack.c.b16 %v6408, %v6400
    %v6601 = vpack.c.b16 %v6409, %v6401
    %v6602 = vpack.c.b16 %v6418, %v6410
    %v6603 = vpack.c.b16 %v6419, %v6411
    %v6604 = vpack.c.b16 %v6420, %v6412
    %v6605 = vpack.c.b16 %v6421, %v6413
    %v6606 = vpack.c.b16 %v6422, %v6414
    %v6607 = vpack.c.b16 %v6423, %v6415
    %v6608 = vpack.c.b16 %v6424, %v6416
    %v6609 = vpack.c.b16 %v6425, %v6417
    %v6610 = vpack.c.b16 %v6434, %v6426
    %v6611 = vpack.c.b16 %v6435, %v6427
    %v6612 = vpack.c.b16 %v6436, %v6428
    %v6613 = vpack.c.b16 %v6437, %v6429
    %v6614 = vpack.c.b16 %v6438, %v6430
    %v6615 = vpack.c.b16 %v6439, %v6431
    %v6616 = vpack.c.b16 %v6440, %v6432
    %v6617 = vpack.c.b16 %v6441, %v6433
    %v6618 = vpack.c.b16 %v6450, %v6442
    %v6619 = vpack.c.b16 %v6451, %v6443
    %v6620 = vpack.c.b16 %v6452, %v6444
    %v6621 = vpack.c.b16 %v6453, %v6445
    %v6622 = vpack.c.b16 %v6454, %v6446
    %v6623 = vpack.c.b16 %v6455, %v6447
    %v6624 = vpack.c.b16 %v6456, %v6448
    %v6625 = vpack.c.b16 %v6457, %v6449
    %v6626 = vpack.c.b16 %v6466, %v6458
    %v6627 = vpack.c.b16 %v6467, %v6459
    %v6628 = vpack.c.b16 %v6468, %v6460
    %v6629 = vpack.c.b16 %v6469, %v6461
    %v6630 = vpack.c.b16 %v6470, %v6462
    %v6631 = vpack.c.b16 %v6471, %v6463
    %v6632 = vpack.c.b16 %v6472, %v6464
    %v6633 = vpack.c.b16 %v6473, %v6465
    %v6634 = vpack.c.b16 %v6482, %v6474
    %v6635 = vpack.c.b16 %v6483, %v6475
    %v6636 = vpack.c.b16 %v6484, %v6476
    %v6637 = vpack.c.b16 %v6485, %v6477
    %v6638 = vpack.c.b16 %v6486, %v6478
    %v6639 = vpack.c.b16 %v6487, %v6479
    %v6640 = vpack.c.b16 %v6488, %v6480
    %v6641 = vpack.c.b16 %v6489, %v6481
    %v6642 = vpack.c.b16 %v6498, %v6490
    %v6643 = vpack.c.b16 %v6499, %v6491
    %v6644 = vpack.c.b16 %v6500, %v6492
    %v6645 = vpack.c.b16 %v6501, %v6493
    %v6646 = vpack.c.b16 %v6502, %v6494
    %v6647 = vpack.c.b16 %v6503, %v6495
    %v6648 = vpack.c.b16 %v6504, %v6496
    %v6649 = vpack.c.b16 %v6505, %v6497
    %v6650 = vpack.c.b16 %v6514, %v6506
    %v6651 = vpack.c.b16 %v6515, %v6507
    %v6652 = vpack.c.b16 %v6516, %v6508
    %v6653 = vpack.c.b16 %v6517, %v6509
    %v6654 = vpack.c.b16 %v6518, %v6510
    %v6655 = vpack.c.b16 %v6519, %v6511
    %v6656 = vpack.c.b16 %v6520, %v6512
    %v6657 = vpack.c.b16 %v6521, %v6513
    %v6658 = vpack.c.b16 %v6530, %v6522
    %v6659 = vpack.c.b16 %v6531, %v6523
    %v6660 = vpack.c.b16 %v6532, %v6524
    %v6661 = vpack.c.b16 %v6533, %v6525
    %v6662 = vpack.c.b16 %v6534, %v6526
    %v6663 = vpack.c.b16 %v6535, %v6527
    %v6664 = vpack.c.b16 %v6536, %v6528
    %v6665 = vpack.c.b16 %v6537, %v6529
    %6794 = vmatprep.subr.bf16.mxu0 %v6595
    %6795 = vmatpush1.bf16.msra.mxu0 %v6594
    %6796 = vmatprep.subr.bf16.mxu0 %v6587
    %6797 = vmatpush1.bf16.msra.mxu0 %v6586
    %6798 = vmatprep.subr.bf16.mxu0 %v6579
    %6799 = vmatpush1.bf16.msra.mxu0 %v6578
    %6800 = vmatprep.subr.bf16.mxu0 %v6571
    %6801 = vmatpush1.bf16.msra.mxu0 %v6570
    %6802 = vmatprep.subr.bf16.mxu0 %v6563
    %6803 = vmatpush1.bf16.msra.mxu0 %v6562
    %6804 = vmatprep.subr.bf16.mxu0 %v6555
    %6805 = vmatpush1.bf16.msra.mxu0 %v6554
    %6806 = vmatprep.subr.bf16.mxu0 %v6547
    %6807 = vmatpush1.bf16.msra.mxu0 %v6546
    %6808 = vmatprep.subr.bf16.mxu0 %v6539
    %6809 = vmatpush1.bf16.msra.mxu0 %v6538
    %6810 = vmatprep.subr.bf16.mxu0 %v6659
    %6811 = vmatpush2.bf16.msra.mxu0 %v6658
    %6812 = vmatprep.subr.bf16.mxu0 %v6651
    %6813 = vmatpush2.bf16.msra.mxu0 %v6650
    %6814 = vmatprep.subr.bf16.mxu0 %v6643
    %6815 = vmatpush2.bf16.msra.mxu0 %v6642
    %6816 = vmatprep.subr.bf16.mxu0 %v6635
    %6817 = vmatpush2.bf16.msra.mxu0 %v6634
    %6818 = vmatprep.subr.bf16.mxu0 %v6627
    %6819 = vmatpush2.bf16.msra.mxu0 %v6626
    %6820 = vmatprep.subr.bf16.mxu0 %v6619
    %6821 = vmatpush2.bf16.msra.mxu0 %v6618
    %6822 = vmatprep.subr.bf16.mxu0 %v6611
    %6823 = vmatpush2.bf16.msra.mxu0 %v6610
    %6824 = vmatprep.subr.bf16.mxu0 %v6603
    %6825 = vmatpush2.bf16.msra.mxu0 %v6602
    %6826 = vmatprep.mubr.bf16.mxu0 %v6025
    %6827 = vmatmul.mubr.bf16.gmra.mxu0 %v6024
    %v6828 = vpop.f32.mrf.mxu0
    %v6829 = vadd.f32 0.0, %v6828
    %v6830 = vpop.f32.mrf.mxu0
    %v6831 = vadd.f32 0.0, %v6830
    %v6832 = vpop.f32.mrf.mxu0
    %v6833 = vpop.f32.mrf.mxu0
    %6834 = vdwg.mxu0
    %6835 = vmatprep.subr.bf16.mxu0 %v6597
    %6836 = vmatpush1.bf16.msra.mxu0 %v6596
    %6837 = vmatprep.subr.bf16.mxu0 %v6589
    %6838 = vmatpush1.bf16.msra.mxu0 %v6588
    %6839 = vmatprep.subr.bf16.mxu0 %v6581
    %6840 = vmatpush1.bf16.msra.mxu0 %v6580
    %6841 = vmatprep.subr.bf16.mxu0 %v6573
    %6842 = vmatpush1.bf16.msra.mxu0 %v6572
    %6843 = vmatprep.subr.bf16.mxu0 %v6565
    %6844 = vmatpush1.bf16.msra.mxu0 %v6564
    %6845 = vmatprep.subr.bf16.mxu0 %v6557
    %6846 = vmatpush1.bf16.msra.mxu0 %v6556
    %6847 = vmatprep.subr.bf16.mxu0 %v6549
    %6848 = vmatpush1.bf16.msra.mxu0 %v6548
    %6849 = vmatprep.subr.bf16.mxu0 %v6541
    %6850 = vmatpush1.bf16.msra.mxu0 %v6540
    %6851 = vmatprep.subr.bf16.mxu0 %v6661
    %6852 = vmatpush2.bf16.msra.mxu0 %v6660
    %6853 = vmatprep.subr.bf16.mxu0 %v6653
    %6854 = vmatpush2.bf16.msra.mxu0 %v6652
    %6855 = vmatprep.subr.bf16.mxu0 %v6645
    %6856 = vmatpush2.bf16.msra.mxu0 %v6644
    %6857 = vmatprep.subr.bf16.mxu0 %v6637
    %6858 = vmatpush2.bf16.msra.mxu0 %v6636
    %6859 = vmatprep.subr.bf16.mxu0 %v6629
    %6860 = vmatpush2.bf16.msra.mxu0 %v6628
    %6861 = vmatprep.subr.bf16.mxu0 %v6621
    %6862 = vmatpush2.bf16.msra.mxu0 %v6620
    %6863 = vmatprep.subr.bf16.mxu0 %v6613
    %6864 = vmatpush2.bf16.msra.mxu0 %v6612
    %6865 = vmatprep.subr.bf16.mxu0 %v6605
    %6866 = vmatpush2.bf16.msra.mxu0 %v6604
    %6867 = vmatprep.mubr.bf16.mxu0 %v6025
    %6868 = vmatmul.mubr.bf16.gmra.mxu0 %v6024
    %v6869 = vpop.f32.mrf.mxu0
    %v6870 = vadd.f32 0.0, %v6869
    %v6871 = vpop.f32.mrf.mxu0
    %v6872 = vadd.f32 0.0, %v6871
    %v6873 = vpop.f32.mrf.mxu0
    %v6874 = vpop.f32.mrf.mxu0
    %6875 = vdwg.mxu0
    %6876 = vmatprep.subr.bf16.mxu0 %v6599
    %6877 = vmatpush1.bf16.msra.mxu0 %v6598
    %6878 = vmatprep.subr.bf16.mxu0 %v6591
    %6879 = vmatpush1.bf16.msra.mxu0 %v6590
    %6880 = vmatprep.subr.bf16.mxu0 %v6583
    %6881 = vmatpush1.bf16.msra.mxu0 %v6582
    %6882 = vmatprep.subr.bf16.mxu0 %v6575
    %6883 = vmatpush1.bf16.msra.mxu0 %v6574
    %6884 = vmatprep.subr.bf16.mxu0 %v6567
    %6885 = vmatpush1.bf16.msra.mxu0 %v6566
    %6886 = vmatprep.subr.bf16.mxu0 %v6559
    %6887 = vmatpush1.bf16.msra.mxu0 %v6558
    %6888 = vmatprep.subr.bf16.mxu0 %v6551
    %6889 = vmatpush1.bf16.msra.mxu0 %v6550
    %6890 = vmatprep.subr.bf16.mxu0 %v6543
    %6891 = vmatpush1.bf16.msra.mxu0 %v6542
    %6892 = vmatprep.subr.bf16.mxu0 %v6663
    %6893 = vmatpush2.bf16.msra.mxu0 %v6662
    %6894 = vmatprep.subr.bf16.mxu0 %v6655
    %6895 = vmatpush2.bf16.msra.mxu0 %v6654
    %6896 = vmatprep.subr.bf16.mxu0 %v6647
    %6897 = vmatpush2.bf16.msra.mxu0 %v6646
    %6898 = vmatprep.subr.bf16.mxu0 %v6639
    %6899 = vmatpush2.bf16.msra.mxu0 %v6638
    %6900 = vmatprep.subr.bf16.mxu0 %v6631
    %6901 = vmatpush2.bf16.msra.mxu0 %v6630
    %6902 = vmatprep.subr.bf16.mxu0 %v6623
    %6903 = vmatpush2.bf16.msra.mxu0 %v6622
    %6904 = vmatprep.subr.bf16.mxu0 %v6615
    %6905 = vmatpush2.bf16.msra.mxu0 %v6614
    %6906 = vmatprep.subr.bf16.mxu0 %v6607
    %6907 = vmatpush2.bf16.msra.mxu0 %v6606
    %6908 = vmatprep.mubr.bf16.mxu0 %v6025
    %6909 = vmatmul.mubr.bf16.gmra.mxu0 %v6024
    %v6910 = vpop.f32.mrf.mxu0
    %v6911 = vadd.f32 0.0, %v6910
    %v6912 = vpop.f32.mrf.mxu0
    %v6913 = vadd.f32 0.0, %v6912
    %v6914 = vpop.f32.mrf.mxu0
    %v6915 = vpop.f32.mrf.mxu0
    %6916 = vdwg.mxu0
    %6917 = vmatprep.subr.bf16.mxu0 %v6601
    %6918 = vmatpush1.bf16.msra.mxu0 %v6600
    %6919 = vmatprep.subr.bf16.mxu0 %v6593
    %6920 = vmatpush1.bf16.msra.mxu0 %v6592
    %6921 = vmatprep.subr.bf16.mxu0 %v6585
    %6922 = vmatpush1.bf16.msra.mxu0 %v6584
    %6923 = vmatprep.subr.bf16.mxu0 %v6577
    %6924 = vmatpush1.bf16.msra.mxu0 %v6576
    %6925 = vmatprep.subr.bf16.mxu0 %v6569
    %6926 = vmatpush1.bf16.msra.mxu0 %v6568
    %6927 = vmatprep.subr.bf16.mxu0 %v6561
    %6928 = vmatpush1.bf16.msra.mxu0 %v6560
    %6929 = vmatprep.subr.bf16.mxu0 %v6553
    %6930 = vmatpush1.bf16.msra.mxu0 %v6552
    %6931 = vmatprep.subr.bf16.mxu0 %v6545
    %6932 = vmatpush1.bf16.msra.mxu0 %v6544
    %6933 = vmatprep.subr.bf16.mxu0 %v6665
    %6934 = vmatpush2.bf16.msra.mxu0 %v6664
    %6935 = vmatprep.subr.bf16.mxu0 %v6657
    %6936 = vmatpush2.bf16.msra.mxu0 %v6656
    %6937 = vmatprep.subr.bf16.mxu0 %v6649
    %6938 = vmatpush2.bf16.msra.mxu0 %v6648
    %6939 = vmatprep.subr.bf16.mxu0 %v6641
    %6940 = vmatpush2.bf16.msra.mxu0 %v6640
    %6941 = vmatprep.subr.bf16.mxu0 %v6633
    %6942 = vmatpush2.bf16.msra.mxu0 %v6632
    %6943 = vmatprep.subr.bf16.mxu0 %v6625
    %6944 = vmatpush2.bf16.msra.mxu0 %v6624
    %6945 = vmatprep.subr.bf16.mxu0 %v6617
    %6946 = vmatpush2.bf16.msra.mxu0 %v6616
    %6947 = vmatprep.subr.bf16.mxu0 %v6609
    %6948 = vmatpush2.bf16.msra.mxu0 %v6608
    %6949 = vmatprep.mubr.bf16.mxu0 %v6025
    %6950 = vmatmul.mubr.bf16.gmra.mxu0 %v6024
    %v6951 = vpop.f32.mrf.mxu0
    %v6952 = vadd.f32 0.0, %v6951
    %v6953 = vpop.f32.mrf.mxu0
    %v6954 = vadd.f32 0.0, %v6953
    %v6955 = vpop.f32.mrf.mxu0
    %v6956 = vpop.f32.mrf.mxu0
    %6957 = vdwg.mxu0
    %v6958 = vadd.f32 %v6014, %v6829
    %v6959 = vadd.f32 %v6015, %v6831
    %v6960 = vadd.f32 %v6016, %v6870
    %v6961 = vadd.f32 %v6017, %v6872
    %v6962 = vadd.f32 %v6018, %v6911
    %v6963 = vadd.f32 %v6019, %v6913
    %v6964 = vadd.f32 %v6020, %v6952
    %v6965 = vadd.f32 %v6021, %v6954
    %v6966 = vxor.u32 %v6958, 2147483648
    %v6967 = vxor.u32 %v6959, 2147483648
    %v6968 = vxor.u32 %v6960, 2147483648
    %v6969 = vxor.u32 %v6961, 2147483648
    %v6970 = vxor.u32 %v6962, 2147483648
    %v6971 = vxor.u32 %v6963, 2147483648
    %v6972 = vmul.f32 %v6966, 1.442695
    %v6973 = vpow.pop %v6972
    %v6974 = vmul.f32 %v6967, 1.442695
    %v6975 = vpow.pop %v6974
    %v6976 = vmul.f32 %v6968, 1.442695
    %v6977 = vpow.pop %v6976
    %v6978 = vmul.f32 %v6969, 1.442695
    %v6979 = vpow.pop %v6978
    %v6980 = vmul.f32 %v6970, 1.442695
    %v6981 = vpow.pop %v6980
    %v6982 = vmul.f32 %v6971, 1.442695
    %v6983 = vpow.pop %v6982
    %v6984 = vadd.f32 %v6973, 1.0
    %v6985 = vadd.f32 %v6975, 1.0
    %v6986 = vadd.f32 %v6977, 1.0
    %v6987 = vadd.f32 %v6979, 1.0
    %v6988 = vadd.f32 %v6981, 1.0
    %v6989 = vadd.f32 %v6983, 1.0
    %v6990 = vrcp.pop %v6984
    %v6991 = vmul.f32 1.0, %v6990
    %v6992 = vrcp.pop %v6985
    %v6993 = vmul.f32 1.0, %v6992
    %v6994 = vrcp.pop %v6986
    %v6995 = vmul.f32 1.0, %v6994
    %v6996 = vrcp.pop %v6987
    %v6997 = vmul.f32 1.0, %v6996
    %v6998 = vrcp.pop %v6988
    %v6999 = vmul.f32 1.0, %v6998
    %v7000 = vrcp.pop %v6989
    %v7001 = vmul.f32 1.0, %v7000
    %v7002 = vtanh.pop %v6964
    %v7003 = vtanh.pop %v6965
    %v7004 = vld [vmem:[#allocation4] sm:$0xff]
    %v7005 = vld [vmem:[#allocation4 + $0x8] sm:$0xff]
    %v7006 = vmul.f32 %v6995, %v7004
    %v7007 = vmul.f32 %v6997, %v7005
    %v7008 = vmul.f32 %v6991, %v7002
    %v7009 = vmul.f32 %v6993, %v7003
    %v7010 = vadd.f32 %v7006, %v7008
    %v7011 = vadd.f32 %v7007, %v7009
    %7012 = vst [vmem:[#allocation4] sm:$0xff] %v7010
    %7013 = vst [vmem:[#allocation4 + $0x8] sm:$0xff] %v7011
    %v7014 = vtanh.pop %v7010
    %v7015 = vtanh.pop %v7011
    %v7016 = vmul.f32 %v6999, %v7014
    %v7017 = vmul.f32 %v7001, %v7015
    %7018 = vst [vmem:[#allocation3] sm:$0xff] %v7016
    %7019 = vst [vmem:[#allocation3 + $0x8] sm:$0xff] %v7017
    %s7020 = smul.u32 6, 8
    %s7021 = smul.addr %s7020, 4
    %s7022 = scalar_lea.vmem [#allocation2], %s7021
    %v7023 = vld [vmem:[%s7022] sm:$0xff]
    %v7024 = vld [vmem:[%s7022 + $0x8] sm:$0xff]
    %v7025 = vld [vmem:[%s7022 + $0x10] sm:$0xff]
    %v7026 = vld [vmem:[%s7022 + $0x18] sm:$0xff]
    %v7027 = vunpack.c.l.bf16 %v7023
    %v7028 = vunpack.c.h.bf16 %v7023
    %v7029 = vunpack.c.l.bf16 %v7024
    %v7030 = vunpack.c.h.bf16 %v7024
    %v7031 = vunpack.c.l.bf16 %v7025
    %v7032 = vunpack.c.h.bf16 %v7025
    %v7033 = vunpack.c.l.bf16 %v7026
    %v7034 = vunpack.c.h.bf16 %v7026
    %v7035 = vld [vmem:[#allocation3] sm:$0xff]
    %v7036 = vld [vmem:[#allocation3 + $0x8] sm:$0xff]
    %v7037 = vpack.c.bf16 %v7035, %v7035
    %v7038 = vpack.c.bf16 %v7036, %v7036
    %v7039 = vld [vmem:[#allocation11] sm:$0xff]
    %v7040 = vld [vmem:[#allocation11 + $0x8] sm:$0xff]
    %v7041 = vld [vmem:[#allocation11 + $0x10] sm:$0xff]
    %v7042 = vld [vmem:[#allocation11 + $0x18] sm:$0xff]
    %v7043 = vld [vmem:[#allocation11 + $0x20] sm:$0xff]
    %v7044 = vld [vmem:[#allocation11 + $0x28] sm:$0xff]
    %v7045 = vld [vmem:[#allocation11 + $0x30] sm:$0xff]
    %v7046 = vld [vmem:[#allocation11 + $0x38] sm:$0xff]
    %v7047 = vld [vmem:[#allocation11 + $0x40] sm:$0xff]
    %v7048 = vld [vmem:[#allocation11 + $0x48] sm:$0xff]
    %v7049 = vld [vmem:[#allocation11 + $0x50] sm:$0xff]
    %v7050 = vld [vmem:[#allocation11 + $0x58] sm:$0xff]
    %v7051 = vld [vmem:[#allocation11 + $0x60] sm:$0xff]
    %v7052 = vld [vmem:[#allocation11 + $0x68] sm:$0xff]
    %v7053 = vld [vmem:[#allocation11 + $0x70] sm:$0xff]
    %v7054 = vld [vmem:[#allocation11 + $0x78] sm:$0xff]
    %v7055 = vld [vmem:[#allocation11 + $0x80] sm:$0xff]
    %v7056 = vld [vmem:[#allocation11 + $0x88] sm:$0xff]
    %v7057 = vld [vmem:[#allocation11 + $0x90] sm:$0xff]
    %v7058 = vld [vmem:[#allocation11 + $0x98] sm:$0xff]
    %v7059 = vld [vmem:[#allocation11 + $0xa0] sm:$0xff]
    %v7060 = vld [vmem:[#allocation11 + $0xa8] sm:$0xff]
    %v7061 = vld [vmem:[#allocation11 + $0xb0] sm:$0xff]
    %v7062 = vld [vmem:[#allocation11 + $0xb8] sm:$0xff]
    %v7063 = vld [vmem:[#allocation11 + $0xc0] sm:$0xff]
    %v7064 = vld [vmem:[#allocation11 + $0xc8] sm:$0xff]
    %v7065 = vld [vmem:[#allocation11 + $0xd0] sm:$0xff]
    %v7066 = vld [vmem:[#allocation11 + $0xd8] sm:$0xff]
    %v7067 = vld [vmem:[#allocation11 + $0xe0] sm:$0xff]
    %v7068 = vld [vmem:[#allocation11 + $0xe8] sm:$0xff]
    %v7069 = vld [vmem:[#allocation11 + $0xf0] sm:$0xff]
    %v7070 = vld [vmem:[#allocation11 + $0xf8] sm:$0xff]
    %v7071 = vld [vmem:[#allocation11 + $0x100] sm:$0xff]
    %v7072 = vld [vmem:[#allocation11 + $0x108] sm:$0xff]
    %v7073 = vld [vmem:[#allocation11 + $0x110] sm:$0xff]
    %v7074 = vld [vmem:[#allocation11 + $0x118] sm:$0xff]
    %v7075 = vld [vmem:[#allocation11 + $0x120] sm:$0xff]
    %v7076 = vld [vmem:[#allocation11 + $0x128] sm:$0xff]
    %v7077 = vld [vmem:[#allocation11 + $0x130] sm:$0xff]
    %v7078 = vld [vmem:[#allocation11 + $0x138] sm:$0xff]
    %v7079 = vld [vmem:[#allocation11 + $0x140] sm:$0xff]
    %v7080 = vld [vmem:[#allocation11 + $0x148] sm:$0xff]
    %v7081 = vld [vmem:[#allocation11 + $0x150] sm:$0xff]
    %v7082 = vld [vmem:[#allocation11 + $0x158] sm:$0xff]
    %v7083 = vld [vmem:[#allocation11 + $0x160] sm:$0xff]
    %v7084 = vld [vmem:[#allocation11 + $0x168] sm:$0xff]
    %v7085 = vld [vmem:[#allocation11 + $0x170] sm:$0xff]
    %v7086 = vld [vmem:[#allocation11 + $0x178] sm:$0xff]
    %v7087 = vld [vmem:[#allocation11 + $0x180] sm:$0xff]
    %v7088 = vld [vmem:[#allocation11 + $0x188] sm:$0xff]
    %v7089 = vld [vmem:[#allocation11 + $0x190] sm:$0xff]
    %v7090 = vld [vmem:[#allocation11 + $0x198] sm:$0xff]
    %v7091 = vld [vmem:[#allocation11 + $0x1a0] sm:$0xff]
    %v7092 = vld [vmem:[#allocation11 + $0x1a8] sm:$0xff]
    %v7093 = vld [vmem:[#allocation11 + $0x1b0] sm:$0xff]
    %v7094 = vld [vmem:[#allocation11 + $0x1b8] sm:$0xff]
    %v7095 = vld [vmem:[#allocation11 + $0x1c0] sm:$0xff]
    %v7096 = vld [vmem:[#allocation11 + $0x1c8] sm:$0xff]
    %v7097 = vld [vmem:[#allocation11 + $0x1d0] sm:$0xff]
    %v7098 = vld [vmem:[#allocation11 + $0x1d8] sm:$0xff]
    %v7099 = vld [vmem:[#allocation11 + $0x1e0] sm:$0xff]
    %v7100 = vld [vmem:[#allocation11 + $0x1e8] sm:$0xff]
    %v7101 = vld [vmem:[#allocation11 + $0x1f0] sm:$0xff]
    %v7102 = vld [vmem:[#allocation11 + $0x1f8] sm:$0xff]
    %v7103 = vld [vmem:[#allocation11 + $0x200] sm:$0xff]
    %v7104 = vld [vmem:[#allocation11 + $0x208] sm:$0xff]
    %v7105 = vld [vmem:[#allocation11 + $0x210] sm:$0xff]
    %v7106 = vld [vmem:[#allocation11 + $0x218] sm:$0xff]
    %v7107 = vld [vmem:[#allocation11 + $0x220] sm:$0xff]
    %v7108 = vld [vmem:[#allocation11 + $0x228] sm:$0xff]
    %v7109 = vld [vmem:[#allocation11 + $0x230] sm:$0xff]
    %v7110 = vld [vmem:[#allocation11 + $0x238] sm:$0xff]
    %v7111 = vld [vmem:[#allocation11 + $0x240] sm:$0xff]
    %v7112 = vld [vmem:[#allocation11 + $0x248] sm:$0xff]
    %v7113 = vld [vmem:[#allocation11 + $0x250] sm:$0xff]
    %v7114 = vld [vmem:[#allocation11 + $0x258] sm:$0xff]
    %v7115 = vld [vmem:[#allocation11 + $0x260] sm:$0xff]
    %v7116 = vld [vmem:[#allocation11 + $0x268] sm:$0xff]
    %v7117 = vld [vmem:[#allocation11 + $0x270] sm:$0xff]
    %v7118 = vld [vmem:[#allocation11 + $0x278] sm:$0xff]
    %v7119 = vld [vmem:[#allocation11 + $0x280] sm:$0xff]
    %v7120 = vld [vmem:[#allocation11 + $0x288] sm:$0xff]
    %v7121 = vld [vmem:[#allocation11 + $0x290] sm:$0xff]
    %v7122 = vld [vmem:[#allocation11 + $0x298] sm:$0xff]
    %v7123 = vld [vmem:[#allocation11 + $0x2a0] sm:$0xff]
    %v7124 = vld [vmem:[#allocation11 + $0x2a8] sm:$0xff]
    %v7125 = vld [vmem:[#allocation11 + $0x2b0] sm:$0xff]
    %v7126 = vld [vmem:[#allocation11 + $0x2b8] sm:$0xff]
    %v7127 = vld [vmem:[#allocation11 + $0x2c0] sm:$0xff]
    %v7128 = vld [vmem:[#allocation11 + $0x2c8] sm:$0xff]
    %v7129 = vld [vmem:[#allocation11 + $0x2d0] sm:$0xff]
    %v7130 = vld [vmem:[#allocation11 + $0x2d8] sm:$0xff]
    %v7131 = vld [vmem:[#allocation11 + $0x2e0] sm:$0xff]
    %v7132 = vld [vmem:[#allocation11 + $0x2e8] sm:$0xff]
    %v7133 = vld [vmem:[#allocation11 + $0x2f0] sm:$0xff]
    %v7134 = vld [vmem:[#allocation11 + $0x2f8] sm:$0xff]
    %v7135 = vld [vmem:[#allocation11 + $0x300] sm:$0xff]
    %v7136 = vld [vmem:[#allocation11 + $0x308] sm:$0xff]
    %v7137 = vld [vmem:[#allocation11 + $0x310] sm:$0xff]
    %v7138 = vld [vmem:[#allocation11 + $0x318] sm:$0xff]
    %v7139 = vld [vmem:[#allocation11 + $0x320] sm:$0xff]
    %v7140 = vld [vmem:[#allocation11 + $0x328] sm:$0xff]
    %v7141 = vld [vmem:[#allocation11 + $0x330] sm:$0xff]
    %v7142 = vld [vmem:[#allocation11 + $0x338] sm:$0xff]
    %v7143 = vld [vmem:[#allocation11 + $0x340] sm:$0xff]
    %v7144 = vld [vmem:[#allocation11 + $0x348] sm:$0xff]
    %v7145 = vld [vmem:[#allocation11 + $0x350] sm:$0xff]
    %v7146 = vld [vmem:[#allocation11 + $0x358] sm:$0xff]
    %v7147 = vld [vmem:[#allocation11 + $0x360] sm:$0xff]
    %v7148 = vld [vmem:[#allocation11 + $0x368] sm:$0xff]
    %v7149 = vld [vmem:[#allocation11 + $0x370] sm:$0xff]
    %v7150 = vld [vmem:[#allocation11 + $0x378] sm:$0xff]
    %v7151 = vld [vmem:[#allocation11 + $0x380] sm:$0xff]
    %v7152 = vld [vmem:[#allocation11 + $0x388] sm:$0xff]
    %v7153 = vld [vmem:[#allocation11 + $0x390] sm:$0xff]
    %v7154 = vld [vmem:[#allocation11 + $0x398] sm:$0xff]
    %v7155 = vld [vmem:[#allocation11 + $0x3a0] sm:$0xff]
    %v7156 = vld [vmem:[#allocation11 + $0x3a8] sm:$0xff]
    %v7157 = vld [vmem:[#allocation11 + $0x3b0] sm:$0xff]
    %v7158 = vld [vmem:[#allocation11 + $0x3b8] sm:$0xff]
    %v7159 = vld [vmem:[#allocation11 + $0x3c0] sm:$0xff]
    %v7160 = vld [vmem:[#allocation11 + $0x3c8] sm:$0xff]
    %v7161 = vld [vmem:[#allocation11 + $0x3d0] sm:$0xff]
    %v7162 = vld [vmem:[#allocation11 + $0x3d8] sm:$0xff]
    %v7163 = vld [vmem:[#allocation11 + $0x3e0] sm:$0xff]
    %v7164 = vld [vmem:[#allocation11 + $0x3e8] sm:$0xff]
    %v7165 = vld [vmem:[#allocation11 + $0x3f0] sm:$0xff]
    %v7166 = vld [vmem:[#allocation11 + $0x3f8] sm:$0xff]
    %v7295 = vunpack.c.l.b16 %v7039
    %v7296 = vunpack.c.h.b16 %v7039
    %v7297 = vunpack.c.l.b16 %v7040
    %v7298 = vunpack.c.h.b16 %v7040
    %v7299 = vunpack.c.l.b16 %v7041
    %v7300 = vunpack.c.h.b16 %v7041
    %v7301 = vunpack.c.l.b16 %v7042
    %v7302 = vunpack.c.h.b16 %v7042
    %v7303 = vunpack.c.l.b16 %v7043
    %v7304 = vunpack.c.h.b16 %v7043
    %v7305 = vunpack.c.l.b16 %v7044
    %v7306 = vunpack.c.h.b16 %v7044
    %v7307 = vunpack.c.l.b16 %v7045
    %v7308 = vunpack.c.h.b16 %v7045
    %v7309 = vunpack.c.l.b16 %v7046
    %v7310 = vunpack.c.h.b16 %v7046
    %v7311 = vunpack.c.l.b16 %v7047
    %v7312 = vunpack.c.h.b16 %v7047
    %v7313 = vunpack.c.l.b16 %v7048
    %v7314 = vunpack.c.h.b16 %v7048
    %v7315 = vunpack.c.l.b16 %v7049
    %v7316 = vunpack.c.h.b16 %v7049
    %v7317 = vunpack.c.l.b16 %v7050
    %v7318 = vunpack.c.h.b16 %v7050
    %v7319 = vunpack.c.l.b16 %v7051
    %v7320 = vunpack.c.h.b16 %v7051
    %v7321 = vunpack.c.l.b16 %v7052
    %v7322 = vunpack.c.h.b16 %v7052
    %v7323 = vunpack.c.l.b16 %v7053
    %v7324 = vunpack.c.h.b16 %v7053
    %v7325 = vunpack.c.l.b16 %v7054
    %v7326 = vunpack.c.h.b16 %v7054
    %v7327 = vunpack.c.l.b16 %v7055
    %v7328 = vunpack.c.h.b16 %v7055
    %v7329 = vunpack.c.l.b16 %v7056
    %v7330 = vunpack.c.h.b16 %v7056
    %v7331 = vunpack.c.l.b16 %v7057
    %v7332 = vunpack.c.h.b16 %v7057
    %v7333 = vunpack.c.l.b16 %v7058
    %v7334 = vunpack.c.h.b16 %v7058
    %v7335 = vunpack.c.l.b16 %v7059
    %v7336 = vunpack.c.h.b16 %v7059
    %v7337 = vunpack.c.l.b16 %v7060
    %v7338 = vunpack.c.h.b16 %v7060
    %v7339 = vunpack.c.l.b16 %v7061
    %v7340 = vunpack.c.h.b16 %v7061
    %v7341 = vunpack.c.l.b16 %v7062
    %v7342 = vunpack.c.h.b16 %v7062
    %v7343 = vunpack.c.l.b16 %v7063
    %v7344 = vunpack.c.h.b16 %v7063
    %v7345 = vunpack.c.l.b16 %v7064
    %v7346 = vunpack.c.h.b16 %v7064
    %v7347 = vunpack.c.l.b16 %v7065
    %v7348 = vunpack.c.h.b16 %v7065
    %v7349 = vunpack.c.l.b16 %v7066
    %v7350 = vunpack.c.h.b16 %v7066
    %v7351 = vunpack.c.l.b16 %v7067
    %v7352 = vunpack.c.h.b16 %v7067
    %v7353 = vunpack.c.l.b16 %v7068
    %v7354 = vunpack.c.h.b16 %v7068
    %v7355 = vunpack.c.l.b16 %v7069
    %v7356 = vunpack.c.h.b16 %v7069
    %v7357 = vunpack.c.l.b16 %v7070
    %v7358 = vunpack.c.h.b16 %v7070
    %v7359 = vunpack.c.l.b16 %v7071
    %v7360 = vunpack.c.h.b16 %v7071
    %v7361 = vunpack.c.l.b16 %v7072
    %v7362 = vunpack.c.h.b16 %v7072
    %v7363 = vunpack.c.l.b16 %v7073
    %v7364 = vunpack.c.h.b16 %v7073
    %v7365 = vunpack.c.l.b16 %v7074
    %v7366 = vunpack.c.h.b16 %v7074
    %v7367 = vunpack.c.l.b16 %v7075
    %v7368 = vunpack.c.h.b16 %v7075
    %v7369 = vunpack.c.l.b16 %v7076
    %v7370 = vunpack.c.h.b16 %v7076
    %v7371 = vunpack.c.l.b16 %v7077
    %v7372 = vunpack.c.h.b16 %v7077
    %v7373 = vunpack.c.l.b16 %v7078
    %v7374 = vunpack.c.h.b16 %v7078
    %v7375 = vunpack.c.l.b16 %v7079
    %v7376 = vunpack.c.h.b16 %v7079
    %v7377 = vunpack.c.l.b16 %v7080
    %v7378 = vunpack.c.h.b16 %v7080
    %v7379 = vunpack.c.l.b16 %v7081
    %v7380 = vunpack.c.h.b16 %v7081
    %v7381 = vunpack.c.l.b16 %v7082
    %v7382 = vunpack.c.h.b16 %v7082
    %v7383 = vunpack.c.l.b16 %v7083
    %v7384 = vunpack.c.h.b16 %v7083
    %v7385 = vunpack.c.l.b16 %v7084
    %v7386 = vunpack.c.h.b16 %v7084
    %v7387 = vunpack.c.l.b16 %v7085
    %v7388 = vunpack.c.h.b16 %v7085
    %v7389 = vunpack.c.l.b16 %v7086
    %v7390 = vunpack.c.h.b16 %v7086
    %v7391 = vunpack.c.l.b16 %v7087
    %v7392 = vunpack.c.h.b16 %v7087
    %v7393 = vunpack.c.l.b16 %v7088
    %v7394 = vunpack.c.h.b16 %v7088
    %v7395 = vunpack.c.l.b16 %v7089
    %v7396 = vunpack.c.h.b16 %v7089
    %v7397 = vunpack.c.l.b16 %v7090
    %v7398 = vunpack.c.h.b16 %v7090
    %v7399 = vunpack.c.l.b16 %v7091
    %v7400 = vunpack.c.h.b16 %v7091
    %v7401 = vunpack.c.l.b16 %v7092
    %v7402 = vunpack.c.h.b16 %v7092
    %v7403 = vunpack.c.l.b16 %v7093
    %v7404 = vunpack.c.h.b16 %v7093
    %v7405 = vunpack.c.l.b16 %v7094
    %v7406 = vunpack.c.h.b16 %v7094
    %v7407 = vunpack.c.l.b16 %v7095
    %v7408 = vunpack.c.h.b16 %v7095
    %v7409 = vunpack.c.l.b16 %v7096
    %v7410 = vunpack.c.h.b16 %v7096
    %v7411 = vunpack.c.l.b16 %v7097
    %v7412 = vunpack.c.h.b16 %v7097
    %v7413 = vunpack.c.l.b16 %v7098
    %v7414 = vunpack.c.h.b16 %v7098
    %v7415 = vunpack.c.l.b16 %v7099
    %v7416 = vunpack.c.h.b16 %v7099
    %v7417 = vunpack.c.l.b16 %v7100
    %v7418 = vunpack.c.h.b16 %v7100
    %v7419 = vunpack.c.l.b16 %v7101
    %v7420 = vunpack.c.h.b16 %v7101
    %v7421 = vunpack.c.l.b16 %v7102
    %v7422 = vunpack.c.h.b16 %v7102
    %v7423 = vunpack.c.l.b16 %v7103
    %v7424 = vunpack.c.h.b16 %v7103
    %v7425 = vunpack.c.l.b16 %v7104
    %v7426 = vunpack.c.h.b16 %v7104
    %v7427 = vunpack.c.l.b16 %v7105
    %v7428 = vunpack.c.h.b16 %v7105
    %v7429 = vunpack.c.l.b16 %v7106
    %v7430 = vunpack.c.h.b16 %v7106
    %v7431 = vunpack.c.l.b16 %v7107
    %v7432 = vunpack.c.h.b16 %v7107
    %v7433 = vunpack.c.l.b16 %v7108
    %v7434 = vunpack.c.h.b16 %v7108
    %v7435 = vunpack.c.l.b16 %v7109
    %v7436 = vunpack.c.h.b16 %v7109
    %v7437 = vunpack.c.l.b16 %v7110
    %v7438 = vunpack.c.h.b16 %v7110
    %v7439 = vunpack.c.l.b16 %v7111
    %v7440 = vunpack.c.h.b16 %v7111
    %v7441 = vunpack.c.l.b16 %v7112
    %v7442 = vunpack.c.h.b16 %v7112
    %v7443 = vunpack.c.l.b16 %v7113
    %v7444 = vunpack.c.h.b16 %v7113
    %v7445 = vunpack.c.l.b16 %v7114
    %v7446 = vunpack.c.h.b16 %v7114
    %v7447 = vunpack.c.l.b16 %v7115
    %v7448 = vunpack.c.h.b16 %v7115
    %v7449 = vunpack.c.l.b16 %v7116
    %v7450 = vunpack.c.h.b16 %v7116
    %v7451 = vunpack.c.l.b16 %v7117
    %v7452 = vunpack.c.h.b16 %v7117
    %v7453 = vunpack.c.l.b16 %v7118
    %v7454 = vunpack.c.h.b16 %v7118
    %v7455 = vunpack.c.l.b16 %v7119
    %v7456 = vunpack.c.h.b16 %v7119
    %v7457 = vunpack.c.l.b16 %v7120
    %v7458 = vunpack.c.h.b16 %v7120
    %v7459 = vunpack.c.l.b16 %v7121
    %v7460 = vunpack.c.h.b16 %v7121
    %v7461 = vunpack.c.l.b16 %v7122
    %v7462 = vunpack.c.h.b16 %v7122
    %v7463 = vunpack.c.l.b16 %v7123
    %v7464 = vunpack.c.h.b16 %v7123
    %v7465 = vunpack.c.l.b16 %v7124
    %v7466 = vunpack.c.h.b16 %v7124
    %v7467 = vunpack.c.l.b16 %v7125
    %v7468 = vunpack.c.h.b16 %v7125
    %v7469 = vunpack.c.l.b16 %v7126
    %v7470 = vunpack.c.h.b16 %v7126
    %v7471 = vunpack.c.l.b16 %v7127
    %v7472 = vunpack.c.h.b16 %v7127
    %v7473 = vunpack.c.l.b16 %v7128
    %v7474 = vunpack.c.h.b16 %v7128
    %v7475 = vunpack.c.l.b16 %v7129
    %v7476 = vunpack.c.h.b16 %v7129
    %v7477 = vunpack.c.l.b16 %v7130
    %v7478 = vunpack.c.h.b16 %v7130
    %v7479 = vunpack.c.l.b16 %v7131
    %v7480 = vunpack.c.h.b16 %v7131
    %v7481 = vunpack.c.l.b16 %v7132
    %v7482 = vunpack.c.h.b16 %v7132
    %v7483 = vunpack.c.l.b16 %v7133
    %v7484 = vunpack.c.h.b16 %v7133
    %v7485 = vunpack.c.l.b16 %v7134
    %v7486 = vunpack.c.h.b16 %v7134
    %v7487 = vunpack.c.l.b16 %v7135
    %v7488 = vunpack.c.h.b16 %v7135
    %v7489 = vunpack.c.l.b16 %v7136
    %v7490 = vunpack.c.h.b16 %v7136
    %v7491 = vunpack.c.l.b16 %v7137
    %v7492 = vunpack.c.h.b16 %v7137
    %v7493 = vunpack.c.l.b16 %v7138
    %v7494 = vunpack.c.h.b16 %v7138
    %v7495 = vunpack.c.l.b16 %v7139
    %v7496 = vunpack.c.h.b16 %v7139
    %v7497 = vunpack.c.l.b16 %v7140
    %v7498 = vunpack.c.h.b16 %v7140
    %v7499 = vunpack.c.l.b16 %v7141
    %v7500 = vunpack.c.h.b16 %v7141
    %v7501 = vunpack.c.l.b16 %v7142
    %v7502 = vunpack.c.h.b16 %v7142
    %v7503 = vunpack.c.l.b16 %v7143
    %v7504 = vunpack.c.h.b16 %v7143
    %v7505 = vunpack.c.l.b16 %v7144
    %v7506 = vunpack.c.h.b16 %v7144
    %v7507 = vunpack.c.l.b16 %v7145
    %v7508 = vunpack.c.h.b16 %v7145
    %v7509 = vunpack.c.l.b16 %v7146
    %v7510 = vunpack.c.h.b16 %v7146
    %v7511 = vunpack.c.l.b16 %v7147
    %v7512 = vunpack.c.h.b16 %v7147
    %v7513 = vunpack.c.l.b16 %v7148
    %v7514 = vunpack.c.h.b16 %v7148
    %v7515 = vunpack.c.l.b16 %v7149
    %v7516 = vunpack.c.h.b16 %v7149
    %v7517 = vunpack.c.l.b16 %v7150
    %v7518 = vunpack.c.h.b16 %v7150
    %v7519 = vunpack.c.l.b16 %v7151
    %v7520 = vunpack.c.h.b16 %v7151
    %v7521 = vunpack.c.l.b16 %v7152
    %v7522 = vunpack.c.h.b16 %v7152
    %v7523 = vunpack.c.l.b16 %v7153
    %v7524 = vunpack.c.h.b16 %v7153
    %v7525 = vunpack.c.l.b16 %v7154
    %v7526 = vunpack.c.h.b16 %v7154
    %v7527 = vunpack.c.l.b16 %v7155
    %v7528 = vunpack.c.h.b16 %v7155
    %v7529 = vunpack.c.l.b16 %v7156
    %v7530 = vunpack.c.h.b16 %v7156
    %v7531 = vunpack.c.l.b16 %v7157
    %v7532 = vunpack.c.h.b16 %v7157
    %v7533 = vunpack.c.l.b16 %v7158
    %v7534 = vunpack.c.h.b16 %v7158
    %v7535 = vunpack.c.l.b16 %v7159
    %v7536 = vunpack.c.h.b16 %v7159
    %v7537 = vunpack.c.l.b16 %v7160
    %v7538 = vunpack.c.h.b16 %v7160
    %v7539 = vunpack.c.l.b16 %v7161
    %v7540 = vunpack.c.h.b16 %v7161
    %v7541 = vunpack.c.l.b16 %v7162
    %v7542 = vunpack.c.h.b16 %v7162
    %v7543 = vunpack.c.l.b16 %v7163
    %v7544 = vunpack.c.h.b16 %v7163
    %v7545 = vunpack.c.l.b16 %v7164
    %v7546 = vunpack.c.h.b16 %v7164
    %v7547 = vunpack.c.l.b16 %v7165
    %v7548 = vunpack.c.h.b16 %v7165
    %v7549 = vunpack.c.l.b16 %v7166
    %v7550 = vunpack.c.h.b16 %v7166
    %v7551 = vpack.c.b16 %v7303, %v7295
    %v7552 = vpack.c.b16 %v7304, %v7296
    %v7553 = vpack.c.b16 %v7305, %v7297
    %v7554 = vpack.c.b16 %v7306, %v7298
    %v7555 = vpack.c.b16 %v7307, %v7299
    %v7556 = vpack.c.b16 %v7308, %v7300
    %v7557 = vpack.c.b16 %v7309, %v7301
    %v7558 = vpack.c.b16 %v7310, %v7302
    %v7559 = vpack.c.b16 %v7319, %v7311
    %v7560 = vpack.c.b16 %v7320, %v7312
    %v7561 = vpack.c.b16 %v7321, %v7313
    %v7562 = vpack.c.b16 %v7322, %v7314
    %v7563 = vpack.c.b16 %v7323, %v7315
    %v7564 = vpack.c.b16 %v7324, %v7316
    %v7565 = vpack.c.b16 %v7325, %v7317
    %v7566 = vpack.c.b16 %v7326, %v7318
    %v7567 = vpack.c.b16 %v7335, %v7327
    %v7568 = vpack.c.b16 %v7336, %v7328
    %v7569 = vpack.c.b16 %v7337, %v7329
    %v7570 = vpack.c.b16 %v7338, %v7330
    %v7571 = vpack.c.b16 %v7339, %v7331
    %v7572 = vpack.c.b16 %v7340, %v7332
    %v7573 = vpack.c.b16 %v7341, %v7333
    %v7574 = vpack.c.b16 %v7342, %v7334
    %v7575 = vpack.c.b16 %v7351, %v7343
    %v7576 = vpack.c.b16 %v7352, %v7344
    %v7577 = vpack.c.b16 %v7353, %v7345
    %v7578 = vpack.c.b16 %v7354, %v7346
    %v7579 = vpack.c.b16 %v7355, %v7347
    %v7580 = vpack.c.b16 %v7356, %v7348
    %v7581 = vpack.c.b16 %v7357, %v7349
    %v7582 = vpack.c.b16 %v7358, %v7350
    %v7583 = vpack.c.b16 %v7367, %v7359
    %v7584 = vpack.c.b16 %v7368, %v7360
    %v7585 = vpack.c.b16 %v7369, %v7361
    %v7586 = vpack.c.b16 %v7370, %v7362
    %v7587 = vpack.c.b16 %v7371, %v7363
    %v7588 = vpack.c.b16 %v7372, %v7364
    %v7589 = vpack.c.b16 %v7373, %v7365
    %v7590 = vpack.c.b16 %v7374, %v7366
    %v7591 = vpack.c.b16 %v7383, %v7375
    %v7592 = vpack.c.b16 %v7384, %v7376
    %v7593 = vpack.c.b16 %v7385, %v7377
    %v7594 = vpack.c.b16 %v7386, %v7378
    %v7595 = vpack.c.b16 %v7387, %v7379
    %v7596 = vpack.c.b16 %v7388, %v7380
    %v7597 = vpack.c.b16 %v7389, %v7381
    %v7598 = vpack.c.b16 %v7390, %v7382
    %v7599 = vpack.c.b16 %v7399, %v7391
    %v7600 = vpack.c.b16 %v7400, %v7392
    %v7601 = vpack.c.b16 %v7401, %v7393
    %v7602 = vpack.c.b16 %v7402, %v7394
    %v7603 = vpack.c.b16 %v7403, %v7395
    %v7604 = vpack.c.b16 %v7404, %v7396
    %v7605 = vpack.c.b16 %v7405, %v7397
    %v7606 = vpack.c.b16 %v7406, %v7398
    %v7607 = vpack.c.b16 %v7415, %v7407
    %v7608 = vpack.c.b16 %v7416, %v7408
    %v7609 = vpack.c.b16 %v7417, %v7409
    %v7610 = vpack.c.b16 %v7418, %v7410
    %v7611 = vpack.c.b16 %v7419, %v7411
    %v7612 = vpack.c.b16 %v7420, %v7412
    %v7613 = vpack.c.b16 %v7421, %v7413
    %v7614 = vpack.c.b16 %v7422, %v7414
    %v7615 = vpack.c.b16 %v7431, %v7423
    %v7616 = vpack.c.b16 %v7432, %v7424
    %v7617 = vpack.c.b16 %v7433, %v7425
    %v7618 = vpack.c.b16 %v7434, %v7426
    %v7619 = vpack.c.b16 %v7435, %v7427
    %v7620 = vpack.c.b16 %v7436, %v7428
    %v7621 = vpack.c.b16 %v7437, %v7429
    %v7622 = vpack.c.b16 %v7438, %v7430
    %v7623 = vpack.c.b16 %v7447, %v7439
    %v7624 = vpack.c.b16 %v7448, %v7440
    %v7625 = vpack.c.b16 %v7449, %v7441
    %v7626 = vpack.c.b16 %v7450, %v7442
    %v7627 = vpack.c.b16 %v7451, %v7443
    %v7628 = vpack.c.b16 %v7452, %v7444
    %v7629 = vpack.c.b16 %v7453, %v7445
    %v7630 = vpack.c.b16 %v7454, %v7446
    %v7631 = vpack.c.b16 %v7463, %v7455
    %v7632 = vpack.c.b16 %v7464, %v7456
    %v7633 = vpack.c.b16 %v7465, %v7457
    %v7634 = vpack.c.b16 %v7466, %v7458
    %v7635 = vpack.c.b16 %v7467, %v7459
    %v7636 = vpack.c.b16 %v7468, %v7460
    %v7637 = vpack.c.b16 %v7469, %v7461
    %v7638 = vpack.c.b16 %v7470, %v7462
    %v7639 = vpack.c.b16 %v7479, %v7471
    %v7640 = vpack.c.b16 %v7480, %v7472
    %v7641 = vpack.c.b16 %v7481, %v7473
    %v7642 = vpack.c.b16 %v7482, %v7474
    %v7643 = vpack.c.b16 %v7483, %v7475
    %v7644 = vpack.c.b16 %v7484, %v7476
    %v7645 = vpack.c.b16 %v7485, %v7477
    %v7646 = vpack.c.b16 %v7486, %v7478
    %v7647 = vpack.c.b16 %v7495, %v7487
    %v7648 = vpack.c.b16 %v7496, %v7488
    %v7649 = vpack.c.b16 %v7497, %v7489
    %v7650 = vpack.c.b16 %v7498, %v7490
    %v7651 = vpack.c.b16 %v7499, %v7491
    %v7652 = vpack.c.b16 %v7500, %v7492
    %v7653 = vpack.c.b16 %v7501, %v7493
    %v7654 = vpack.c.b16 %v7502, %v7494
    %v7655 = vpack.c.b16 %v7511, %v7503
    %v7656 = vpack.c.b16 %v7512, %v7504
    %v7657 = vpack.c.b16 %v7513, %v7505
    %v7658 = vpack.c.b16 %v7514, %v7506
    %v7659 = vpack.c.b16 %v7515, %v7507
    %v7660 = vpack.c.b16 %v7516, %v7508
    %v7661 = vpack.c.b16 %v7517, %v7509
    %v7662 = vpack.c.b16 %v7518, %v7510
    %v7663 = vpack.c.b16 %v7527, %v7519
    %v7664 = vpack.c.b16 %v7528, %v7520
    %v7665 = vpack.c.b16 %v7529, %v7521
    %v7666 = vpack.c.b16 %v7530, %v7522
    %v7667 = vpack.c.b16 %v7531, %v7523
    %v7668 = vpack.c.b16 %v7532, %v7524
    %v7669 = vpack.c.b16 %v7533, %v7525
    %v7670 = vpack.c.b16 %v7534, %v7526
    %v7671 = vpack.c.b16 %v7543, %v7535
    %v7672 = vpack.c.b16 %v7544, %v7536
    %v7673 = vpack.c.b16 %v7545, %v7537
    %v7674 = vpack.c.b16 %v7546, %v7538
    %v7675 = vpack.c.b16 %v7547, %v7539
    %v7676 = vpack.c.b16 %v7548, %v7540
    %v7677 = vpack.c.b16 %v7549, %v7541
    %v7678 = vpack.c.b16 %v7550, %v7542
    %7807 = vmatprep.subr.bf16.mxu0 %v7608
    %7808 = vmatpush1.bf16.msra.mxu0 %v7607
    %7809 = vmatprep.subr.bf16.mxu0 %v7600
    %7810 = vmatpush1.bf16.msra.mxu0 %v7599
    %7811 = vmatprep.subr.bf16.mxu0 %v7592
    %7812 = vmatpush1.bf16.msra.mxu0 %v7591
    %7813 = vmatprep.subr.bf16.mxu0 %v7584
    %7814 = vmatpush1.bf16.msra.mxu0 %v7583
    %7815 = vmatprep.subr.bf16.mxu0 %v7576
    %7816 = vmatpush1.bf16.msra.mxu0 %v7575
    %7817 = vmatprep.subr.bf16.mxu0 %v7568
    %7818 = vmatpush1.bf16.msra.mxu0 %v7567
    %7819 = vmatprep.subr.bf16.mxu0 %v7560
    %7820 = vmatpush1.bf16.msra.mxu0 %v7559
    %7821 = vmatprep.subr.bf16.mxu0 %v7552
    %7822 = vmatpush1.bf16.msra.mxu0 %v7551
    %7823 = vmatprep.subr.bf16.mxu0 %v7672
    %7824 = vmatpush2.bf16.msra.mxu0 %v7671
    %7825 = vmatprep.subr.bf16.mxu0 %v7664
    %7826 = vmatpush2.bf16.msra.mxu0 %v7663
    %7827 = vmatprep.subr.bf16.mxu0 %v7656
    %7828 = vmatpush2.bf16.msra.mxu0 %v7655
    %7829 = vmatprep.subr.bf16.mxu0 %v7648
    %7830 = vmatpush2.bf16.msra.mxu0 %v7647
    %7831 = vmatprep.subr.bf16.mxu0 %v7640
    %7832 = vmatpush2.bf16.msra.mxu0 %v7639
    %7833 = vmatprep.subr.bf16.mxu0 %v7632
    %7834 = vmatpush2.bf16.msra.mxu0 %v7631
    %7835 = vmatprep.subr.bf16.mxu0 %v7624
    %7836 = vmatpush2.bf16.msra.mxu0 %v7623
    %7837 = vmatprep.subr.bf16.mxu0 %v7616
    %7838 = vmatpush2.bf16.msra.mxu0 %v7615
    %7839 = vmatprep.mubr.bf16.mxu0 %v7038
    %7840 = vmatmul.mubr.bf16.gmra.mxu0 %v7037
    %v7841 = vpop.f32.mrf.mxu0
    %v7842 = vadd.f32 0.0, %v7841
    %v7843 = vpop.f32.mrf.mxu0
    %v7844 = vadd.f32 0.0, %v7843
    %v7845 = vpop.f32.mrf.mxu0
    %v7846 = vpop.f32.mrf.mxu0
    %7847 = vdwg.mxu0
    %7848 = vmatprep.subr.bf16.mxu0 %v7610
    %7849 = vmatpush1.bf16.msra.mxu0 %v7609
    %7850 = vmatprep.subr.bf16.mxu0 %v7602
    %7851 = vmatpush1.bf16.msra.mxu0 %v7601
    %7852 = vmatprep.subr.bf16.mxu0 %v7594
    %7853 = vmatpush1.bf16.msra.mxu0 %v7593
    %7854 = vmatprep.subr.bf16.mxu0 %v7586
    %7855 = vmatpush1.bf16.msra.mxu0 %v7585
    %7856 = vmatprep.subr.bf16.mxu0 %v7578
    %7857 = vmatpush1.bf16.msra.mxu0 %v7577
    %7858 = vmatprep.subr.bf16.mxu0 %v7570
    %7859 = vmatpush1.bf16.msra.mxu0 %v7569
    %7860 = vmatprep.subr.bf16.mxu0 %v7562
    %7861 = vmatpush1.bf16.msra.mxu0 %v7561
    %7862 = vmatprep.subr.bf16.mxu0 %v7554
    %7863 = vmatpush1.bf16.msra.mxu0 %v7553
    %7864 = vmatprep.subr.bf16.mxu0 %v7674
    %7865 = vmatpush2.bf16.msra.mxu0 %v7673
    %7866 = vmatprep.subr.bf16.mxu0 %v7666
    %7867 = vmatpush2.bf16.msra.mxu0 %v7665
    %7868 = vmatprep.subr.bf16.mxu0 %v7658
    %7869 = vmatpush2.bf16.msra.mxu0 %v7657
    %7870 = vmatprep.subr.bf16.mxu0 %v7650
    %7871 = vmatpush2.bf16.msra.mxu0 %v7649
    %7872 = vmatprep.subr.bf16.mxu0 %v7642
    %7873 = vmatpush2.bf16.msra.mxu0 %v7641
    %7874 = vmatprep.subr.bf16.mxu0 %v7634
    %7875 = vmatpush2.bf16.msra.mxu0 %v7633
    %7876 = vmatprep.subr.bf16.mxu0 %v7626
    %7877 = vmatpush2.bf16.msra.mxu0 %v7625
    %7878 = vmatprep.subr.bf16.mxu0 %v7618
    %7879 = vmatpush2.bf16.msra.mxu0 %v7617
    %7880 = vmatprep.mubr.bf16.mxu0 %v7038
    %7881 = vmatmul.mubr.bf16.gmra.mxu0 %v7037
    %v7882 = vpop.f32.mrf.mxu0
    %v7883 = vadd.f32 0.0, %v7882
    %v7884 = vpop.f32.mrf.mxu0
    %v7885 = vadd.f32 0.0, %v7884
    %v7886 = vpop.f32.mrf.mxu0
    %v7887 = vpop.f32.mrf.mxu0
    %7888 = vdwg.mxu0
    %7889 = vmatprep.subr.bf16.mxu0 %v7612
    %7890 = vmatpush1.bf16.msra.mxu0 %v7611
    %7891 = vmatprep.subr.bf16.mxu0 %v7604
    %7892 = vmatpush1.bf16.msra.mxu0 %v7603
    %7893 = vmatprep.subr.bf16.mxu0 %v7596
    %7894 = vmatpush1.bf16.msra.mxu0 %v7595
    %7895 = vmatprep.subr.bf16.mxu0 %v7588
    %7896 = vmatpush1.bf16.msra.mxu0 %v7587
    %7897 = vmatprep.subr.bf16.mxu0 %v7580
    %7898 = vmatpush1.bf16.msra.mxu0 %v7579
    %7899 = vmatprep.subr.bf16.mxu0 %v7572
    %7900 = vmatpush1.bf16.msra.mxu0 %v7571
    %7901 = vmatprep.subr.bf16.mxu0 %v7564
    %7902 = vmatpush1.bf16.msra.mxu0 %v7563
    %7903 = vmatprep.subr.bf16.mxu0 %v7556
    %7904 = vmatpush1.bf16.msra.mxu0 %v7555
    %7905 = vmatprep.subr.bf16.mxu0 %v7676
    %7906 = vmatpush2.bf16.msra.mxu0 %v7675
    %7907 = vmatprep.subr.bf16.mxu0 %v7668
    %7908 = vmatpush2.bf16.msra.mxu0 %v7667
    %7909 = vmatprep.subr.bf16.mxu0 %v7660
    %7910 = vmatpush2.bf16.msra.mxu0 %v7659
    %7911 = vmatprep.subr.bf16.mxu0 %v7652
    %7912 = vmatpush2.bf16.msra.mxu0 %v7651
    %7913 = vmatprep.subr.bf16.mxu0 %v7644
    %7914 = vmatpush2.bf16.msra.mxu0 %v7643
    %7915 = vmatprep.subr.bf16.mxu0 %v7636
    %7916 = vmatpush2.bf16.msra.mxu0 %v7635
    %7917 = vmatprep.subr.bf16.mxu0 %v7628
    %7918 = vmatpush2.bf16.msra.mxu0 %v7627
    %7919 = vmatprep.subr.bf16.mxu0 %v7620
    %7920 = vmatpush2.bf16.msra.mxu0 %v7619
    %7921 = vmatprep.mubr.bf16.mxu0 %v7038
    %7922 = vmatmul.mubr.bf16.gmra.mxu0 %v7037
    %v7923 = vpop.f32.mrf.mxu0
    %v7924 = vadd.f32 0.0, %v7923
    %v7925 = vpop.f32.mrf.mxu0
    %v7926 = vadd.f32 0.0, %v7925
    %v7927 = vpop.f32.mrf.mxu0
    %v7928 = vpop.f32.mrf.mxu0
    %7929 = vdwg.mxu0
    %7930 = vmatprep.subr.bf16.mxu0 %v7614
    %7931 = vmatpush1.bf16.msra.mxu0 %v7613
    %7932 = vmatprep.subr.bf16.mxu0 %v7606
    %7933 = vmatpush1.bf16.msra.mxu0 %v7605
    %7934 = vmatprep.subr.bf16.mxu0 %v7598
    %7935 = vmatpush1.bf16.msra.mxu0 %v7597
    %7936 = vmatprep.subr.bf16.mxu0 %v7590
    %7937 = vmatpush1.bf16.msra.mxu0 %v7589
    %7938 = vmatprep.subr.bf16.mxu0 %v7582
    %7939 = vmatpush1.bf16.msra.mxu0 %v7581
    %7940 = vmatprep.subr.bf16.mxu0 %v7574
    %7941 = vmatpush1.bf16.msra.mxu0 %v7573
    %7942 = vmatprep.subr.bf16.mxu0 %v7566
    %7943 = vmatpush1.bf16.msra.mxu0 %v7565
    %7944 = vmatprep.subr.bf16.mxu0 %v7558
    %7945 = vmatpush1.bf16.msra.mxu0 %v7557
    %7946 = vmatprep.subr.bf16.mxu0 %v7678
    %7947 = vmatpush2.bf16.msra.mxu0 %v7677
    %7948 = vmatprep.subr.bf16.mxu0 %v7670
    %7949 = vmatpush2.bf16.msra.mxu0 %v7669
    %7950 = vmatprep.subr.bf16.mxu0 %v7662
    %7951 = vmatpush2.bf16.msra.mxu0 %v7661
    %7952 = vmatprep.subr.bf16.mxu0 %v7654
    %7953 = vmatpush2.bf16.msra.mxu0 %v7653
    %7954 = vmatprep.subr.bf16.mxu0 %v7646
    %7955 = vmatpush2.bf16.msra.mxu0 %v7645
    %7956 = vmatprep.subr.bf16.mxu0 %v7638
    %7957 = vmatpush2.bf16.msra.mxu0 %v7637
    %7958 = vmatprep.subr.bf16.mxu0 %v7630
    %7959 = vmatpush2.bf16.msra.mxu0 %v7629
    %7960 = vmatprep.subr.bf16.mxu0 %v7622
    %7961 = vmatpush2.bf16.msra.mxu0 %v7621
    %7962 = vmatprep.mubr.bf16.mxu0 %v7038
    %7963 = vmatmul.mubr.bf16.gmra.mxu0 %v7037
    %v7964 = vpop.f32.mrf.mxu0
    %v7965 = vadd.f32 0.0, %v7964
    %v7966 = vpop.f32.mrf.mxu0
    %v7967 = vadd.f32 0.0, %v7966
    %v7968 = vpop.f32.mrf.mxu0
    %v7969 = vpop.f32.mrf.mxu0
    %7970 = vdwg.mxu0
    %v7971 = vadd.f32 %v7027, %v7842
    %v7972 = vadd.f32 %v7028, %v7844
    %v7973 = vadd.f32 %v7029, %v7883
    %v7974 = vadd.f32 %v7030, %v7885
    %v7975 = vadd.f32 %v7031, %v7924
    %v7976 = vadd.f32 %v7032, %v7926
    %v7977 = vadd.f32 %v7033, %v7965
    %v7978 = vadd.f32 %v7034, %v7967
    %v7979 = vxor.u32 %v7971, 2147483648
    %v7980 = vxor.u32 %v7972, 2147483648
    %v7981 = vxor.u32 %v7973, 2147483648
    %v7982 = vxor.u32 %v7974, 2147483648
    %v7983 = vxor.u32 %v7975, 2147483648
    %v7984 = vxor.u32 %v7976, 2147483648
    %v7985 = vmul.f32 %v7979, 1.442695
    %v7986 = vpow.pop %v7985
    %v7987 = vmul.f32 %v7980, 1.442695
    %v7988 = vpow.pop %v7987
    %v7989 = vmul.f32 %v7981, 1.442695
    %v7990 = vpow.pop %v7989
    %v7991 = vmul.f32 %v7982, 1.442695
    %v7992 = vpow.pop %v7991
    %v7993 = vmul.f32 %v7983, 1.442695
    %v7994 = vpow.pop %v7993
    %v7995 = vmul.f32 %v7984, 1.442695
    %v7996 = vpow.pop %v7995
    %v7997 = vadd.f32 %v7986, 1.0
    %v7998 = vadd.f32 %v7988, 1.0
    %v7999 = vadd.f32 %v7990, 1.0
    %v8000 = vadd.f32 %v7992, 1.0
    %v8001 = vadd.f32 %v7994, 1.0
    %v8002 = vadd.f32 %v7996, 1.0
    %v8003 = vrcp.pop %v7997
    %v8004 = vmul.f32 1.0, %v8003
    %v8005 = vrcp.pop %v7998
    %v8006 = vmul.f32 1.0, %v8005
    %v8007 = vrcp.pop %v7999
    %v8008 = vmul.f32 1.0, %v8007
    %v8009 = vrcp.pop %v8000
    %v8010 = vmul.f32 1.0, %v8009
    %v8011 = vrcp.pop %v8001
    %v8012 = vmul.f32 1.0, %v8011
    %v8013 = vrcp.pop %v8002
    %v8014 = vmul.f32 1.0, %v8013
    %v8015 = vtanh.pop %v7977
    %v8016 = vtanh.pop %v7978
    %v8017 = vld [vmem:[#allocation4] sm:$0xff]
    %v8018 = vld [vmem:[#allocation4 + $0x8] sm:$0xff]
    %v8019 = vmul.f32 %v8008, %v8017
    %v8020 = vmul.f32 %v8010, %v8018
    %v8021 = vmul.f32 %v8004, %v8015
    %v8022 = vmul.f32 %v8006, %v8016
    %v8023 = vadd.f32 %v8019, %v8021
    %v8024 = vadd.f32 %v8020, %v8022
    %8025 = vst [vmem:[#allocation4] sm:$0xff] %v8023
    %8026 = vst [vmem:[#allocation4 + $0x8] sm:$0xff] %v8024
    %v8027 = vtanh.pop %v8023
    %v8028 = vtanh.pop %v8024
    %v8029 = vmul.f32 %v8012, %v8027
    %v8030 = vmul.f32 %v8014, %v8028
    %8031 = vst [vmem:[#allocation3] sm:$0xff] %v8029
    %8032 = vst [vmem:[#allocation3 + $0x8] sm:$0xff] %v8030
    %s8033 = smul.u32 7, 8
    %s8034 = smul.addr %s8033, 4
    %s8035 = scalar_lea.vmem [#allocation2], %s8034
    %v8036 = vld [vmem:[%s8035] sm:$0xff]
    %v8037 = vld [vmem:[%s8035 + $0x8] sm:$0xff]
    %v8038 = vld [vmem:[%s8035 + $0x10] sm:$0xff]
    %v8039 = vld [vmem:[%s8035 + $0x18] sm:$0xff]
    %v8040 = vunpack.c.l.bf16 %v8036
    %v8041 = vunpack.c.h.bf16 %v8036
    %v8042 = vunpack.c.l.bf16 %v8037
    %v8043 = vunpack.c.h.bf16 %v8037
    %v8044 = vunpack.c.l.bf16 %v8038
    %v8045 = vunpack.c.h.bf16 %v8038
    %v8046 = vunpack.c.l.bf16 %v8039
    %v8047 = vunpack.c.h.bf16 %v8039
    %v8048 = vld [vmem:[#allocation3] sm:$0xff]
    %v8049 = vld [vmem:[#allocation3 + $0x8] sm:$0xff]
    %v8050 = vpack.c.bf16 %v8048, %v8048
    %v8051 = vpack.c.bf16 %v8049, %v8049
    %v8052 = vld [vmem:[#allocation11] sm:$0xff]
    %v8053 = vld [vmem:[#allocation11 + $0x8] sm:$0xff]
    %v8054 = vld [vmem:[#allocation11 + $0x10] sm:$0xff]
    %v8055 = vld [vmem:[#allocation11 + $0x18] sm:$0xff]
    %v8056 = vld [vmem:[#allocation11 + $0x20] sm:$0xff]
    %v8057 = vld [vmem:[#allocation11 + $0x28] sm:$0xff]
    %v8058 = vld [vmem:[#allocation11 + $0x30] sm:$0xff]
    %v8059 = vld [vmem:[#allocation11 + $0x38] sm:$0xff]
    %v8060 = vld [vmem:[#allocation11 + $0x40] sm:$0xff]
    %v8061 = vld [vmem:[#allocation11 + $0x48] sm:$0xff]
    %v8062 = vld [vmem:[#allocation11 + $0x50] sm:$0xff]
    %v8063 = vld [vmem:[#allocation11 + $0x58] sm:$0xff]
    %v8064 = vld [vmem:[#allocation11 + $0x60] sm:$0xff]
    %v8065 = vld [vmem:[#allocation11 + $0x68] sm:$0xff]
    %v8066 = vld [vmem:[#allocation11 + $0x70] sm:$0xff]
    %v8067 = vld [vmem:[#allocation11 + $0x78] sm:$0xff]
    %v8068 = vld [vmem:[#allocation11 + $0x80] sm:$0xff]
    %v8069 = vld [vmem:[#allocation11 + $0x88] sm:$0xff]
    %v8070 = vld [vmem:[#allocation11 + $0x90] sm:$0xff]
    %v8071 = vld [vmem:[#allocation11 + $0x98] sm:$0xff]
    %v8072 = vld [vmem:[#allocation11 + $0xa0] sm:$0xff]
    %v8073 = vld [vmem:[#allocation11 + $0xa8] sm:$0xff]
    %v8074 = vld [vmem:[#allocation11 + $0xb0] sm:$0xff]
    %v8075 = vld [vmem:[#allocation11 + $0xb8] sm:$0xff]
    %v8076 = vld [vmem:[#allocation11 + $0xc0] sm:$0xff]
    %v8077 = vld [vmem:[#allocation11 + $0xc8] sm:$0xff]
    %v8078 = vld [vmem:[#allocation11 + $0xd0] sm:$0xff]
    %v8079 = vld [vmem:[#allocation11 + $0xd8] sm:$0xff]
    %v8080 = vld [vmem:[#allocation11 + $0xe0] sm:$0xff]
    %v8081 = vld [vmem:[#allocation11 + $0xe8] sm:$0xff]
    %v8082 = vld [vmem:[#allocation11 + $0xf0] sm:$0xff]
    %v8083 = vld [vmem:[#allocation11 + $0xf8] sm:$0xff]
    %v8084 = vld [vmem:[#allocation11 + $0x100] sm:$0xff]
    %v8085 = vld [vmem:[#allocation11 + $0x108] sm:$0xff]
    %v8086 = vld [vmem:[#allocation11 + $0x110] sm:$0xff]
    %v8087 = vld [vmem:[#allocation11 + $0x118] sm:$0xff]
    %v8088 = vld [vmem:[#allocation11 + $0x120] sm:$0xff]
    %v8089 = vld [vmem:[#allocation11 + $0x128] sm:$0xff]
    %v8090 = vld [vmem:[#allocation11 + $0x130] sm:$0xff]
    %v8091 = vld [vmem:[#allocation11 + $0x138] sm:$0xff]
    %v8092 = vld [vmem:[#allocation11 + $0x140] sm:$0xff]
    %v8093 = vld [vmem:[#allocation11 + $0x148] sm:$0xff]
    %v8094 = vld [vmem:[#allocation11 + $0x150] sm:$0xff]
    %v8095 = vld [vmem:[#allocation11 + $0x158] sm:$0xff]
    %v8096 = vld [vmem:[#allocation11 + $0x160] sm:$0xff]
    %v8097 = vld [vmem:[#allocation11 + $0x168] sm:$0xff]
    %v8098 = vld [vmem:[#allocation11 + $0x170] sm:$0xff]
    %v8099 = vld [vmem:[#allocation11 + $0x178] sm:$0xff]
    %v8100 = vld [vmem:[#allocation11 + $0x180] sm:$0xff]
    %v8101 = vld [vmem:[#allocation11 + $0x188] sm:$0xff]
    %v8102 = vld [vmem:[#allocation11 + $0x190] sm:$0xff]
    %v8103 = vld [vmem:[#allocation11 + $0x198] sm:$0xff]
    %v8104 = vld [vmem:[#allocation11 + $0x1a0] sm:$0xff]
    %v8105 = vld [vmem:[#allocation11 + $0x1a8] sm:$0xff]
    %v8106 = vld [vmem:[#allocation11 + $0x1b0] sm:$0xff]
    %v8107 = vld [vmem:[#allocation11 + $0x1b8] sm:$0xff]
    %v8108 = vld [vmem:[#allocation11 + $0x1c0] sm:$0xff]
    %v8109 = vld [vmem:[#allocation11 + $0x1c8] sm:$0xff]
    %v8110 = vld [vmem:[#allocation11 + $0x1d0] sm:$0xff]
    %v8111 = vld [vmem:[#allocation11 + $0x1d8] sm:$0xff]
    %v8112 = vld [vmem:[#allocation11 + $0x1e0] sm:$0xff]
    %v8113 = vld [vmem:[#allocation11 + $0x1e8] sm:$0xff]
    %v8114 = vld [vmem:[#allocation11 + $0x1f0] sm:$0xff]
    %v8115 = vld [vmem:[#allocation11 + $0x1f8] sm:$0xff]
    %v8116 = vld [vmem:[#allocation11 + $0x200] sm:$0xff]
    %v8117 = vld [vmem:[#allocation11 + $0x208] sm:$0xff]
    %v8118 = vld [vmem:[#allocation11 + $0x210] sm:$0xff]
    %v8119 = vld [vmem:[#allocation11 + $0x218] sm:$0xff]
    %v8120 = vld [vmem:[#allocation11 + $0x220] sm:$0xff]
    %v8121 = vld [vmem:[#allocation11 + $0x228] sm:$0xff]
    %v8122 = vld [vmem:[#allocation11 + $0x230] sm:$0xff]
    %v8123 = vld [vmem:[#allocation11 + $0x238] sm:$0xff]
    %v8124 = vld [vmem:[#allocation11 + $0x240] sm:$0xff]
    %v8125 = vld [vmem:[#allocation11 + $0x248] sm:$0xff]
    %v8126 = vld [vmem:[#allocation11 + $0x250] sm:$0xff]
    %v8127 = vld [vmem:[#allocation11 + $0x258] sm:$0xff]
    %v8128 = vld [vmem:[#allocation11 + $0x260] sm:$0xff]
    %v8129 = vld [vmem:[#allocation11 + $0x268] sm:$0xff]
    %v8130 = vld [vmem:[#allocation11 + $0x270] sm:$0xff]
    %v8131 = vld [vmem:[#allocation11 + $0x278] sm:$0xff]
    %v8132 = vld [vmem:[#allocation11 + $0x280] sm:$0xff]
    %v8133 = vld [vmem:[#allocation11 + $0x288] sm:$0xff]
    %v8134 = vld [vmem:[#allocation11 + $0x290] sm:$0xff]
    %v8135 = vld [vmem:[#allocation11 + $0x298] sm:$0xff]
    %v8136 = vld [vmem:[#allocation11 + $0x2a0] sm:$0xff]
    %v8137 = vld [vmem:[#allocation11 + $0x2a8] sm:$0xff]
    %v8138 = vld [vmem:[#allocation11 + $0x2b0] sm:$0xff]
    %v8139 = vld [vmem:[#allocation11 + $0x2b8] sm:$0xff]
    %v8140 = vld [vmem:[#allocation11 + $0x2c0] sm:$0xff]
    %v8141 = vld [vmem:[#allocation11 + $0x2c8] sm:$0xff]
    %v8142 = vld [vmem:[#allocation11 + $0x2d0] sm:$0xff]
    %v8143 = vld [vmem:[#allocation11 + $0x2d8] sm:$0xff]
    %v8144 = vld [vmem:[#allocation11 + $0x2e0] sm:$0xff]
    %v8145 = vld [vmem:[#allocation11 + $0x2e8] sm:$0xff]
    %v8146 = vld [vmem:[#allocation11 + $0x2f0] sm:$0xff]
    %v8147 = vld [vmem:[#allocation11 + $0x2f8] sm:$0xff]
    %v8148 = vld [vmem:[#allocation11 + $0x300] sm:$0xff]
    %v8149 = vld [vmem:[#allocation11 + $0x308] sm:$0xff]
    %v8150 = vld [vmem:[#allocation11 + $0x310] sm:$0xff]
    %v8151 = vld [vmem:[#allocation11 + $0x318] sm:$0xff]
    %v8152 = vld [vmem:[#allocation11 + $0x320] sm:$0xff]
    %v8153 = vld [vmem:[#allocation11 + $0x328] sm:$0xff]
    %v8154 = vld [vmem:[#allocation11 + $0x330] sm:$0xff]
    %v8155 = vld [vmem:[#allocation11 + $0x338] sm:$0xff]
    %v8156 = vld [vmem:[#allocation11 + $0x340] sm:$0xff]
    %v8157 = vld [vmem:[#allocation11 + $0x348] sm:$0xff]
    %v8158 = vld [vmem:[#allocation11 + $0x350] sm:$0xff]
    %v8159 = vld [vmem:[#allocation11 + $0x358] sm:$0xff]
    %v8160 = vld [vmem:[#allocation11 + $0x360] sm:$0xff]
    %v8161 = vld [vmem:[#allocation11 + $0x368] sm:$0xff]
    %v8162 = vld [vmem:[#allocation11 + $0x370] sm:$0xff]
    %v8163 = vld [vmem:[#allocation11 + $0x378] sm:$0xff]
    %v8164 = vld [vmem:[#allocation11 + $0x380] sm:$0xff]
    %v8165 = vld [vmem:[#allocation11 + $0x388] sm:$0xff]
    %v8166 = vld [vmem:[#allocation11 + $0x390] sm:$0xff]
    %v8167 = vld [vmem:[#allocation11 + $0x398] sm:$0xff]
    %v8168 = vld [vmem:[#allocation11 + $0x3a0] sm:$0xff]
    %v8169 = vld [vmem:[#allocation11 + $0x3a8] sm:$0xff]
    %v8170 = vld [vmem:[#allocation11 + $0x3b0] sm:$0xff]
    %v8171 = vld [vmem:[#allocation11 + $0x3b8] sm:$0xff]
    %v8172 = vld [vmem:[#allocation11 + $0x3c0] sm:$0xff]
    %v8173 = vld [vmem:[#allocation11 + $0x3c8] sm:$0xff]
    %v8174 = vld [vmem:[#allocation11 + $0x3d0] sm:$0xff]
    %v8175 = vld [vmem:[#allocation11 + $0x3d8] sm:$0xff]
    %v8176 = vld [vmem:[#allocation11 + $0x3e0] sm:$0xff]
    %v8177 = vld [vmem:[#allocation11 + $0x3e8] sm:$0xff]
    %v8178 = vld [vmem:[#allocation11 + $0x3f0] sm:$0xff]
    %v8179 = vld [vmem:[#allocation11 + $0x3f8] sm:$0xff]
    %v8308 = vunpack.c.l.b16 %v8052
    %v8309 = vunpack.c.h.b16 %v8052
    %v8310 = vunpack.c.l.b16 %v8053
    %v8311 = vunpack.c.h.b16 %v8053
    %v8312 = vunpack.c.l.b16 %v8054
    %v8313 = vunpack.c.h.b16 %v8054
    %v8314 = vunpack.c.l.b16 %v8055
    %v8315 = vunpack.c.h.b16 %v8055
    %v8316 = vunpack.c.l.b16 %v8056
    %v8317 = vunpack.c.h.b16 %v8056
    %v8318 = vunpack.c.l.b16 %v8057
    %v8319 = vunpack.c.h.b16 %v8057
    %v8320 = vunpack.c.l.b16 %v8058
    %v8321 = vunpack.c.h.b16 %v8058
    %v8322 = vunpack.c.l.b16 %v8059
    %v8323 = vunpack.c.h.b16 %v8059
    %v8324 = vunpack.c.l.b16 %v8060
    %v8325 = vunpack.c.h.b16 %v8060
    %v8326 = vunpack.c.l.b16 %v8061
    %v8327 = vunpack.c.h.b16 %v8061
    %v8328 = vunpack.c.l.b16 %v8062
    %v8329 = vunpack.c.h.b16 %v8062
    %v8330 = vunpack.c.l.b16 %v8063
    %v8331 = vunpack.c.h.b16 %v8063
    %v8332 = vunpack.c.l.b16 %v8064
    %v8333 = vunpack.c.h.b16 %v8064
    %v8334 = vunpack.c.l.b16 %v8065
    %v8335 = vunpack.c.h.b16 %v8065
    %v8336 = vunpack.c.l.b16 %v8066
    %v8337 = vunpack.c.h.b16 %v8066
    %v8338 = vunpack.c.l.b16 %v8067
    %v8339 = vunpack.c.h.b16 %v8067
    %v8340 = vunpack.c.l.b16 %v8068
    %v8341 = vunpack.c.h.b16 %v8068
    %v8342 = vunpack.c.l.b16 %v8069
    %v8343 = vunpack.c.h.b16 %v8069
    %v8344 = vunpack.c.l.b16 %v8070
    %v8345 = vunpack.c.h.b16 %v8070
    %v8346 = vunpack.c.l.b16 %v8071
    %v8347 = vunpack.c.h.b16 %v8071
    %v8348 = vunpack.c.l.b16 %v8072
    %v8349 = vunpack.c.h.b16 %v8072
    %v8350 = vunpack.c.l.b16 %v8073
    %v8351 = vunpack.c.h.b16 %v8073
    %v8352 = vunpack.c.l.b16 %v8074
    %v8353 = vunpack.c.h.b16 %v8074
    %v8354 = vunpack.c.l.b16 %v8075
    %v8355 = vunpack.c.h.b16 %v8075
    %v8356 = vunpack.c.l.b16 %v8076
    %v8357 = vunpack.c.h.b16 %v8076
    %v8358 = vunpack.c.l.b16 %v8077
    %v8359 = vunpack.c.h.b16 %v8077
    %v8360 = vunpack.c.l.b16 %v8078
    %v8361 = vunpack.c.h.b16 %v8078
    %v8362 = vunpack.c.l.b16 %v8079
    %v8363 = vunpack.c.h.b16 %v8079
    %v8364 = vunpack.c.l.b16 %v8080
    %v8365 = vunpack.c.h.b16 %v8080
    %v8366 = vunpack.c.l.b16 %v8081
    %v8367 = vunpack.c.h.b16 %v8081
    %v8368 = vunpack.c.l.b16 %v8082
    %v8369 = vunpack.c.h.b16 %v8082
    %v8370 = vunpack.c.l.b16 %v8083
    %v8371 = vunpack.c.h.b16 %v8083
    %v8372 = vunpack.c.l.b16 %v8084
    %v8373 = vunpack.c.h.b16 %v8084
    %v8374 = vunpack.c.l.b16 %v8085
    %v8375 = vunpack.c.h.b16 %v8085
    %v8376 = vunpack.c.l.b16 %v8086
    %v8377 = vunpack.c.h.b16 %v8086
    %v8378 = vunpack.c.l.b16 %v8087
    %v8379 = vunpack.c.h.b16 %v8087
    %v8380 = vunpack.c.l.b16 %v8088
    %v8381 = vunpack.c.h.b16 %v8088
    %v8382 = vunpack.c.l.b16 %v8089
    %v8383 = vunpack.c.h.b16 %v8089
    %v8384 = vunpack.c.l.b16 %v8090
    %v8385 = vunpack.c.h.b16 %v8090
    %v8386 = vunpack.c.l.b16 %v8091
    %v8387 = vunpack.c.h.b16 %v8091
    %v8388 = vunpack.c.l.b16 %v8092
    %v8389 = vunpack.c.h.b16 %v8092
    %v8390 = vunpack.c.l.b16 %v8093
    %v8391 = vunpack.c.h.b16 %v8093
    %v8392 = vunpack.c.l.b16 %v8094
    %v8393 = vunpack.c.h.b16 %v8094
    %v8394 = vunpack.c.l.b16 %v8095
    %v8395 = vunpack.c.h.b16 %v8095
    %v8396 = vunpack.c.l.b16 %v8096
    %v8397 = vunpack.c.h.b16 %v8096
    %v8398 = vunpack.c.l.b16 %v8097
    %v8399 = vunpack.c.h.b16 %v8097
    %v8400 = vunpack.c.l.b16 %v8098
    %v8401 = vunpack.c.h.b16 %v8098
    %v8402 = vunpack.c.l.b16 %v8099
    %v8403 = vunpack.c.h.b16 %v8099
    %v8404 = vunpack.c.l.b16 %v8100
    %v8405 = vunpack.c.h.b16 %v8100
    %v8406 = vunpack.c.l.b16 %v8101
    %v8407 = vunpack.c.h.b16 %v8101
    %v8408 = vunpack.c.l.b16 %v8102
    %v8409 = vunpack.c.h.b16 %v8102
    %v8410 = vunpack.c.l.b16 %v8103
    %v8411 = vunpack.c.h.b16 %v8103
    %v8412 = vunpack.c.l.b16 %v8104
    %v8413 = vunpack.c.h.b16 %v8104
    %v8414 = vunpack.c.l.b16 %v8105
    %v8415 = vunpack.c.h.b16 %v8105
    %v8416 = vunpack.c.l.b16 %v8106
    %v8417 = vunpack.c.h.b16 %v8106
    %v8418 = vunpack.c.l.b16 %v8107
    %v8419 = vunpack.c.h.b16 %v8107
    %v8420 = vunpack.c.l.b16 %v8108
    %v8421 = vunpack.c.h.b16 %v8108
    %v8422 = vunpack.c.l.b16 %v8109
    %v8423 = vunpack.c.h.b16 %v8109
    %v8424 = vunpack.c.l.b16 %v8110
    %v8425 = vunpack.c.h.b16 %v8110
    %v8426 = vunpack.c.l.b16 %v8111
    %v8427 = vunpack.c.h.b16 %v8111
    %v8428 = vunpack.c.l.b16 %v8112
    %v8429 = vunpack.c.h.b16 %v8112
    %v8430 = vunpack.c.l.b16 %v8113
    %v8431 = vunpack.c.h.b16 %v8113
    %v8432 = vunpack.c.l.b16 %v8114
    %v8433 = vunpack.c.h.b16 %v8114
    %v8434 = vunpack.c.l.b16 %v8115
    %v8435 = vunpack.c.h.b16 %v8115
    %v8436 = vunpack.c.l.b16 %v8116
    %v8437 = vunpack.c.h.b16 %v8116
    %v8438 = vunpack.c.l.b16 %v8117
    %v8439 = vunpack.c.h.b16 %v8117
    %v8440 = vunpack.c.l.b16 %v8118
    %v8441 = vunpack.c.h.b16 %v8118
    %v8442 = vunpack.c.l.b16 %v8119
    %v8443 = vunpack.c.h.b16 %v8119
    %v8444 = vunpack.c.l.b16 %v8120
    %v8445 = vunpack.c.h.b16 %v8120
    %v8446 = vunpack.c.l.b16 %v8121
    %v8447 = vunpack.c.h.b16 %v8121
    %v8448 = vunpack.c.l.b16 %v8122
    %v8449 = vunpack.c.h.b16 %v8122
    %v8450 = vunpack.c.l.b16 %v8123
    %v8451 = vunpack.c.h.b16 %v8123
    %v8452 = vunpack.c.l.b16 %v8124
    %v8453 = vunpack.c.h.b16 %v8124
    %v8454 = vunpack.c.l.b16 %v8125
    %v8455 = vunpack.c.h.b16 %v8125
    %v8456 = vunpack.c.l.b16 %v8126
    %v8457 = vunpack.c.h.b16 %v8126
    %v8458 = vunpack.c.l.b16 %v8127
    %v8459 = vunpack.c.h.b16 %v8127
    %v8460 = vunpack.c.l.b16 %v8128
    %v8461 = vunpack.c.h.b16 %v8128
    %v8462 = vunpack.c.l.b16 %v8129
    %v8463 = vunpack.c.h.b16 %v8129
    %v8464 = vunpack.c.l.b16 %v8130
    %v8465 = vunpack.c.h.b16 %v8130
    %v8466 = vunpack.c.l.b16 %v8131
    %v8467 = vunpack.c.h.b16 %v8131
    %v8468 = vunpack.c.l.b16 %v8132
    %v8469 = vunpack.c.h.b16 %v8132
    %v8470 = vunpack.c.l.b16 %v8133
    %v8471 = vunpack.c.h.b16 %v8133
    %v8472 = vunpack.c.l.b16 %v8134
    %v8473 = vunpack.c.h.b16 %v8134
    %v8474 = vunpack.c.l.b16 %v8135
    %v8475 = vunpack.c.h.b16 %v8135
    %v8476 = vunpack.c.l.b16 %v8136
    %v8477 = vunpack.c.h.b16 %v8136
    %v8478 = vunpack.c.l.b16 %v8137
    %v8479 = vunpack.c.h.b16 %v8137
    %v8480 = vunpack.c.l.b16 %v8138
    %v8481 = vunpack.c.h.b16 %v8138
    %v8482 = vunpack.c.l.b16 %v8139
    %v8483 = vunpack.c.h.b16 %v8139
    %v8484 = vunpack.c.l.b16 %v8140
    %v8485 = vunpack.c.h.b16 %v8140
    %v8486 = vunpack.c.l.b16 %v8141
    %v8487 = vunpack.c.h.b16 %v8141
    %v8488 = vunpack.c.l.b16 %v8142
    %v8489 = vunpack.c.h.b16 %v8142
    %v8490 = vunpack.c.l.b16 %v8143
    %v8491 = vunpack.c.h.b16 %v8143
    %v8492 = vunpack.c.l.b16 %v8144
    %v8493 = vunpack.c.h.b16 %v8144
    %v8494 = vunpack.c.l.b16 %v8145
    %v8495 = vunpack.c.h.b16 %v8145
    %v8496 = vunpack.c.l.b16 %v8146
    %v8497 = vunpack.c.h.b16 %v8146
    %v8498 = vunpack.c.l.b16 %v8147
    %v8499 = vunpack.c.h.b16 %v8147
    %v8500 = vunpack.c.l.b16 %v8148
    %v8501 = vunpack.c.h.b16 %v8148
    %v8502 = vunpack.c.l.b16 %v8149
    %v8503 = vunpack.c.h.b16 %v8149
    %v8504 = vunpack.c.l.b16 %v8150
    %v8505 = vunpack.c.h.b16 %v8150
    %v8506 = vunpack.c.l.b16 %v8151
    %v8507 = vunpack.c.h.b16 %v8151
    %v8508 = vunpack.c.l.b16 %v8152
    %v8509 = vunpack.c.h.b16 %v8152
    %v8510 = vunpack.c.l.b16 %v8153
    %v8511 = vunpack.c.h.b16 %v8153
    %v8512 = vunpack.c.l.b16 %v8154
    %v8513 = vunpack.c.h.b16 %v8154
    %v8514 = vunpack.c.l.b16 %v8155
    %v8515 = vunpack.c.h.b16 %v8155
    %v8516 = vunpack.c.l.b16 %v8156
    %v8517 = vunpack.c.h.b16 %v8156
    %v8518 = vunpack.c.l.b16 %v8157
    %v8519 = vunpack.c.h.b16 %v8157
    %v8520 = vunpack.c.l.b16 %v8158
    %v8521 = vunpack.c.h.b16 %v8158
    %v8522 = vunpack.c.l.b16 %v8159
    %v8523 = vunpack.c.h.b16 %v8159
    %v8524 = vunpack.c.l.b16 %v8160
    %v8525 = vunpack.c.h.b16 %v8160
    %v8526 = vunpack.c.l.b16 %v8161
    %v8527 = vunpack.c.h.b16 %v8161
    %v8528 = vunpack.c.l.b16 %v8162
    %v8529 = vunpack.c.h.b16 %v8162
    %v8530 = vunpack.c.l.b16 %v8163
    %v8531 = vunpack.c.h.b16 %v8163
    %v8532 = vunpack.c.l.b16 %v8164
    %v8533 = vunpack.c.h.b16 %v8164
    %v8534 = vunpack.c.l.b16 %v8165
    %v8535 = vunpack.c.h.b16 %v8165
    %v8536 = vunpack.c.l.b16 %v8166
    %v8537 = vunpack.c.h.b16 %v8166
    %v8538 = vunpack.c.l.b16 %v8167
    %v8539 = vunpack.c.h.b16 %v8167
    %v8540 = vunpack.c.l.b16 %v8168
    %v8541 = vunpack.c.h.b16 %v8168
    %v8542 = vunpack.c.l.b16 %v8169
    %v8543 = vunpack.c.h.b16 %v8169
    %v8544 = vunpack.c.l.b16 %v8170
    %v8545 = vunpack.c.h.b16 %v8170
    %v8546 = vunpack.c.l.b16 %v8171
    %v8547 = vunpack.c.h.b16 %v8171
    %v8548 = vunpack.c.l.b16 %v8172
    %v8549 = vunpack.c.h.b16 %v8172
    %v8550 = vunpack.c.l.b16 %v8173
    %v8551 = vunpack.c.h.b16 %v8173
    %v8552 = vunpack.c.l.b16 %v8174
    %v8553 = vunpack.c.h.b16 %v8174
    %v8554 = vunpack.c.l.b16 %v8175
    %v8555 = vunpack.c.h.b16 %v8175
    %v8556 = vunpack.c.l.b16 %v8176
    %v8557 = vunpack.c.h.b16 %v8176
    %v8558 = vunpack.c.l.b16 %v8177
    %v8559 = vunpack.c.h.b16 %v8177
    %v8560 = vunpack.c.l.b16 %v8178
    %v8561 = vunpack.c.h.b16 %v8178
    %v8562 = vunpack.c.l.b16 %v8179
    %v8563 = vunpack.c.h.b16 %v8179
    %v8564 = vpack.c.b16 %v8316, %v8308
    %v8565 = vpack.c.b16 %v8317, %v8309
    %v8566 = vpack.c.b16 %v8318, %v8310
    %v8567 = vpack.c.b16 %v8319, %v8311
    %v8568 = vpack.c.b16 %v8320, %v8312
    %v8569 = vpack.c.b16 %v8321, %v8313
    %v8570 = vpack.c.b16 %v8322, %v8314
    %v8571 = vpack.c.b16 %v8323, %v8315
    %v8572 = vpack.c.b16 %v8332, %v8324
    %v8573 = vpack.c.b16 %v8333, %v8325
    %v8574 = vpack.c.b16 %v8334, %v8326
    %v8575 = vpack.c.b16 %v8335, %v8327
    %v8576 = vpack.c.b16 %v8336, %v8328
    %v8577 = vpack.c.b16 %v8337, %v8329
    %v8578 = vpack.c.b16 %v8338, %v8330
    %v8579 = vpack.c.b16 %v8339, %v8331
    %v8580 = vpack.c.b16 %v8348, %v8340
    %v8581 = vpack.c.b16 %v8349, %v8341
    %v8582 = vpack.c.b16 %v8350, %v8342
    %v8583 = vpack.c.b16 %v8351, %v8343
    %v8584 = vpack.c.b16 %v8352, %v8344
    %v8585 = vpack.c.b16 %v8353, %v8345
    %v8586 = vpack.c.b16 %v8354, %v8346
    %v8587 = vpack.c.b16 %v8355, %v8347
    %v8588 = vpack.c.b16 %v8364, %v8356
    %v8589 = vpack.c.b16 %v8365, %v8357
    %v8590 = vpack.c.b16 %v8366, %v8358
    %v8591 = vpack.c.b16 %v8367, %v8359
    %v8592 = vpack.c.b16 %v8368, %v8360
    %v8593 = vpack.c.b16 %v8369, %v8361
    %v8594 = vpack.c.b16 %v8370, %v8362
    %v8595 = vpack.c.b16 %v8371, %v8363
    %v8596 = vpack.c.b16 %v8380, %v8372
    %v8597 = vpack.c.b16 %v8381, %v8373
    %v8598 = vpack.c.b16 %v8382, %v8374
    %v8599 = vpack.c.b16 %v8383, %v8375
    %v8600 = vpack.c.b16 %v8384, %v8376
    %v8601 = vpack.c.b16 %v8385, %v8377
    %v8602 = vpack.c.b16 %v8386, %v8378
    %v8603 = vpack.c.b16 %v8387, %v8379
    %v8604 = vpack.c.b16 %v8396, %v8388
    %v8605 = vpack.c.b16 %v8397, %v8389
    %v8606 = vpack.c.b16 %v8398, %v8390
    %v8607 = vpack.c.b16 %v8399, %v8391
    %v8608 = vpack.c.b16 %v8400, %v8392
    %v8609 = vpack.c.b16 %v8401, %v8393
    %v8610 = vpack.c.b16 %v8402, %v8394
    %v8611 = vpack.c.b16 %v8403, %v8395
    %v8612 = vpack.c.b16 %v8412, %v8404
    %v8613 = vpack.c.b16 %v8413, %v8405
    %v8614 = vpack.c.b16 %v8414, %v8406
    %v8615 = vpack.c.b16 %v8415, %v8407
    %v8616 = vpack.c.b16 %v8416, %v8408
    %v8617 = vpack.c.b16 %v8417, %v8409
    %v8618 = vpack.c.b16 %v8418, %v8410
    %v8619 = vpack.c.b16 %v8419, %v8411
    %v8620 = vpack.c.b16 %v8428, %v8420
    %v8621 = vpack.c.b16 %v8429, %v8421
    %v8622 = vpack.c.b16 %v8430, %v8422
    %v8623 = vpack.c.b16 %v8431, %v8423
    %v8624 = vpack.c.b16 %v8432, %v8424
    %v8625 = vpack.c.b16 %v8433, %v8425
    %v8626 = vpack.c.b16 %v8434, %v8426
    %v8627 = vpack.c.b16 %v8435, %v8427
    %v8628 = vpack.c.b16 %v8444, %v8436
    %v8629 = vpack.c.b16 %v8445, %v8437
    %v8630 = vpack.c.b16 %v8446, %v8438
    %v8631 = vpack.c.b16 %v8447, %v8439
    %v8632 = vpack.c.b16 %v8448, %v8440
    %v8633 = vpack.c.b16 %v8449, %v8441
    %v8634 = vpack.c.b16 %v8450, %v8442
    %v8635 = vpack.c.b16 %v8451, %v8443
    %v8636 = vpack.c.b16 %v8460, %v8452
    %v8637 = vpack.c.b16 %v8461, %v8453
    %v8638 = vpack.c.b16 %v8462, %v8454
    %v8639 = vpack.c.b16 %v8463, %v8455
    %v8640 = vpack.c.b16 %v8464, %v8456
    %v8641 = vpack.c.b16 %v8465, %v8457
    %v8642 = vpack.c.b16 %v8466, %v8458
    %v8643 = vpack.c.b16 %v8467, %v8459
    %v8644 = vpack.c.b16 %v8476, %v8468
    %v8645 = vpack.c.b16 %v8477, %v8469
    %v8646 = vpack.c.b16 %v8478, %v8470
    %v8647 = vpack.c.b16 %v8479, %v8471
    %v8648 = vpack.c.b16 %v8480, %v8472
    %v8649 = vpack.c.b16 %v8481, %v8473
    %v8650 = vpack.c.b16 %v8482, %v8474
    %v8651 = vpack.c.b16 %v8483, %v8475
    %v8652 = vpack.c.b16 %v8492, %v8484
    %v8653 = vpack.c.b16 %v8493, %v8485
    %v8654 = vpack.c.b16 %v8494, %v8486
    %v8655 = vpack.c.b16 %v8495, %v8487
    %v8656 = vpack.c.b16 %v8496, %v8488
    %v8657 = vpack.c.b16 %v8497, %v8489
    %v8658 = vpack.c.b16 %v8498, %v8490
    %v8659 = vpack.c.b16 %v8499, %v8491
    %v8660 = vpack.c.b16 %v8508, %v8500
    %v8661 = vpack.c.b16 %v8509, %v8501
    %v8662 = vpack.c.b16 %v8510, %v8502
    %v8663 = vpack.c.b16 %v8511, %v8503
    %v8664 = vpack.c.b16 %v8512, %v8504
    %v8665 = vpack.c.b16 %v8513, %v8505
    %v8666 = vpack.c.b16 %v8514, %v8506
    %v8667 = vpack.c.b16 %v8515, %v8507
    %v8668 = vpack.c.b16 %v8524, %v8516
    %v8669 = vpack.c.b16 %v8525, %v8517
    %v8670 = vpack.c.b16 %v8526, %v8518
    %v8671 = vpack.c.b16 %v8527, %v8519
    %v8672 = vpack.c.b16 %v8528, %v8520
    %v8673 = vpack.c.b16 %v8529, %v8521
    %v8674 = vpack.c.b16 %v8530, %v8522
    %v8675 = vpack.c.b16 %v8531, %v8523
    %v8676 = vpack.c.b16 %v8540, %v8532
    %v8677 = vpack.c.b16 %v8541, %v8533
    %v8678 = vpack.c.b16 %v8542, %v8534
    %v8679 = vpack.c.b16 %v8543, %v8535
    %v8680 = vpack.c.b16 %v8544, %v8536
    %v8681 = vpack.c.b16 %v8545, %v8537
    %v8682 = vpack.c.b16 %v8546, %v8538
    %v8683 = vpack.c.b16 %v8547, %v8539
    %v8684 = vpack.c.b16 %v8556, %v8548
    %v8685 = vpack.c.b16 %v8557, %v8549
    %v8686 = vpack.c.b16 %v8558, %v8550
    %v8687 = vpack.c.b16 %v8559, %v8551
    %v8688 = vpack.c.b16 %v8560, %v8552
    %v8689 = vpack.c.b16 %v8561, %v8553
    %v8690 = vpack.c.b16 %v8562, %v8554
    %v8691 = vpack.c.b16 %v8563, %v8555
    %8820 = vmatprep.subr.bf16.mxu0 %v8621
    %8821 = vmatpush1.bf16.msra.mxu0 %v8620
    %8822 = vmatprep.subr.bf16.mxu0 %v8613
    %8823 = vmatpush1.bf16.msra.mxu0 %v8612
    %8824 = vmatprep.subr.bf16.mxu0 %v8605
    %8825 = vmatpush1.bf16.msra.mxu0 %v8604
    %8826 = vmatprep.subr.bf16.mxu0 %v8597
    %8827 = vmatpush1.bf16.msra.mxu0 %v8596
    %8828 = vmatprep.subr.bf16.mxu0 %v8589
    %8829 = vmatpush1.bf16.msra.mxu0 %v8588
    %8830 = vmatprep.subr.bf16.mxu0 %v8581
    %8831 = vmatpush1.bf16.msra.mxu0 %v8580
    %8832 = vmatprep.subr.bf16.mxu0 %v8573
    %8833 = vmatpush1.bf16.msra.mxu0 %v8572
    %8834 = vmatprep.subr.bf16.mxu0 %v8565
    %8835 = vmatpush1.bf16.msra.mxu0 %v8564
    %8836 = vmatprep.subr.bf16.mxu0 %v8685
    %8837 = vmatpush2.bf16.msra.mxu0 %v8684
    %8838 = vmatprep.subr.bf16.mxu0 %v8677
    %8839 = vmatpush2.bf16.msra.mxu0 %v8676
    %8840 = vmatprep.subr.bf16.mxu0 %v8669
    %8841 = vmatpush2.bf16.msra.mxu0 %v8668
    %8842 = vmatprep.subr.bf16.mxu0 %v8661
    %8843 = vmatpush2.bf16.msra.mxu0 %v8660
    %8844 = vmatprep.subr.bf16.mxu0 %v8653
    %8845 = vmatpush2.bf16.msra.mxu0 %v8652
    %8846 = vmatprep.subr.bf16.mxu0 %v8645
    %8847 = vmatpush2.bf16.msra.mxu0 %v8644
    %8848 = vmatprep.subr.bf16.mxu0 %v8637
    %8849 = vmatpush2.bf16.msra.mxu0 %v8636
    %8850 = vmatprep.subr.bf16.mxu0 %v8629
    %8851 = vmatpush2.bf16.msra.mxu0 %v8628
    %8852 = vmatprep.mubr.bf16.mxu0 %v8051
    %8853 = vmatmul.mubr.bf16.gmra.mxu0 %v8050
    %v8854 = vpop.f32.mrf.mxu0
    %v8855 = vadd.f32 0.0, %v8854
    %v8856 = vpop.f32.mrf.mxu0
    %v8857 = vadd.f32 0.0, %v8856
    %v8858 = vpop.f32.mrf.mxu0
    %v8859 = vpop.f32.mrf.mxu0
    %8860 = vdwg.mxu0
    %8861 = vmatprep.subr.bf16.mxu0 %v8623
    %8862 = vmatpush1.bf16.msra.mxu0 %v8622
    %8863 = vmatprep.subr.bf16.mxu0 %v8615
    %8864 = vmatpush1.bf16.msra.mxu0 %v8614
    %8865 = vmatprep.subr.bf16.mxu0 %v8607
    %8866 = vmatpush1.bf16.msra.mxu0 %v8606
    %8867 = vmatprep.subr.bf16.mxu0 %v8599
    %8868 = vmatpush1.bf16.msra.mxu0 %v8598
    %8869 = vmatprep.subr.bf16.mxu0 %v8591
    %8870 = vmatpush1.bf16.msra.mxu0 %v8590
    %8871 = vmatprep.subr.bf16.mxu0 %v8583
    %8872 = vmatpush1.bf16.msra.mxu0 %v8582
    %8873 = vmatprep.subr.bf16.mxu0 %v8575
    %8874 = vmatpush1.bf16.msra.mxu0 %v8574
    %8875 = vmatprep.subr.bf16.mxu0 %v8567
    %8876 = vmatpush1.bf16.msra.mxu0 %v8566
    %8877 = vmatprep.subr.bf16.mxu0 %v8687
    %8878 = vmatpush2.bf16.msra.mxu0 %v8686
    %8879 = vmatprep.subr.bf16.mxu0 %v8679
    %8880 = vmatpush2.bf16.msra.mxu0 %v8678
    %8881 = vmatprep.subr.bf16.mxu0 %v8671
    %8882 = vmatpush2.bf16.msra.mxu0 %v8670
    %8883 = vmatprep.subr.bf16.mxu0 %v8663
    %8884 = vmatpush2.bf16.msra.mxu0 %v8662
    %8885 = vmatprep.subr.bf16.mxu0 %v8655
    %8886 = vmatpush2.bf16.msra.mxu0 %v8654
    %8887 = vmatprep.subr.bf16.mxu0 %v8647
    %8888 = vmatpush2.bf16.msra.mxu0 %v8646
    %8889 = vmatprep.subr.bf16.mxu0 %v8639
    %8890 = vmatpush2.bf16.msra.mxu0 %v8638
    %8891 = vmatprep.subr.bf16.mxu0 %v8631
    %8892 = vmatpush2.bf16.msra.mxu0 %v8630
    %8893 = vmatprep.mubr.bf16.mxu0 %v8051
    %8894 = vmatmul.mubr.bf16.gmra.mxu0 %v8050
    %v8895 = vpop.f32.mrf.mxu0
    %v8896 = vadd.f32 0.0, %v8895
    %v8897 = vpop.f32.mrf.mxu0
    %v8898 = vadd.f32 0.0, %v8897
    %v8899 = vpop.f32.mrf.mxu0
    %v8900 = vpop.f32.mrf.mxu0
    %8901 = vdwg.mxu0
    %8902 = vmatprep.subr.bf16.mxu0 %v8625
    %8903 = vmatpush1.bf16.msra.mxu0 %v8624
    %8904 = vmatprep.subr.bf16.mxu0 %v8617
    %8905 = vmatpush1.bf16.msra.mxu0 %v8616
    %8906 = vmatprep.subr.bf16.mxu0 %v8609
    %8907 = vmatpush1.bf16.msra.mxu0 %v8608
    %8908 = vmatprep.subr.bf16.mxu0 %v8601
    %8909 = vmatpush1.bf16.msra.mxu0 %v8600
    %8910 = vmatprep.subr.bf16.mxu0 %v8593
    %8911 = vmatpush1.bf16.msra.mxu0 %v8592
    %8912 = vmatprep.subr.bf16.mxu0 %v8585
    %8913 = vmatpush1.bf16.msra.mxu0 %v8584
    %8914 = vmatprep.subr.bf16.mxu0 %v8577
    %8915 = vmatpush1.bf16.msra.mxu0 %v8576
    %8916 = vmatprep.subr.bf16.mxu0 %v8569
    %8917 = vmatpush1.bf16.msra.mxu0 %v8568
    %8918 = vmatprep.subr.bf16.mxu0 %v8689
    %8919 = vmatpush2.bf16.msra.mxu0 %v8688
    %8920 = vmatprep.subr.bf16.mxu0 %v8681
    %8921 = vmatpush2.bf16.msra.mxu0 %v8680
    %8922 = vmatprep.subr.bf16.mxu0 %v8673
    %8923 = vmatpush2.bf16.msra.mxu0 %v8672
    %8924 = vmatprep.subr.bf16.mxu0 %v8665
    %8925 = vmatpush2.bf16.msra.mxu0 %v8664
    %8926 = vmatprep.subr.bf16.mxu0 %v8657
    %8927 = vmatpush2.bf16.msra.mxu0 %v8656
    %8928 = vmatprep.subr.bf16.mxu0 %v8649
    %8929 = vmatpush2.bf16.msra.mxu0 %v8648
    %8930 = vmatprep.subr.bf16.mxu0 %v8641
    %8931 = vmatpush2.bf16.msra.mxu0 %v8640
    %8932 = vmatprep.subr.bf16.mxu0 %v8633
    %8933 = vmatpush2.bf16.msra.mxu0 %v8632
    %8934 = vmatprep.mubr.bf16.mxu0 %v8051
    %8935 = vmatmul.mubr.bf16.gmra.mxu0 %v8050
    %v8936 = vpop.f32.mrf.mxu0
    %v8937 = vadd.f32 0.0, %v8936
    %v8938 = vpop.f32.mrf.mxu0
    %v8939 = vadd.f32 0.0, %v8938
    %v8940 = vpop.f32.mrf.mxu0
    %v8941 = vpop.f32.mrf.mxu0
    %8942 = vdwg.mxu0
    %8943 = vmatprep.subr.bf16.mxu0 %v8627
    %8944 = vmatpush1.bf16.msra.mxu0 %v8626
    %8945 = vmatprep.subr.bf16.mxu0 %v8619
    %8946 = vmatpush1.bf16.msra.mxu0 %v8618
    %8947 = vmatprep.subr.bf16.mxu0 %v8611
    %8948 = vmatpush1.bf16.msra.mxu0 %v8610
    %8949 = vmatprep.subr.bf16.mxu0 %v8603
    %8950 = vmatpush1.bf16.msra.mxu0 %v8602
    %8951 = vmatprep.subr.bf16.mxu0 %v8595
    %8952 = vmatpush1.bf16.msra.mxu0 %v8594
    %8953 = vmatprep.subr.bf16.mxu0 %v8587
    %8954 = vmatpush1.bf16.msra.mxu0 %v8586
    %8955 = vmatprep.subr.bf16.mxu0 %v8579
    %8956 = vmatpush1.bf16.msra.mxu0 %v8578
    %8957 = vmatprep.subr.bf16.mxu0 %v8571
    %8958 = vmatpush1.bf16.msra.mxu0 %v8570
    %8959 = vmatprep.subr.bf16.mxu0 %v8691
    %8960 = vmatpush2.bf16.msra.mxu0 %v8690
    %8961 = vmatprep.subr.bf16.mxu0 %v8683
    %8962 = vmatpush2.bf16.msra.mxu0 %v8682
    %8963 = vmatprep.subr.bf16.mxu0 %v8675
    %8964 = vmatpush2.bf16.msra.mxu0 %v8674
    %8965 = vmatprep.subr.bf16.mxu0 %v8667
    %8966 = vmatpush2.bf16.msra.mxu0 %v8666
    %8967 = vmatprep.subr.bf16.mxu0 %v8659
    %8968 = vmatpush2.bf16.msra.mxu0 %v8658
    %8969 = vmatprep.subr.bf16.mxu0 %v8651
    %8970 = vmatpush2.bf16.msra.mxu0 %v8650
    %8971 = vmatprep.subr.bf16.mxu0 %v8643
    %8972 = vmatpush2.bf16.msra.mxu0 %v8642
    %8973 = vmatprep.subr.bf16.mxu0 %v8635
    %8974 = vmatpush2.bf16.msra.mxu0 %v8634
    %8975 = vmatprep.mubr.bf16.mxu0 %v8051
    %8976 = vmatmul.mubr.bf16.gmra.mxu0 %v8050
    %v8977 = vpop.f32.mrf.mxu0
    %v8978 = vadd.f32 0.0, %v8977
    %v8979 = vpop.f32.mrf.mxu0
    %v8980 = vadd.f32 0.0, %v8979
    %v8981 = vpop.f32.mrf.mxu0
    %v8982 = vpop.f32.mrf.mxu0
    %8983 = vdwg.mxu0
    %v8984 = vadd.f32 %v8040, %v8855
    %v8985 = vadd.f32 %v8041, %v8857
    %v8986 = vadd.f32 %v8042, %v8896
    %v8987 = vadd.f32 %v8043, %v8898
    %v8988 = vadd.f32 %v8044, %v8937
    %v8989 = vadd.f32 %v8045, %v8939
    %v8990 = vadd.f32 %v8046, %v8978
    %v8991 = vadd.f32 %v8047, %v8980
    %v8992 = vxor.u32 %v8984, 2147483648
    %v8993 = vxor.u32 %v8985, 2147483648
    %v8994 = vxor.u32 %v8986, 2147483648
    %v8995 = vxor.u32 %v8987, 2147483648
    %v8996 = vxor.u32 %v8988, 2147483648
    %v8997 = vxor.u32 %v8989, 2147483648
    %v8998 = vmul.f32 %v8992, 1.442695
    %v8999 = vpow.pop %v8998
    %v9000 = vmul.f32 %v8993, 1.442695
    %v9001 = vpow.pop %v9000
    %v9002 = vmul.f32 %v8994, 1.442695
    %v9003 = vpow.pop %v9002
    %v9004 = vmul.f32 %v8995, 1.442695
    %v9005 = vpow.pop %v9004
    %v9006 = vmul.f32 %v8996, 1.442695
    %v9007 = vpow.pop %v9006
    %v9008 = vmul.f32 %v8997, 1.442695
    %v9009 = vpow.pop %v9008
    %v9010 = vadd.f32 %v8999, 1.0
    %v9011 = vadd.f32 %v9001, 1.0
    %v9012 = vadd.f32 %v9003, 1.0
    %v9013 = vadd.f32 %v9005, 1.0
    %v9014 = vadd.f32 %v9007, 1.0
    %v9015 = vadd.f32 %v9009, 1.0
    %v9016 = vrcp.pop %v9010
    %v9017 = vmul.f32 1.0, %v9016
    %v9018 = vrcp.pop %v9011
    %v9019 = vmul.f32 1.0, %v9018
    %v9020 = vrcp.pop %v9012
    %v9021 = vmul.f32 1.0, %v9020
    %v9022 = vrcp.pop %v9013
    %v9023 = vmul.f32 1.0, %v9022
    %v9024 = vrcp.pop %v9014
    %v9025 = vmul.f32 1.0, %v9024
    %v9026 = vrcp.pop %v9015
    %v9027 = vmul.f32 1.0, %v9026
    %v9028 = vtanh.pop %v8990
    %v9029 = vtanh.pop %v8991
    %v9030 = vld [vmem:[#allocation4] sm:$0xff]
    %v9031 = vld [vmem:[#allocation4 + $0x8] sm:$0xff]
    %v9032 = vmul.f32 %v9021, %v9030
    %v9033 = vmul.f32 %v9023, %v9031
    %v9034 = vmul.f32 %v9017, %v9028
    %v9035 = vmul.f32 %v9019, %v9029
    %v9036 = vadd.f32 %v9032, %v9034
    %v9037 = vadd.f32 %v9033, %v9035
    %9038 = vst [vmem:[#allocation4] sm:$0xff] %v9036
    %9039 = vst [vmem:[#allocation4 + $0x8] sm:$0xff] %v9037
    %v9040 = vtanh.pop %v9036
    %v9041 = vtanh.pop %v9037
    %v9042 = vmul.f32 %v9025, %v9040
    %v9043 = vmul.f32 %v9027, %v9041
    %9044 = vst [vmem:[#allocation3] sm:$0xff] %v9042
    %9045 = vst [vmem:[#allocation3 + $0x8] sm:$0xff] %v9043
    // Predicated region
    $region38: #{tpu_custom_call.1} parent=1 // pred_check
      %p9046 = pneg %p78
    $region39: #{tpu_custom_call.1} parent=1 // pred_check_branch
      %9048 = sbr.rel (%p9046) target = $region41
    $region40: #{tpu_custom_call.1} parent=1 // pred_region
      %v9049 = vld [vmem:[#allocation3] sm:$0xff]
      %v9050 = vld [vmem:[#allocation3 + $0x8] sm:$0xff]
      %9051 = vst [vmem:[#allocation13] sm:$0xff] %v9049
      %9052 = vst [vmem:[#allocation13 + $0x8] sm:$0xff] %v9050
    $region41: #{tpu_custom_call.1} parent=1 // pred_fallthru
      _
    // Predicated region
    $region42: #{tpu_custom_call.1} parent=1 // pred_check
      _
    $region43: #{tpu_custom_call.1} parent=1 // pred_check_branch
      %9054 = sbr.rel (0) target = $region45
    $region44: #{tpu_custom_call.1} parent=1 // pred_region
      %s9056 = ssub.s32 256, 256
      %9057 = vsyncadd [#allocation7], %s9056
      %s9059 = sshll.u32 [#allocation13], 4
      %s9060 = int_to_ptr.vmem [resolvable:$true] %s9059
      %9062 = dma.vmem_to_hbm [thread:$0]  %s9060, 256, %s4, [#allocation7]
    $region45: #{tpu_custom_call.1} parent=1 // pred_fallthru
      _
    // Predicated region
    $region46: #{tpu_custom_call.1} parent=1 // pred_check
      _
    $region47: #{tpu_custom_call.1} parent=1 // pred_check_branch
      %9064 = sbr.rel (0) target = $region49
    $region48: #{tpu_custom_call.1} parent=1 // pred_region
      %9065 = dma.done [#allocation7], 256
    $region49: #{tpu_custom_call.1} parent=1 // pred_fallthru
      _
    %9066 = vsyncpa [#allocation6], 1
    %9067 = vsyncpa [#allocation9], 1
    %9068 = vsyncpa [#allocation12], 1
    %9069 = vsyncpa [#allocation7], 1

</llo_original>
